<compile_context>
chip_gen: v6e
topology: v6e:2x2x1
jax: 0.10.0
libtpu: 0.0.40
codegen_flags: <defaults>
</compile_context>

<pallas_src>
import jax
import jax.numpy as jnp
import numpy as np
from jax import lax
from jax.experimental import pallas as pl
from jax.experimental.pallas import tpu as pltpu


# ------------------------------ geometry tables ------------------------------

def _same_geom(h, w):
    hp, wp = h + 2, w + 2
    return dict(H=h, W=w, Hp=hp, Wp=wp, Rp=hp * wp, G=wp + 1)


def _up_geom(h, w, op):
    ho, wo = 2 * h - 1 + op, 2 * w - 1 + op       # ConvT(k=3,s=2,p=1,op) output
    hdp, wdp = 2 * h + 1 + op, 2 * w + 1 + op     # dilated + padded grid
    u = dict(Ho=ho, Wo=wo, Hdp=hdp, Wdp=wdp, Rdp=hdp * wdp)
    u["Nout"] = u["Rdp"] - wdp - 1                # dilated-layout columns we keep
    u["Nd"] = u["Nout"] + 2 * wdp + 2             # + high guard for the 9 tap slices
    return u


_G0 = _same_geom(4, 4)       # rb0 / rb1 input geometry
_G1 = _same_geom(7, 7)       # rb2 / rb3 input geometry
_G2 = _same_geom(14, 14)     # rb4 / rb5 input geometry
_G3 = _same_geom(28, 28)     # final-layer geometry
_U0 = _up_geom(4, 4, 0)      # rb1 (first=True -> output_padding=0)
_U1 = _up_geom(7, 7, 1)      # rb3
_U2 = _up_geom(14, 14, 1)    # rb5


def _interior_mask(g):
    m = np.zeros((1, g["Rp"]), np.float32)
    for y in range(g["H"]):
        s = (y + 1) * g["Wp"] + 1
        m[0, s:s + g["W"]] = 1.0
    return m


def _anchor_mask(u):
    m = np.zeros((1, u["Nout"]), np.float32)
    for yo in range(u["Ho"]):
        s = yo * u["Wdp"]
        m[0, s:s + u["Wo"]] = 1.0
    return m


def _dilation_matrix(g, u):
    # (Rp_in, Nd) 0/1: padded-flat input pixel -> dilated(+padded) position,
    # with Nd - Rdp trailing zero columns acting as the high guard for taps.
    e = np.zeros((g["Rp"], u["Nd"]), np.float32)
    for y in range(g["H"]):
        for x in range(g["W"]):
            r_in = (y + 1) * g["Wp"] + (x + 1)
            r_d = (2 * y + 1) * u["Wdp"] + (2 * x + 1)
            e[r_in, r_d] = 1.0
    return e


# ------------------------------- fused kernel -------------------------------

def _conv3x3_fused(x, w_ref, b_ref, m_ref, g, relu_in):
    """3x3 / stride 1 / pad 1 conv on padded-flat layout: ONE fused-tap matmul."""
    G, Wp, Rp = g["G"], g["Wp"], g["Rp"]
    c = x.shape[0]
    a = jnp.maximum(x, 0.0) if relu_in else x                     # relu hoisted
    zg = jnp.zeros((c, G), jnp.float32)
    af = jnp.concatenate([zg, a, zg], axis=1)                     # (C, Rp + 2G) guarded
    offs = [(dy - 1) * Wp + (dx - 1) for dy in range(3) for dx in range(3)]
    stk = jnp.concatenate([af[:, G + o:G + o + Rp] for o in offs], axis=0)
    acc = jnp.dot(w_ref[...], stk.astype(jnp.bfloat16),
                  preferred_element_type=jnp.float32)             # (Cout, Rp)
    return (acc + b_ref[...]) * m_ref[...]                        # zero the border


def _plain_block(x, prm, g):
    w1, b1, w2, b2, m = prm
    r1 = _conv3x3_fused(x, w1, b1, m, g, relu_in=True)
    r2 = _conv3x3_fused(r1, w2, b2, m, g, relu_in=True)
    return x + r2


def _up_block(x, prm, g, u, g_next):
    """Residual up block: both ConvTranspose2d branches in one dilation + one matmul."""
    w1, b1, m, wup, bup, e_ref, vm = prm
    r1 = _conv3x3_fused(x, w1, b1, m, g, relu_in=True)            # (Cin, Rp)
    # shortcut branch sees raw x, residual branch sees relu(r1)
    a_cat = jnp.concatenate([x, jnp.maximum(r1, 0.0)], axis=0)    # (2Cin, Rp)
    d = jnp.dot(a_cat.astype(jnp.bfloat16), e_ref[...],
                preferred_element_type=jnp.float32)               # (2Cin, Nd) dilated
    wdp, nout = u["Wdp"], u["Nout"]
    offs = [dy * wdp + dx for dy in range(3) for dx in range(3)]
    stk = jnp.concatenate([d[:, o:o + nout] for o in offs], axis=0)   # (18Cin, Nout)
    acc = jnp.dot(wup[...], stk.astype(jnp.bfloat16),
                  preferred_element_type=jnp.float32)             # (Cout, Nout)
    res = (acc + bup[...]) * vm[...]                              # keep anchors only
    gn = g_next["G"]
    cout = res.shape[0]
    # anchor index rd maps to next padded-flat index rd + G_next, so the repack
    # into the next stage's padded layout is a single zero-prefix concat.
    return jnp.concatenate([jnp.zeros((cout, gn), jnp.float32), res], axis=1)


def _kernel(*refs):
    it = iter(refs)
    a0_ref = next(it)
    blocks = []
    for kind in ("plain", "up", "plain", "up", "plain", "up"):
        blocks.append([next(it) for _ in range(5 if kind == "plain" else 7)])
    wf_ref = next(it)
    bf_ref = next(it)
    out_ref = next(it)

    x = a0_ref[0]                                                 # (c0, 36) f32, padded
    x = _plain_block(x, blocks[0], _G0)
    x = _up_block(x, blocks[1], _G0, _U0, _G1)
    x = _plain_block(x, blocks[2], _G1)
    x = _up_block(x, blocks[3], _G1, _U1, _G2)
    x = _plain_block(x, blocks[4], _G2)
    x = _up_block(x, blocks[5], _G2, _U2, _G3)

    # final: relu + 1x1 conv (cm -> 1) as per-channel scale + sublane reduce (VPU/XLU).
    act = jnp.maximum(x, 0.0)                                     # (cm, 900)
    row = jnp.sum(act * wf_ref[...], axis=0, keepdims=True) + bf_ref[...]
    out_ref[0] = row                                              # lane-dense (1, 900)


# --------------------------- weight / const packing ---------------------------

def _pack_conv_fused(w):       # (Co, Ci, 3, 3) -> (Co, 9*Ci) bf16, tap-major columns
    co, ci = w.shape[0], w.shape[1]
    return jnp.transpose(w, (0, 2, 3, 1)).reshape(co, 9 * ci).astype(jnp.bfloat16)


def _pack_up_fused(ws, w2):    # each (Ci, Co, 3, 3) -> flipped, (Co, 9*2*Ci) bf16
    ci, co = ws.shape[0], ws.shape[1]

    def flip(w):               # -> (Co, 3, 3, Ci) with spatial flip (ConvT == conv w/ flip)
        return jnp.transpose(w[:, :, ::-1, ::-1], (1, 2, 3, 0))

    cat = jnp.concatenate([flip(ws), flip(w2)], axis=3)           # (Co, 3, 3, 2Ci)
    return cat.reshape(co, 9 * 2 * ci).astype(jnp.bfloat16)


def _pack_bias(b):
    return b.reshape(-1, 1).astype(jnp.float32)


def pack_params(params, cm):
    m0 = jnp.asarray(_interior_mask(_G0))
    m1 = jnp.asarray(_interior_mask(_G1))
    m2 = jnp.asarray(_interior_mask(_G2))
    v0 = jnp.asarray(_anchor_mask(_U0))
    v1 = jnp.asarray(_anchor_mask(_U1))
    v2 = jnp.asarray(_anchor_mask(_U2))
    e0 = jnp.asarray(_dilation_matrix(_G0, _U0), jnp.bfloat16)
    e1 = jnp.asarray(_dilation_matrix(_G1, _U1), jnp.bfloat16)
    e2 = jnp.asarray(_dilation_matrix(_G2, _U2), jnp.bfloat16)

    consts = []

    def plain(p, m):
        consts.extend([_pack_conv_fused(p["w1"]), _pack_bias(p["b1"]),
                       _pack_conv_fused(p["w2"]), _pack_bias(p["b2"]), m])

    def up(p, m_in, e, vm):
        consts.extend([_pack_conv_fused(p["w1"]), _pack_bias(p["b1"]), m_in,
                       _pack_up_fused(p["ws"], p["w2"]),
                       _pack_bias(p["bs"] + p["b2"]),   # both branches add their bias
                       e, vm])

    plain(params["rb0"], m0)
    up(params["rb1"], m0, e0, v0)
    plain(params["rb2"], m1)
    up(params["rb3"], m1, e1, v1)
    plain(params["rb4"], m2)
    up(params["rb5"], m2, e2, v2)
    consts.append(params["final_w"].reshape(cm, 1).astype(jnp.float32))
    consts.append(params["final_b"].reshape(1, 1).astype(jnp.float32))
    return tuple(consts)


# ------------------------------ decoder forward ------------------------------

def conv_decoder_forward(x, params, packed, cm):
    b = x.shape[0]
    c0 = cm * 8

    # Initial Linear (XLA, tiny) -> NCHW-ordered columns -> padded (C, 6*6) layout.
    t = x @ params["init_w"] + params["init_b"]            # (B, 4*4*c0)
    t = t.reshape(b, c0, 4, 4)
    t = jnp.pad(t, ((0, 0), (0, 0), (1, 1), (1, 1)))
    a0 = t.reshape(b, c0, _G0["Rp"])                       # (B, c0, 36)

    in_specs = [pl.BlockSpec((1, c0, _G0["Rp"]), lambda i: (i, 0, 0))]
    for arr in packed:
        nd = arr.ndim
        in_specs.append(pl.BlockSpec(arr.shape, lambda i, _n=nd: (0,) * _n))

    out = pl.pallas_call(
        _kernel,
        out_shape=jax.ShapeDtypeStruct((b, 1, _G3["Rp"]), jnp.float32),
        grid_spec=pltpu.PrefetchScalarGridSpec(
            num_scalar_prefetch=0,
            grid=(b,),
            in_specs=in_specs,
            out_specs=pl.BlockSpec((1, 1, _G3["Rp"]), lambda i: (i, 0, 0))),
        compiler_params=pltpu.CompilerParams(
            dimension_semantics=("parallel",),
            vmem_limit_bytes=32 * 1024 * 1024),
    )(a0, *packed)

    out = out.reshape(b, _G3["Hp"], _G3["Wp"])[:, 1:1 + _G3["H"], 1:1 + _G3["W"]]
    return out.reshape(b, 1, _G3["H"], _G3["W"])           # NCHW, like PyTorch


# --------------------------- parameter creation ---------------------------

def init_params(key, latent_features, cm):
    keys = iter(jax.random.split(key, 64))

    def dense(i_, o_):
        return (jax.random.normal(next(keys), (i_, o_), jnp.float32) / np.sqrt(i_),
                0.01 * jax.random.normal(next(keys), (o_,), jnp.float32))

    def conv(cin, cout):
        return (jax.random.normal(next(keys), (cout, cin, 3, 3), jnp.float32)
                / np.sqrt(9 * cin),
                0.01 * jax.random.normal(next(keys), (cout,), jnp.float32))

    def convT(cin, cout):
        return (jax.random.normal(next(keys), (cin, cout, 3, 3), jnp.float32)
                / np.sqrt(9 * cin),
                0.01 * jax.random.normal(next(keys), (cout,), jnp.float32))

    def plain_block(c):
        w1, b1 = conv(c, c)
        w2, b2 = conv(c, c)
        return dict(w1=w1, b1=b1, w2=w2, b2=b2)

    def up_block(c):
        ws, bs = convT(c, c // 2)
        w1, b1 = conv(c, c)
        w2, b2 = convT(c, c // 2)
        return dict(ws=ws, bs=bs, w1=w1, b1=b1, w2=w2, b2=b2)

    p = {}
    p["init_w"], p["init_b"] = dense(latent_features, 4 * 4 * cm * 8)
    p["rb0"] = plain_block(cm * 8)
    p["rb1"] = up_block(cm * 8)
    p["rb2"] = plain_block(cm * 4)
    p["rb3"] = up_block(cm * 4)
    p["rb4"] = plain_block(cm * 2)
    p["rb5"] = up_block(cm * 2)
    p["final_w"], p["final_b"] = dense(cm, 1)  # 1x1 conv (cm -> 1) as dense
    return p


# ------------------------- pure-JAX reference (XLA) -------------------------

def _ref_conv3x3(x, w_oihw, b):
    out = lax.conv_general_dilated(
        x, jnp.transpose(w_oihw, (2, 3, 1, 0)),
        window_strides=(1, 1), padding=((1, 1), (1, 1)),
        dimension_numbers=("NHWC", "HWIO", "NHWC"))
    return out + b.reshape(1, 1, 1, -1)


def _ref_convT(x, w_iohw, b, op):
    w_hwio = jnp.transpose(w_iohw[:, :, ::-1, ::-1], (2, 3, 0, 1))
    out = lax.conv_general_dilated(
        x, w_hwio, window_strides=(1, 1),
        padding=((1, 1 + op), (1, 1 + op)), lhs_dilation=(2, 2),
        dimension_numbers=("NHWC", "HWIO", "NHWC"))
    return out + b.reshape(1, 1, 1, -1)


def reference_forward(x, params, cm):
    relu = lambda a: jnp.maximum(a, 0.0)
    b = x.shape[0]
    t = x @ params["init_w"] + params["init_b"]
    t = jnp.transpose(t.reshape(b, cm * 8, 4, 4), (0, 2, 3, 1))

    def plain(t, p):
        r1 = _ref_conv3x3(relu(t), p["w1"], p["b1"])
        return t + _ref_conv3x3(relu(r1), p["w2"], p["b2"])

    def up(t, p, op):
        s = _ref_convT(t, p["ws"], p["bs"], op)
        r1 = _ref_conv3x3(relu(t), p["w1"], p["b1"])
        return s + _ref_convT(relu(r1), p["w2"], p["b2"], op)

    t = plain(t, params["rb0"])
    t = up(t, params["rb1"], 0)
    t = plain(t, params["rb2"])
    t = up(t, params["rb3"], 1)
    t = plain(t, params["rb4"])
    t = up(t, params["rb5"], 1)
    t = relu(t)
    out = jnp.einsum("bhwc,co->bhwo", t, params["final_w"]) + params["final_b"]
    return jnp.transpose(out, (0, 3, 1, 2))


# ----------------------------------- main -----------------------------------

if __name__ == "__main__":
    B = 2
    LATENT = 8
    CM = 4  # channels_multiplier -> channels 32 -> 16 -> 8 -> 4, spatial 4 -> 28

    key = jax.random.PRNGKey(0)
    k_params, k_x = jax.random.split(key)
    params = init_params(k_params, LATENT, CM)
    x = jax.random.normal(k_x, (B, LATENT), jnp.float32)

    packed = pack_params(params, CM)
    fwd = jax.jit(lambda xv, pv, cv: conv_decoder_forward(xv, pv, cv, CM))
    out = jax.block_until_ready(fwd(x, params, packed))

    assert out.shape == (B, 1, 28, 28), out.shape
    assert bool(jnp.all(jnp.isfinite(out)))

    ref = jax.block_until_ready(reference_forward(x, params, CM))
    # bf16 MXU operands with f32 accumulation -> tolerance loosened vs f32.
    np.testing.assert_allclose(np.asarray(out), np.asarray(ref),
                               rtol=5e-2, atol=5e-2)

    print("KERNEL_OK")
</pallas_src>

<mosaic_0001>
module attributes {stable_mosaic.version = 11 : i64} {
  func.func @_kernel(%arg0: i32, %arg1: memref<1x32x36xf32, #tpu.memory_space<vmem>>, %arg2: memref<32x288xbf16, #tpu.memory_space<vmem>>, %arg3: memref<32x1xf32, #tpu.memory_space<vmem>>, %arg4: memref<32x288xbf16, #tpu.memory_space<vmem>>, %arg5: memref<32x1xf32, #tpu.memory_space<vmem>>, %arg6: memref<1x36xf32, #tpu.memory_space<vmem>>, %arg7: memref<32x288xbf16, #tpu.memory_space<vmem>>, %arg8: memref<32x1xf32, #tpu.memory_space<vmem>>, %arg9: memref<1x36xf32, #tpu.memory_space<vmem>>, %arg10: memref<16x576xbf16, #tpu.memory_space<vmem>>, %arg11: memref<16x1xf32, #tpu.memory_space<vmem>>, %arg12: memref<36x91xbf16, #tpu.memory_space<vmem>>, %arg13: memref<1x71xf32, #tpu.memory_space<vmem>>, %arg14: memref<16x144xbf16, #tpu.memory_space<vmem>>, %arg15: memref<16x1xf32, #tpu.memory_space<vmem>>, %arg16: memref<16x144xbf16, #tpu.memory_space<vmem>>, %arg17: memref<16x1xf32, #tpu.memory_space<vmem>>, %arg18: memref<1x81xf32, #tpu.memory_space<vmem>>, %arg19: memref<16x144xbf16, #tpu.memory_space<vmem>>, %arg20: memref<16x1xf32, #tpu.memory_space<vmem>>, %arg21: memref<1x81xf32, #tpu.memory_space<vmem>>, %arg22: memref<8x288xbf16, #tpu.memory_space<vmem>>, %arg23: memref<8x1xf32, #tpu.memory_space<vmem>>, %arg24: memref<81x273xbf16, #tpu.memory_space<vmem>>, %arg25: memref<1x239xf32, #tpu.memory_space<vmem>>, %arg26: memref<8x72xbf16, #tpu.memory_space<vmem>>, %arg27: memref<8x1xf32, #tpu.memory_space<vmem>>, %arg28: memref<8x72xbf16, #tpu.memory_space<vmem>>, %arg29: memref<8x1xf32, #tpu.memory_space<vmem>>, %arg30: memref<1x256xf32, #tpu.memory_space<vmem>>, %arg31: memref<8x72xbf16, #tpu.memory_space<vmem>>, %arg32: memref<8x1xf32, #tpu.memory_space<vmem>>, %arg33: memref<1x256xf32, #tpu.memory_space<vmem>>, %arg34: memref<4x144xbf16, #tpu.memory_space<vmem>>, %arg35: memref<4x1xf32, #tpu.memory_space<vmem>>, %arg36: memref<256x931xbf16, #tpu.memory_space<vmem>>, %arg37: memref<1x869xf32, #tpu.memory_space<vmem>>, %arg38: memref<4x1xf32, #tpu.memory_space<vmem>>, %arg39: memref<1x1xf32, #tpu.memory_space<vmem>>, %arg40: memref<1x1x900xf32, #tpu.memory_space<vmem>>) attributes {dimension_semantics = [#tpu.dimension_semantics<parallel>], iteration_bounds = array<i64: 2>, scalar_prefetch = 0 : i64, scratch_operands = 0 : i64, tpu.core_type = #tpu.core_type<tc>, window_params = [{transform_indices = @transform_0, window_bounds = array<i64: 1, 32, 36>}, {pipeline_mode = #tpu.pipeline_mode<synchronous>, transform_indices = @transform_1, window_bounds = array<i64: 32, 288>}, {pipeline_mode = #tpu.pipeline_mode<synchronous>, transform_indices = @transform_2, window_bounds = array<i64: 32, 1>}, {pipeline_mode = #tpu.pipeline_mode<synchronous>, transform_indices = @transform_3, window_bounds = array<i64: 32, 288>}, {pipeline_mode = #tpu.pipeline_mode<synchronous>, transform_indices = @transform_4, window_bounds = array<i64: 32, 1>}, {pipeline_mode = #tpu.pipeline_mode<synchronous>, transform_indices = @transform_5, window_bounds = array<i64: 1, 36>}, {pipeline_mode = #tpu.pipeline_mode<synchronous>, transform_indices = @transform_6, window_bounds = array<i64: 32, 288>}, {pipeline_mode = #tpu.pipeline_mode<synchronous>, transform_indices = @transform_7, window_bounds = array<i64: 32, 1>}, {pipeline_mode = #tpu.pipeline_mode<synchronous>, transform_indices = @transform_8, window_bounds = array<i64: 1, 36>}, {pipeline_mode = #tpu.pipeline_mode<synchronous>, transform_indices = @transform_9, window_bounds = array<i64: 16, 576>}, {pipeline_mode = #tpu.pipeline_mode<synchronous>, transform_indices = @transform_10, window_bounds = array<i64: 16, 1>}, {pipeline_mode = #tpu.pipeline_mode<synchronous>, transform_indices = @transform_11, window_bounds = array<i64: 36, 91>}, {pipeline_mode = #tpu.pipeline_mode<synchronous>, transform_indices = @transform_12, window_bounds = array<i64: 1, 71>}, {pipeline_mode = #tpu.pipeline_mode<synchronous>, transform_indices = @transform_13, window_bounds = array<i64: 16, 144>}, {pipeline_mode = #tpu.pipeline_mode<synchronous>, transform_indices = @transform_14, window_bounds = array<i64: 16, 1>}, {pipeline_mode = #tpu.pipeline_mode<synchronous>, transform_indices = @transform_15, window_bounds = array<i64: 16, 144>}, {pipeline_mode = #tpu.pipeline_mode<synchronous>, transform_indices = @transform_16, window_bounds = array<i64: 16, 1>}, {pipeline_mode = #tpu.pipeline_mode<synchronous>, transform_indices = @transform_17, window_bounds = array<i64: 1, 81>}, {pipeline_mode = #tpu.pipeline_mode<synchronous>, transform_indices = @transform_18, window_bounds = array<i64: 16, 144>}, {pipeline_mode = #tpu.pipeline_mode<synchronous>, transform_indices = @transform_19, window_bounds = array<i64: 16, 1>}, {pipeline_mode = #tpu.pipeline_mode<synchronous>, transform_indices = @transform_20, window_bounds = array<i64: 1, 81>}, {pipeline_mode = #tpu.pipeline_mode<synchronous>, transform_indices = @transform_21, window_bounds = array<i64: 8, 288>}, {pipeline_mode = #tpu.pipeline_mode<synchronous>, transform_indices = @transform_22, window_bounds = array<i64: 8, 1>}, {pipeline_mode = #tpu.pipeline_mode<synchronous>, transform_indices = @transform_23, window_bounds = array<i64: 81, 273>}, {pipeline_mode = #tpu.pipeline_mode<synchronous>, transform_indices = @transform_24, window_bounds = array<i64: 1, 239>}, {pipeline_mode = #tpu.pipeline_mode<synchronous>, transform_indices = @transform_25, window_bounds = array<i64: 8, 72>}, {pipeline_mode = #tpu.pipeline_mode<synchronous>, transform_indices = @transform_26, window_bounds = array<i64: 8, 1>}, {pipeline_mode = #tpu.pipeline_mode<synchronous>, transform_indices = @transform_27, window_bounds = array<i64: 8, 72>}, {pipeline_mode = #tpu.pipeline_mode<synchronous>, transform_indices = @transform_28, window_bounds = array<i64: 8, 1>}, {pipeline_mode = #tpu.pipeline_mode<synchronous>, transform_indices = @transform_29, window_bounds = array<i64: 1, 256>}, {pipeline_mode = #tpu.pipeline_mode<synchronous>, transform_indices = @transform_30, window_bounds = array<i64: 8, 72>}, {pipeline_mode = #tpu.pipeline_mode<synchronous>, transform_indices = @transform_31, window_bounds = array<i64: 8, 1>}, {pipeline_mode = #tpu.pipeline_mode<synchronous>, transform_indices = @transform_32, window_bounds = array<i64: 1, 256>}, {pipeline_mode = #tpu.pipeline_mode<synchronous>, transform_indices = @transform_33, window_bounds = array<i64: 4, 144>}, {pipeline_mode = #tpu.pipeline_mode<synchronous>, transform_indices = @transform_34, window_bounds = array<i64: 4, 1>}, {pipeline_mode = #tpu.pipeline_mode<synchronous>, transform_indices = @transform_35, window_bounds = array<i64: 256, 931>}, {pipeline_mode = #tpu.pipeline_mode<synchronous>, transform_indices = @transform_36, window_bounds = array<i64: 1, 869>}, {pipeline_mode = #tpu.pipeline_mode<synchronous>, transform_indices = @transform_37, window_bounds = array<i64: 4, 1>}, {pipeline_mode = #tpu.pipeline_mode<synchronous>, transform_indices = @transform_38, window_bounds = array<i64: 1, 1>}, {transform_indices = @transform_39, window_bounds = array<i64: 1, 1, 900>}]} {
    %c0 = arith.constant 0 : index
    %c0_0 = arith.constant 0 : index
    %c0_1 = arith.constant 0 : index
    %0 = vector.load %arg1[%c0, %c0_0, %c0_1] : memref<1x32x36xf32, #tpu.memory_space<vmem>>, vector<1x32x36xf32>
    %1 = vector.shape_cast %0 : vector<1x32x36xf32> to vector<32x36xf32>
    %cst = arith.constant 0.000000e+00 : f32
    %2 = vector.broadcast %cst : f32 to vector<32x36xf32>
    %3 = arith.maximumf %1, %2 : vector<32x36xf32>
    %cst_2 = arith.constant 0.000000e+00 : f32
    %4 = vector.broadcast %cst_2 : f32 to vector<32x7xf32>
    %5 = tpu.concatenate %4, %3, %4 in 1 : vector<32x7xf32>, vector<32x36xf32>, vector<32x7xf32> -> vector<32x50xf32>
    %6 = vector.extract_strided_slice %5 {offsets = [0, 0], sizes = [32, 36], strides = [1, 1]} : vector<32x50xf32> to vector<32x36xf32>
    %7 = vector.extract_strided_slice %5 {offsets = [0, 1], sizes = [32, 36], strides = [1, 1]} : vector<32x50xf32> to vector<32x36xf32>
    %8 = vector.extract_strided_slice %5 {offsets = [0, 2], sizes = [32, 36], strides = [1, 1]} : vector<32x50xf32> to vector<32x36xf32>
    %9 = vector.extract_strided_slice %5 {offsets = [0, 6], sizes = [32, 36], strides = [1, 1]} : vector<32x50xf32> to vector<32x36xf32>
    %10 = vector.extract_strided_slice %5 {offsets = [0, 7], sizes = [32, 36], strides = [1, 1]} : vector<32x50xf32> to vector<32x36xf32>
    %11 = vector.extract_strided_slice %5 {offsets = [0, 8], sizes = [32, 36], strides = [1, 1]} : vector<32x50xf32> to vector<32x36xf32>
    %12 = vector.extract_strided_slice %5 {offsets = [0, 12], sizes = [32, 36], strides = [1, 1]} : vector<32x50xf32> to vector<32x36xf32>
    %13 = vector.extract_strided_slice %5 {offsets = [0, 13], sizes = [32, 36], strides = [1, 1]} : vector<32x50xf32> to vector<32x36xf32>
    %14 = vector.extract_strided_slice %5 {offsets = [0, 14], sizes = [32, 36], strides = [1, 1]} : vector<32x50xf32> to vector<32x36xf32>
    %15 = tpu.concatenate %6, %7, %8, %9, %10, %11, %12, %13, %14 in 0 : vector<32x36xf32>, vector<32x36xf32>, vector<32x36xf32>, vector<32x36xf32>, vector<32x36xf32>, vector<32x36xf32>, vector<32x36xf32>, vector<32x36xf32>, vector<32x36xf32> -> vector<288x36xf32>
    %c0_3 = arith.constant 0 : index
    %c0_4 = arith.constant 0 : index
    %16 = vector.load %arg2[%c0_3, %c0_4] : memref<32x288xbf16, #tpu.memory_space<vmem>>, vector<32x288xbf16>
    %17 = arith.truncf %15 : vector<288x36xf32> to vector<288x36xbf16>
    %cst_5 = arith.constant dense<0.000000e+00> : vector<32x36xf32>
    %18 = tpu.matmul %16, %17, %cst_5 {dimension_numbers = #tpu.dot_dimension_numbers<[1], [0], [0], [1], [0, 0, 1, 1], [], []>} : vector<32x288xbf16>, vector<288x36xbf16>, vector<32x36xf32> -> vector<32x36xf32>
    %c0_6 = arith.constant 0 : index
    %c0_7 = arith.constant 0 : index
    %19 = vector.load %arg3[%c0_6, %c0_7] : memref<32x1xf32, #tpu.memory_space<vmem>>, vector<32x1xf32>
    %20 = vector.broadcast %19 : vector<32x1xf32> to vector<32x36xf32>
    %21 = arith.addf %18, %20 : vector<32x36xf32>
    %c0_8 = arith.constant 0 : index
    %c0_9 = arith.constant 0 : index
    %22 = vector.load %arg6[%c0_8, %c0_9] : memref<1x36xf32, #tpu.memory_space<vmem>>, vector<1x36xf32>
    %23 = vector.broadcast %22 : vector<1x36xf32> to vector<32x36xf32>
    %24 = arith.mulf %21, %23 : vector<32x36xf32>
    %cst_10 = arith.constant 0.000000e+00 : f32
    %25 = vector.broadcast %cst_10 : f32 to vector<32x36xf32>
    %26 = arith.maximumf %24, %25 : vector<32x36xf32>
    %cst_11 = arith.constant 0.000000e+00 : f32
    %27 = vector.broadcast %cst_11 : f32 to vector<32x7xf32>
    %28 = tpu.concatenate %27, %26, %27 in 1 : vector<32x7xf32>, vector<32x36xf32>, vector<32x7xf32> -> vector<32x50xf32>
    %29 = vector.extract_strided_slice %28 {offsets = [0, 0], sizes = [32, 36], strides = [1, 1]} : vector<32x50xf32> to vector<32x36xf32>
    %30 = vector.extract_strided_slice %28 {offsets = [0, 1], sizes = [32, 36], strides = [1, 1]} : vector<32x50xf32> to vector<32x36xf32>
    %31 = vector.extract_strided_slice %28 {offsets = [0, 2], sizes = [32, 36], strides = [1, 1]} : vector<32x50xf32> to vector<32x36xf32>
    %32 = vector.extract_strided_slice %28 {offsets = [0, 6], sizes = [32, 36], strides = [1, 1]} : vector<32x50xf32> to vector<32x36xf32>
    %33 = vector.extract_strided_slice %28 {offsets = [0, 7], sizes = [32, 36], strides = [1, 1]} : vector<32x50xf32> to vector<32x36xf32>
    %34 = vector.extract_strided_slice %28 {offsets = [0, 8], sizes = [32, 36], strides = [1, 1]} : vector<32x50xf32> to vector<32x36xf32>
    %35 = vector.extract_strided_slice %28 {offsets = [0, 12], sizes = [32, 36], strides = [1, 1]} : vector<32x50xf32> to vector<32x36xf32>
    %36 = vector.extract_strided_slice %28 {offsets = [0, 13], sizes = [32, 36], strides = [1, 1]} : vector<32x50xf32> to vector<32x36xf32>
    %37 = vector.extract_strided_slice %28 {offsets = [0, 14], sizes = [32, 36], strides = [1, 1]} : vector<32x50xf32> to vector<32x36xf32>
    %38 = tpu.concatenate %29, %30, %31, %32, %33, %34, %35, %36, %37 in 0 : vector<32x36xf32>, vector<32x36xf32>, vector<32x36xf32>, vector<32x36xf32>, vector<32x36xf32>, vector<32x36xf32>, vector<32x36xf32>, vector<32x36xf32>, vector<32x36xf32> -> vector<288x36xf32>
    %c0_12 = arith.constant 0 : index
    %c0_13 = arith.constant 0 : index
    %39 = vector.load %arg4[%c0_12, %c0_13] : memref<32x288xbf16, #tpu.memory_space<vmem>>, vector<32x288xbf16>
    %40 = arith.truncf %38 : vector<288x36xf32> to vector<288x36xbf16>
    %cst_14 = arith.constant dense<0.000000e+00> : vector<32x36xf32>
    %41 = tpu.matmul %39, %40, %cst_14 {dimension_numbers = #tpu.dot_dimension_numbers<[1], [0], [0], [1], [0, 0, 1, 1], [], []>} : vector<32x288xbf16>, vector<288x36xbf16>, vector<32x36xf32> -> vector<32x36xf32>
    %c0_15 = arith.constant 0 : index
    %c0_16 = arith.constant 0 : index
    %42 = vector.load %arg5[%c0_15, %c0_16] : memref<32x1xf32, #tpu.memory_space<vmem>>, vector<32x1xf32>
    %43 = vector.broadcast %42 : vector<32x1xf32> to vector<32x36xf32>
    %44 = arith.addf %41, %43 : vector<32x36xf32>
    %c0_17 = arith.constant 0 : index
    %c0_18 = arith.constant 0 : index
    %45 = vector.load %arg6[%c0_17, %c0_18] : memref<1x36xf32, #tpu.memory_space<vmem>>, vector<1x36xf32>
    %46 = vector.broadcast %45 : vector<1x36xf32> to vector<32x36xf32>
    %47 = arith.mulf %44, %46 : vector<32x36xf32>
    %48 = arith.addf %1, %47 : vector<32x36xf32>
    %cst_19 = arith.constant 0.000000e+00 : f32
    %49 = vector.broadcast %cst_19 : f32 to vector<32x36xf32>
    %50 = arith.maximumf %48, %49 : vector<32x36xf32>
    %cst_20 = arith.constant 0.000000e+00 : f32
    %51 = vector.broadcast %cst_20 : f32 to vector<32x7xf32>
    %52 = tpu.concatenate %51, %50, %51 in 1 : vector<32x7xf32>, vector<32x36xf32>, vector<32x7xf32> -> vector<32x50xf32>
    %53 = vector.extract_strided_slice %52 {offsets = [0, 0], sizes = [32, 36], strides = [1, 1]} : vector<32x50xf32> to vector<32x36xf32>
    %54 = vector.extract_strided_slice %52 {offsets = [0, 1], sizes = [32, 36], strides = [1, 1]} : vector<32x50xf32> to vector<32x36xf32>
    %55 = vector.extract_strided_slice %52 {offsets = [0, 2], sizes = [32, 36], strides = [1, 1]} : vector<32x50xf32> to vector<32x36xf32>
    %56 = vector.extract_strided_slice %52 {offsets = [0, 6], sizes = [32, 36], strides = [1, 1]} : vector<32x50xf32> to vector<32x36xf32>
    %57 = vector.extract_strided_slice %52 {offsets = [0, 7], sizes = [32, 36], strides = [1, 1]} : vector<32x50xf32> to vector<32x36xf32>
    %58 = vector.extract_strided_slice %52 {offsets = [0, 8], sizes = [32, 36], strides = [1, 1]} : vector<32x50xf32> to vector<32x36xf32>
    %59 = vector.extract_strided_slice %52 {offsets = [0, 12], sizes = [32, 36], strides = [1, 1]} : vector<32x50xf32> to vector<32x36xf32>
    %60 = vector.extract_strided_slice %52 {offsets = [0, 13], sizes = [32, 36], strides = [1, 1]} : vector<32x50xf32> to vector<32x36xf32>
    %61 = vector.extract_strided_slice %52 {offsets = [0, 14], sizes = [32, 36], strides = [1, 1]} : vector<32x50xf32> to vector<32x36xf32>
    %62 = tpu.concatenate %53, %54, %55, %56, %57, %58, %59, %60, %61 in 0 : vector<32x36xf32>, vector<32x36xf32>, vector<32x36xf32>, vector<32x36xf32>, vector<32x36xf32>, vector<32x36xf32>, vector<32x36xf32>, vector<32x36xf32>, vector<32x36xf32> -> vector<288x36xf32>
    %c0_21 = arith.constant 0 : index
    %c0_22 = arith.constant 0 : index
    %63 = vector.load %arg7[%c0_21, %c0_22] : memref<32x288xbf16, #tpu.memory_space<vmem>>, vector<32x288xbf16>
    %64 = arith.truncf %62 : vector<288x36xf32> to vector<288x36xbf16>
    %cst_23 = arith.constant dense<0.000000e+00> : vector<32x36xf32>
    %65 = tpu.matmul %63, %64, %cst_23 {dimension_numbers = #tpu.dot_dimension_numbers<[1], [0], [0], [1], [0, 0, 1, 1], [], []>} : vector<32x288xbf16>, vector<288x36xbf16>, vector<32x36xf32> -> vector<32x36xf32>
    %c0_24 = arith.constant 0 : index
    %c0_25 = arith.constant 0 : index
    %66 = vector.load %arg8[%c0_24, %c0_25] : memref<32x1xf32, #tpu.memory_space<vmem>>, vector<32x1xf32>
    %67 = vector.broadcast %66 : vector<32x1xf32> to vector<32x36xf32>
    %68 = arith.addf %65, %67 : vector<32x36xf32>
    %c0_26 = arith.constant 0 : index
    %c0_27 = arith.constant 0 : index
    %69 = vector.load %arg9[%c0_26, %c0_27] : memref<1x36xf32, #tpu.memory_space<vmem>>, vector<1x36xf32>
    %70 = vector.broadcast %69 : vector<1x36xf32> to vector<32x36xf32>
    %71 = arith.mulf %68, %70 : vector<32x36xf32>
    %cst_28 = arith.constant 0.000000e+00 : f32
    %72 = vector.broadcast %cst_28 : f32 to vector<32x36xf32>
    %73 = arith.maximumf %71, %72 : vector<32x36xf32>
    %74 = tpu.concatenate %48, %73 in 0 : vector<32x36xf32>, vector<32x36xf32> -> vector<64x36xf32>
    %75 = arith.truncf %74 : vector<64x36xf32> to vector<64x36xbf16>
    %c0_29 = arith.constant 0 : index
    %c0_30 = arith.constant 0 : index
    %76 = vector.load %arg12[%c0_29, %c0_30] : memref<36x91xbf16, #tpu.memory_space<vmem>>, vector<36x91xbf16>
    %cst_31 = arith.constant dense<0.000000e+00> : vector<64x91xf32>
    %77 = tpu.matmul %75, %76, %cst_31 {dimension_numbers = #tpu.dot_dimension_numbers<[1], [0], [0], [1], [0, 0, 1, 1], [], []>} : vector<64x36xbf16>, vector<36x91xbf16>, vector<64x91xf32> -> vector<64x91xf32>
    %78 = vector.extract_strided_slice %77 {offsets = [0, 0], sizes = [64, 71], strides = [1, 1]} : vector<64x91xf32> to vector<64x71xf32>
    %79 = vector.extract_strided_slice %77 {offsets = [0, 1], sizes = [64, 71], strides = [1, 1]} : vector<64x91xf32> to vector<64x71xf32>
    %80 = vector.extract_strided_slice %77 {offsets = [0, 2], sizes = [64, 71], strides = [1, 1]} : vector<64x91xf32> to vector<64x71xf32>
    %81 = vector.extract_strided_slice %77 {offsets = [0, 9], sizes = [64, 71], strides = [1, 1]} : vector<64x91xf32> to vector<64x71xf32>
    %82 = vector.extract_strided_slice %77 {offsets = [0, 10], sizes = [64, 71], strides = [1, 1]} : vector<64x91xf32> to vector<64x71xf32>
    %83 = vector.extract_strided_slice %77 {offsets = [0, 11], sizes = [64, 71], strides = [1, 1]} : vector<64x91xf32> to vector<64x71xf32>
    %84 = vector.extract_strided_slice %77 {offsets = [0, 18], sizes = [64, 71], strides = [1, 1]} : vector<64x91xf32> to vector<64x71xf32>
    %85 = vector.extract_strided_slice %77 {offsets = [0, 19], sizes = [64, 71], strides = [1, 1]} : vector<64x91xf32> to vector<64x71xf32>
    %86 = vector.extract_strided_slice %77 {offsets = [0, 20], sizes = [64, 71], strides = [1, 1]} : vector<64x91xf32> to vector<64x71xf32>
    %87 = tpu.concatenate %78, %79, %80, %81, %82, %83, %84, %85, %86 in 0 : vector<64x71xf32>, vector<64x71xf32>, vector<64x71xf32>, vector<64x71xf32>, vector<64x71xf32>, vector<64x71xf32>, vector<64x71xf32>, vector<64x71xf32>, vector<64x71xf32> -> vector<576x71xf32>
    %c0_32 = arith.constant 0 : index
    %c0_33 = arith.constant 0 : index
    %88 = vector.load %arg10[%c0_32, %c0_33] : memref<16x576xbf16, #tpu.memory_space<vmem>>, vector<16x576xbf16>
    %89 = arith.truncf %87 : vector<576x71xf32> to vector<576x71xbf16>
    %cst_34 = arith.constant dense<0.000000e+00> : vector<16x71xf32>
    %90 = tpu.matmul %88, %89, %cst_34 {dimension_numbers = #tpu.dot_dimension_numbers<[1], [0], [0], [1], [0, 0, 1, 1], [], []>} : vector<16x576xbf16>, vector<576x71xbf16>, vector<16x71xf32> -> vector<16x71xf32>
    %c0_35 = arith.constant 0 : index
    %c0_36 = arith.constant 0 : index
    %91 = vector.load %arg11[%c0_35, %c0_36] : memref<16x1xf32, #tpu.memory_space<vmem>>, vector<16x1xf32>
    %92 = vector.broadcast %91 : vector<16x1xf32> to vector<16x71xf32>
    %93 = arith.addf %90, %92 : vector<16x71xf32>
    %c0_37 = arith.constant 0 : index
    %c0_38 = arith.constant 0 : index
    %94 = vector.load %arg13[%c0_37, %c0_38] : memref<1x71xf32, #tpu.memory_space<vmem>>, vector<1x71xf32>
    %95 = vector.broadcast %94 : vector<1x71xf32> to vector<16x71xf32>
    %96 = arith.mulf %93, %95 : vector<16x71xf32>
    %cst_39 = arith.constant 0.000000e+00 : f32
    %97 = vector.broadcast %cst_39 : f32 to vector<16x10xf32>
    %98 = tpu.concatenate %97, %96 in 1 : vector<16x10xf32>, vector<16x71xf32> -> vector<16x81xf32>
    %cst_40 = arith.constant 0.000000e+00 : f32
    %99 = vector.broadcast %cst_40 : f32 to vector<16x81xf32>
    %100 = arith.maximumf %98, %99 : vector<16x81xf32>
    %cst_41 = arith.constant 0.000000e+00 : f32
    %101 = vector.broadcast %cst_41 : f32 to vector<16x10xf32>
    %102 = tpu.concatenate %101, %100, %101 in 1 : vector<16x10xf32>, vector<16x81xf32>, vector<16x10xf32> -> vector<16x101xf32>
    %103 = vector.extract_strided_slice %102 {offsets = [0, 0], sizes = [16, 81], strides = [1, 1]} : vector<16x101xf32> to vector<16x81xf32>
    %104 = vector.extract_strided_slice %102 {offsets = [0, 1], sizes = [16, 81], strides = [1, 1]} : vector<16x101xf32> to vector<16x81xf32>
    %105 = vector.extract_strided_slice %102 {offsets = [0, 2], sizes = [16, 81], strides = [1, 1]} : vector<16x101xf32> to vector<16x81xf32>
    %106 = vector.extract_strided_slice %102 {offsets = [0, 9], sizes = [16, 81], strides = [1, 1]} : vector<16x101xf32> to vector<16x81xf32>
    %107 = vector.extract_strided_slice %102 {offsets = [0, 10], sizes = [16, 81], strides = [1, 1]} : vector<16x101xf32> to vector<16x81xf32>
    %108 = vector.extract_strided_slice %102 {offsets = [0, 11], sizes = [16, 81], strides = [1, 1]} : vector<16x101xf32> to vector<16x81xf32>
    %109 = vector.extract_strided_slice %102 {offsets = [0, 18], sizes = [16, 81], strides = [1, 1]} : vector<16x101xf32> to vector<16x81xf32>
    %110 = vector.extract_strided_slice %102 {offsets = [0, 19], sizes = [16, 81], strides = [1, 1]} : vector<16x101xf32> to vector<16x81xf32>
    %111 = vector.extract_strided_slice %102 {offsets = [0, 20], sizes = [16, 81], strides = [1, 1]} : vector<16x101xf32> to vector<16x81xf32>
    %112 = tpu.concatenate %103, %104, %105, %106, %107, %108, %109, %110, %111 in 0 : vector<16x81xf32>, vector<16x81xf32>, vector<16x81xf32>, vector<16x81xf32>, vector<16x81xf32>, vector<16x81xf32>, vector<16x81xf32>, vector<16x81xf32>, vector<16x81xf32> -> vector<144x81xf32>
    %c0_42 = arith.constant 0 : index
    %c0_43 = arith.constant 0 : index
    %113 = vector.load %arg14[%c0_42, %c0_43] : memref<16x144xbf16, #tpu.memory_space<vmem>>, vector<16x144xbf16>
    %114 = arith.truncf %112 : vector<144x81xf32> to vector<144x81xbf16>
    %cst_44 = arith.constant dense<0.000000e+00> : vector<16x81xf32>
    %115 = tpu.matmul %113, %114, %cst_44 {dimension_numbers = #tpu.dot_dimension_numbers<[1], [0], [0], [1], [0, 0, 1, 1], [], []>} : vector<16x144xbf16>, vector<144x81xbf16>, vector<16x81xf32> -> vector<16x81xf32>
    %c0_45 = arith.constant 0 : index
    %c0_46 = arith.constant 0 : index
    %116 = vector.load %arg15[%c0_45, %c0_46] : memref<16x1xf32, #tpu.memory_space<vmem>>, vector<16x1xf32>
    %117 = vector.broadcast %116 : vector<16x1xf32> to vector<16x81xf32>
    %118 = arith.addf %115, %117 : vector<16x81xf32>
    %c0_47 = arith.constant 0 : index
    %c0_48 = arith.constant 0 : index
    %119 = vector.load %arg18[%c0_47, %c0_48] : memref<1x81xf32, #tpu.memory_space<vmem>>, vector<1x81xf32>
    %120 = vector.broadcast %119 : vector<1x81xf32> to vector<16x81xf32>
    %121 = arith.mulf %118, %120 : vector<16x81xf32>
    %cst_49 = arith.constant 0.000000e+00 : f32
    %122 = vector.broadcast %cst_49 : f32 to vector<16x81xf32>
    %123 = arith.maximumf %121, %122 : vector<16x81xf32>
    %cst_50 = arith.constant 0.000000e+00 : f32
    %124 = vector.broadcast %cst_50 : f32 to vector<16x10xf32>
    %125 = tpu.concatenate %124, %123, %124 in 1 : vector<16x10xf32>, vector<16x81xf32>, vector<16x10xf32> -> vector<16x101xf32>
    %126 = vector.extract_strided_slice %125 {offsets = [0, 0], sizes = [16, 81], strides = [1, 1]} : vector<16x101xf32> to vector<16x81xf32>
    %127 = vector.extract_strided_slice %125 {offsets = [0, 1], sizes = [16, 81], strides = [1, 1]} : vector<16x101xf32> to vector<16x81xf32>
    %128 = vector.extract_strided_slice %125 {offsets = [0, 2], sizes = [16, 81], strides = [1, 1]} : vector<16x101xf32> to vector<16x81xf32>
    %129 = vector.extract_strided_slice %125 {offsets = [0, 9], sizes = [16, 81], strides = [1, 1]} : vector<16x101xf32> to vector<16x81xf32>
    %130 = vector.extract_strided_slice %125 {offsets = [0, 10], sizes = [16, 81], strides = [1, 1]} : vector<16x101xf32> to vector<16x81xf32>
    %131 = vector.extract_strided_slice %125 {offsets = [0, 11], sizes = [16, 81], strides = [1, 1]} : vector<16x101xf32> to vector<16x81xf32>
    %132 = vector.extract_strided_slice %125 {offsets = [0, 18], sizes = [16, 81], strides = [1, 1]} : vector<16x101xf32> to vector<16x81xf32>
    %133 = vector.extract_strided_slice %125 {offsets = [0, 19], sizes = [16, 81], strides = [1, 1]} : vector<16x101xf32> to vector<16x81xf32>
    %134 = vector.extract_strided_slice %125 {offsets = [0, 20], sizes = [16, 81], strides = [1, 1]} : vector<16x101xf32> to vector<16x81xf32>
    %135 = tpu.concatenate %126, %127, %128, %129, %130, %131, %132, %133, %134 in 0 : vector<16x81xf32>, vector<16x81xf32>, vector<16x81xf32>, vector<16x81xf32>, vector<16x81xf32>, vector<16x81xf32>, vector<16x81xf32>, vector<16x81xf32>, vector<16x81xf32> -> vector<144x81xf32>
    %c0_51 = arith.constant 0 : index
    %c0_52 = arith.constant 0 : index
    %136 = vector.load %arg16[%c0_51, %c0_52] : memref<16x144xbf16, #tpu.memory_space<vmem>>, vector<16x144xbf16>
    %137 = arith.truncf %135 : vector<144x81xf32> to vector<144x81xbf16>
    %cst_53 = arith.constant dense<0.000000e+00> : vector<16x81xf32>
    %138 = tpu.matmul %136, %137, %cst_53 {dimension_numbers = #tpu.dot_dimension_numbers<[1], [0], [0], [1], [0, 0, 1, 1], [], []>} : vector<16x144xbf16>, vector<144x81xbf16>, vector<16x81xf32> -> vector<16x81xf32>
    %c0_54 = arith.constant 0 : index
    %c0_55 = arith.constant 0 : index
    %139 = vector.load %arg17[%c0_54, %c0_55] : memref<16x1xf32, #tpu.memory_space<vmem>>, vector<16x1xf32>
    %140 = vector.broadcast %139 : vector<16x1xf32> to vector<16x81xf32>
    %141 = arith.addf %138, %140 : vector<16x81xf32>
    %c0_56 = arith.constant 0 : index
    %c0_57 = arith.constant 0 : index
    %142 = vector.load %arg18[%c0_56, %c0_57] : memref<1x81xf32, #tpu.memory_space<vmem>>, vector<1x81xf32>
    %143 = vector.broadcast %142 : vector<1x81xf32> to vector<16x81xf32>
    %144 = arith.mulf %141, %143 : vector<16x81xf32>
    %145 = arith.addf %98, %144 : vector<16x81xf32>
    %cst_58 = arith.constant 0.000000e+00 : f32
    %146 = vector.broadcast %cst_58 : f32 to vector<16x81xf32>
    %147 = arith.maximumf %145, %146 : vector<16x81xf32>
    %cst_59 = arith.constant 0.000000e+00 : f32
    %148 = vector.broadcast %cst_59 : f32 to vector<16x10xf32>
    %149 = tpu.concatenate %148, %147, %148 in 1 : vector<16x10xf32>, vector<16x81xf32>, vector<16x10xf32> -> vector<16x101xf32>
    %150 = vector.extract_strided_slice %149 {offsets = [0, 0], sizes = [16, 81], strides = [1, 1]} : vector<16x101xf32> to vector<16x81xf32>
    %151 = vector.extract_strided_slice %149 {offsets = [0, 1], sizes = [16, 81], strides = [1, 1]} : vector<16x101xf32> to vector<16x81xf32>
    %152 = vector.extract_strided_slice %149 {offsets = [0, 2], sizes = [16, 81], strides = [1, 1]} : vector<16x101xf32> to vector<16x81xf32>
    %153 = vector.extract_strided_slice %149 {offsets = [0, 9], sizes = [16, 81], strides = [1, 1]} : vector<16x101xf32> to vector<16x81xf32>
    %154 = vector.extract_strided_slice %149 {offsets = [0, 10], sizes = [16, 81], strides = [1, 1]} : vector<16x101xf32> to vector<16x81xf32>
    %155 = vector.extract_strided_slice %149 {offsets = [0, 11], sizes = [16, 81], strides = [1, 1]} : vector<16x101xf32> to vector<16x81xf32>
    %156 = vector.extract_strided_slice %149 {offsets = [0, 18], sizes = [16, 81], strides = [1, 1]} : vector<16x101xf32> to vector<16x81xf32>
    %157 = vector.extract_strided_slice %149 {offsets = [0, 19], sizes = [16, 81], strides = [1, 1]} : vector<16x101xf32> to vector<16x81xf32>
    %158 = vector.extract_strided_slice %149 {offsets = [0, 20], sizes = [16, 81], strides = [1, 1]} : vector<16x101xf32> to vector<16x81xf32>
    %159 = tpu.concatenate %150, %151, %152, %153, %154, %155, %156, %157, %158 in 0 : vector<16x81xf32>, vector<16x81xf32>, vector<16x81xf32>, vector<16x81xf32>, vector<16x81xf32>, vector<16x81xf32>, vector<16x81xf32>, vector<16x81xf32>, vector<16x81xf32> -> vector<144x81xf32>
    %c0_60 = arith.constant 0 : index
    %c0_61 = arith.constant 0 : index
    %160 = vector.load %arg19[%c0_60, %c0_61] : memref<16x144xbf16, #tpu.memory_space<vmem>>, vector<16x144xbf16>
    %161 = arith.truncf %159 : vector<144x81xf32> to vector<144x81xbf16>
    %cst_62 = arith.constant dense<0.000000e+00> : vector<16x81xf32>
    %162 = tpu.matmul %160, %161, %cst_62 {dimension_numbers = #tpu.dot_dimension_numbers<[1], [0], [0], [1], [0, 0, 1, 1], [], []>} : vector<16x144xbf16>, vector<144x81xbf16>, vector<16x81xf32> -> vector<16x81xf32>
    %c0_63 = arith.constant 0 : index
    %c0_64 = arith.constant 0 : index
    %163 = vector.load %arg20[%c0_63, %c0_64] : memref<16x1xf32, #tpu.memory_space<vmem>>, vector<16x1xf32>
    %164 = vector.broadcast %163 : vector<16x1xf32> to vector<16x81xf32>
    %165 = arith.addf %162, %164 : vector<16x81xf32>
    %c0_65 = arith.constant 0 : index
    %c0_66 = arith.constant 0 : index
    %166 = vector.load %arg21[%c0_65, %c0_66] : memref<1x81xf32, #tpu.memory_space<vmem>>, vector<1x81xf32>
    %167 = vector.broadcast %166 : vector<1x81xf32> to vector<16x81xf32>
    %168 = arith.mulf %165, %167 : vector<16x81xf32>
    %cst_67 = arith.constant 0.000000e+00 : f32
    %169 = vector.broadcast %cst_67 : f32 to vector<16x81xf32>
    %170 = arith.maximumf %168, %169 : vector<16x81xf32>
    %171 = tpu.concatenate %145, %170 in 0 : vector<16x81xf32>, vector<16x81xf32> -> vector<32x81xf32>
    %172 = arith.truncf %171 : vector<32x81xf32> to vector<32x81xbf16>
    %c0_68 = arith.constant 0 : index
    %c0_69 = arith.constant 0 : index
    %173 = vector.load %arg24[%c0_68, %c0_69] : memref<81x273xbf16, #tpu.memory_space<vmem>>, vector<81x273xbf16>
    %cst_70 = arith.constant dense<0.000000e+00> : vector<32x273xf32>
    %174 = tpu.matmul %172, %173, %cst_70 {dimension_numbers = #tpu.dot_dimension_numbers<[1], [0], [0], [1], [0, 0, 1, 1], [], []>} : vector<32x81xbf16>, vector<81x273xbf16>, vector<32x273xf32> -> vector<32x273xf32>
    %175 = vector.extract_strided_slice %174 {offsets = [0, 0], sizes = [32, 239], strides = [1, 1]} : vector<32x273xf32> to vector<32x239xf32>
    %176 = vector.extract_strided_slice %174 {offsets = [0, 1], sizes = [32, 239], strides = [1, 1]} : vector<32x273xf32> to vector<32x239xf32>
    %177 = vector.extract_strided_slice %174 {offsets = [0, 2], sizes = [32, 239], strides = [1, 1]} : vector<32x273xf32> to vector<32x239xf32>
    %178 = vector.extract_strided_slice %174 {offsets = [0, 16], sizes = [32, 239], strides = [1, 1]} : vector<32x273xf32> to vector<32x239xf32>
    %179 = vector.extract_strided_slice %174 {offsets = [0, 17], sizes = [32, 239], strides = [1, 1]} : vector<32x273xf32> to vector<32x239xf32>
    %180 = vector.extract_strided_slice %174 {offsets = [0, 18], sizes = [32, 239], strides = [1, 1]} : vector<32x273xf32> to vector<32x239xf32>
    %181 = vector.extract_strided_slice %174 {offsets = [0, 32], sizes = [32, 239], strides = [1, 1]} : vector<32x273xf32> to vector<32x239xf32>
    %182 = vector.extract_strided_slice %174 {offsets = [0, 33], sizes = [32, 239], strides = [1, 1]} : vector<32x273xf32> to vector<32x239xf32>
    %183 = vector.extract_strided_slice %174 {offsets = [0, 34], sizes = [32, 239], strides = [1, 1]} : vector<32x273xf32> to vector<32x239xf32>
    %184 = tpu.concatenate %175, %176, %177, %178, %179, %180, %181, %182, %183 in 0 : vector<32x239xf32>, vector<32x239xf32>, vector<32x239xf32>, vector<32x239xf32>, vector<32x239xf32>, vector<32x239xf32>, vector<32x239xf32>, vector<32x239xf32>, vector<32x239xf32> -> vector<288x239xf32>
    %c0_71 = arith.constant 0 : index
    %c0_72 = arith.constant 0 : index
    %185 = vector.load %arg22[%c0_71, %c0_72] : memref<8x288xbf16, #tpu.memory_space<vmem>>, vector<8x288xbf16>
    %186 = arith.truncf %184 : vector<288x239xf32> to vector<288x239xbf16>
    %cst_73 = arith.constant dense<0.000000e+00> : vector<8x239xf32>
    %187 = tpu.matmul %185, %186, %cst_73 {dimension_numbers = #tpu.dot_dimension_numbers<[1], [0], [0], [1], [0, 0, 1, 1], [], []>} : vector<8x288xbf16>, vector<288x239xbf16>, vector<8x239xf32> -> vector<8x239xf32>
    %c0_74 = arith.constant 0 : index
    %c0_75 = arith.constant 0 : index
    %188 = vector.load %arg23[%c0_74, %c0_75] : memref<8x1xf32, #tpu.memory_space<vmem>>, vector<8x1xf32>
    %189 = vector.broadcast %188 : vector<8x1xf32> to vector<8x239xf32>
    %190 = arith.addf %187, %189 : vector<8x239xf32>
    %c0_76 = arith.constant 0 : index
    %c0_77 = arith.constant 0 : index
    %191 = vector.load %arg25[%c0_76, %c0_77] : memref<1x239xf32, #tpu.memory_space<vmem>>, vector<1x239xf32>
    %192 = vector.broadcast %191 : vector<1x239xf32> to vector<8x239xf32>
    %193 = arith.mulf %190, %192 : vector<8x239xf32>
    %cst_78 = arith.constant 0.000000e+00 : f32
    %194 = vector.broadcast %cst_78 : f32 to vector<8x17xf32>
    %195 = tpu.concatenate %194, %193 in 1 : vector<8x17xf32>, vector<8x239xf32> -> vector<8x256xf32>
    %cst_79 = arith.constant 0.000000e+00 : f32
    %196 = vector.broadcast %cst_79 : f32 to vector<8x256xf32>
    %197 = arith.maximumf %195, %196 : vector<8x256xf32>
    %cst_80 = arith.constant 0.000000e+00 : f32
    %198 = vector.broadcast %cst_80 : f32 to vector<8x17xf32>
    %199 = tpu.concatenate %198, %197, %198 in 1 : vector<8x17xf32>, vector<8x256xf32>, vector<8x17xf32> -> vector<8x290xf32>
    %200 = vector.extract_strided_slice %199 {offsets = [0, 0], sizes = [8, 256], strides = [1, 1]} : vector<8x290xf32> to vector<8x256xf32>
    %201 = vector.extract_strided_slice %199 {offsets = [0, 1], sizes = [8, 256], strides = [1, 1]} : vector<8x290xf32> to vector<8x256xf32>
    %202 = vector.extract_strided_slice %199 {offsets = [0, 2], sizes = [8, 256], strides = [1, 1]} : vector<8x290xf32> to vector<8x256xf32>
    %203 = vector.extract_strided_slice %199 {offsets = [0, 16], sizes = [8, 256], strides = [1, 1]} : vector<8x290xf32> to vector<8x256xf32>
    %204 = vector.extract_strided_slice %199 {offsets = [0, 17], sizes = [8, 256], strides = [1, 1]} : vector<8x290xf32> to vector<8x256xf32>
    %205 = vector.extract_strided_slice %199 {offsets = [0, 18], sizes = [8, 256], strides = [1, 1]} : vector<8x290xf32> to vector<8x256xf32>
    %206 = vector.extract_strided_slice %199 {offsets = [0, 32], sizes = [8, 256], strides = [1, 1]} : vector<8x290xf32> to vector<8x256xf32>
    %207 = vector.extract_strided_slice %199 {offsets = [0, 33], sizes = [8, 256], strides = [1, 1]} : vector<8x290xf32> to vector<8x256xf32>
    %208 = vector.extract_strided_slice %199 {offsets = [0, 34], sizes = [8, 256], strides = [1, 1]} : vector<8x290xf32> to vector<8x256xf32>
    %209 = tpu.concatenate %200, %201, %202, %203, %204, %205, %206, %207, %208 in 0 : vector<8x256xf32>, vector<8x256xf32>, vector<8x256xf32>, vector<8x256xf32>, vector<8x256xf32>, vector<8x256xf32>, vector<8x256xf32>, vector<8x256xf32>, vector<8x256xf32> -> vector<72x256xf32>
    %c0_81 = arith.constant 0 : index
    %c0_82 = arith.constant 0 : index
    %210 = vector.load %arg26[%c0_81, %c0_82] : memref<8x72xbf16, #tpu.memory_space<vmem>>, vector<8x72xbf16>
    %211 = arith.truncf %209 : vector<72x256xf32> to vector<72x256xbf16>
    %cst_83 = arith.constant dense<0.000000e+00> : vector<8x256xf32>
    %212 = tpu.matmul %210, %211, %cst_83 {dimension_numbers = #tpu.dot_dimension_numbers<[1], [0], [0], [1], [0, 0, 1, 1], [], []>} : vector<8x72xbf16>, vector<72x256xbf16>, vector<8x256xf32> -> vector<8x256xf32>
    %c0_84 = arith.constant 0 : index
    %c0_85 = arith.constant 0 : index
    %213 = vector.load %arg27[%c0_84, %c0_85] : memref<8x1xf32, #tpu.memory_space<vmem>>, vector<8x1xf32>
    %214 = vector.broadcast %213 : vector<8x1xf32> to vector<8x256xf32>
    %215 = arith.addf %212, %214 : vector<8x256xf32>
    %c0_86 = arith.constant 0 : index
    %c0_87 = arith.constant 0 : index
    %216 = vector.load %arg30[%c0_86, %c0_87] : memref<1x256xf32, #tpu.memory_space<vmem>>, vector<1x256xf32>
    %217 = vector.broadcast %216 : vector<1x256xf32> to vector<8x256xf32>
    %218 = arith.mulf %215, %217 : vector<8x256xf32>
    %cst_88 = arith.constant 0.000000e+00 : f32
    %219 = vector.broadcast %cst_88 : f32 to vector<8x256xf32>
    %220 = arith.maximumf %218, %219 : vector<8x256xf32>
    %cst_89 = arith.constant 0.000000e+00 : f32
    %221 = vector.broadcast %cst_89 : f32 to vector<8x17xf32>
    %222 = tpu.concatenate %221, %220, %221 in 1 : vector<8x17xf32>, vector<8x256xf32>, vector<8x17xf32> -> vector<8x290xf32>
    %223 = vector.extract_strided_slice %222 {offsets = [0, 0], sizes = [8, 256], strides = [1, 1]} : vector<8x290xf32> to vector<8x256xf32>
    %224 = vector.extract_strided_slice %222 {offsets = [0, 1], sizes = [8, 256], strides = [1, 1]} : vector<8x290xf32> to vector<8x256xf32>
    %225 = vector.extract_strided_slice %222 {offsets = [0, 2], sizes = [8, 256], strides = [1, 1]} : vector<8x290xf32> to vector<8x256xf32>
    %226 = vector.extract_strided_slice %222 {offsets = [0, 16], sizes = [8, 256], strides = [1, 1]} : vector<8x290xf32> to vector<8x256xf32>
    %227 = vector.extract_strided_slice %222 {offsets = [0, 17], sizes = [8, 256], strides = [1, 1]} : vector<8x290xf32> to vector<8x256xf32>
    %228 = vector.extract_strided_slice %222 {offsets = [0, 18], sizes = [8, 256], strides = [1, 1]} : vector<8x290xf32> to vector<8x256xf32>
    %229 = vector.extract_strided_slice %222 {offsets = [0, 32], sizes = [8, 256], strides = [1, 1]} : vector<8x290xf32> to vector<8x256xf32>
    %230 = vector.extract_strided_slice %222 {offsets = [0, 33], sizes = [8, 256], strides = [1, 1]} : vector<8x290xf32> to vector<8x256xf32>
    %231 = vector.extract_strided_slice %222 {offsets = [0, 34], sizes = [8, 256], strides = [1, 1]} : vector<8x290xf32> to vector<8x256xf32>
    %232 = tpu.concatenate %223, %224, %225, %226, %227, %228, %229, %230, %231 in 0 : vector<8x256xf32>, vector<8x256xf32>, vector<8x256xf32>, vector<8x256xf32>, vector<8x256xf32>, vector<8x256xf32>, vector<8x256xf32>, vector<8x256xf32>, vector<8x256xf32> -> vector<72x256xf32>
    %c0_90 = arith.constant 0 : index
    %c0_91 = arith.constant 0 : index
    %233 = vector.load %arg28[%c0_90, %c0_91] : memref<8x72xbf16, #tpu.memory_space<vmem>>, vector<8x72xbf16>
    %234 = arith.truncf %232 : vector<72x256xf32> to vector<72x256xbf16>
    %cst_92 = arith.constant dense<0.000000e+00> : vector<8x256xf32>
    %235 = tpu.matmul %233, %234, %cst_92 {dimension_numbers = #tpu.dot_dimension_numbers<[1], [0], [0], [1], [0, 0, 1, 1], [], []>} : vector<8x72xbf16>, vector<72x256xbf16>, vector<8x256xf32> -> vector<8x256xf32>
    %c0_93 = arith.constant 0 : index
    %c0_94 = arith.constant 0 : index
    %236 = vector.load %arg29[%c0_93, %c0_94] : memref<8x1xf32, #tpu.memory_space<vmem>>, vector<8x1xf32>
    %237 = vector.broadcast %236 : vector<8x1xf32> to vector<8x256xf32>
    %238 = arith.addf %235, %237 : vector<8x256xf32>
    %c0_95 = arith.constant 0 : index
    %c0_96 = arith.constant 0 : index
    %239 = vector.load %arg30[%c0_95, %c0_96] : memref<1x256xf32, #tpu.memory_space<vmem>>, vector<1x256xf32>
    %240 = vector.broadcast %239 : vector<1x256xf32> to vector<8x256xf32>
    %241 = arith.mulf %238, %240 : vector<8x256xf32>
    %242 = arith.addf %195, %241 : vector<8x256xf32>
    %cst_97 = arith.constant 0.000000e+00 : f32
    %243 = vector.broadcast %cst_97 : f32 to vector<8x256xf32>
    %244 = arith.maximumf %242, %243 : vector<8x256xf32>
    %cst_98 = arith.constant 0.000000e+00 : f32
    %245 = vector.broadcast %cst_98 : f32 to vector<8x17xf32>
    %246 = tpu.concatenate %245, %244, %245 in 1 : vector<8x17xf32>, vector<8x256xf32>, vector<8x17xf32> -> vector<8x290xf32>
    %247 = vector.extract_strided_slice %246 {offsets = [0, 0], sizes = [8, 256], strides = [1, 1]} : vector<8x290xf32> to vector<8x256xf32>
    %248 = vector.extract_strided_slice %246 {offsets = [0, 1], sizes = [8, 256], strides = [1, 1]} : vector<8x290xf32> to vector<8x256xf32>
    %249 = vector.extract_strided_slice %246 {offsets = [0, 2], sizes = [8, 256], strides = [1, 1]} : vector<8x290xf32> to vector<8x256xf32>
    %250 = vector.extract_strided_slice %246 {offsets = [0, 16], sizes = [8, 256], strides = [1, 1]} : vector<8x290xf32> to vector<8x256xf32>
    %251 = vector.extract_strided_slice %246 {offsets = [0, 17], sizes = [8, 256], strides = [1, 1]} : vector<8x290xf32> to vector<8x256xf32>
    %252 = vector.extract_strided_slice %246 {offsets = [0, 18], sizes = [8, 256], strides = [1, 1]} : vector<8x290xf32> to vector<8x256xf32>
    %253 = vector.extract_strided_slice %246 {offsets = [0, 32], sizes = [8, 256], strides = [1, 1]} : vector<8x290xf32> to vector<8x256xf32>
    %254 = vector.extract_strided_slice %246 {offsets = [0, 33], sizes = [8, 256], strides = [1, 1]} : vector<8x290xf32> to vector<8x256xf32>
    %255 = vector.extract_strided_slice %246 {offsets = [0, 34], sizes = [8, 256], strides = [1, 1]} : vector<8x290xf32> to vector<8x256xf32>
    %256 = tpu.concatenate %247, %248, %249, %250, %251, %252, %253, %254, %255 in 0 : vector<8x256xf32>, vector<8x256xf32>, vector<8x256xf32>, vector<8x256xf32>, vector<8x256xf32>, vector<8x256xf32>, vector<8x256xf32>, vector<8x256xf32>, vector<8x256xf32> -> vector<72x256xf32>
    %c0_99 = arith.constant 0 : index
    %c0_100 = arith.constant 0 : index
    %257 = vector.load %arg31[%c0_99, %c0_100] : memref<8x72xbf16, #tpu.memory_space<vmem>>, vector<8x72xbf16>
    %258 = arith.truncf %256 : vector<72x256xf32> to vector<72x256xbf16>
    %cst_101 = arith.constant dense<0.000000e+00> : vector<8x256xf32>
    %259 = tpu.matmul %257, %258, %cst_101 {dimension_numbers = #tpu.dot_dimension_numbers<[1], [0], [0], [1], [0, 0, 1, 1], [], []>} : vector<8x72xbf16>, vector<72x256xbf16>, vector<8x256xf32> -> vector<8x256xf32>
    %c0_102 = arith.constant 0 : index
    %c0_103 = arith.constant 0 : index
    %260 = vector.load %arg32[%c0_102, %c0_103] : memref<8x1xf32, #tpu.memory_space<vmem>>, vector<8x1xf32>
    %261 = vector.broadcast %260 : vector<8x1xf32> to vector<8x256xf32>
    %262 = arith.addf %259, %261 : vector<8x256xf32>
    %c0_104 = arith.constant 0 : index
    %c0_105 = arith.constant 0 : index
    %263 = vector.load %arg33[%c0_104, %c0_105] : memref<1x256xf32, #tpu.memory_space<vmem>>, vector<1x256xf32>
    %264 = vector.broadcast %263 : vector<1x256xf32> to vector<8x256xf32>
    %265 = arith.mulf %262, %264 : vector<8x256xf32>
    %cst_106 = arith.constant 0.000000e+00 : f32
    %266 = vector.broadcast %cst_106 : f32 to vector<8x256xf32>
    %267 = arith.maximumf %265, %266 : vector<8x256xf32>
    %268 = tpu.concatenate %242, %267 in 0 : vector<8x256xf32>, vector<8x256xf32> -> vector<16x256xf32>
    %269 = arith.truncf %268 : vector<16x256xf32> to vector<16x256xbf16>
    %c0_107 = arith.constant 0 : index
    %c0_108 = arith.constant 0 : index
    %270 = vector.load %arg36[%c0_107, %c0_108] : memref<256x931xbf16, #tpu.memory_space<vmem>>, vector<256x931xbf16>
    %cst_109 = arith.constant dense<0.000000e+00> : vector<16x931xf32>
    %271 = tpu.matmul %269, %270, %cst_109 {dimension_numbers = #tpu.dot_dimension_numbers<[1], [0], [0], [1], [0, 0, 1, 1], [], []>} : vector<16x256xbf16>, vector<256x931xbf16>, vector<16x931xf32> -> vector<16x931xf32>
    %272 = vector.extract_strided_slice %271 {offsets = [0, 0], sizes = [16, 869], strides = [1, 1]} : vector<16x931xf32> to vector<16x869xf32>
    %273 = vector.extract_strided_slice %271 {offsets = [0, 1], sizes = [16, 869], strides = [1, 1]} : vector<16x931xf32> to vector<16x869xf32>
    %274 = vector.extract_strided_slice %271 {offsets = [0, 2], sizes = [16, 869], strides = [1, 1]} : vector<16x931xf32> to vector<16x869xf32>
    %275 = vector.extract_strided_slice %271 {offsets = [0, 30], sizes = [16, 869], strides = [1, 1]} : vector<16x931xf32> to vector<16x869xf32>
    %276 = vector.extract_strided_slice %271 {offsets = [0, 31], sizes = [16, 869], strides = [1, 1]} : vector<16x931xf32> to vector<16x869xf32>
    %277 = vector.extract_strided_slice %271 {offsets = [0, 32], sizes = [16, 869], strides = [1, 1]} : vector<16x931xf32> to vector<16x869xf32>
    %278 = vector.extract_strided_slice %271 {offsets = [0, 60], sizes = [16, 869], strides = [1, 1]} : vector<16x931xf32> to vector<16x869xf32>
    %279 = vector.extract_strided_slice %271 {offsets = [0, 61], sizes = [16, 869], strides = [1, 1]} : vector<16x931xf32> to vector<16x869xf32>
    %280 = vector.extract_strided_slice %271 {offsets = [0, 62], sizes = [16, 869], strides = [1, 1]} : vector<16x931xf32> to vector<16x869xf32>
    %281 = tpu.concatenate %272, %273, %274, %275, %276, %277, %278, %279, %280 in 0 : vector<16x869xf32>, vector<16x869xf32>, vector<16x869xf32>, vector<16x869xf32>, vector<16x869xf32>, vector<16x869xf32>, vector<16x869xf32>, vector<16x869xf32>, vector<16x869xf32> -> vector<144x869xf32>
    %c0_110 = arith.constant 0 : index
    %c0_111 = arith.constant 0 : index
    %282 = vector.load %arg34[%c0_110, %c0_111] : memref<4x144xbf16, #tpu.memory_space<vmem>>, vector<4x144xbf16>
    %283 = arith.truncf %281 : vector<144x869xf32> to vector<144x869xbf16>
    %cst_112 = arith.constant dense<0.000000e+00> : vector<4x869xf32>
    %284 = tpu.matmul %282, %283, %cst_112 {dimension_numbers = #tpu.dot_dimension_numbers<[1], [0], [0], [1], [0, 0, 1, 1], [], []>} : vector<4x144xbf16>, vector<144x869xbf16>, vector<4x869xf32> -> vector<4x869xf32>
    %c0_113 = arith.constant 0 : index
    %c0_114 = arith.constant 0 : index
    %285 = vector.load %arg35[%c0_113, %c0_114] : memref<4x1xf32, #tpu.memory_space<vmem>>, vector<4x1xf32>
    %286 = vector.broadcast %285 : vector<4x1xf32> to vector<4x869xf32>
    %287 = arith.addf %284, %286 : vector<4x869xf32>
    %c0_115 = arith.constant 0 : index
    %c0_116 = arith.constant 0 : index
    %288 = vector.load %arg37[%c0_115, %c0_116] : memref<1x869xf32, #tpu.memory_space<vmem>>, vector<1x869xf32>
    %289 = vector.broadcast %288 : vector<1x869xf32> to vector<4x869xf32>
    %290 = arith.mulf %287, %289 : vector<4x869xf32>
    %cst_117 = arith.constant 0.000000e+00 : f32
    %291 = vector.broadcast %cst_117 : f32 to vector<4x31xf32>
    %292 = tpu.concatenate %291, %290 in 1 : vector<4x31xf32>, vector<4x869xf32> -> vector<4x900xf32>
    %cst_118 = arith.constant 0.000000e+00 : f32
    %293 = vector.broadcast %cst_118 : f32 to vector<4x900xf32>
    %294 = arith.maximumf %292, %293 : vector<4x900xf32>
    %c0_119 = arith.constant 0 : index
    %c0_120 = arith.constant 0 : index
    %295 = vector.load %arg38[%c0_119, %c0_120] : memref<4x1xf32, #tpu.memory_space<vmem>>, vector<4x1xf32>
    %296 = vector.broadcast %295 : vector<4x1xf32> to vector<4x900xf32>
    %297 = arith.mulf %294, %296 : vector<4x900xf32>
    %cst_121 = arith.constant dense<0.000000e+00> : vector<900xf32>
    %298 = vector.multi_reduction <add>, %297, %cst_121 [0] : vector<4x900xf32> to vector<900xf32>
    %299 = vector.shape_cast %298 : vector<900xf32> to vector<1x900xf32>
    %c0_122 = arith.constant 0 : index
    %c0_123 = arith.constant 0 : index
    %300 = vector.load %arg39[%c0_122, %c0_123] : memref<1x1xf32, #tpu.memory_space<vmem>>, vector<1x1xf32>
    %301 = vector.broadcast %300 : vector<1x1xf32> to vector<1x900xf32>
    %302 = arith.addf %299, %301 : vector<1x900xf32>
    %c0_124 = arith.constant 0 : index
    %c0_125 = arith.constant 0 : index
    %c0_126 = arith.constant 0 : index
    %303 = vector.load %arg40[%c0_124, %c0_125, %c0_126] : memref<1x1x900xf32, #tpu.memory_space<vmem>>, vector<1x1x900xf32>
    %304 = vector.shape_cast %303 : vector<1x1x900xf32> to vector<1x900xf32>
    %305 = vector.shape_cast %302 : vector<1x900xf32> to vector<1x1x900xf32>
    tpu.vector_store %arg40[%c0_124, %c0_125, %c0_126], %305 {strides = array<i32>} : memref<1x1x900xf32, #tpu.memory_space<vmem>>, vector<1x1x900xf32>,
    return
  }
  func.func @transform_0(%arg0: i32) -> (i32, i32, i32) {
    %c0_i32 = arith.constant 0 : i32
    %c0_i32_0 = arith.constant 0 : i32
    %c0_i32_1 = arith.constant 0 : i32
    return %arg0, %c0_i32, %c0_i32_0 : i32, i32, i32
  }
  func.func @transform_1(%arg0: i32) -> (i32, i32) {
    %c0_i32 = arith.constant 0 : i32
    %c0_i32_0 = arith.constant 0 : i32
    %c0_i32_1 = arith.constant 0 : i32
    return %c0_i32, %c0_i32_0 : i32, i32
  }
  func.func @transform_2(%arg0: i32) -> (i32, i32) {
    %c0_i32 = arith.constant 0 : i32
    %c0_i32_0 = arith.constant 0 : i32
    %c0_i32_1 = arith.constant 0 : i32
    return %c0_i32, %c0_i32_0 : i32, i32
  }
  func.func @transform_3(%arg0: i32) -> (i32, i32) {
    %c0_i32 = arith.constant 0 : i32
    %c0_i32_0 = arith.constant 0 : i32
    %c0_i32_1 = arith.constant 0 : i32
    return %c0_i32, %c0_i32_0 : i32, i32
  }
  func.func @transform_4(%arg0: i32) -> (i32, i32) {
    %c0_i32 = arith.constant 0 : i32
    %c0_i32_0 = arith.constant 0 : i32
    %c0_i32_1 = arith.constant 0 : i32
    return %c0_i32, %c0_i32_0 : i32, i32
  }
  func.func @transform_5(%arg0: i32) -> (i32, i32) {
    %c0_i32 = arith.constant 0 : i32
    %c0_i32_0 = arith.constant 0 : i32
    %c0_i32_1 = arith.constant 0 : i32
    return %c0_i32, %c0_i32_0 : i32, i32
  }
  func.func @transform_6(%arg0: i32) -> (i32, i32) {
    %c0_i32 = arith.constant 0 : i32
    %c0_i32_0 = arith.constant 0 : i32
    %c0_i32_1 = arith.constant 0 : i32
    return %c0_i32, %c0_i32_0 : i32, i32
  }
  func.func @transform_7(%arg0: i32) -> (i32, i32) {
    %c0_i32 = arith.constant 0 : i32
    %c0_i32_0 = arith.constant 0 : i32
    %c0_i32_1 = arith.constant 0 : i32
    return %c0_i32, %c0_i32_0 : i32, i32
  }
  func.func @transform_8(%arg0: i32) -> (i32, i32) {
    %c0_i32 = arith.constant 0 : i32
    %c0_i32_0 = arith.constant 0 : i32
    %c0_i32_1 = arith.constant 0 : i32
    return %c0_i32, %c0_i32_0 : i32, i32
  }
  func.func @transform_9(%arg0: i32) -> (i32, i32) {
    %c0_i32 = arith.constant 0 : i32
    %c0_i32_0 = arith.constant 0 : i32
    %c0_i32_1 = arith.constant 0 : i32
    return %c0_i32, %c0_i32_0 : i32, i32
  }
  func.func @transform_10(%arg0: i32) -> (i32, i32) {
    %c0_i32 = arith.constant 0 : i32
    %c0_i32_0 = arith.constant 0 : i32
    %c0_i32_1 = arith.constant 0 : i32
    return %c0_i32, %c0_i32_0 : i32, i32
  }
  func.func @transform_11(%arg0: i32) -> (i32, i32) {
    %c0_i32 = arith.constant 0 : i32
    %c0_i32_0 = arith.constant 0 : i32
    %c0_i32_1 = arith.constant 0 : i32
    return %c0_i32, %c0_i32_0 : i32, i32
  }
  func.func @transform_12(%arg0: i32) -> (i32, i32) {
    %c0_i32 = arith.constant 0 : i32
    %c0_i32_0 = arith.constant 0 : i32
    %c0_i32_1 = arith.constant 0 : i32
    return %c0_i32, %c0_i32_0 : i32, i32
  }
  func.func @transform_13(%arg0: i32) -> (i32, i32) {
    %c0_i32 = arith.constant 0 : i32
    %c0_i32_0 = arith.constant 0 : i32
    %c0_i32_1 = arith.constant 0 : i32
    return %c0_i32, %c0_i32_0 : i32, i32
  }
  func.func @transform_14(%arg0: i32) -> (i32, i32) {
    %c0_i32 = arith.constant 0 : i32
    %c0_i32_0 = arith.constant 0 : i32
    %c0_i32_1 = arith.constant 0 : i32
    return %c0_i32, %c0_i32_0 : i32, i32
  }
  func.func @transform_15(%arg0: i32) -> (i32, i32) {
    %c0_i32 = arith.constant 0 : i32
    %c0_i32_0 = arith.constant 0 : i32
    %c0_i32_1 = arith.constant 0 : i32
    return %c0_i32, %c0_i32_0 : i32, i32
  }
  func.func @transform_16(%arg0: i32) -> (i32, i32) {
    %c0_i32 = arith.constant 0 : i32
    %c0_i32_0 = arith.constant 0 : i32
    %c0_i32_1 = arith.constant 0 : i32
    return %c0_i32, %c0_i32_0 : i32, i32
  }
  func.func @transform_17(%arg0: i32) -> (i32, i32) {
    %c0_i32 = arith.constant 0 : i32
    %c0_i32_0 = arith.constant 0 : i32
    %c0_i32_1 = arith.constant 0 : i32
    return %c0_i32, %c0_i32_0 : i32, i32
  }
  func.func @transform_18(%arg0: i32) -> (i32, i32) {
    %c0_i32 = arith.constant 0 : i32
    %c0_i32_0 = arith.constant 0 : i32
    %c0_i32_1 = arith.constant 0 : i32
    return %c0_i32, %c0_i32_0 : i32, i32
  }
  func.func @transform_19(%arg0: i32) -> (i32, i32) {
    %c0_i32 = arith.constant 0 : i32
    %c0_i32_0 = arith.constant 0 : i32
    %c0_i32_1 = arith.constant 0 : i32
    return %c0_i32, %c0_i32_0 : i32, i32
  }
  func.func @transform_20(%arg0: i32) -> (i32, i32) {
    %c0_i32 = arith.constant 0 : i32
    %c0_i32_0 = arith.constant 0 : i32
    %c0_i32_1 = arith.constant 0 : i32
    return %c0_i32, %c0_i32_0 : i32, i32
  }
  func.func @transform_21(%arg0: i32) -> (i32, i32) {
    %c0_i32 = arith.constant 0 : i32
    %c0_i32_0 = arith.constant 0 : i32
    %c0_i32_1 = arith.constant 0 : i32
    return %c0_i32, %c0_i32_0 : i32, i32
  }
  func.func @transform_22(%arg0: i32) -> (i32, i32) {
    %c0_i32 = arith.constant 0 : i32
    %c0_i32_0 = arith.constant 0 : i32
    %c0_i32_1 = arith.constant 0 : i32
    return %c0_i32, %c0_i32_0 : i32, i32
  }
  func.func @transform_23(%arg0: i32) -> (i32, i32) {
    %c0_i32 = arith.constant 0 : i32
    %c0_i32_0 = arith.constant 0 : i32
    %c0_i32_1 = arith.constant 0 : i32
    return %c0_i32, %c0_i32_0 : i32, i32
  }
  func.func @transform_24(%arg0: i32) -> (i32, i32) {
    %c0_i32 = arith.constant 0 : i32
    %c0_i32_0 = arith.constant 0 : i32
    %c0_i32_1 = arith.constant 0 : i32
    return %c0_i32, %c0_i32_0 : i32, i32
  }
  func.func @transform_25(%arg0: i32) -> (i32, i32) {
    %c0_i32 = arith.constant 0 : i32
    %c0_i32_0 = arith.constant 0 : i32
    %c0_i32_1 = arith.constant 0 : i32
    return %c0_i32, %c0_i32_0 : i32, i32
  }
  func.func @transform_26(%arg0: i32) -> (i32, i32) {
    %c0_i32 = arith.constant 0 : i32
    %c0_i32_0 = arith.constant 0 : i32
    %c0_i32_1 = arith.constant 0 : i32
    return %c0_i32, %c0_i32_0 : i32, i32
  }
  func.func @transform_27(%arg0: i32) -> (i32, i32) {
    %c0_i32 = arith.constant 0 : i32
    %c0_i32_0 = arith.constant 0 : i32
    %c0_i32_1 = arith.constant 0 : i32
    return %c0_i32, %c0_i32_0 : i32, i32
  }
  func.func @transform_28(%arg0: i32) -> (i32, i32) {
    %c0_i32 = arith.constant 0 : i32
    %c0_i32_0 = arith.constant 0 : i32
    %c0_i32_1 = arith.constant 0 : i32
    return %c0_i32, %c0_i32_0 : i32, i32
  }
  func.func @transform_29(%arg0: i32) -> (i32, i32) {
    %c0_i32 = arith.constant 0 : i32
    %c0_i32_0 = arith.constant 0 : i32
    %c0_i32_1 = arith.constant 0 : i32
    return %c0_i32, %c0_i32_0 : i32, i32
  }
  func.func @transform_30(%arg0: i32) -> (i32, i32) {
    %c0_i32 = arith.constant 0 : i32
    %c0_i32_0 = arith.constant 0 : i32
    %c0_i32_1 = arith.constant 0 : i32
    return %c0_i32, %c0_i32_0 : i32, i32
  }
  func.func @transform_31(%arg0: i32) -> (i32, i32) {
    %c0_i32 = arith.constant 0 : i32
    %c0_i32_0 = arith.constant 0 : i32
    %c0_i32_1 = arith.constant 0 : i32
    return %c0_i32, %c0_i32_0 : i32, i32
  }
  func.func @transform_32(%arg0: i32) -> (i32, i32) {
    %c0_i32 = arith.constant 0 : i32
    %c0_i32_0 = arith.constant 0 : i32
    %c0_i32_1 = arith.constant 0 : i32
    return %c0_i32, %c0_i32_0 : i32, i32
  }
  func.func @transform_33(%arg0: i32) -> (i32, i32) {
    %c0_i32 = arith.constant 0 : i32
    %c0_i32_0 = arith.constant 0 : i32
    %c0_i32_1 = arith.constant 0 : i32
    return %c0_i32, %c0_i32_0 : i32, i32
  }
  func.func @transform_34(%arg0: i32) -> (i32, i32) {
    %c0_i32 = arith.constant 0 : i32
    %c0_i32_0 = arith.constant 0 : i32
    %c0_i32_1 = arith.constant 0 : i32
    return %c0_i32, %c0_i32_0 : i32, i32
  }
  func.func @transform_35(%arg0: i32) -> (i32, i32) {
    %c0_i32 = arith.constant 0 : i32
    %c0_i32_0 = arith.constant 0 : i32
    %c0_i32_1 = arith.constant 0 : i32
    return %c0_i32, %c0_i32_0 : i32, i32
  }
  func.func @transform_36(%arg0: i32) -> (i32, i32) {
    %c0_i32 = arith.constant 0 : i32
    %c0_i32_0 = arith.constant 0 : i32
    %c0_i32_1 = arith.constant 0 : i32
    return %c0_i32, %c0_i32_0 : i32, i32
  }
  func.func @transform_37(%arg0: i32) -> (i32, i32) {
    %c0_i32 = arith.constant 0 : i32
    %c0_i32_0 = arith.constant 0 : i32
    %c0_i32_1 = arith.constant 0 : i32
    return %c0_i32, %c0_i32_0 : i32, i32
  }
  func.func @transform_38(%arg0: i32) -> (i32, i32) {
    %c0_i32 = arith.constant 0 : i32
    %c0_i32_0 = arith.constant 0 : i32
    %c0_i32_1 = arith.constant 0 : i32
    return %c0_i32, %c0_i32_0 : i32, i32
  }
  func.func @transform_39(%arg0: i32) -> (i32, i32, i32) {
    %c0_i32 = arith.constant 0 : i32
    %c0_i32_0 = arith.constant 0 : i32
    %c0_i32_1 = arith.constant 0 : i32
    return %arg0, %c0_i32, %c0_i32_0 : i32, i32, i32
  }
}

</mosaic_0001>

<llo_original>
// kernel: _lambda_.1
$region0: #{_lambda_.1}
  #allocation0 [shape = 'u32[]', space=smem, size = 0x4, offset = 0x4, fixed_abs, tag = 'smem constant byte address 0x4 - core index']
  #allocation1 [shape = 'u32[144,128]{1,0:T(1,128)}', space=vmem, size = 0x12000, scoped, tag = 'internal scratch']
  #allocation2 [shape = 'f32[1,1]{1,0:T(1,128)S(1)}', space=vmem, size = 0x200, scoped, tag = 'scoped memory for _lambda_.1']
  %s0 = inlined_call_operand.smem [shape: u32[40], index: -1, kind: input, shape index: {}]
  %s1 = sld [smem:[%s0]]
  %s2 = scalar_lea.smem %s0, 1
  %s3 = sld [smem:[%s2]]
  %s4 = scalar_lea.smem %s0, 2
  %s5 = sld [smem:[%s4]]
  %s6 = scalar_lea.smem %s0, 3
  %s7 = sld [smem:[%s6]]
  %s8 = scalar_lea.smem %s0, 4
  %s9 = sld [smem:[%s8]]
  %s10 = scalar_lea.smem %s0, 5
  %s11 = sld [smem:[%s10]]
  %s12 = scalar_lea.smem %s0, 6
  %s13 = sld [smem:[%s12]]
  %s14 = scalar_lea.smem %s0, 7
  %s15 = sld [smem:[%s14]]
  %s16 = scalar_lea.smem %s0, 8
  %s17 = sld [smem:[%s16]]
  %s18 = scalar_lea.smem %s0, 9
  %s19 = sld [smem:[%s18]]
  %s20 = scalar_lea.smem %s0, 10
  %s21 = sld [smem:[%s20]]
  %s22 = scalar_lea.smem %s0, 11
  %s23 = sld [smem:[%s22]]
  %s24 = scalar_lea.smem %s0, 12
  %s25 = sld [smem:[%s24]]
  %s26 = scalar_lea.smem %s0, 13
  %s27 = sld [smem:[%s26]]
  %s28 = scalar_lea.smem %s0, 14
  %s29 = sld [smem:[%s28]]
  %s30 = scalar_lea.smem %s0, 15
  %s31 = sld [smem:[%s30]]
  %s32 = scalar_lea.smem %s0, 16
  %s33 = sld [smem:[%s32]]
  %s34 = scalar_lea.smem %s0, 17
  %s35 = sld [smem:[%s34]]
  %s36 = scalar_lea.smem %s0, 18
  %s37 = sld [smem:[%s36]]
  %s38 = scalar_lea.smem %s0, 19
  %s39 = sld [smem:[%s38]]
  %s40 = scalar_lea.smem %s0, 20
  %s41 = sld [smem:[%s40]]
  %s42 = scalar_lea.smem %s0, 21
  %s43 = sld [smem:[%s42]]
  %s44 = scalar_lea.smem %s0, 22
  %s45 = sld [smem:[%s44]]
  %s46 = scalar_lea.smem %s0, 23
  %s47 = sld [smem:[%s46]]
  %s48 = scalar_lea.smem %s0, 24
  %s49 = sld [smem:[%s48]]
  %s50 = scalar_lea.smem %s0, 25
  %s51 = sld [smem:[%s50]]
  %s52 = scalar_lea.smem %s0, 26
  %s53 = sld [smem:[%s52]]
  %s54 = scalar_lea.smem %s0, 27
  %s55 = sld [smem:[%s54]]
  %s56 = scalar_lea.smem %s0, 28
  %s57 = sld [smem:[%s56]]
  %s58 = scalar_lea.smem %s0, 29
  %s59 = sld [smem:[%s58]]
  %s60 = scalar_lea.smem %s0, 30
  %s61 = sld [smem:[%s60]]
  %s62 = scalar_lea.smem %s0, 31
  %s63 = sld [smem:[%s62]]
  %s64 = scalar_lea.smem %s0, 32
  %s65 = sld [smem:[%s64]]
  %s66 = scalar_lea.smem %s0, 33
  %s67 = sld [smem:[%s66]]
  %s68 = scalar_lea.smem %s0, 34
  %s69 = sld [smem:[%s68]]
  %s70 = scalar_lea.smem %s0, 35
  %s71 = sld [smem:[%s70]]
  %s72 = scalar_lea.smem %s0, 36
  %s73 = sld [smem:[%s72]]
  %s74 = scalar_lea.smem %s0, 37
  %s75 = sld [smem:[%s74]]
  %s76 = scalar_lea.smem %s0, 38
  %s77 = sld [smem:[%s76]]
  %s78 = scalar_lea.smem %s0, 39
  %s79 = sld [smem:[%s78]]
  %s80 = sld [smem:[#allocation0]]
  $region189: #{_lambda_.1} parent=0
    _
  %s82 = ssub.s32 1, %s80
  %s83 = scalar_select 0, %s82, %s80
  %v84 = vstv %s77
  %85 = vst [vmem:[#allocation2] sm:$0x1] %v84
  loop: start=0, step=1, limit=4
  $region2: #{_lambda_.1} parent=0 // loop_pre_header
    _
  $region3: #{_lambda_.1} parent=0 // loop_header
    %s87 = sphi 0, %s91
    %p88 = scmp.ge.s32.totalorder %s87, 4
    %s97 = sphi 0, %s99
    %s100 = sphi 0, %s97
    %s101 = sphi 0, %s100
    %s117 = sphi 0, %s101
    %s121 = sphi 0, %s121
    %s123 = sphi 0, %s121
    %s124 = sphi 0, %s123
    %s138 = sphi 0, %s124
    %s142 = sphi 0, %s142
    %s144 = sphi 0, %s142
    %s145 = sphi 0, %s144
    %s159 = sphi 0, %s145
    %s163 = sphi 0, %s163
    %s165 = sphi 0, %s163
    %s166 = sphi 0, %s165
    %s180 = sphi 0, %s166
    %s184 = sphi 0, %s184
    %s186 = sphi 0, %s184
    %s187 = sphi 0, %s186
    %s201 = sphi 0, %s187
    %s205 = sphi 0, %s205
    %s207 = sphi 0, %s205
    %s208 = sphi 0, %s207
    %s222 = sphi 0, %s208
    %s226 = sphi 0, %s226
    %s228 = sphi 0, %s226
    %s229 = sphi 0, %s228
    %s243 = sphi 0, %s229
    %s247 = sphi 0, %s247
    %s249 = sphi 0, %s247
    %s250 = sphi 0, %s249
    %s264 = sphi 0, %s250
    %s268 = sphi 0, %s268
    %s270 = sphi 0, %s268
    %s271 = sphi 0, %s270
    %s285 = sphi 0, %s271
    %s289 = sphi 0, %s289
    %s291 = sphi 0, %s289
    %s292 = sphi 0, %s291
    %s306 = sphi 0, %s292
    %s310 = sphi 0, %s310
    %s312 = sphi 0, %s310
    %s313 = sphi 0, %s312
    %s327 = sphi 0, %s313
    %s331 = sphi 0, %s331
    %s333 = sphi 0, %s331
    %s334 = sphi 0, %s333
    %s348 = sphi 0, %s334
    %s352 = sphi 0, %s352
    %s354 = sphi 0, %s352
    %s355 = sphi 0, %s354
    %s369 = sphi 0, %s355
    %s373 = sphi 0, %s373
    %s375 = sphi 0, %s373
    %s376 = sphi 0, %s375
    %s390 = sphi 0, %s376
    %s394 = sphi 0, %s394
    %s396 = sphi 0, %s394
    %s397 = sphi 0, %s396
    %s411 = sphi 0, %s397
    %s415 = sphi 0, %s415
    %s417 = sphi 0, %s415
    %s418 = sphi 0, %s417
    %s432 = sphi 0, %s418
    %s436 = sphi 0, %s436
    %s438 = sphi 0, %s436
    %s439 = sphi 0, %s438
    %s453 = sphi 0, %s439
    %s457 = sphi 0, %s457
    %s459 = sphi 0, %s457
    %s460 = sphi 0, %s459
    %s474 = sphi 0, %s460
    %s478 = sphi 0, %s478
    %s480 = sphi 0, %s478
    %s481 = sphi 0, %s480
    %s495 = sphi 0, %s481
    %s499 = sphi 0, %s499
    %s501 = sphi 0, %s499
    %s502 = sphi 0, %s501
    %s516 = sphi 0, %s502
    %s520 = sphi 0, %s520
    %s522 = sphi 0, %s520
    %s523 = sphi 0, %s522
    %s537 = sphi 0, %s523
    %s541 = sphi 0, %s541
    %s543 = sphi 0, %s541
    %s544 = sphi 0, %s543
    %s558 = sphi 0, %s544
    %s562 = sphi 0, %s562
    %s564 = sphi 0, %s562
    %s565 = sphi 0, %s564
    %s579 = sphi 0, %s565
    %s583 = sphi 0, %s583
    %s585 = sphi 0, %s583
    %s586 = sphi 0, %s585
    %s600 = sphi 0, %s586
    %s604 = sphi 0, %s604
    %s606 = sphi 0, %s604
    %s607 = sphi 0, %s606
    %s621 = sphi 0, %s607
    %s625 = sphi 0, %s625
    %s627 = sphi 0, %s625
    %s628 = sphi 0, %s627
    %s642 = sphi 0, %s628
    %s646 = sphi 0, %s646
    %s648 = sphi 0, %s646
    %s649 = sphi 0, %s648
    %s663 = sphi 0, %s649
    %s667 = sphi 0, %s667
    %s669 = sphi 0, %s667
    %s670 = sphi 0, %s669
    %s684 = sphi 0, %s670
    %s688 = sphi 0, %s688
    %s690 = sphi 0, %s688
    %s691 = sphi 0, %s690
    %s705 = sphi 0, %s691
    %s709 = sphi 0, %s709
    %s711 = sphi 0, %s709
    %s712 = sphi 0, %s711
    %s726 = sphi 0, %s712
    %s730 = sphi 0, %s730
    %s732 = sphi 0, %s730
    %s733 = sphi 0, %s732
    %s747 = sphi 0, %s733
    %s751 = sphi 0, %s751
    %s753 = sphi 0, %s751
    %s754 = sphi 0, %s753
    %s768 = sphi 0, %s754
    %s772 = sphi 0, %s772
    %s774 = sphi 0, %s772
    %s775 = sphi 0, %s774
    %s789 = sphi 0, %s775
    %s793 = sphi 0, %s793
    %s795 = sphi 0, %s793
    %s796 = sphi 0, %s795
    %s810 = sphi 0, %s796
    %s814 = sphi 0, %s814
    %s816 = sphi 0, %s814
    %s817 = sphi 0, %s816
    %s831 = sphi 0, %s817
    %s835 = sphi 0, %s835
    %s837 = sphi 0, %s835
    %s838 = sphi 0, %s837
    %s852 = sphi 0, %s838
    %s856 = sphi 0, %s856
    %s858 = sphi 0, %s856
    %s859 = sphi 0, %s858
    %s873 = sphi 0, %s859
    %s877 = sphi 0, %s877
    %s879 = sphi 0, %s877
    %s880 = sphi 0, %s879
    %s894 = sphi 0, %s880
    %s898 = sphi 0, %s898
    %s900 = sphi 0, %s898
    %s901 = sphi 0, %s900
    %s915 = sphi 0, %s901
    %s921 = sphi 0, %s923
    %s924 = sphi 0, %s921
    %s925 = sphi 0, %s924
    %s941 = sphi 0, %s925
  $region4: #{_lambda_.1} parent=0 // loop_header_branch
    %90 = sbr.rel (%p88) target = $region8
  $region5: #{_lambda_.1} parent=0 // loop_body
    %s92 = ssub.s32 %s87, 1
    %s93 = ssub.s32 %s87, 2
    %s94 = sadd.s32 %s87, 1
    %s95 = ssub.s32 %s87, %s94
    %p96 = scmp.eq.s32.totalorder %s95, 0
    %s98 = sadd.s32 %s97, 1
    %s99 = scalar_select %p96, %s97, %s98
    %p102 = pneg %p96
    %p103 = scmp.eq.s32.totalorder %s87, 1
    %p104 = por %p102, %p103
    %p105 = scmp.ne.s32.totalorder %s97, %s100
    %p106 = scmp.eq.s32.totalorder %s87, 0
    %p107 = por %p105, %p106
    %p108 = scmp.ne.s32.totalorder %s97, %s100
    %p109 = scmp.eq.s32.totalorder %s92, 1
    %p110 = por %p108, %p109
    %p111 = scmp.ne.s32.totalorder %s100, %s101
    %p112 = scmp.eq.s32.totalorder %s92, 0
    %p113 = por %p111, %p112
    %p114 = scmp.ne.s32.totalorder %s100, %s101
    %p115 = scmp.eq.s32.totalorder %s93, 1
    %p116 = por %p114, %p115
    %p118 = scmp.ne.s32.totalorder %s101, %s117
    %p119 = scmp.eq.s32.totalorder %s93, 0
    %p120 = por %p118, %p119
    %s122 = sadd.s32 %s121, 1
    %p125 = scmp.eq.s32.totalorder %s87, 1
    %p126 = scmp.ne.s32.totalorder %s121, %s123
    %p127 = scmp.eq.s32.totalorder %s87, 0
    %p128 = por %p126, %p127
    %p129 = scmp.ne.s32.totalorder %s121, %s123
    %p130 = scmp.eq.s32.totalorder %s92, 1
    %p131 = por %p129, %p130
    %p132 = scmp.ne.s32.totalorder %s123, %s124
    %p133 = scmp.eq.s32.totalorder %s92, 0
    %p134 = por %p132, %p133
    %p135 = scmp.ne.s32.totalorder %s123, %s124
    %p136 = scmp.eq.s32.totalorder %s93, 1
    %p137 = por %p135, %p136
    %p139 = scmp.ne.s32.totalorder %s124, %s138
    %p140 = scmp.eq.s32.totalorder %s93, 0
    %p141 = por %p139, %p140
    %s143 = sadd.s32 %s142, 1
    %p146 = scmp.eq.s32.totalorder %s87, 1
    %p147 = scmp.ne.s32.totalorder %s142, %s144
    %p148 = scmp.eq.s32.totalorder %s87, 0
    %p149 = por %p147, %p148
    %p150 = scmp.ne.s32.totalorder %s142, %s144
    %p151 = scmp.eq.s32.totalorder %s92, 1
    %p152 = por %p150, %p151
    %p153 = scmp.ne.s32.totalorder %s144, %s145
    %p154 = scmp.eq.s32.totalorder %s92, 0
    %p155 = por %p153, %p154
    %p156 = scmp.ne.s32.totalorder %s144, %s145
    %p157 = scmp.eq.s32.totalorder %s93, 1
    %p158 = por %p156, %p157
    %p160 = scmp.ne.s32.totalorder %s145, %s159
    %p161 = scmp.eq.s32.totalorder %s93, 0
    %p162 = por %p160, %p161
    %s164 = sadd.s32 %s163, 1
    %p167 = scmp.eq.s32.totalorder %s87, 1
    %p168 = scmp.ne.s32.totalorder %s163, %s165
    %p169 = scmp.eq.s32.totalorder %s87, 0
    %p170 = por %p168, %p169
    %p171 = scmp.ne.s32.totalorder %s163, %s165
    %p172 = scmp.eq.s32.totalorder %s92, 1
    %p173 = por %p171, %p172
    %p174 = scmp.ne.s32.totalorder %s165, %s166
    %p175 = scmp.eq.s32.totalorder %s92, 0
    %p176 = por %p174, %p175
    %p177 = scmp.ne.s32.totalorder %s165, %s166
    %p178 = scmp.eq.s32.totalorder %s93, 1
    %p179 = por %p177, %p178
    %p181 = scmp.ne.s32.totalorder %s166, %s180
    %p182 = scmp.eq.s32.totalorder %s93, 0
    %p183 = por %p181, %p182
    %s185 = sadd.s32 %s184, 1
    %p188 = scmp.eq.s32.totalorder %s87, 1
    %p189 = scmp.ne.s32.totalorder %s184, %s186
    %p190 = scmp.eq.s32.totalorder %s87, 0
    %p191 = por %p189, %p190
    %p192 = scmp.ne.s32.totalorder %s184, %s186
    %p193 = scmp.eq.s32.totalorder %s92, 1
    %p194 = por %p192, %p193
    %p195 = scmp.ne.s32.totalorder %s186, %s187
    %p196 = scmp.eq.s32.totalorder %s92, 0
    %p197 = por %p195, %p196
    %p198 = scmp.ne.s32.totalorder %s186, %s187
    %p199 = scmp.eq.s32.totalorder %s93, 1
    %p200 = por %p198, %p199
    %p202 = scmp.ne.s32.totalorder %s187, %s201
    %p203 = scmp.eq.s32.totalorder %s93, 0
    %p204 = por %p202, %p203
    %s206 = sadd.s32 %s205, 1
    %p209 = scmp.eq.s32.totalorder %s87, 1
    %p210 = scmp.ne.s32.totalorder %s205, %s207
    %p211 = scmp.eq.s32.totalorder %s87, 0
    %p212 = por %p210, %p211
    %p213 = scmp.ne.s32.totalorder %s205, %s207
    %p214 = scmp.eq.s32.totalorder %s92, 1
    %p215 = por %p213, %p214
    %p216 = scmp.ne.s32.totalorder %s207, %s208
    %p217 = scmp.eq.s32.totalorder %s92, 0
    %p218 = por %p216, %p217
    %p219 = scmp.ne.s32.totalorder %s207, %s208
    %p220 = scmp.eq.s32.totalorder %s93, 1
    %p221 = por %p219, %p220
    %p223 = scmp.ne.s32.totalorder %s208, %s222
    %p224 = scmp.eq.s32.totalorder %s93, 0
    %p225 = por %p223, %p224
    %s227 = sadd.s32 %s226, 1
    %p230 = scmp.eq.s32.totalorder %s87, 1
    %p231 = scmp.ne.s32.totalorder %s226, %s228
    %p232 = scmp.eq.s32.totalorder %s87, 0
    %p233 = por %p231, %p232
    %p234 = scmp.ne.s32.totalorder %s226, %s228
    %p235 = scmp.eq.s32.totalorder %s92, 1
    %p236 = por %p234, %p235
    %p237 = scmp.ne.s32.totalorder %s228, %s229
    %p238 = scmp.eq.s32.totalorder %s92, 0
    %p239 = por %p237, %p238
    %p240 = scmp.ne.s32.totalorder %s228, %s229
    %p241 = scmp.eq.s32.totalorder %s93, 1
    %p242 = por %p240, %p241
    %p244 = scmp.ne.s32.totalorder %s229, %s243
    %p245 = scmp.eq.s32.totalorder %s93, 0
    %p246 = por %p244, %p245
    %s248 = sadd.s32 %s247, 1
    %p251 = scmp.eq.s32.totalorder %s87, 1
    %p252 = scmp.ne.s32.totalorder %s247, %s249
    %p253 = scmp.eq.s32.totalorder %s87, 0
    %p254 = por %p252, %p253
    %p255 = scmp.ne.s32.totalorder %s247, %s249
    %p256 = scmp.eq.s32.totalorder %s92, 1
    %p257 = por %p255, %p256
    %p258 = scmp.ne.s32.totalorder %s249, %s250
    %p259 = scmp.eq.s32.totalorder %s92, 0
    %p260 = por %p258, %p259
    %p261 = scmp.ne.s32.totalorder %s249, %s250
    %p262 = scmp.eq.s32.totalorder %s93, 1
    %p263 = por %p261, %p262
    %p265 = scmp.ne.s32.totalorder %s250, %s264
    %p266 = scmp.eq.s32.totalorder %s93, 0
    %p267 = por %p265, %p266
    %s269 = sadd.s32 %s268, 1
    %p272 = scmp.eq.s32.totalorder %s87, 1
    %p273 = scmp.ne.s32.totalorder %s268, %s270
    %p274 = scmp.eq.s32.totalorder %s87, 0
    %p275 = por %p273, %p274
    %p276 = scmp.ne.s32.totalorder %s268, %s270
    %p277 = scmp.eq.s32.totalorder %s92, 1
    %p278 = por %p276, %p277
    %p279 = scmp.ne.s32.totalorder %s270, %s271
    %p280 = scmp.eq.s32.totalorder %s92, 0
    %p281 = por %p279, %p280
    %p282 = scmp.ne.s32.totalorder %s270, %s271
    %p283 = scmp.eq.s32.totalorder %s93, 1
    %p284 = por %p282, %p283
    %p286 = scmp.ne.s32.totalorder %s271, %s285
    %p287 = scmp.eq.s32.totalorder %s93, 0
    %p288 = por %p286, %p287
    %s290 = sadd.s32 %s289, 1
    %p293 = scmp.eq.s32.totalorder %s87, 1
    %p294 = scmp.ne.s32.totalorder %s289, %s291
    %p295 = scmp.eq.s32.totalorder %s87, 0
    %p296 = por %p294, %p295
    %p297 = scmp.ne.s32.totalorder %s289, %s291
    %p298 = scmp.eq.s32.totalorder %s92, 1
    %p299 = por %p297, %p298
    %p300 = scmp.ne.s32.totalorder %s291, %s292
    %p301 = scmp.eq.s32.totalorder %s92, 0
    %p302 = por %p300, %p301
    %p303 = scmp.ne.s32.totalorder %s291, %s292
    %p304 = scmp.eq.s32.totalorder %s93, 1
    %p305 = por %p303, %p304
    %p307 = scmp.ne.s32.totalorder %s292, %s306
    %p308 = scmp.eq.s32.totalorder %s93, 0
    %p309 = por %p307, %p308
    %s311 = sadd.s32 %s310, 1
    %p314 = scmp.eq.s32.totalorder %s87, 1
    %p315 = scmp.ne.s32.totalorder %s310, %s312
    %p316 = scmp.eq.s32.totalorder %s87, 0
    %p317 = por %p315, %p316
    %p318 = scmp.ne.s32.totalorder %s310, %s312
    %p319 = scmp.eq.s32.totalorder %s92, 1
    %p320 = por %p318, %p319
    %p321 = scmp.ne.s32.totalorder %s312, %s313
    %p322 = scmp.eq.s32.totalorder %s92, 0
    %p323 = por %p321, %p322
    %p324 = scmp.ne.s32.totalorder %s312, %s313
    %p325 = scmp.eq.s32.totalorder %s93, 1
    %p326 = por %p324, %p325
    %p328 = scmp.ne.s32.totalorder %s313, %s327
    %p329 = scmp.eq.s32.totalorder %s93, 0
    %p330 = por %p328, %p329
    %s332 = sadd.s32 %s331, 1
    %p335 = scmp.eq.s32.totalorder %s87, 1
    %p336 = scmp.ne.s32.totalorder %s331, %s333
    %p337 = scmp.eq.s32.totalorder %s87, 0
    %p338 = por %p336, %p337
    %p339 = scmp.ne.s32.totalorder %s331, %s333
    %p340 = scmp.eq.s32.totalorder %s92, 1
    %p341 = por %p339, %p340
    %p342 = scmp.ne.s32.totalorder %s333, %s334
    %p343 = scmp.eq.s32.totalorder %s92, 0
    %p344 = por %p342, %p343
    %p345 = scmp.ne.s32.totalorder %s333, %s334
    %p346 = scmp.eq.s32.totalorder %s93, 1
    %p347 = por %p345, %p346
    %p349 = scmp.ne.s32.totalorder %s334, %s348
    %p350 = scmp.eq.s32.totalorder %s93, 0
    %p351 = por %p349, %p350
    %s353 = sadd.s32 %s352, 1
    %p356 = scmp.eq.s32.totalorder %s87, 1
    %p357 = scmp.ne.s32.totalorder %s352, %s354
    %p358 = scmp.eq.s32.totalorder %s87, 0
    %p359 = por %p357, %p358
    %p360 = scmp.ne.s32.totalorder %s352, %s354
    %p361 = scmp.eq.s32.totalorder %s92, 1
    %p362 = por %p360, %p361
    %p363 = scmp.ne.s32.totalorder %s354, %s355
    %p364 = scmp.eq.s32.totalorder %s92, 0
    %p365 = por %p363, %p364
    %p366 = scmp.ne.s32.totalorder %s354, %s355
    %p367 = scmp.eq.s32.totalorder %s93, 1
    %p368 = por %p366, %p367
    %p370 = scmp.ne.s32.totalorder %s355, %s369
    %p371 = scmp.eq.s32.totalorder %s93, 0
    %p372 = por %p370, %p371
    %s374 = sadd.s32 %s373, 1
    %p377 = scmp.eq.s32.totalorder %s87, 1
    %p378 = scmp.ne.s32.totalorder %s373, %s375
    %p379 = scmp.eq.s32.totalorder %s87, 0
    %p380 = por %p378, %p379
    %p381 = scmp.ne.s32.totalorder %s373, %s375
    %p382 = scmp.eq.s32.totalorder %s92, 1
    %p383 = por %p381, %p382
    %p384 = scmp.ne.s32.totalorder %s375, %s376
    %p385 = scmp.eq.s32.totalorder %s92, 0
    %p386 = por %p384, %p385
    %p387 = scmp.ne.s32.totalorder %s375, %s376
    %p388 = scmp.eq.s32.totalorder %s93, 1
    %p389 = por %p387, %p388
    %p391 = scmp.ne.s32.totalorder %s376, %s390
    %p392 = scmp.eq.s32.totalorder %s93, 0
    %p393 = por %p391, %p392
    %s395 = sadd.s32 %s394, 1
    %p398 = scmp.eq.s32.totalorder %s87, 1
    %p399 = scmp.ne.s32.totalorder %s394, %s396
    %p400 = scmp.eq.s32.totalorder %s87, 0
    %p401 = por %p399, %p400
    %p402 = scmp.ne.s32.totalorder %s394, %s396
    %p403 = scmp.eq.s32.totalorder %s92, 1
    %p404 = por %p402, %p403
    %p405 = scmp.ne.s32.totalorder %s396, %s397
    %p406 = scmp.eq.s32.totalorder %s92, 0
    %p407 = por %p405, %p406
    %p408 = scmp.ne.s32.totalorder %s396, %s397
    %p409 = scmp.eq.s32.totalorder %s93, 1
    %p410 = por %p408, %p409
    %p412 = scmp.ne.s32.totalorder %s397, %s411
    %p413 = scmp.eq.s32.totalorder %s93, 0
    %p414 = por %p412, %p413
    %s416 = sadd.s32 %s415, 1
    %p419 = scmp.eq.s32.totalorder %s87, 1
    %p420 = scmp.ne.s32.totalorder %s415, %s417
    %p421 = scmp.eq.s32.totalorder %s87, 0
    %p422 = por %p420, %p421
    %p423 = scmp.ne.s32.totalorder %s415, %s417
    %p424 = scmp.eq.s32.totalorder %s92, 1
    %p425 = por %p423, %p424
    %p426 = scmp.ne.s32.totalorder %s417, %s418
    %p427 = scmp.eq.s32.totalorder %s92, 0
    %p428 = por %p426, %p427
    %p429 = scmp.ne.s32.totalorder %s417, %s418
    %p430 = scmp.eq.s32.totalorder %s93, 1
    %p431 = por %p429, %p430
    %p433 = scmp.ne.s32.totalorder %s418, %s432
    %p434 = scmp.eq.s32.totalorder %s93, 0
    %p435 = por %p433, %p434
    %s437 = sadd.s32 %s436, 1
    %p440 = scmp.eq.s32.totalorder %s87, 1
    %p441 = scmp.ne.s32.totalorder %s436, %s438
    %p442 = scmp.eq.s32.totalorder %s87, 0
    %p443 = por %p441, %p442
    %p444 = scmp.ne.s32.totalorder %s436, %s438
    %p445 = scmp.eq.s32.totalorder %s92, 1
    %p446 = por %p444, %p445
    %p447 = scmp.ne.s32.totalorder %s438, %s439
    %p448 = scmp.eq.s32.totalorder %s92, 0
    %p449 = por %p447, %p448
    %p450 = scmp.ne.s32.totalorder %s438, %s439
    %p451 = scmp.eq.s32.totalorder %s93, 1
    %p452 = por %p450, %p451
    %p454 = scmp.ne.s32.totalorder %s439, %s453
    %p455 = scmp.eq.s32.totalorder %s93, 0
    %p456 = por %p454, %p455
    %s458 = sadd.s32 %s457, 1
    %p461 = scmp.eq.s32.totalorder %s87, 1
    %p462 = scmp.ne.s32.totalorder %s457, %s459
    %p463 = scmp.eq.s32.totalorder %s87, 0
    %p464 = por %p462, %p463
    %p465 = scmp.ne.s32.totalorder %s457, %s459
    %p466 = scmp.eq.s32.totalorder %s92, 1
    %p467 = por %p465, %p466
    %p468 = scmp.ne.s32.totalorder %s459, %s460
    %p469 = scmp.eq.s32.totalorder %s92, 0
    %p470 = por %p468, %p469
    %p471 = scmp.ne.s32.totalorder %s459, %s460
    %p472 = scmp.eq.s32.totalorder %s93, 1
    %p473 = por %p471, %p472
    %p475 = scmp.ne.s32.totalorder %s460, %s474
    %p476 = scmp.eq.s32.totalorder %s93, 0
    %p477 = por %p475, %p476
    %s479 = sadd.s32 %s478, 1
    %p482 = scmp.eq.s32.totalorder %s87, 1
    %p483 = scmp.ne.s32.totalorder %s478, %s480
    %p484 = scmp.eq.s32.totalorder %s87, 0
    %p485 = por %p483, %p484
    %p486 = scmp.ne.s32.totalorder %s478, %s480
    %p487 = scmp.eq.s32.totalorder %s92, 1
    %p488 = por %p486, %p487
    %p489 = scmp.ne.s32.totalorder %s480, %s481
    %p490 = scmp.eq.s32.totalorder %s92, 0
    %p491 = por %p489, %p490
    %p492 = scmp.ne.s32.totalorder %s480, %s481
    %p493 = scmp.eq.s32.totalorder %s93, 1
    %p494 = por %p492, %p493
    %p496 = scmp.ne.s32.totalorder %s481, %s495
    %p497 = scmp.eq.s32.totalorder %s93, 0
    %p498 = por %p496, %p497
    %s500 = sadd.s32 %s499, 1
    %p503 = scmp.eq.s32.totalorder %s87, 1
    %p504 = scmp.ne.s32.totalorder %s499, %s501
    %p505 = scmp.eq.s32.totalorder %s87, 0
    %p506 = por %p504, %p505
    %p507 = scmp.ne.s32.totalorder %s499, %s501
    %p508 = scmp.eq.s32.totalorder %s92, 1
    %p509 = por %p507, %p508
    %p510 = scmp.ne.s32.totalorder %s501, %s502
    %p511 = scmp.eq.s32.totalorder %s92, 0
    %p512 = por %p510, %p511
    %p513 = scmp.ne.s32.totalorder %s501, %s502
    %p514 = scmp.eq.s32.totalorder %s93, 1
    %p515 = por %p513, %p514
    %p517 = scmp.ne.s32.totalorder %s502, %s516
    %p518 = scmp.eq.s32.totalorder %s93, 0
    %p519 = por %p517, %p518
    %s521 = sadd.s32 %s520, 1
    %p524 = scmp.eq.s32.totalorder %s87, 1
    %p525 = scmp.ne.s32.totalorder %s520, %s522
    %p526 = scmp.eq.s32.totalorder %s87, 0
    %p527 = por %p525, %p526
    %p528 = scmp.ne.s32.totalorder %s520, %s522
    %p529 = scmp.eq.s32.totalorder %s92, 1
    %p530 = por %p528, %p529
    %p531 = scmp.ne.s32.totalorder %s522, %s523
    %p532 = scmp.eq.s32.totalorder %s92, 0
    %p533 = por %p531, %p532
    %p534 = scmp.ne.s32.totalorder %s522, %s523
    %p535 = scmp.eq.s32.totalorder %s93, 1
    %p536 = por %p534, %p535
    %p538 = scmp.ne.s32.totalorder %s523, %s537
    %p539 = scmp.eq.s32.totalorder %s93, 0
    %p540 = por %p538, %p539
    %s542 = sadd.s32 %s541, 1
    %p545 = scmp.eq.s32.totalorder %s87, 1
    %p546 = scmp.ne.s32.totalorder %s541, %s543
    %p547 = scmp.eq.s32.totalorder %s87, 0
    %p548 = por %p546, %p547
    %p549 = scmp.ne.s32.totalorder %s541, %s543
    %p550 = scmp.eq.s32.totalorder %s92, 1
    %p551 = por %p549, %p550
    %p552 = scmp.ne.s32.totalorder %s543, %s544
    %p553 = scmp.eq.s32.totalorder %s92, 0
    %p554 = por %p552, %p553
    %p555 = scmp.ne.s32.totalorder %s543, %s544
    %p556 = scmp.eq.s32.totalorder %s93, 1
    %p557 = por %p555, %p556
    %p559 = scmp.ne.s32.totalorder %s544, %s558
    %p560 = scmp.eq.s32.totalorder %s93, 0
    %p561 = por %p559, %p560
    %s563 = sadd.s32 %s562, 1
    %p566 = scmp.eq.s32.totalorder %s87, 1
    %p567 = scmp.ne.s32.totalorder %s562, %s564
    %p568 = scmp.eq.s32.totalorder %s87, 0
    %p569 = por %p567, %p568
    %p570 = scmp.ne.s32.totalorder %s562, %s564
    %p571 = scmp.eq.s32.totalorder %s92, 1
    %p572 = por %p570, %p571
    %p573 = scmp.ne.s32.totalorder %s564, %s565
    %p574 = scmp.eq.s32.totalorder %s92, 0
    %p575 = por %p573, %p574
    %p576 = scmp.ne.s32.totalorder %s564, %s565
    %p577 = scmp.eq.s32.totalorder %s93, 1
    %p578 = por %p576, %p577
    %p580 = scmp.ne.s32.totalorder %s565, %s579
    %p581 = scmp.eq.s32.totalorder %s93, 0
    %p582 = por %p580, %p581
    %s584 = sadd.s32 %s583, 1
    %p587 = scmp.eq.s32.totalorder %s87, 1
    %p588 = scmp.ne.s32.totalorder %s583, %s585
    %p589 = scmp.eq.s32.totalorder %s87, 0
    %p590 = por %p588, %p589
    %p591 = scmp.ne.s32.totalorder %s583, %s585
    %p592 = scmp.eq.s32.totalorder %s92, 1
    %p593 = por %p591, %p592
    %p594 = scmp.ne.s32.totalorder %s585, %s586
    %p595 = scmp.eq.s32.totalorder %s92, 0
    %p596 = por %p594, %p595
    %p597 = scmp.ne.s32.totalorder %s585, %s586
    %p598 = scmp.eq.s32.totalorder %s93, 1
    %p599 = por %p597, %p598
    %p601 = scmp.ne.s32.totalorder %s586, %s600
    %p602 = scmp.eq.s32.totalorder %s93, 0
    %p603 = por %p601, %p602
    %s605 = sadd.s32 %s604, 1
    %p608 = scmp.eq.s32.totalorder %s87, 1
    %p609 = scmp.ne.s32.totalorder %s604, %s606
    %p610 = scmp.eq.s32.totalorder %s87, 0
    %p611 = por %p609, %p610
    %p612 = scmp.ne.s32.totalorder %s604, %s606
    %p613 = scmp.eq.s32.totalorder %s92, 1
    %p614 = por %p612, %p613
    %p615 = scmp.ne.s32.totalorder %s606, %s607
    %p616 = scmp.eq.s32.totalorder %s92, 0
    %p617 = por %p615, %p616
    %p618 = scmp.ne.s32.totalorder %s606, %s607
    %p619 = scmp.eq.s32.totalorder %s93, 1
    %p620 = por %p618, %p619
    %p622 = scmp.ne.s32.totalorder %s607, %s621
    %p623 = scmp.eq.s32.totalorder %s93, 0
    %p624 = por %p622, %p623
    %s626 = sadd.s32 %s625, 1
    %p629 = scmp.eq.s32.totalorder %s87, 1
    %p630 = scmp.ne.s32.totalorder %s625, %s627
    %p631 = scmp.eq.s32.totalorder %s87, 0
    %p632 = por %p630, %p631
    %p633 = scmp.ne.s32.totalorder %s625, %s627
    %p634 = scmp.eq.s32.totalorder %s92, 1
    %p635 = por %p633, %p634
    %p636 = scmp.ne.s32.totalorder %s627, %s628
    %p637 = scmp.eq.s32.totalorder %s92, 0
    %p638 = por %p636, %p637
    %p639 = scmp.ne.s32.totalorder %s627, %s628
    %p640 = scmp.eq.s32.totalorder %s93, 1
    %p641 = por %p639, %p640
    %p643 = scmp.ne.s32.totalorder %s628, %s642
    %p644 = scmp.eq.s32.totalorder %s93, 0
    %p645 = por %p643, %p644
    %s647 = sadd.s32 %s646, 1
    %p650 = scmp.eq.s32.totalorder %s87, 1
    %p651 = scmp.ne.s32.totalorder %s646, %s648
    %p652 = scmp.eq.s32.totalorder %s87, 0
    %p653 = por %p651, %p652
    %p654 = scmp.ne.s32.totalorder %s646, %s648
    %p655 = scmp.eq.s32.totalorder %s92, 1
    %p656 = por %p654, %p655
    %p657 = scmp.ne.s32.totalorder %s648, %s649
    %p658 = scmp.eq.s32.totalorder %s92, 0
    %p659 = por %p657, %p658
    %p660 = scmp.ne.s32.totalorder %s648, %s649
    %p661 = scmp.eq.s32.totalorder %s93, 1
    %p662 = por %p660, %p661
    %p664 = scmp.ne.s32.totalorder %s649, %s663
    %p665 = scmp.eq.s32.totalorder %s93, 0
    %p666 = por %p664, %p665
    %s668 = sadd.s32 %s667, 1
    %p671 = scmp.eq.s32.totalorder %s87, 1
    %p672 = scmp.ne.s32.totalorder %s667, %s669
    %p673 = scmp.eq.s32.totalorder %s87, 0
    %p674 = por %p672, %p673
    %p675 = scmp.ne.s32.totalorder %s667, %s669
    %p676 = scmp.eq.s32.totalorder %s92, 1
    %p677 = por %p675, %p676
    %p678 = scmp.ne.s32.totalorder %s669, %s670
    %p679 = scmp.eq.s32.totalorder %s92, 0
    %p680 = por %p678, %p679
    %p681 = scmp.ne.s32.totalorder %s669, %s670
    %p682 = scmp.eq.s32.totalorder %s93, 1
    %p683 = por %p681, %p682
    %p685 = scmp.ne.s32.totalorder %s670, %s684
    %p686 = scmp.eq.s32.totalorder %s93, 0
    %p687 = por %p685, %p686
    %s689 = sadd.s32 %s688, 1
    %p692 = scmp.eq.s32.totalorder %s87, 1
    %p693 = scmp.ne.s32.totalorder %s688, %s690
    %p694 = scmp.eq.s32.totalorder %s87, 0
    %p695 = por %p693, %p694
    %p696 = scmp.ne.s32.totalorder %s688, %s690
    %p697 = scmp.eq.s32.totalorder %s92, 1
    %p698 = por %p696, %p697
    %p699 = scmp.ne.s32.totalorder %s690, %s691
    %p700 = scmp.eq.s32.totalorder %s92, 0
    %p701 = por %p699, %p700
    %p702 = scmp.ne.s32.totalorder %s690, %s691
    %p703 = scmp.eq.s32.totalorder %s93, 1
    %p704 = por %p702, %p703
    %p706 = scmp.ne.s32.totalorder %s691, %s705
    %p707 = scmp.eq.s32.totalorder %s93, 0
    %p708 = por %p706, %p707
    %s710 = sadd.s32 %s709, 1
    %p713 = scmp.eq.s32.totalorder %s87, 1
    %p714 = scmp.ne.s32.totalorder %s709, %s711
    %p715 = scmp.eq.s32.totalorder %s87, 0
    %p716 = por %p714, %p715
    %p717 = scmp.ne.s32.totalorder %s709, %s711
    %p718 = scmp.eq.s32.totalorder %s92, 1
    %p719 = por %p717, %p718
    %p720 = scmp.ne.s32.totalorder %s711, %s712
    %p721 = scmp.eq.s32.totalorder %s92, 0
    %p722 = por %p720, %p721
    %p723 = scmp.ne.s32.totalorder %s711, %s712
    %p724 = scmp.eq.s32.totalorder %s93, 1
    %p725 = por %p723, %p724
    %p727 = scmp.ne.s32.totalorder %s712, %s726
    %p728 = scmp.eq.s32.totalorder %s93, 0
    %p729 = por %p727, %p728
    %s731 = sadd.s32 %s730, 1
    %p734 = scmp.eq.s32.totalorder %s87, 1
    %p735 = scmp.ne.s32.totalorder %s730, %s732
    %p736 = scmp.eq.s32.totalorder %s87, 0
    %p737 = por %p735, %p736
    %p738 = scmp.ne.s32.totalorder %s730, %s732
    %p739 = scmp.eq.s32.totalorder %s92, 1
    %p740 = por %p738, %p739
    %p741 = scmp.ne.s32.totalorder %s732, %s733
    %p742 = scmp.eq.s32.totalorder %s92, 0
    %p743 = por %p741, %p742
    %p744 = scmp.ne.s32.totalorder %s732, %s733
    %p745 = scmp.eq.s32.totalorder %s93, 1
    %p746 = por %p744, %p745
    %p748 = scmp.ne.s32.totalorder %s733, %s747
    %p749 = scmp.eq.s32.totalorder %s93, 0
    %p750 = por %p748, %p749
    %s752 = sadd.s32 %s751, 1
    %p755 = scmp.eq.s32.totalorder %s87, 1
    %p756 = scmp.ne.s32.totalorder %s751, %s753
    %p757 = scmp.eq.s32.totalorder %s87, 0
    %p758 = por %p756, %p757
    %p759 = scmp.ne.s32.totalorder %s751, %s753
    %p760 = scmp.eq.s32.totalorder %s92, 1
    %p761 = por %p759, %p760
    %p762 = scmp.ne.s32.totalorder %s753, %s754
    %p763 = scmp.eq.s32.totalorder %s92, 0
    %p764 = por %p762, %p763
    %p765 = scmp.ne.s32.totalorder %s753, %s754
    %p766 = scmp.eq.s32.totalorder %s93, 1
    %p767 = por %p765, %p766
    %p769 = scmp.ne.s32.totalorder %s754, %s768
    %p770 = scmp.eq.s32.totalorder %s93, 0
    %p771 = por %p769, %p770
    %s773 = sadd.s32 %s772, 1
    %p776 = scmp.eq.s32.totalorder %s87, 1
    %p777 = scmp.ne.s32.totalorder %s772, %s774
    %p778 = scmp.eq.s32.totalorder %s87, 0
    %p779 = por %p777, %p778
    %p780 = scmp.ne.s32.totalorder %s772, %s774
    %p781 = scmp.eq.s32.totalorder %s92, 1
    %p782 = por %p780, %p781
    %p783 = scmp.ne.s32.totalorder %s774, %s775
    %p784 = scmp.eq.s32.totalorder %s92, 0
    %p785 = por %p783, %p784
    %p786 = scmp.ne.s32.totalorder %s774, %s775
    %p787 = scmp.eq.s32.totalorder %s93, 1
    %p788 = por %p786, %p787
    %p790 = scmp.ne.s32.totalorder %s775, %s789
    %p791 = scmp.eq.s32.totalorder %s93, 0
    %p792 = por %p790, %p791
    %s794 = sadd.s32 %s793, 1
    %p797 = scmp.eq.s32.totalorder %s87, 1
    %p798 = scmp.ne.s32.totalorder %s793, %s795
    %p799 = scmp.eq.s32.totalorder %s87, 0
    %p800 = por %p798, %p799
    %p801 = scmp.ne.s32.totalorder %s793, %s795
    %p802 = scmp.eq.s32.totalorder %s92, 1
    %p803 = por %p801, %p802
    %p804 = scmp.ne.s32.totalorder %s795, %s796
    %p805 = scmp.eq.s32.totalorder %s92, 0
    %p806 = por %p804, %p805
    %p807 = scmp.ne.s32.totalorder %s795, %s796
    %p808 = scmp.eq.s32.totalorder %s93, 1
    %p809 = por %p807, %p808
    %p811 = scmp.ne.s32.totalorder %s796, %s810
    %p812 = scmp.eq.s32.totalorder %s93, 0
    %p813 = por %p811, %p812
    %s815 = sadd.s32 %s814, 1
    %p818 = scmp.eq.s32.totalorder %s87, 1
    %p819 = scmp.ne.s32.totalorder %s814, %s816
    %p820 = scmp.eq.s32.totalorder %s87, 0
    %p821 = por %p819, %p820
    %p822 = scmp.ne.s32.totalorder %s814, %s816
    %p823 = scmp.eq.s32.totalorder %s92, 1
    %p824 = por %p822, %p823
    %p825 = scmp.ne.s32.totalorder %s816, %s817
    %p826 = scmp.eq.s32.totalorder %s92, 0
    %p827 = por %p825, %p826
    %p828 = scmp.ne.s32.totalorder %s816, %s817
    %p829 = scmp.eq.s32.totalorder %s93, 1
    %p830 = por %p828, %p829
    %p832 = scmp.ne.s32.totalorder %s817, %s831
    %p833 = scmp.eq.s32.totalorder %s93, 0
    %p834 = por %p832, %p833
    %s836 = sadd.s32 %s835, 1
    %p839 = scmp.eq.s32.totalorder %s87, 1
    %p840 = scmp.ne.s32.totalorder %s835, %s837
    %p841 = scmp.eq.s32.totalorder %s87, 0
    %p842 = por %p840, %p841
    %p843 = scmp.ne.s32.totalorder %s835, %s837
    %p844 = scmp.eq.s32.totalorder %s92, 1
    %p845 = por %p843, %p844
    %p846 = scmp.ne.s32.totalorder %s837, %s838
    %p847 = scmp.eq.s32.totalorder %s92, 0
    %p848 = por %p846, %p847
    %p849 = scmp.ne.s32.totalorder %s837, %s838
    %p850 = scmp.eq.s32.totalorder %s93, 1
    %p851 = por %p849, %p850
    %p853 = scmp.ne.s32.totalorder %s838, %s852
    %p854 = scmp.eq.s32.totalorder %s93, 0
    %p855 = por %p853, %p854
    %s857 = sadd.s32 %s856, 1
    %p860 = scmp.eq.s32.totalorder %s87, 1
    %p861 = scmp.ne.s32.totalorder %s856, %s858
    %p862 = scmp.eq.s32.totalorder %s87, 0
    %p863 = por %p861, %p862
    %p864 = scmp.ne.s32.totalorder %s856, %s858
    %p865 = scmp.eq.s32.totalorder %s92, 1
    %p866 = por %p864, %p865
    %p867 = scmp.ne.s32.totalorder %s858, %s859
    %p868 = scmp.eq.s32.totalorder %s92, 0
    %p869 = por %p867, %p868
    %p870 = scmp.ne.s32.totalorder %s858, %s859
    %p871 = scmp.eq.s32.totalorder %s93, 1
    %p872 = por %p870, %p871
    %p874 = scmp.ne.s32.totalorder %s859, %s873
    %p875 = scmp.eq.s32.totalorder %s93, 0
    %p876 = por %p874, %p875
    %s878 = sadd.s32 %s877, 1
    %p881 = scmp.eq.s32.totalorder %s87, 1
    %p882 = scmp.ne.s32.totalorder %s877, %s879
    %p883 = scmp.eq.s32.totalorder %s87, 0
    %p884 = por %p882, %p883
    %p885 = scmp.ne.s32.totalorder %s877, %s879
    %p886 = scmp.eq.s32.totalorder %s92, 1
    %p887 = por %p885, %p886
    %p888 = scmp.ne.s32.totalorder %s879, %s880
    %p889 = scmp.eq.s32.totalorder %s92, 0
    %p890 = por %p888, %p889
    %p891 = scmp.ne.s32.totalorder %s879, %s880
    %p892 = scmp.eq.s32.totalorder %s93, 1
    %p893 = por %p891, %p892
    %p895 = scmp.ne.s32.totalorder %s880, %s894
    %p896 = scmp.eq.s32.totalorder %s93, 0
    %p897 = por %p895, %p896
    %s899 = sadd.s32 %s898, 1
    %p902 = scmp.eq.s32.totalorder %s87, 1
    %p903 = scmp.ne.s32.totalorder %s898, %s900
    %p904 = scmp.eq.s32.totalorder %s87, 0
    %p905 = por %p903, %p904
    %p906 = scmp.ne.s32.totalorder %s898, %s900
    %p907 = scmp.eq.s32.totalorder %s92, 1
    %p908 = por %p906, %p907
    %p909 = scmp.ne.s32.totalorder %s900, %s901
    %p910 = scmp.eq.s32.totalorder %s92, 0
    %p911 = por %p909, %p910
    %p912 = scmp.ne.s32.totalorder %s900, %s901
    %p913 = scmp.eq.s32.totalorder %s93, 1
    %p914 = por %p912, %p913
    %p916 = scmp.ne.s32.totalorder %s901, %s915
    %p917 = scmp.eq.s32.totalorder %s93, 0
    %p918 = por %p916, %p917
    %s919 = ssub.s32 %s87, %s94
    %p920 = scmp.eq.s32.totalorder %s919, 0
    %s922 = sadd.s32 %s921, 1
    %s923 = scalar_select %p920, %s921, %s922
    %p926 = pneg %p920
    %p927 = scmp.eq.s32.totalorder %s87, 1
    %p928 = por %p926, %p927
    %p929 = scmp.ne.s32.totalorder %s921, %s924
    %p930 = scmp.eq.s32.totalorder %s87, 0
    %p931 = por %p929, %p930
    %p932 = scmp.ne.s32.totalorder %s921, %s924
    %p933 = scmp.eq.s32.totalorder %s92, 1
    %p934 = por %p932, %p933
    %p935 = scmp.ne.s32.totalorder %s924, %s925
    %p936 = scmp.eq.s32.totalorder %s92, 0
    %p937 = por %p935, %p936
    %p938 = scmp.ne.s32.totalorder %s924, %s925
    %p939 = scmp.eq.s32.totalorder %s93, 1
    %p940 = por %p938, %p939
    %p942 = scmp.ne.s32.totalorder %s925, %s941
    %p943 = scmp.eq.s32.totalorder %s93, 0
    %p944 = por %p942, %p943
    %p945 = scmp.le.s32.totalorder 1, %s87
    %p946 = scmp.lt.s32.totalorder %s87, 3
    %p947 = pnand %p945, %p946
    %p948 = pneg %p947
    // Predicated region
    $region9: #{_lambda_.1} parent=5 // pred_check
      _
    $region10: #{_lambda_.1} parent=5 // pred_check_branch
      %950 = sbr.rel (%p947) target = $region12
    $region11: #{_lambda_.1} parent=5 // pred_region
      %s951 = ssub.s32 %s87, 1
      // Predicated region
      $region13: #{_lambda_.1} parent=11 // pred_check
        %p952 = pneg %p134
      $region14: #{_lambda_.1} parent=11 // pred_check_branch
        %954 = sbr.rel (%p952) target = $region16
      $region15: #{_lambda_.1} parent=11 // pred_region
        _
      $region16: #{_lambda_.1} parent=11 // pred_fallthru
        _
      // Predicated region
      $region17: #{_lambda_.1} parent=11 // pred_check
        %p955 = pneg %p155
      $region18: #{_lambda_.1} parent=11 // pred_check_branch
        %957 = sbr.rel (%p955) target = $region20
      $region19: #{_lambda_.1} parent=11 // pred_region
        _
      $region20: #{_lambda_.1} parent=11 // pred_fallthru
        _
      // Predicated region
      $region21: #{_lambda_.1} parent=11 // pred_check
        %p958 = pneg %p176
      $region22: #{_lambda_.1} parent=11 // pred_check_branch
        %960 = sbr.rel (%p958) target = $region24
      $region23: #{_lambda_.1} parent=11 // pred_region
        _
      $region24: #{_lambda_.1} parent=11 // pred_fallthru
        _
      // Predicated region
      $region25: #{_lambda_.1} parent=11 // pred_check
        %p961 = pneg %p197
      $region26: #{_lambda_.1} parent=11 // pred_check_branch
        %963 = sbr.rel (%p961) target = $region28
      $region27: #{_lambda_.1} parent=11 // pred_region
        _
      $region28: #{_lambda_.1} parent=11 // pred_fallthru
        _
      // Predicated region
      $region29: #{_lambda_.1} parent=11 // pred_check
        %p964 = pneg %p218
      $region30: #{_lambda_.1} parent=11 // pred_check_branch
        %966 = sbr.rel (%p964) target = $region32
      $region31: #{_lambda_.1} parent=11 // pred_region
        _
      $region32: #{_lambda_.1} parent=11 // pred_fallthru
        _
      // Predicated region
      $region33: #{_lambda_.1} parent=11 // pred_check
        %p967 = pneg %p239
      $region34: #{_lambda_.1} parent=11 // pred_check_branch
        %969 = sbr.rel (%p967) target = $region36
      $region35: #{_lambda_.1} parent=11 // pred_region
        _
      $region36: #{_lambda_.1} parent=11 // pred_fallthru
        _
      // Predicated region
      $region37: #{_lambda_.1} parent=11 // pred_check
        %p970 = pneg %p260
      $region38: #{_lambda_.1} parent=11 // pred_check_branch
        %972 = sbr.rel (%p970) target = $region40
      $region39: #{_lambda_.1} parent=11 // pred_region
        _
      $region40: #{_lambda_.1} parent=11 // pred_fallthru
        _
      // Predicated region
      $region41: #{_lambda_.1} parent=11 // pred_check
        %p973 = pneg %p281
      $region42: #{_lambda_.1} parent=11 // pred_check_branch
        %975 = sbr.rel (%p973) target = $region44
      $region43: #{_lambda_.1} parent=11 // pred_region
        _
      $region44: #{_lambda_.1} parent=11 // pred_fallthru
        _
      // Predicated region
      $region45: #{_lambda_.1} parent=11 // pred_check
        %p976 = pneg %p302
      $region46: #{_lambda_.1} parent=11 // pred_check_branch
        %978 = sbr.rel (%p976) target = $region48
      $region47: #{_lambda_.1} parent=11 // pred_region
        _
      $region48: #{_lambda_.1} parent=11 // pred_fallthru
        _
      // Predicated region
      $region49: #{_lambda_.1} parent=11 // pred_check
        %p979 = pneg %p323
      $region50: #{_lambda_.1} parent=11 // pred_check_branch
        %981 = sbr.rel (%p979) target = $region52
      $region51: #{_lambda_.1} parent=11 // pred_region
        _
      $region52: #{_lambda_.1} parent=11 // pred_fallthru
        _
      // Predicated region
      $region53: #{_lambda_.1} parent=11 // pred_check
        %p982 = pneg %p344
      $region54: #{_lambda_.1} parent=11 // pred_check_branch
        %984 = sbr.rel (%p982) target = $region56
      $region55: #{_lambda_.1} parent=11 // pred_region
        _
      $region56: #{_lambda_.1} parent=11 // pred_fallthru
        _
      // Predicated region
      $region57: #{_lambda_.1} parent=11 // pred_check
        %p985 = pneg %p365
      $region58: #{_lambda_.1} parent=11 // pred_check_branch
        %987 = sbr.rel (%p985) target = $region60
      $region59: #{_lambda_.1} parent=11 // pred_region
        _
      $region60: #{_lambda_.1} parent=11 // pred_fallthru
        _
      // Predicated region
      $region61: #{_lambda_.1} parent=11 // pred_check
        %p988 = pneg %p386
      $region62: #{_lambda_.1} parent=11 // pred_check_branch
        %990 = sbr.rel (%p988) target = $region64
      $region63: #{_lambda_.1} parent=11 // pred_region
        _
      $region64: #{_lambda_.1} parent=11 // pred_fallthru
        _
      // Predicated region
      $region65: #{_lambda_.1} parent=11 // pred_check
        %p991 = pneg %p407
      $region66: #{_lambda_.1} parent=11 // pred_check_branch
        %993 = sbr.rel (%p991) target = $region68
      $region67: #{_lambda_.1} parent=11 // pred_region
        _
      $region68: #{_lambda_.1} parent=11 // pred_fallthru
        _
      // Predicated region
      $region69: #{_lambda_.1} parent=11 // pred_check
        %p994 = pneg %p428
      $region70: #{_lambda_.1} parent=11 // pred_check_branch
        %996 = sbr.rel (%p994) target = $region72
      $region71: #{_lambda_.1} parent=11 // pred_region
        _
      $region72: #{_lambda_.1} parent=11 // pred_fallthru
        _
      // Predicated region
      $region73: #{_lambda_.1} parent=11 // pred_check
        %p997 = pneg %p449
      $region74: #{_lambda_.1} parent=11 // pred_check_branch
        %999 = sbr.rel (%p997) target = $region76
      $region75: #{_lambda_.1} parent=11 // pred_region
        _
      $region76: #{_lambda_.1} parent=11 // pred_fallthru
        _
      // Predicated region
      $region77: #{_lambda_.1} parent=11 // pred_check
        %p1000 = pneg %p470
      $region78: #{_lambda_.1} parent=11 // pred_check_branch
        %1002 = sbr.rel (%p1000) target = $region80
      $region79: #{_lambda_.1} parent=11 // pred_region
        _
      $region80: #{_lambda_.1} parent=11 // pred_fallthru
        _
      // Predicated region
      $region81: #{_lambda_.1} parent=11 // pred_check
        %p1003 = pneg %p491
      $region82: #{_lambda_.1} parent=11 // pred_check_branch
        %1005 = sbr.rel (%p1003) target = $region84
      $region83: #{_lambda_.1} parent=11 // pred_region
        _
      $region84: #{_lambda_.1} parent=11 // pred_fallthru
        _
      // Predicated region
      $region85: #{_lambda_.1} parent=11 // pred_check
        %p1006 = pneg %p512
      $region86: #{_lambda_.1} parent=11 // pred_check_branch
        %1008 = sbr.rel (%p1006) target = $region88
      $region87: #{_lambda_.1} parent=11 // pred_region
        _
      $region88: #{_lambda_.1} parent=11 // pred_fallthru
        _
      // Predicated region
      $region89: #{_lambda_.1} parent=11 // pred_check
        %p1009 = pneg %p533
      $region90: #{_lambda_.1} parent=11 // pred_check_branch
        %1011 = sbr.rel (%p1009) target = $region92
      $region91: #{_lambda_.1} parent=11 // pred_region
        _
      $region92: #{_lambda_.1} parent=11 // pred_fallthru
        _
      // Predicated region
      $region93: #{_lambda_.1} parent=11 // pred_check
        %p1012 = pneg %p554
      $region94: #{_lambda_.1} parent=11 // pred_check_branch
        %1014 = sbr.rel (%p1012) target = $region96
      $region95: #{_lambda_.1} parent=11 // pred_region
        _
      $region96: #{_lambda_.1} parent=11 // pred_fallthru
        _
      // Predicated region
      $region97: #{_lambda_.1} parent=11 // pred_check
        %p1015 = pneg %p575
      $region98: #{_lambda_.1} parent=11 // pred_check_branch
        %1017 = sbr.rel (%p1015) target = $region100
      $region99: #{_lambda_.1} parent=11 // pred_region
        _
      $region100: #{_lambda_.1} parent=11 // pred_fallthru
        _
      // Predicated region
      $region101: #{_lambda_.1} parent=11 // pred_check
        %p1018 = pneg %p596
      $region102: #{_lambda_.1} parent=11 // pred_check_branch
        %1020 = sbr.rel (%p1018) target = $region104
      $region103: #{_lambda_.1} parent=11 // pred_region
        _
      $region104: #{_lambda_.1} parent=11 // pred_fallthru
        _
      // Predicated region
      $region105: #{_lambda_.1} parent=11 // pred_check
        %p1021 = pneg %p617
      $region106: #{_lambda_.1} parent=11 // pred_check_branch
        %1023 = sbr.rel (%p1021) target = $region108
      $region107: #{_lambda_.1} parent=11 // pred_region
        _
      $region108: #{_lambda_.1} parent=11 // pred_fallthru
        _
      // Predicated region
      $region109: #{_lambda_.1} parent=11 // pred_check
        %p1024 = pneg %p638
      $region110: #{_lambda_.1} parent=11 // pred_check_branch
        %1026 = sbr.rel (%p1024) target = $region112
      $region111: #{_lambda_.1} parent=11 // pred_region
        _
      $region112: #{_lambda_.1} parent=11 // pred_fallthru
        _
      // Predicated region
      $region113: #{_lambda_.1} parent=11 // pred_check
        %p1027 = pneg %p659
      $region114: #{_lambda_.1} parent=11 // pred_check_branch
        %1029 = sbr.rel (%p1027) target = $region116
      $region115: #{_lambda_.1} parent=11 // pred_region
        _
      $region116: #{_lambda_.1} parent=11 // pred_fallthru
        _
      // Predicated region
      $region117: #{_lambda_.1} parent=11 // pred_check
        %p1030 = pneg %p680
      $region118: #{_lambda_.1} parent=11 // pred_check_branch
        %1032 = sbr.rel (%p1030) target = $region120
      $region119: #{_lambda_.1} parent=11 // pred_region
        _
      $region120: #{_lambda_.1} parent=11 // pred_fallthru
        _
      // Predicated region
      $region121: #{_lambda_.1} parent=11 // pred_check
        %p1033 = pneg %p701
      $region122: #{_lambda_.1} parent=11 // pred_check_branch
        %1035 = sbr.rel (%p1033) target = $region124
      $region123: #{_lambda_.1} parent=11 // pred_region
        _
      $region124: #{_lambda_.1} parent=11 // pred_fallthru
        _
      // Predicated region
      $region125: #{_lambda_.1} parent=11 // pred_check
        %p1036 = pneg %p722
      $region126: #{_lambda_.1} parent=11 // pred_check_branch
        %1038 = sbr.rel (%p1036) target = $region128
      $region127: #{_lambda_.1} parent=11 // pred_region
        _
      $region128: #{_lambda_.1} parent=11 // pred_fallthru
        _
      // Predicated region
      $region129: #{_lambda_.1} parent=11 // pred_check
        %p1039 = pneg %p743
      $region130: #{_lambda_.1} parent=11 // pred_check_branch
        %1041 = sbr.rel (%p1039) target = $region132
      $region131: #{_lambda_.1} parent=11 // pred_region
        _
      $region132: #{_lambda_.1} parent=11 // pred_fallthru
        _
      // Predicated region
      $region133: #{_lambda_.1} parent=11 // pred_check
        %p1042 = pneg %p764
      $region134: #{_lambda_.1} parent=11 // pred_check_branch
        %1044 = sbr.rel (%p1042) target = $region136
      $region135: #{_lambda_.1} parent=11 // pred_region
        _
      $region136: #{_lambda_.1} parent=11 // pred_fallthru
        _
      // Predicated region
      $region137: #{_lambda_.1} parent=11 // pred_check
        %p1045 = pneg %p785
      $region138: #{_lambda_.1} parent=11 // pred_check_branch
        %1047 = sbr.rel (%p1045) target = $region140
      $region139: #{_lambda_.1} parent=11 // pred_region
        _
      $region140: #{_lambda_.1} parent=11 // pred_fallthru
        _
      // Predicated region
      $region141: #{_lambda_.1} parent=11 // pred_check
        %p1048 = pneg %p806
      $region142: #{_lambda_.1} parent=11 // pred_check_branch
        %1050 = sbr.rel (%p1048) target = $region144
      $region143: #{_lambda_.1} parent=11 // pred_region
        _
      $region144: #{_lambda_.1} parent=11 // pred_fallthru
        _
      // Predicated region
      $region145: #{_lambda_.1} parent=11 // pred_check
        %p1051 = pneg %p827
      $region146: #{_lambda_.1} parent=11 // pred_check_branch
        %1053 = sbr.rel (%p1051) target = $region148
      $region147: #{_lambda_.1} parent=11 // pred_region
        _
      $region148: #{_lambda_.1} parent=11 // pred_fallthru
        _
      // Predicated region
      $region149: #{_lambda_.1} parent=11 // pred_check
        %p1054 = pneg %p848
      $region150: #{_lambda_.1} parent=11 // pred_check_branch
        %1056 = sbr.rel (%p1054) target = $region152
      $region151: #{_lambda_.1} parent=11 // pred_region
        _
      $region152: #{_lambda_.1} parent=11 // pred_fallthru
        _
      // Predicated region
      $region153: #{_lambda_.1} parent=11 // pred_check
        %p1057 = pneg %p869
      $region154: #{_lambda_.1} parent=11 // pred_check_branch
        %1059 = sbr.rel (%p1057) target = $region156
      $region155: #{_lambda_.1} parent=11 // pred_region
        _
      $region156: #{_lambda_.1} parent=11 // pred_fallthru
        _
      // Predicated region
      $region157: #{_lambda_.1} parent=11 // pred_check
        %p1060 = pneg %p890
      $region158: #{_lambda_.1} parent=11 // pred_check_branch
        %1062 = sbr.rel (%p1060) target = $region160
      $region159: #{_lambda_.1} parent=11 // pred_region
        _
      $region160: #{_lambda_.1} parent=11 // pred_fallthru
        _
      // Predicated region
      $region161: #{_lambda_.1} parent=11 // pred_check
        %p1063 = pneg %p911
      $region162: #{_lambda_.1} parent=11 // pred_check_branch
        %1065 = sbr.rel (%p1063) target = $region164
      $region163: #{_lambda_.1} parent=11 // pred_region
        _
      $region164: #{_lambda_.1} parent=11 // pred_fallthru
        _
    $region12: #{_lambda_.1} parent=5 // pred_fallthru
      _
    %p1066 = scmp.lt.s32.totalorder %s87, 2
    // Predicated region
    $region165: #{_lambda_.1} parent=5 // pred_check
      %p1067 = pneg %p1066
    $region166: #{_lambda_.1} parent=5 // pred_check_branch
      %1069 = sbr.rel (%p1067) target = $region168
    $region167: #{_lambda_.1} parent=5 // pred_region
      // Predicated region
      $region169: #{_lambda_.1} parent=167 // pred_check
        %p1070 = pneg %p107
      $region170: #{_lambda_.1} parent=167 // pred_check_branch
        %1072 = sbr.rel (%p1070) target = $region172
      $region171: #{_lambda_.1} parent=167 // pred_region
        %p1073 = scmp.lt.s32.totalorder %s87, 1
        %s1074 = scalar_select %p1073, %s87, 1
        %s1075 = smul.addr %s1074, 4
        %s1076 = smul.addr %s1075, 8
        %s1077 = scalar_lea.vmem %s1, %s1076
      $region172: #{_lambda_.1} parent=167 // pred_fallthru
        _
    $region168: #{_lambda_.1} parent=5 // pred_fallthru
      _
    %p1078 = scmp.le.s32.totalorder 1, %s87
    %p1079 = scmp.lt.s32.totalorder %s87, 3
    %p1080 = pnand %p1078, %p1079
    %p1081 = pneg %p1080
    // Predicated region
    $region173: #{_lambda_.1} parent=5 // pred_check
      _
    $region174: #{_lambda_.1} parent=5 // pred_check_branch
      %1083 = sbr.rel (%p1080) target = $region176
    $region175: #{_lambda_.1} parent=5 // pred_region
      %s1084 = ssub.s32 %s87, 1
      %p1085 = scmp.lt.s32.totalorder %s92, 1
      %s1086 = scalar_select %p1085, %s92, 1
      %s1087 = smul.addr %s1086, 4
      %s1088 = smul.addr %s1087, 8
      %s1089 = scalar_lea.vmem %s1, %s1088
      %p1090 = pneg %p113
      %p1091 = pneg %p110
      %p1092 = pneg %p134
      %p1093 = pneg %p131
      %p1094 = pneg %p155
      %p1095 = pneg %p152
      %p1096 = pneg %p176
      %p1097 = pneg %p173
      %p1098 = pneg %p197
      %p1099 = pneg %p194
      %p1100 = pneg %p218
      %p1101 = pneg %p215
      %p1102 = pneg %p239
      %p1103 = pneg %p236
      %p1104 = pneg %p260
      %p1105 = pneg %p257
      %p1106 = pneg %p281
      %p1107 = pneg %p278
      %p1108 = pneg %p302
      %p1109 = pneg %p299
      %p1110 = pneg %p323
      %p1111 = pneg %p320
      %p1112 = pneg %p344
      %p1113 = pneg %p341
      %p1114 = pneg %p365
      %p1115 = pneg %p362
      %p1116 = pneg %p386
      %p1117 = pneg %p383
      %p1118 = pneg %p407
      %p1119 = pneg %p404
      %p1120 = pneg %p428
      %p1121 = pneg %p425
      %p1122 = pneg %p449
      %p1123 = pneg %p446
      %p1124 = pneg %p470
      %p1125 = pneg %p467
      %p1126 = pneg %p491
      %p1127 = pneg %p488
      %p1128 = pneg %p512
      %p1129 = pneg %p509
      %p1130 = pneg %p533
      %p1131 = pneg %p530
      %p1132 = pneg %p554
      %p1133 = pneg %p551
      %p1134 = pneg %p575
      %p1135 = pneg %p572
      %p1136 = pneg %p596
      %p1137 = pneg %p593
      %p1138 = pneg %p617
      %p1139 = pneg %p614
      %p1140 = pneg %p638
      %p1141 = pneg %p635
      %p1142 = pneg %p659
      %p1143 = pneg %p656
      %p1144 = pneg %p680
      %p1145 = pneg %p677
      %p1146 = pneg %p701
      %p1147 = pneg %p698
      %p1148 = pneg %p722
      %p1149 = pneg %p719
      %p1150 = pneg %p743
      %p1151 = pneg %p740
      %p1152 = pneg %p764
      %p1153 = pneg %p761
      %p1154 = pneg %p785
      %p1155 = pneg %p782
      %p1156 = pneg %p806
      %p1157 = pneg %p803
      %p1158 = pneg %p827
      %p1159 = pneg %p824
      %p1160 = pneg %p848
      %p1161 = pneg %p845
      %p1162 = pneg %p869
      %p1163 = pneg %p866
      %p1164 = pneg %p890
      %p1165 = pneg %p887
      %p1166 = pneg %p911
      %p1167 = pneg %p908
      %p1168 = pneg %p937
      %p1169 = pneg %p934
      %p1170 = scmp.lt.s32.totalorder %s92, 1
      %s1171 = scalar_select %p1170, %s92, 1
      %s1172 = smul.addr %s1171, 8
      %s1173 = scalar_lea.vmem %s79, %s1172
      %p1174 = scmp.lt.s32.totalorder %s92, 1
      %s1175 = scalar_select %p1174, %s92, 1
      %s1176 = smul.addr %s1175, 4
      %s1177 = smul.addr %s1176, 8
      %s1178 = scalar_lea.vmem %s1, %s1177
      %p1179 = scmp.lt.s32.totalorder %s92, 1
      %s1180 = scalar_select %p1179, %s92, 1
      %s1181 = smul.addr %s1180, 8
      %s1182 = scalar_lea.vmem %s79, %s1181
      %v1184 = vld [vmem:[%s1178] sm:$0xff]
      %v1185 = vld [vmem:[%s1178 + $0x8] sm:$0xff]
      %v1186 = vld [vmem:[%s1178 + $0x10] sm:$0xff]
      %v1187 = vld [vmem:[%s1178 + $0x18] sm:$0xff]
      %v1188 = vmax.f32 %v1184, 0.0
      %v1189 = vmax.f32 %v1185, 0.0
      %v1190 = vmax.f32 %v1186, 0.0
      %v1191 = vmax.f32 %v1187, 0.0
      %1196 = vrot.lane.b32.xlu0 %v1188, 7
      %v1197 = vpop.permute.xlu0 %1196
      %1198 = vrot.lane.b32.xlu0 %v1189, 7
      %v1199 = vpop.permute.xlu0 %1198
      %1200 = vrot.lane.b32.xlu0 %v1190, 7
      %v1201 = vpop.permute.xlu0 %1200
      %1202 = vrot.lane.b32.xlu0 %v1191, 7
      %v1203 = vpop.permute.xlu0 %1202
      %vm1208 = vcmask 56320
      %v1209 = vsel %vm1208, 0.0, %v1197
      %v1210 = vsel %vm1208, 0.0, %v1199
      %v1211 = vsel %vm1208, 0.0, %v1201
      %v1212 = vsel %vm1208, 0.0, %v1203
      %vm1213 = vcmask 351232
      %v1214 = vsel %vm1213, %v1209, 0.0
      %v1215 = vsel %vm1213, %v1210, 0.0
      %v1216 = vsel %vm1213, %v1211, 0.0
      %v1217 = vsel %vm1213, %v1212, 0.0
      %1222 = vrot.lane.b32.xlu0 %v1214, 127
      %v1223 = vpop.permute.xlu0 %1222
      %1224 = vrot.lane.b32.xlu0 %v1215, 127
      %v1225 = vpop.permute.xlu0 %1224
      %1226 = vrot.lane.b32.xlu0 %v1216, 127
      %v1227 = vpop.permute.xlu0 %1226
      %1228 = vrot.lane.b32.xlu0 %v1217, 127
      %v1229 = vpop.permute.xlu0 %1228
      %1234 = vrot.lane.b32.xlu0 %v1214, 126
      %v1235 = vpop.permute.xlu0 %1234
      %1236 = vrot.lane.b32.xlu0 %v1215, 126
      %v1237 = vpop.permute.xlu0 %1236
      %1238 = vrot.lane.b32.xlu0 %v1216, 126
      %v1239 = vpop.permute.xlu0 %1238
      %1240 = vrot.lane.b32.xlu0 %v1217, 126
      %v1241 = vpop.permute.xlu0 %1240
      %1246 = vrot.lane.b32.xlu0 %v1214, 122
      %v1247 = vpop.permute.xlu0 %1246
      %1248 = vrot.lane.b32.xlu0 %v1215, 122
      %v1249 = vpop.permute.xlu0 %1248
      %1250 = vrot.lane.b32.xlu0 %v1216, 122
      %v1251 = vpop.permute.xlu0 %1250
      %1252 = vrot.lane.b32.xlu0 %v1217, 122
      %v1253 = vpop.permute.xlu0 %1252
      %1258 = vrot.lane.b32.xlu0 %v1214, 121
      %v1259 = vpop.permute.xlu0 %1258
      %1260 = vrot.lane.b32.xlu0 %v1215, 121
      %v1261 = vpop.permute.xlu0 %1260
      %1262 = vrot.lane.b32.xlu0 %v1216, 121
      %v1263 = vpop.permute.xlu0 %1262
      %1264 = vrot.lane.b32.xlu0 %v1217, 121
      %v1265 = vpop.permute.xlu0 %1264
      %1270 = vrot.lane.b32.xlu0 %v1214, 120
      %v1271 = vpop.permute.xlu0 %1270
      %1272 = vrot.lane.b32.xlu0 %v1215, 120
      %v1273 = vpop.permute.xlu0 %1272
      %1274 = vrot.lane.b32.xlu0 %v1216, 120
      %v1275 = vpop.permute.xlu0 %1274
      %1276 = vrot.lane.b32.xlu0 %v1217, 120
      %v1277 = vpop.permute.xlu0 %1276
      %1282 = vrot.lane.b32.xlu0 %v1214, 116
      %v1283 = vpop.permute.xlu0 %1282
      %1284 = vrot.lane.b32.xlu0 %v1215, 116
      %v1285 = vpop.permute.xlu0 %1284
      %1286 = vrot.lane.b32.xlu0 %v1216, 116
      %v1287 = vpop.permute.xlu0 %1286
      %1288 = vrot.lane.b32.xlu0 %v1217, 116
      %v1289 = vpop.permute.xlu0 %1288
      %1294 = vrot.lane.b32.xlu0 %v1214, 115
      %v1295 = vpop.permute.xlu0 %1294
      %1296 = vrot.lane.b32.xlu0 %v1215, 115
      %v1297 = vpop.permute.xlu0 %1296
      %1298 = vrot.lane.b32.xlu0 %v1216, 115
      %v1299 = vpop.permute.xlu0 %1298
      %1300 = vrot.lane.b32.xlu0 %v1217, 115
      %v1301 = vpop.permute.xlu0 %1300
      %1306 = vrot.lane.b32.xlu0 %v1214, 114
      %v1307 = vpop.permute.xlu0 %1306
      %1308 = vrot.lane.b32.xlu0 %v1215, 114
      %v1309 = vpop.permute.xlu0 %1308
      %1310 = vrot.lane.b32.xlu0 %v1216, 114
      %v1311 = vpop.permute.xlu0 %1310
      %1312 = vrot.lane.b32.xlu0 %v1217, 114
      %v1313 = vpop.permute.xlu0 %1312
      %v1318 = vld [vmem:[%s3] sm:$0xff]
      %v1319 = vld [vmem:[%s3 + $0x8] sm:$0xf]
      %v1320 = vld [vmem:[%s3 + $0xc] sm:$0xff]
      %v1321 = vld [vmem:[%s3 + $0x14] sm:$0xf]
      %v1322 = vld [vmem:[%s3 + $0x18] sm:$0xff]
      %v1323 = vld [vmem:[%s3 + $0x20] sm:$0xf]
      %v1324 = vld [vmem:[%s3 + $0x24] sm:$0xff]
      %v1325 = vld [vmem:[%s3 + $0x2c] sm:$0xf]
      %v1326 = vpack.c.bf16 %v1215, %v1214
      %v1327 = vpack.c.bf16 %v1217, %v1216
      %v1328 = vpack.c.bf16 %v1225, %v1223
      %v1329 = vpack.c.bf16 %v1229, %v1227
      %v1330 = vpack.c.bf16 %v1237, %v1235
      %v1331 = vpack.c.bf16 %v1241, %v1239
      %v1332 = vpack.c.bf16 %v1249, %v1247
      %v1333 = vpack.c.bf16 %v1253, %v1251
      %v1334 = vpack.c.bf16 %v1261, %v1259
      %v1335 = vpack.c.bf16 %v1265, %v1263
      %v1336 = vpack.c.bf16 %v1273, %v1271
      %v1337 = vpack.c.bf16 %v1277, %v1275
      %v1338 = vpack.c.bf16 %v1285, %v1283
      %v1339 = vpack.c.bf16 %v1289, %v1287
      %v1340 = vpack.c.bf16 %v1297, %v1295
      %v1341 = vpack.c.bf16 %v1301, %v1299
      %v1342 = vpack.c.bf16 %v1309, %v1307
      %v1343 = vpack.c.bf16 %v1313, %v1311
      %v1344 = vld [vmem:[%s5] sm:$0xff]
      %v1345 = vld [vmem:[%s5 + $0x8] sm:$0xff]
      %v1346 = vld [vmem:[%s5 + $0x10] sm:$0xff]
      %v1347 = vld [vmem:[%s5 + $0x18] sm:$0xff]
      %1349 = vset.pattern.permute.xlu0 0
      %1350 = vperm.xlu0 %1349, %v1344
      %v1351 = vpop.permute.xlu0 %1350
      %1354 = vset.pattern.permute.xlu0 0
      %1355 = vperm.xlu0 %1354, %v1345
      %v1356 = vpop.permute.xlu0 %1355
      %1359 = vset.pattern.permute.xlu0 0
      %1360 = vperm.xlu0 %1359, %v1346
      %v1361 = vpop.permute.xlu0 %1360
      %1364 = vset.pattern.permute.xlu0 0
      %1365 = vperm.xlu0 %1364, %v1347
      %v1366 = vpop.permute.xlu0 %1365
      %v1376 = vunpack.c.l.b16 %v1318
      %v1377 = vunpack.c.h.b16 %v1318
      %v1378 = vunpack.c.l.b16 %v1319
      %v1379 = vunpack.c.l.b16 %v1320
      %v1380 = vunpack.c.h.b16 %v1320
      %v1381 = vunpack.c.l.b16 %v1321
      %v1382 = vunpack.c.l.b16 %v1322
      %v1383 = vunpack.c.h.b16 %v1322
      %v1384 = vunpack.c.l.b16 %v1323
      %v1385 = vunpack.c.l.b16 %v1324
      %v1386 = vunpack.c.h.b16 %v1324
      %v1387 = vunpack.c.l.b16 %v1325
      %v1388 = vpack.c.b16 %v1379, %v1376
      %v1389 = vpack.c.b16 %v1380, %v1377
      %v1390 = vpack.c.b16 %v1381, %v1378
      %v1391 = vpack.c.b16 %v1385, %v1382
      %v1392 = vpack.c.b16 %v1386, %v1383
      %v1393 = vpack.c.b16 %v1387, %v1384
      %vm1398 = vcmask 261120
      %v1400 = vsel %vm1398, %v1390, 0
      %v1403 = vsel %vm1398, %v1393, 0
      %1405 = vmatprep.subr.bf16.mxu0 0
      %1406 = vmatpush1.bf16.msra.mxu0 %v1333
      %1407 = vmatprep.subr.bf16.mxu0 0
      %1408 = vmatpush1.bf16.msra.mxu0 %v1332
      %1409 = vmatprep.subr.bf16.mxu0 0
      %1410 = vmatpush1.bf16.msra.mxu0 %v1331
      %1411 = vmatprep.subr.bf16.mxu0 0
      %1412 = vmatpush1.bf16.msra.mxu0 %v1330
      %1413 = vmatprep.subr.bf16.mxu0 0
      %1414 = vmatpush1.bf16.msra.mxu0 %v1329
      %1415 = vmatprep.subr.bf16.mxu0 0
      %1416 = vmatpush1.bf16.msra.mxu0 %v1328
      %1417 = vmatprep.subr.bf16.mxu0 0
      %1418 = vmatpush1.bf16.msra.mxu0 %v1327
      %1419 = vmatprep.subr.bf16.mxu0 0
      %1420 = vmatpush1.bf16.msra.mxu0 %v1326
      %1421 = vmatprep.subr.bf16.mxu0 0
      %1422 = vmatpush2.bf16.msra.mxu0 %v1341
      %1423 = vmatprep.subr.bf16.mxu0 0
      %1424 = vmatpush2.bf16.msra.mxu0 %v1340
      %1425 = vmatprep.subr.bf16.mxu0 0
      %1426 = vmatpush2.bf16.msra.mxu0 %v1339
      %1427 = vmatprep.subr.bf16.mxu0 0
      %1428 = vmatpush2.bf16.msra.mxu0 %v1338
      %1429 = vmatprep.subr.bf16.mxu0 0
      %1430 = vmatpush2.bf16.msra.mxu0 %v1337
      %1431 = vmatprep.subr.bf16.mxu0 0
      %1432 = vmatpush2.bf16.msra.mxu0 %v1336
      %1433 = vmatprep.subr.bf16.mxu0 0
      %1434 = vmatpush2.bf16.msra.mxu0 %v1335
      %1435 = vmatprep.subr.bf16.mxu0 0
      %1436 = vmatpush2.bf16.msra.mxu0 %v1334
      %1437 = vmatprep.mubr.bf16.mxu0 %v1389
      %1438 = vmatmul.mubr.bf16.gmra.mxu0 %v1388
      %v1439 = vpop.f32.mrf.mxu0
      %v1440 = vadd.f32 %v1351, %v1439
      %v1441 = vpop.f32.mrf.mxu0
      %v1442 = vpop.f32.mrf.mxu0
      %v1443 = vadd.f32 %v1356, %v1442
      %v1444 = vpop.f32.mrf.mxu0
      %1445 = vmatprep.mubr.bf16.mxu0 %v1392
      %1446 = vmatmul.mubr.bf16.gmra.mxu0 %v1391
      %v1447 = vpop.f32.mrf.mxu0
      %v1448 = vadd.f32 %v1361, %v1447
      %v1449 = vpop.f32.mrf.mxu0
      %v1450 = vpop.f32.mrf.mxu0
      %v1451 = vadd.f32 %v1366, %v1450
      %v1452 = vpop.f32.mrf.mxu0
      %1453 = vdwg.mxu0
      %1454 = vmatprep.subr.bf16.mxu0 0
      %1455 = vmatpush1.bf16.msra.mxu0 0
      %1456 = vmatprep.subr.bf16.mxu0 0
      %1457 = vmatpush1.bf16.msra.mxu0 0
      %1458 = vmatprep.subr.bf16.mxu0 0
      %1459 = vmatpush1.bf16.msra.mxu0 0
      %1460 = vmatprep.subr.bf16.mxu0 0
      %1461 = vmatpush1.bf16.msra.mxu0 0
      %1462 = vmatprep.subr.bf16.mxu0 0
      %1463 = vmatpush1.bf16.msra.mxu0 0
      %1464 = vmatprep.subr.bf16.mxu0 0
      %1465 = vmatpush1.bf16.msra.mxu0 0
      %1466 = vmatprep.subr.bf16.mxu0 0
      %1467 = vmatpush1.bf16.msra.mxu0 %v1343
      %1468 = vmatprep.subr.bf16.mxu0 0
      %1469 = vmatpush1.bf16.msra.mxu0 %v1342
      %1470 = vmatprep.subr.bf16.mxu0 0
      %1471 = vmatpush2.bf16.msra.mxu0 0
      %1472 = vmatprep.subr.bf16.mxu0 0
      %1473 = vmatpush2.bf16.msra.mxu0 0
      %1474 = vmatprep.subr.bf16.mxu0 0
      %1475 = vmatpush2.bf16.msra.mxu0 0
      %1476 = vmatprep.subr.bf16.mxu0 0
      %1477 = vmatpush2.bf16.msra.mxu0 0
      %1478 = vmatprep.subr.bf16.mxu0 0
      %1479 = vmatpush2.bf16.msra.mxu0 0
      %1480 = vmatprep.subr.bf16.mxu0 0
      %1481 = vmatpush2.bf16.msra.mxu0 0
      %1482 = vmatprep.subr.bf16.mxu0 0
      %1483 = vmatpush2.bf16.msra.mxu0 0
      %1484 = vmatprep.subr.bf16.mxu0 0
      %1485 = vmatpush2.bf16.msra.mxu0 0
      %1486 = vmatprep.mubr.bf16.mxu0 0
      %1487 = vmatmul.mubr.bf16.gmra.mxu0 %v1400
      %v1488 = vpop.f32.mrf.mxu0
      %v1489 = vadd.f32 %v1440, %v1488
      %v1490 = vpop.f32.mrf.mxu0
      %v1491 = vpop.f32.mrf.mxu0
      %v1492 = vadd.f32 %v1443, %v1491
      %v1493 = vpop.f32.mrf.mxu0
      %1494 = vmatprep.mubr.bf16.mxu0 0
      %1495 = vmatmul.mubr.bf16.gmra.mxu0 %v1403
      %v1496 = vpop.f32.mrf.mxu0
      %v1497 = vadd.f32 %v1448, %v1496
      %v1498 = vpop.f32.mrf.mxu0
      %v1499 = vpop.f32.mrf.mxu0
      %v1500 = vadd.f32 %v1451, %v1499
      %v1501 = vpop.f32.mrf.mxu0
      %1502 = vdwg.mxu0
      %v1503 = vld [vmem:[%s11] sm:$0x1]
      %v1505 = vlaneseq
      %v1506 = vshrl.u32 %v1505, 7
      %v1507 = vsub.s32 0, %v1506
      %v1508 = vrot.slane %v1503, %v1507
      %v1510 = vmul.f32 %v1489, %v1508
      %v1511 = vmul.f32 %v1492, %v1508
      %v1512 = vmul.f32 %v1497, %v1508
      %v1513 = vmul.f32 %v1500, %v1508
      %v1514 = vmax.f32 %v1510, 0.0
      %v1515 = vmax.f32 %v1511, 0.0
      %v1516 = vmax.f32 %v1512, 0.0
      %v1517 = vmax.f32 %v1513, 0.0
      %1522 = vrot.lane.b32.xlu0 %v1514, 7
      %v1523 = vpop.permute.xlu0 %1522
      %1524 = vrot.lane.b32.xlu0 %v1515, 7
      %v1525 = vpop.permute.xlu0 %1524
      %1526 = vrot.lane.b32.xlu0 %v1516, 7
      %v1527 = vpop.permute.xlu0 %1526
      %1528 = vrot.lane.b32.xlu0 %v1517, 7
      %v1529 = vpop.permute.xlu0 %1528
      %v1534 = vsel %vm1208, 0.0, %v1523
      %v1535 = vsel %vm1208, 0.0, %v1525
      %v1536 = vsel %vm1208, 0.0, %v1527
      %v1537 = vsel %vm1208, 0.0, %v1529
      %v1538 = vsel %vm1213, %v1534, 0.0
      %v1539 = vsel %vm1213, %v1535, 0.0
      %v1540 = vsel %vm1213, %v1536, 0.0
      %v1541 = vsel %vm1213, %v1537, 0.0
      %1546 = vrot.lane.b32.xlu0 %v1538, 127
      %v1547 = vpop.permute.xlu0 %1546
      %1548 = vrot.lane.b32.xlu0 %v1539, 127
      %v1549 = vpop.permute.xlu0 %1548
      %1550 = vrot.lane.b32.xlu0 %v1540, 127
      %v1551 = vpop.permute.xlu0 %1550
      %1552 = vrot.lane.b32.xlu0 %v1541, 127
      %v1553 = vpop.permute.xlu0 %1552
      %1558 = vrot.lane.b32.xlu0 %v1538, 126
      %v1559 = vpop.permute.xlu0 %1558
      %1560 = vrot.lane.b32.xlu0 %v1539, 126
      %v1561 = vpop.permute.xlu0 %1560
      %1562 = vrot.lane.b32.xlu0 %v1540, 126
      %v1563 = vpop.permute.xlu0 %1562
      %1564 = vrot.lane.b32.xlu0 %v1541, 126
      %v1565 = vpop.permute.xlu0 %1564
      %1570 = vrot.lane.b32.xlu0 %v1538, 122
      %v1571 = vpop.permute.xlu0 %1570
      %1572 = vrot.lane.b32.xlu0 %v1539, 122
      %v1573 = vpop.permute.xlu0 %1572
      %1574 = vrot.lane.b32.xlu0 %v1540, 122
      %v1575 = vpop.permute.xlu0 %1574
      %1576 = vrot.lane.b32.xlu0 %v1541, 122
      %v1577 = vpop.permute.xlu0 %1576
      %1582 = vrot.lane.b32.xlu0 %v1538, 121
      %v1583 = vpop.permute.xlu0 %1582
      %1584 = vrot.lane.b32.xlu0 %v1539, 121
      %v1585 = vpop.permute.xlu0 %1584
      %1586 = vrot.lane.b32.xlu0 %v1540, 121
      %v1587 = vpop.permute.xlu0 %1586
      %1588 = vrot.lane.b32.xlu0 %v1541, 121
      %v1589 = vpop.permute.xlu0 %1588
      %1594 = vrot.lane.b32.xlu0 %v1538, 120
      %v1595 = vpop.permute.xlu0 %1594
      %1596 = vrot.lane.b32.xlu0 %v1539, 120
      %v1597 = vpop.permute.xlu0 %1596
      %1598 = vrot.lane.b32.xlu0 %v1540, 120
      %v1599 = vpop.permute.xlu0 %1598
      %1600 = vrot.lane.b32.xlu0 %v1541, 120
      %v1601 = vpop.permute.xlu0 %1600
      %1606 = vrot.lane.b32.xlu0 %v1538, 116
      %v1607 = vpop.permute.xlu0 %1606
      %1608 = vrot.lane.b32.xlu0 %v1539, 116
      %v1609 = vpop.permute.xlu0 %1608
      %1610 = vrot.lane.b32.xlu0 %v1540, 116
      %v1611 = vpop.permute.xlu0 %1610
      %1612 = vrot.lane.b32.xlu0 %v1541, 116
      %v1613 = vpop.permute.xlu0 %1612
      %1618 = vrot.lane.b32.xlu0 %v1538, 115
      %v1619 = vpop.permute.xlu0 %1618
      %1620 = vrot.lane.b32.xlu0 %v1539, 115
      %v1621 = vpop.permute.xlu0 %1620
      %1622 = vrot.lane.b32.xlu0 %v1540, 115
      %v1623 = vpop.permute.xlu0 %1622
      %1624 = vrot.lane.b32.xlu0 %v1541, 115
      %v1625 = vpop.permute.xlu0 %1624
      %1630 = vrot.lane.b32.xlu0 %v1538, 114
      %v1631 = vpop.permute.xlu0 %1630
      %1632 = vrot.lane.b32.xlu0 %v1539, 114
      %v1633 = vpop.permute.xlu0 %1632
      %1634 = vrot.lane.b32.xlu0 %v1540, 114
      %v1635 = vpop.permute.xlu0 %1634
      %1636 = vrot.lane.b32.xlu0 %v1541, 114
      %v1637 = vpop.permute.xlu0 %1636
      %v1642 = vld [vmem:[%s7] sm:$0xff]
      %v1643 = vld [vmem:[%s7 + $0x8] sm:$0xf]
      %v1644 = vld [vmem:[%s7 + $0xc] sm:$0xff]
      %v1645 = vld [vmem:[%s7 + $0x14] sm:$0xf]
      %v1646 = vld [vmem:[%s7 + $0x18] sm:$0xff]
      %v1647 = vld [vmem:[%s7 + $0x20] sm:$0xf]
      %v1648 = vld [vmem:[%s7 + $0x24] sm:$0xff]
      %v1649 = vld [vmem:[%s7 + $0x2c] sm:$0xf]
      %v1650 = vpack.c.bf16 %v1539, %v1538
      %v1651 = vpack.c.bf16 %v1541, %v1540
      %v1652 = vpack.c.bf16 %v1549, %v1547
      %v1653 = vpack.c.bf16 %v1553, %v1551
      %v1654 = vpack.c.bf16 %v1561, %v1559
      %v1655 = vpack.c.bf16 %v1565, %v1563
      %v1656 = vpack.c.bf16 %v1573, %v1571
      %v1657 = vpack.c.bf16 %v1577, %v1575
      %v1658 = vpack.c.bf16 %v1585, %v1583
      %v1659 = vpack.c.bf16 %v1589, %v1587
      %v1660 = vpack.c.bf16 %v1597, %v1595
      %v1661 = vpack.c.bf16 %v1601, %v1599
      %v1662 = vpack.c.bf16 %v1609, %v1607
      %v1663 = vpack.c.bf16 %v1613, %v1611
      %v1664 = vpack.c.bf16 %v1621, %v1619
      %v1665 = vpack.c.bf16 %v1625, %v1623
      %v1666 = vpack.c.bf16 %v1633, %v1631
      %v1667 = vpack.c.bf16 %v1637, %v1635
      %v1668 = vld [vmem:[%s9] sm:$0xff]
      %v1669 = vld [vmem:[%s9 + $0x8] sm:$0xff]
      %v1670 = vld [vmem:[%s9 + $0x10] sm:$0xff]
      %v1671 = vld [vmem:[%s9 + $0x18] sm:$0xff]
      %1673 = vset.pattern.permute.xlu0 0
      %1674 = vperm.xlu0 %1673, %v1668
      %v1675 = vpop.permute.xlu0 %1674
      %1678 = vset.pattern.permute.xlu0 0
      %1679 = vperm.xlu0 %1678, %v1669
      %v1680 = vpop.permute.xlu0 %1679
      %1683 = vset.pattern.permute.xlu0 0
      %1684 = vperm.xlu0 %1683, %v1670
      %v1685 = vpop.permute.xlu0 %1684
      %1688 = vset.pattern.permute.xlu0 0
      %1689 = vperm.xlu0 %1688, %v1671
      %v1690 = vpop.permute.xlu0 %1689
      %v1700 = vunpack.c.l.b16 %v1642
      %v1701 = vunpack.c.h.b16 %v1642
      %v1702 = vunpack.c.l.b16 %v1643
      %v1703 = vunpack.c.l.b16 %v1644
      %v1704 = vunpack.c.h.b16 %v1644
      %v1705 = vunpack.c.l.b16 %v1645
      %v1706 = vunpack.c.l.b16 %v1646
      %v1707 = vunpack.c.h.b16 %v1646
      %v1708 = vunpack.c.l.b16 %v1647
      %v1709 = vunpack.c.l.b16 %v1648
      %v1710 = vunpack.c.h.b16 %v1648
      %v1711 = vunpack.c.l.b16 %v1649
      %v1712 = vpack.c.b16 %v1703, %v1700
      %v1713 = vpack.c.b16 %v1704, %v1701
      %v1714 = vpack.c.b16 %v1705, %v1702
      %v1715 = vpack.c.b16 %v1709, %v1706
      %v1716 = vpack.c.b16 %v1710, %v1707
      %v1717 = vpack.c.b16 %v1711, %v1708
      %v1723 = vsel %vm1398, %v1714, 0
      %v1726 = vsel %vm1398, %v1717, 0
      %1728 = vmatprep.subr.bf16.mxu0 0
      %1729 = vmatpush1.bf16.msra.mxu0 %v1657
      %1730 = vmatprep.subr.bf16.mxu0 0
      %1731 = vmatpush1.bf16.msra.mxu0 %v1656
      %1732 = vmatprep.subr.bf16.mxu0 0
      %1733 = vmatpush1.bf16.msra.mxu0 %v1655
      %1734 = vmatprep.subr.bf16.mxu0 0
      %1735 = vmatpush1.bf16.msra.mxu0 %v1654
      %1736 = vmatprep.subr.bf16.mxu0 0
      %1737 = vmatpush1.bf16.msra.mxu0 %v1653
      %1738 = vmatprep.subr.bf16.mxu0 0
      %1739 = vmatpush1.bf16.msra.mxu0 %v1652
      %1740 = vmatprep.subr.bf16.mxu0 0
      %1741 = vmatpush1.bf16.msra.mxu0 %v1651
      %1742 = vmatprep.subr.bf16.mxu0 0
      %1743 = vmatpush1.bf16.msra.mxu0 %v1650
      %1744 = vmatprep.subr.bf16.mxu0 0
      %1745 = vmatpush2.bf16.msra.mxu0 %v1665
      %1746 = vmatprep.subr.bf16.mxu0 0
      %1747 = vmatpush2.bf16.msra.mxu0 %v1664
      %1748 = vmatprep.subr.bf16.mxu0 0
      %1749 = vmatpush2.bf16.msra.mxu0 %v1663
      %1750 = vmatprep.subr.bf16.mxu0 0
      %1751 = vmatpush2.bf16.msra.mxu0 %v1662
      %1752 = vmatprep.subr.bf16.mxu0 0
      %1753 = vmatpush2.bf16.msra.mxu0 %v1661
      %1754 = vmatprep.subr.bf16.mxu0 0
      %1755 = vmatpush2.bf16.msra.mxu0 %v1660
      %1756 = vmatprep.subr.bf16.mxu0 0
      %1757 = vmatpush2.bf16.msra.mxu0 %v1659
      %1758 = vmatprep.subr.bf16.mxu0 0
      %1759 = vmatpush2.bf16.msra.mxu0 %v1658
      %1760 = vmatprep.mubr.bf16.mxu0 %v1713
      %1761 = vmatmul.mubr.bf16.gmra.mxu0 %v1712
      %v1762 = vpop.f32.mrf.mxu0
      %v1763 = vadd.f32 %v1675, %v1762
      %v1764 = vpop.f32.mrf.mxu0
      %v1765 = vpop.f32.mrf.mxu0
      %v1766 = vadd.f32 %v1680, %v1765
      %v1767 = vpop.f32.mrf.mxu0
      %1768 = vmatprep.mubr.bf16.mxu0 %v1716
      %1769 = vmatmul.mubr.bf16.gmra.mxu0 %v1715
      %v1770 = vpop.f32.mrf.mxu0
      %v1771 = vadd.f32 %v1685, %v1770
      %v1772 = vpop.f32.mrf.mxu0
      %v1773 = vpop.f32.mrf.mxu0
      %v1774 = vadd.f32 %v1690, %v1773
      %v1775 = vpop.f32.mrf.mxu0
      %1776 = vdwg.mxu0
      %1777 = vmatprep.subr.bf16.mxu0 0
      %1778 = vmatpush1.bf16.msra.mxu0 0
      %1779 = vmatprep.subr.bf16.mxu0 0
      %1780 = vmatpush1.bf16.msra.mxu0 0
      %1781 = vmatprep.subr.bf16.mxu0 0
      %1782 = vmatpush1.bf16.msra.mxu0 0
      %1783 = vmatprep.subr.bf16.mxu0 0
      %1784 = vmatpush1.bf16.msra.mxu0 0
      %1785 = vmatprep.subr.bf16.mxu0 0
      %1786 = vmatpush1.bf16.msra.mxu0 0
      %1787 = vmatprep.subr.bf16.mxu0 0
      %1788 = vmatpush1.bf16.msra.mxu0 0
      %1789 = vmatprep.subr.bf16.mxu0 0
      %1790 = vmatpush1.bf16.msra.mxu0 %v1667
      %1791 = vmatprep.subr.bf16.mxu0 0
      %1792 = vmatpush1.bf16.msra.mxu0 %v1666
      %1793 = vmatprep.subr.bf16.mxu0 0
      %1794 = vmatpush2.bf16.msra.mxu0 0
      %1795 = vmatprep.subr.bf16.mxu0 0
      %1796 = vmatpush2.bf16.msra.mxu0 0
      %1797 = vmatprep.subr.bf16.mxu0 0
      %1798 = vmatpush2.bf16.msra.mxu0 0
      %1799 = vmatprep.subr.bf16.mxu0 0
      %1800 = vmatpush2.bf16.msra.mxu0 0
      %1801 = vmatprep.subr.bf16.mxu0 0
      %1802 = vmatpush2.bf16.msra.mxu0 0
      %1803 = vmatprep.subr.bf16.mxu0 0
      %1804 = vmatpush2.bf16.msra.mxu0 0
      %1805 = vmatprep.subr.bf16.mxu0 0
      %1806 = vmatpush2.bf16.msra.mxu0 0
      %1807 = vmatprep.subr.bf16.mxu0 0
      %1808 = vmatpush2.bf16.msra.mxu0 0
      %1809 = vmatprep.mubr.bf16.mxu0 0
      %1810 = vmatmul.mubr.bf16.gmra.mxu0 %v1723
      %v1811 = vpop.f32.mrf.mxu0
      %v1812 = vadd.f32 %v1763, %v1811
      %v1813 = vpop.f32.mrf.mxu0
      %v1814 = vpop.f32.mrf.mxu0
      %v1815 = vadd.f32 %v1766, %v1814
      %v1816 = vpop.f32.mrf.mxu0
      %1817 = vmatprep.mubr.bf16.mxu0 0
      %1818 = vmatmul.mubr.bf16.gmra.mxu0 %v1726
      %v1819 = vpop.f32.mrf.mxu0
      %v1820 = vadd.f32 %v1771, %v1819
      %v1821 = vpop.f32.mrf.mxu0
      %v1822 = vpop.f32.mrf.mxu0
      %v1823 = vadd.f32 %v1774, %v1822
      %v1824 = vpop.f32.mrf.mxu0
      %1825 = vdwg.mxu0
      %v1826 = vmul.f32 %v1812, %v1508
      %v1827 = vmul.f32 %v1815, %v1508
      %v1828 = vmul.f32 %v1820, %v1508
      %v1829 = vmul.f32 %v1823, %v1508
      %v1830 = vadd.f32 %v1184, %v1826
      %v1831 = vadd.f32 %v1185, %v1827
      %v1832 = vadd.f32 %v1186, %v1828
      %v1833 = vadd.f32 %v1187, %v1829
      %v1834 = vmax.f32 %v1830, 0.0
      %v1835 = vmax.f32 %v1831, 0.0
      %v1836 = vmax.f32 %v1832, 0.0
      %v1837 = vmax.f32 %v1833, 0.0
      %1842 = vrot.lane.b32.xlu0 %v1834, 7
      %v1843 = vpop.permute.xlu0 %1842
      %1844 = vrot.lane.b32.xlu0 %v1835, 7
      %v1845 = vpop.permute.xlu0 %1844
      %1846 = vrot.lane.b32.xlu0 %v1836, 7
      %v1847 = vpop.permute.xlu0 %1846
      %1848 = vrot.lane.b32.xlu0 %v1837, 7
      %v1849 = vpop.permute.xlu0 %1848
      %v1854 = vsel %vm1208, 0.0, %v1843
      %v1855 = vsel %vm1208, 0.0, %v1845
      %v1856 = vsel %vm1208, 0.0, %v1847
      %v1857 = vsel %vm1208, 0.0, %v1849
      %v1858 = vsel %vm1213, %v1854, 0.0
      %v1859 = vsel %vm1213, %v1855, 0.0
      %v1860 = vsel %vm1213, %v1856, 0.0
      %v1861 = vsel %vm1213, %v1857, 0.0
      %1866 = vrot.lane.b32.xlu0 %v1858, 127
      %v1867 = vpop.permute.xlu0 %1866
      %1868 = vrot.lane.b32.xlu0 %v1859, 127
      %v1869 = vpop.permute.xlu0 %1868
      %1870 = vrot.lane.b32.xlu0 %v1860, 127
      %v1871 = vpop.permute.xlu0 %1870
      %1872 = vrot.lane.b32.xlu0 %v1861, 127
      %v1873 = vpop.permute.xlu0 %1872
      %1878 = vrot.lane.b32.xlu0 %v1858, 126
      %v1879 = vpop.permute.xlu0 %1878
      %1880 = vrot.lane.b32.xlu0 %v1859, 126
      %v1881 = vpop.permute.xlu0 %1880
      %1882 = vrot.lane.b32.xlu0 %v1860, 126
      %v1883 = vpop.permute.xlu0 %1882
      %1884 = vrot.lane.b32.xlu0 %v1861, 126
      %v1885 = vpop.permute.xlu0 %1884
      %1890 = vrot.lane.b32.xlu0 %v1858, 122
      %v1891 = vpop.permute.xlu0 %1890
      %1892 = vrot.lane.b32.xlu0 %v1859, 122
      %v1893 = vpop.permute.xlu0 %1892
      %1894 = vrot.lane.b32.xlu0 %v1860, 122
      %v1895 = vpop.permute.xlu0 %1894
      %1896 = vrot.lane.b32.xlu0 %v1861, 122
      %v1897 = vpop.permute.xlu0 %1896
      %1902 = vrot.lane.b32.xlu0 %v1858, 121
      %v1903 = vpop.permute.xlu0 %1902
      %1904 = vrot.lane.b32.xlu0 %v1859, 121
      %v1905 = vpop.permute.xlu0 %1904
      %1906 = vrot.lane.b32.xlu0 %v1860, 121
      %v1907 = vpop.permute.xlu0 %1906
      %1908 = vrot.lane.b32.xlu0 %v1861, 121
      %v1909 = vpop.permute.xlu0 %1908
      %1914 = vrot.lane.b32.xlu0 %v1858, 120
      %v1915 = vpop.permute.xlu0 %1914
      %1916 = vrot.lane.b32.xlu0 %v1859, 120
      %v1917 = vpop.permute.xlu0 %1916
      %1918 = vrot.lane.b32.xlu0 %v1860, 120
      %v1919 = vpop.permute.xlu0 %1918
      %1920 = vrot.lane.b32.xlu0 %v1861, 120
      %v1921 = vpop.permute.xlu0 %1920
      %1926 = vrot.lane.b32.xlu0 %v1858, 116
      %v1927 = vpop.permute.xlu0 %1926
      %1928 = vrot.lane.b32.xlu0 %v1859, 116
      %v1929 = vpop.permute.xlu0 %1928
      %1930 = vrot.lane.b32.xlu0 %v1860, 116
      %v1931 = vpop.permute.xlu0 %1930
      %1932 = vrot.lane.b32.xlu0 %v1861, 116
      %v1933 = vpop.permute.xlu0 %1932
      %1938 = vrot.lane.b32.xlu0 %v1858, 115
      %v1939 = vpop.permute.xlu0 %1938
      %1940 = vrot.lane.b32.xlu0 %v1859, 115
      %v1941 = vpop.permute.xlu0 %1940
      %1942 = vrot.lane.b32.xlu0 %v1860, 115
      %v1943 = vpop.permute.xlu0 %1942
      %1944 = vrot.lane.b32.xlu0 %v1861, 115
      %v1945 = vpop.permute.xlu0 %1944
      %1950 = vrot.lane.b32.xlu0 %v1858, 114
      %v1951 = vpop.permute.xlu0 %1950
      %1952 = vrot.lane.b32.xlu0 %v1859, 114
      %v1953 = vpop.permute.xlu0 %1952
      %1954 = vrot.lane.b32.xlu0 %v1860, 114
      %v1955 = vpop.permute.xlu0 %1954
      %1956 = vrot.lane.b32.xlu0 %v1861, 114
      %v1957 = vpop.permute.xlu0 %1956
      %v1962 = vld [vmem:[%s13] sm:$0xff]
      %v1963 = vld [vmem:[%s13 + $0x8] sm:$0xf]
      %v1964 = vld [vmem:[%s13 + $0xc] sm:$0xff]
      %v1965 = vld [vmem:[%s13 + $0x14] sm:$0xf]
      %v1966 = vld [vmem:[%s13 + $0x18] sm:$0xff]
      %v1967 = vld [vmem:[%s13 + $0x20] sm:$0xf]
      %v1968 = vld [vmem:[%s13 + $0x24] sm:$0xff]
      %v1969 = vld [vmem:[%s13 + $0x2c] sm:$0xf]
      %v1970 = vpack.c.bf16 %v1859, %v1858
      %v1971 = vpack.c.bf16 %v1861, %v1860
      %v1972 = vpack.c.bf16 %v1869, %v1867
      %v1973 = vpack.c.bf16 %v1873, %v1871
      %v1974 = vpack.c.bf16 %v1881, %v1879
      %v1975 = vpack.c.bf16 %v1885, %v1883
      %v1976 = vpack.c.bf16 %v1893, %v1891
      %v1977 = vpack.c.bf16 %v1897, %v1895
      %v1978 = vpack.c.bf16 %v1905, %v1903
      %v1979 = vpack.c.bf16 %v1909, %v1907
      %v1980 = vpack.c.bf16 %v1917, %v1915
      %v1981 = vpack.c.bf16 %v1921, %v1919
      %v1982 = vpack.c.bf16 %v1929, %v1927
      %v1983 = vpack.c.bf16 %v1933, %v1931
      %v1984 = vpack.c.bf16 %v1941, %v1939
      %v1985 = vpack.c.bf16 %v1945, %v1943
      %v1986 = vpack.c.bf16 %v1953, %v1951
      %v1987 = vpack.c.bf16 %v1957, %v1955
      %v1988 = vld [vmem:[%s15] sm:$0xff]
      %v1989 = vld [vmem:[%s15 + $0x8] sm:$0xff]
      %v1990 = vld [vmem:[%s15 + $0x10] sm:$0xff]
      %v1991 = vld [vmem:[%s15 + $0x18] sm:$0xff]
      %1993 = vset.pattern.permute.xlu0 0
      %1994 = vperm.xlu0 %1993, %v1988
      %v1995 = vpop.permute.xlu0 %1994
      %1998 = vset.pattern.permute.xlu0 0
      %1999 = vperm.xlu0 %1998, %v1989
      %v2000 = vpop.permute.xlu0 %1999
      %2003 = vset.pattern.permute.xlu0 0
      %2004 = vperm.xlu0 %2003, %v1990
      %v2005 = vpop.permute.xlu0 %2004
      %2008 = vset.pattern.permute.xlu0 0
      %2009 = vperm.xlu0 %2008, %v1991
      %v2010 = vpop.permute.xlu0 %2009
      %v2020 = vunpack.c.l.b16 %v1962
      %v2021 = vunpack.c.h.b16 %v1962
      %v2022 = vunpack.c.l.b16 %v1963
      %v2023 = vunpack.c.l.b16 %v1964
      %v2024 = vunpack.c.h.b16 %v1964
      %v2025 = vunpack.c.l.b16 %v1965
      %v2026 = vunpack.c.l.b16 %v1966
      %v2027 = vunpack.c.h.b16 %v1966
      %v2028 = vunpack.c.l.b16 %v1967
      %v2029 = vunpack.c.l.b16 %v1968
      %v2030 = vunpack.c.h.b16 %v1968
      %v2031 = vunpack.c.l.b16 %v1969
      %v2032 = vpack.c.b16 %v2023, %v2020
      %v2033 = vpack.c.b16 %v2024, %v2021
      %v2034 = vpack.c.b16 %v2025, %v2022
      %v2035 = vpack.c.b16 %v2029, %v2026
      %v2036 = vpack.c.b16 %v2030, %v2027
      %v2037 = vpack.c.b16 %v2031, %v2028
      %v2043 = vsel %vm1398, %v2034, 0
      %v2046 = vsel %vm1398, %v2037, 0
      %2048 = vmatprep.subr.bf16.mxu0 0
      %2049 = vmatpush1.bf16.msra.mxu0 %v1977
      %2050 = vmatprep.subr.bf16.mxu0 0
      %2051 = vmatpush1.bf16.msra.mxu0 %v1976
      %2052 = vmatprep.subr.bf16.mxu0 0
      %2053 = vmatpush1.bf16.msra.mxu0 %v1975
      %2054 = vmatprep.subr.bf16.mxu0 0
      %2055 = vmatpush1.bf16.msra.mxu0 %v1974
      %2056 = vmatprep.subr.bf16.mxu0 0
      %2057 = vmatpush1.bf16.msra.mxu0 %v1973
      %2058 = vmatprep.subr.bf16.mxu0 0
      %2059 = vmatpush1.bf16.msra.mxu0 %v1972
      %2060 = vmatprep.subr.bf16.mxu0 0
      %2061 = vmatpush1.bf16.msra.mxu0 %v1971
      %2062 = vmatprep.subr.bf16.mxu0 0
      %2063 = vmatpush1.bf16.msra.mxu0 %v1970
      %2064 = vmatprep.subr.bf16.mxu0 0
      %2065 = vmatpush2.bf16.msra.mxu0 %v1985
      %2066 = vmatprep.subr.bf16.mxu0 0
      %2067 = vmatpush2.bf16.msra.mxu0 %v1984
      %2068 = vmatprep.subr.bf16.mxu0 0
      %2069 = vmatpush2.bf16.msra.mxu0 %v1983
      %2070 = vmatprep.subr.bf16.mxu0 0
      %2071 = vmatpush2.bf16.msra.mxu0 %v1982
      %2072 = vmatprep.subr.bf16.mxu0 0
      %2073 = vmatpush2.bf16.msra.mxu0 %v1981
      %2074 = vmatprep.subr.bf16.mxu0 0
      %2075 = vmatpush2.bf16.msra.mxu0 %v1980
      %2076 = vmatprep.subr.bf16.mxu0 0
      %2077 = vmatpush2.bf16.msra.mxu0 %v1979
      %2078 = vmatprep.subr.bf16.mxu0 0
      %2079 = vmatpush2.bf16.msra.mxu0 %v1978
      %2080 = vmatprep.mubr.bf16.mxu0 %v2033
      %2081 = vmatmul.mubr.bf16.gmra.mxu0 %v2032
      %v2082 = vpop.f32.mrf.mxu0
      %v2083 = vadd.f32 %v1995, %v2082
      %v2084 = vpop.f32.mrf.mxu0
      %v2085 = vpop.f32.mrf.mxu0
      %v2086 = vadd.f32 %v2000, %v2085
      %v2087 = vpop.f32.mrf.mxu0
      %2088 = vmatprep.mubr.bf16.mxu0 %v2036
      %2089 = vmatmul.mubr.bf16.gmra.mxu0 %v2035
      %v2090 = vpop.f32.mrf.mxu0
      %v2091 = vadd.f32 %v2005, %v2090
      %v2092 = vpop.f32.mrf.mxu0
      %v2093 = vpop.f32.mrf.mxu0
      %v2094 = vadd.f32 %v2010, %v2093
      %v2095 = vpop.f32.mrf.mxu0
      %2096 = vdwg.mxu0
      %2097 = vmatprep.subr.bf16.mxu0 0
      %2098 = vmatpush1.bf16.msra.mxu0 0
      %2099 = vmatprep.subr.bf16.mxu0 0
      %2100 = vmatpush1.bf16.msra.mxu0 0
      %2101 = vmatprep.subr.bf16.mxu0 0
      %2102 = vmatpush1.bf16.msra.mxu0 0
      %2103 = vmatprep.subr.bf16.mxu0 0
      %2104 = vmatpush1.bf16.msra.mxu0 0
      %2105 = vmatprep.subr.bf16.mxu0 0
      %2106 = vmatpush1.bf16.msra.mxu0 0
      %2107 = vmatprep.subr.bf16.mxu0 0
      %2108 = vmatpush1.bf16.msra.mxu0 0
      %2109 = vmatprep.subr.bf16.mxu0 0
      %2110 = vmatpush1.bf16.msra.mxu0 %v1987
      %2111 = vmatprep.subr.bf16.mxu0 0
      %2112 = vmatpush1.bf16.msra.mxu0 %v1986
      %2113 = vmatprep.subr.bf16.mxu0 0
      %2114 = vmatpush2.bf16.msra.mxu0 0
      %2115 = vmatprep.subr.bf16.mxu0 0
      %2116 = vmatpush2.bf16.msra.mxu0 0
      %2117 = vmatprep.subr.bf16.mxu0 0
      %2118 = vmatpush2.bf16.msra.mxu0 0
      %2119 = vmatprep.subr.bf16.mxu0 0
      %2120 = vmatpush2.bf16.msra.mxu0 0
      %2121 = vmatprep.subr.bf16.mxu0 0
      %2122 = vmatpush2.bf16.msra.mxu0 0
      %2123 = vmatprep.subr.bf16.mxu0 0
      %2124 = vmatpush2.bf16.msra.mxu0 0
      %2125 = vmatprep.subr.bf16.mxu0 0
      %2126 = vmatpush2.bf16.msra.mxu0 0
      %2127 = vmatprep.subr.bf16.mxu0 0
      %2128 = vmatpush2.bf16.msra.mxu0 0
      %2129 = vmatprep.mubr.bf16.mxu0 0
      %2130 = vmatmul.mubr.bf16.gmra.mxu0 %v2043
      %v2131 = vpop.f32.mrf.mxu0
      %v2132 = vadd.f32 %v2083, %v2131
      %v2133 = vpop.f32.mrf.mxu0
      %v2134 = vpop.f32.mrf.mxu0
      %v2135 = vadd.f32 %v2086, %v2134
      %v2136 = vpop.f32.mrf.mxu0
      %2137 = vmatprep.mubr.bf16.mxu0 0
      %2138 = vmatmul.mubr.bf16.gmra.mxu0 %v2046
      %v2139 = vpop.f32.mrf.mxu0
      %v2140 = vadd.f32 %v2091, %v2139
      %v2141 = vpop.f32.mrf.mxu0
      %v2142 = vpop.f32.mrf.mxu0
      %v2143 = vadd.f32 %v2094, %v2142
      %v2144 = vpop.f32.mrf.mxu0
      %2145 = vdwg.mxu0
      %v2146 = vld [vmem:[%s17] sm:$0x1]
      %v2148 = vlaneseq
      %v2149 = vshrl.u32 %v2148, 7
      %v2150 = vsub.s32 0, %v2149
      %v2151 = vrot.slane %v2146, %v2150
      %v2153 = vmul.f32 %v2132, %v2151
      %v2154 = vmul.f32 %v2135, %v2151
      %v2155 = vmul.f32 %v2140, %v2151
      %v2156 = vmul.f32 %v2143, %v2151
      %v2157 = vmax.f32 %v2153, 0.0
      %v2158 = vmax.f32 %v2154, 0.0
      %v2159 = vmax.f32 %v2155, 0.0
      %v2160 = vmax.f32 %v2156, 0.0
      %v2161 = vpack.c.bf16 %v1831, %v1830
      %v2162 = vpack.c.bf16 %v1833, %v1832
      %v2163 = vpack.c.bf16 %v2158, %v2157
      %v2164 = vpack.c.bf16 %v2160, %v2159
      %v2165 = vld [vmem:[%s23] sm:$0xf]
      %v2166 = vld [vmem:[%s23 + $0x4] sm:$0xf]
      %v2167 = vld [vmem:[%s23 + $0x8] sm:$0xf]
      %v2168 = vld [vmem:[%s23 + $0xc] sm:$0xf]
      %v2169 = vld [vmem:[%s23 + $0x10] sm:$0x3]
      %v2175 = vunpack.c.l.b16 %v2165
      %v2176 = vunpack.c.l.b16 %v2166
      %v2177 = vunpack.c.l.b16 %v2167
      %v2178 = vunpack.c.l.b16 %v2168
      %v2179 = vunpack.c.l.b16 %v2169
      %v2180 = vpack.c.b16 %v2176, %v2175
      %v2181 = vpack.c.b16 %v2178, %v2177
      %v2182 = vpack.c.b16 %v2179, %v2179
      %vm2185 = vcmask 293888
      %v2187 = vsel %vm2185, %v2161, 0
      %v2190 = vsel %vm2185, %v2162, 0
      %v2193 = vsel %vm2185, %v2163, 0
      %v2196 = vsel %vm2185, %v2164, 0
      %vm2198 = vcmask 1041408
      %v2200 = vsel %vm2198, %v2182, 0
      %2202 = vmatprep.subr.bf16.mxu0 0
      %2203 = vmatpush1.bf16.msra.mxu0 0
      %2204 = vmatprep.subr.bf16.mxu0 0
      %2205 = vmatpush1.bf16.msra.mxu0 0
      %2206 = vmatprep.subr.bf16.mxu0 0
      %2207 = vmatpush1.bf16.msra.mxu0 0
      %2208 = vmatprep.subr.bf16.mxu0 0
      %2209 = vmatpush1.bf16.msra.mxu0 0
      %2210 = vmatprep.subr.bf16.mxu0 0
      %2211 = vmatpush1.bf16.msra.mxu0 0
      %2212 = vmatprep.subr.bf16.mxu0 0
      %2213 = vmatpush1.bf16.msra.mxu0 %v2200
      %2214 = vmatprep.subr.bf16.mxu0 0
      %2215 = vmatpush1.bf16.msra.mxu0 %v2181
      %2216 = vmatprep.subr.bf16.mxu0 0
      %2217 = vmatpush1.bf16.msra.mxu0 %v2180
      %2218 = vmatprep.subr.bf16.mxu0 0
      %2219 = vmatpush2.bf16.msra.mxu0 0
      %2220 = vmatprep.subr.bf16.mxu0 0
      %2221 = vmatpush2.bf16.msra.mxu0 0
      %2222 = vmatprep.subr.bf16.mxu0 0
      %2223 = vmatpush2.bf16.msra.mxu0 0
      %2224 = vmatprep.subr.bf16.mxu0 0
      %2225 = vmatpush2.bf16.msra.mxu0 0
      %2226 = vmatprep.subr.bf16.mxu0 0
      %2227 = vmatpush2.bf16.msra.mxu0 0
      %2228 = vmatprep.subr.bf16.mxu0 0
      %2229 = vmatpush2.bf16.msra.mxu0 0
      %2230 = vmatprep.subr.bf16.mxu0 0
      %2231 = vmatpush2.bf16.msra.mxu0 0
      %2232 = vmatprep.subr.bf16.mxu0 0
      %2233 = vmatpush2.bf16.msra.mxu0 0
      %2234 = vmatprep.mubr.bf16.mxu0 0
      %2235 = vmatmul.mubr.bf16.gmra.mxu0 %v2187
      %v2236 = vpop.f32.mrf.mxu0
      %v2237 = vadd.f32 0.0, %v2236
      %v2238 = vpop.f32.mrf.mxu0
      %v2239 = vpop.f32.mrf.mxu0
      %v2240 = vadd.f32 0.0, %v2239
      %v2241 = vpop.f32.mrf.mxu0
      %2242 = vmatprep.mubr.bf16.mxu0 0
      %2243 = vmatmul.mubr.bf16.gmra.mxu0 %v2190
      %v2244 = vpop.f32.mrf.mxu0
      %v2245 = vadd.f32 0.0, %v2244
      %v2246 = vpop.f32.mrf.mxu0
      %v2247 = vpop.f32.mrf.mxu0
      %v2248 = vadd.f32 0.0, %v2247
      %v2249 = vpop.f32.mrf.mxu0
      %2250 = vmatprep.mubr.bf16.mxu0 0
      %2251 = vmatmul.mubr.bf16.gmra.mxu0 %v2193
      %v2252 = vpop.f32.mrf.mxu0
      %v2253 = vadd.f32 0.0, %v2252
      %v2254 = vpop.f32.mrf.mxu0
      %v2255 = vpop.f32.mrf.mxu0
      %v2256 = vadd.f32 0.0, %v2255
      %v2257 = vpop.f32.mrf.mxu0
      %2258 = vmatprep.mubr.bf16.mxu0 0
      %2259 = vmatmul.mubr.bf16.gmra.mxu0 %v2196
      %v2260 = vpop.f32.mrf.mxu0
      %v2261 = vadd.f32 0.0, %v2260
      %v2262 = vpop.f32.mrf.mxu0
      %v2263 = vpop.f32.mrf.mxu0
      %v2264 = vadd.f32 0.0, %v2263
      %v2265 = vpop.f32.mrf.mxu0
      %2266 = vdwg.mxu0
      %2275 = vrot.lane.b32.xlu0 %v2237, 127
      %v2276 = vpop.permute.xlu0 %2275
      %2277 = vrot.lane.b32.xlu0 %v2240, 127
      %v2278 = vpop.permute.xlu0 %2277
      %2279 = vrot.lane.b32.xlu0 %v2245, 127
      %v2280 = vpop.permute.xlu0 %2279
      %2281 = vrot.lane.b32.xlu0 %v2248, 127
      %v2282 = vpop.permute.xlu0 %2281
      %2283 = vrot.lane.b32.xlu0 %v2253, 127
      %v2284 = vpop.permute.xlu0 %2283
      %2285 = vrot.lane.b32.xlu0 %v2256, 127
      %v2286 = vpop.permute.xlu0 %2285
      %2287 = vrot.lane.b32.xlu0 %v2261, 127
      %v2288 = vpop.permute.xlu0 %2287
      %2289 = vrot.lane.b32.xlu0 %v2264, 127
      %v2290 = vpop.permute.xlu0 %2289
      %2299 = vrot.lane.b32.xlu0 %v2237, 126
      %v2300 = vpop.permute.xlu0 %2299
      %2301 = vrot.lane.b32.xlu0 %v2240, 126
      %v2302 = vpop.permute.xlu0 %2301
      %2303 = vrot.lane.b32.xlu0 %v2245, 126
      %v2304 = vpop.permute.xlu0 %2303
      %2305 = vrot.lane.b32.xlu0 %v2248, 126
      %v2306 = vpop.permute.xlu0 %2305
      %2307 = vrot.lane.b32.xlu0 %v2253, 126
      %v2308 = vpop.permute.xlu0 %2307
      %2309 = vrot.lane.b32.xlu0 %v2256, 126
      %v2310 = vpop.permute.xlu0 %2309
      %2311 = vrot.lane.b32.xlu0 %v2261, 126
      %v2312 = vpop.permute.xlu0 %2311
      %2313 = vrot.lane.b32.xlu0 %v2264, 126
      %v2314 = vpop.permute.xlu0 %2313
      %2323 = vrot.lane.b32.xlu0 %v2237, 119
      %v2324 = vpop.permute.xlu0 %2323
      %2325 = vrot.lane.b32.xlu0 %v2240, 119
      %v2326 = vpop.permute.xlu0 %2325
      %2327 = vrot.lane.b32.xlu0 %v2245, 119
      %v2328 = vpop.permute.xlu0 %2327
      %2329 = vrot.lane.b32.xlu0 %v2248, 119
      %v2330 = vpop.permute.xlu0 %2329
      %2331 = vrot.lane.b32.xlu0 %v2253, 119
      %v2332 = vpop.permute.xlu0 %2331
      %2333 = vrot.lane.b32.xlu0 %v2256, 119
      %v2334 = vpop.permute.xlu0 %2333
      %2335 = vrot.lane.b32.xlu0 %v2261, 119
      %v2336 = vpop.permute.xlu0 %2335
      %2337 = vrot.lane.b32.xlu0 %v2264, 119
      %v2338 = vpop.permute.xlu0 %2337
      %2347 = vrot.lane.b32.xlu0 %v2237, 118
      %v2348 = vpop.permute.xlu0 %2347
      %2349 = vrot.lane.b32.xlu0 %v2240, 118
      %v2350 = vpop.permute.xlu0 %2349
      %2351 = vrot.lane.b32.xlu0 %v2245, 118
      %v2352 = vpop.permute.xlu0 %2351
      %2353 = vrot.lane.b32.xlu0 %v2248, 118
      %v2354 = vpop.permute.xlu0 %2353
      %2355 = vrot.lane.b32.xlu0 %v2253, 118
      %v2356 = vpop.permute.xlu0 %2355
      %2357 = vrot.lane.b32.xlu0 %v2256, 118
      %v2358 = vpop.permute.xlu0 %2357
      %2359 = vrot.lane.b32.xlu0 %v2261, 118
      %v2360 = vpop.permute.xlu0 %2359
      %2361 = vrot.lane.b32.xlu0 %v2264, 118
      %v2362 = vpop.permute.xlu0 %2361
      %2371 = vrot.lane.b32.xlu0 %v2237, 117
      %v2372 = vpop.permute.xlu0 %2371
      %2373 = vrot.lane.b32.xlu0 %v2240, 117
      %v2374 = vpop.permute.xlu0 %2373
      %2375 = vrot.lane.b32.xlu0 %v2245, 117
      %v2376 = vpop.permute.xlu0 %2375
      %2377 = vrot.lane.b32.xlu0 %v2248, 117
      %v2378 = vpop.permute.xlu0 %2377
      %2379 = vrot.lane.b32.xlu0 %v2253, 117
      %v2380 = vpop.permute.xlu0 %2379
      %2381 = vrot.lane.b32.xlu0 %v2256, 117
      %v2382 = vpop.permute.xlu0 %2381
      %2383 = vrot.lane.b32.xlu0 %v2261, 117
      %v2384 = vpop.permute.xlu0 %2383
      %2385 = vrot.lane.b32.xlu0 %v2264, 117
      %v2386 = vpop.permute.xlu0 %2385
      %2395 = vrot.lane.b32.xlu0 %v2237, 110
      %v2396 = vpop.permute.xlu0 %2395
      %2397 = vrot.lane.b32.xlu0 %v2240, 110
      %v2398 = vpop.permute.xlu0 %2397
      %2399 = vrot.lane.b32.xlu0 %v2245, 110
      %v2400 = vpop.permute.xlu0 %2399
      %2401 = vrot.lane.b32.xlu0 %v2248, 110
      %v2402 = vpop.permute.xlu0 %2401
      %2403 = vrot.lane.b32.xlu0 %v2253, 110
      %v2404 = vpop.permute.xlu0 %2403
      %2405 = vrot.lane.b32.xlu0 %v2256, 110
      %v2406 = vpop.permute.xlu0 %2405
      %2407 = vrot.lane.b32.xlu0 %v2261, 110
      %v2408 = vpop.permute.xlu0 %2407
      %2409 = vrot.lane.b32.xlu0 %v2264, 110
      %v2410 = vpop.permute.xlu0 %2409
      %2419 = vrot.lane.b32.xlu0 %v2237, 109
      %v2420 = vpop.permute.xlu0 %2419
      %2421 = vrot.lane.b32.xlu0 %v2240, 109
      %v2422 = vpop.permute.xlu0 %2421
      %2423 = vrot.lane.b32.xlu0 %v2245, 109
      %v2424 = vpop.permute.xlu0 %2423
      %2425 = vrot.lane.b32.xlu0 %v2248, 109
      %v2426 = vpop.permute.xlu0 %2425
      %2427 = vrot.lane.b32.xlu0 %v2253, 109
      %v2428 = vpop.permute.xlu0 %2427
      %2429 = vrot.lane.b32.xlu0 %v2256, 109
      %v2430 = vpop.permute.xlu0 %2429
      %2431 = vrot.lane.b32.xlu0 %v2261, 109
      %v2432 = vpop.permute.xlu0 %2431
      %2433 = vrot.lane.b32.xlu0 %v2264, 109
      %v2434 = vpop.permute.xlu0 %2433
      %2443 = vrot.lane.b32.xlu0 %v2237, 108
      %v2444 = vpop.permute.xlu0 %2443
      %2445 = vrot.lane.b32.xlu0 %v2240, 108
      %v2446 = vpop.permute.xlu0 %2445
      %2447 = vrot.lane.b32.xlu0 %v2245, 108
      %v2448 = vpop.permute.xlu0 %2447
      %2449 = vrot.lane.b32.xlu0 %v2248, 108
      %v2450 = vpop.permute.xlu0 %2449
      %2451 = vrot.lane.b32.xlu0 %v2253, 108
      %v2452 = vpop.permute.xlu0 %2451
      %2453 = vrot.lane.b32.xlu0 %v2256, 108
      %v2454 = vpop.permute.xlu0 %2453
      %2455 = vrot.lane.b32.xlu0 %v2261, 108
      %v2456 = vpop.permute.xlu0 %2455
      %2457 = vrot.lane.b32.xlu0 %v2264, 108
      %v2458 = vpop.permute.xlu0 %2457
      %v2467 = vld [vmem:[%s19] sm:$0xff]
      %v2468 = vld [vmem:[%s19 + $0x8] sm:$0xff]
      %v2469 = vld [vmem:[%s19 + $0x10] sm:$0xf]
      %v2470 = vld [vmem:[%s19 + $0x14] sm:$0xff]
      %v2471 = vld [vmem:[%s19 + $0x1c] sm:$0xff]
      %v2472 = vld [vmem:[%s19 + $0x24] sm:$0xf]
      %v2473 = vpack.c.bf16 %v2240, %v2237
      %v2474 = vpack.c.bf16 %v2248, %v2245
      %v2475 = vpack.c.bf16 %v2256, %v2253
      %v2476 = vpack.c.bf16 %v2264, %v2261
      %v2477 = vpack.c.bf16 %v2278, %v2276
      %v2478 = vpack.c.bf16 %v2282, %v2280
      %v2479 = vpack.c.bf16 %v2286, %v2284
      %v2480 = vpack.c.bf16 %v2290, %v2288
      %v2481 = vpack.c.bf16 %v2302, %v2300
      %v2482 = vpack.c.bf16 %v2306, %v2304
      %v2483 = vpack.c.bf16 %v2310, %v2308
      %v2484 = vpack.c.bf16 %v2314, %v2312
      %v2485 = vpack.c.bf16 %v2326, %v2324
      %v2486 = vpack.c.bf16 %v2330, %v2328
      %v2487 = vpack.c.bf16 %v2334, %v2332
      %v2488 = vpack.c.bf16 %v2338, %v2336
      %v2489 = vpack.c.bf16 %v2350, %v2348
      %v2490 = vpack.c.bf16 %v2354, %v2352
      %v2491 = vpack.c.bf16 %v2358, %v2356
      %v2492 = vpack.c.bf16 %v2362, %v2360
      %v2493 = vpack.c.bf16 %v2374, %v2372
      %v2494 = vpack.c.bf16 %v2378, %v2376
      %v2495 = vpack.c.bf16 %v2382, %v2380
      %v2496 = vpack.c.bf16 %v2386, %v2384
      %v2497 = vpack.c.bf16 %v2398, %v2396
      %v2498 = vpack.c.bf16 %v2402, %v2400
      %v2499 = vpack.c.bf16 %v2406, %v2404
      %v2500 = vpack.c.bf16 %v2410, %v2408
      %v2501 = vpack.c.bf16 %v2422, %v2420
      %v2502 = vpack.c.bf16 %v2426, %v2424
      %v2503 = vpack.c.bf16 %v2430, %v2428
      %v2504 = vpack.c.bf16 %v2434, %v2432
      %v2505 = vpack.c.bf16 %v2446, %v2444
      %v2506 = vpack.c.bf16 %v2450, %v2448
      %v2507 = vpack.c.bf16 %v2454, %v2452
      %v2508 = vpack.c.bf16 %v2458, %v2456
      %v2509 = vld [vmem:[%s21] sm:$0xff]
      %v2510 = vld [vmem:[%s21 + $0x8] sm:$0xff]
      %2512 = vset.pattern.permute.xlu0 0
      %2513 = vperm.xlu0 %2512, %v2509
      %v2514 = vpop.permute.xlu0 %2513
      %2517 = vset.pattern.permute.xlu0 0
      %2518 = vperm.xlu0 %2517, %v2510
      %v2519 = vpop.permute.xlu0 %2518
      %v2527 = vunpack.c.l.b16 %v2467
      %v2528 = vunpack.c.h.b16 %v2467
      %v2529 = vunpack.c.l.b16 %v2468
      %v2530 = vunpack.c.h.b16 %v2468
      %v2531 = vunpack.c.l.b16 %v2469
      %v2532 = vunpack.c.l.b16 %v2470
      %v2533 = vunpack.c.h.b16 %v2470
      %v2534 = vunpack.c.l.b16 %v2471
      %v2535 = vunpack.c.h.b16 %v2471
      %v2536 = vunpack.c.l.b16 %v2472
      %v2537 = vpack.c.b16 %v2532, %v2527
      %v2538 = vpack.c.b16 %v2533, %v2528
      %v2539 = vpack.c.b16 %v2534, %v2529
      %v2540 = vpack.c.b16 %v2535, %v2530
      %v2541 = vpack.c.b16 %v2536, %v2531
      %vm2546 = vcmask 523264
      %v2548 = vsel %vm2546, %v2541, 0
      %2550 = vmatprep.subr.bf16.mxu0 0
      %2551 = vmatpush1.bf16.msra.mxu0 %v2480
      %2552 = vmatprep.subr.bf16.mxu0 0
      %2553 = vmatpush1.bf16.msra.mxu0 %v2479
      %2554 = vmatprep.subr.bf16.mxu0 0
      %2555 = vmatpush1.bf16.msra.mxu0 %v2478
      %2556 = vmatprep.subr.bf16.mxu0 0
      %2557 = vmatpush1.bf16.msra.mxu0 %v2477
      %2558 = vmatprep.subr.bf16.mxu0 0
      %2559 = vmatpush1.bf16.msra.mxu0 %v2476
      %2560 = vmatprep.subr.bf16.mxu0 0
      %2561 = vmatpush1.bf16.msra.mxu0 %v2475
      %2562 = vmatprep.subr.bf16.mxu0 0
      %2563 = vmatpush1.bf16.msra.mxu0 %v2474
      %2564 = vmatprep.subr.bf16.mxu0 0
      %2565 = vmatpush1.bf16.msra.mxu0 %v2473
      %2566 = vmatprep.subr.bf16.mxu0 0
      %2567 = vmatpush2.bf16.msra.mxu0 %v2488
      %2568 = vmatprep.subr.bf16.mxu0 0
      %2569 = vmatpush2.bf16.msra.mxu0 %v2487
      %2570 = vmatprep.subr.bf16.mxu0 0
      %2571 = vmatpush2.bf16.msra.mxu0 %v2486
      %2572 = vmatprep.subr.bf16.mxu0 0
      %2573 = vmatpush2.bf16.msra.mxu0 %v2485
      %2574 = vmatprep.subr.bf16.mxu0 0
      %2575 = vmatpush2.bf16.msra.mxu0 %v2484
      %2576 = vmatprep.subr.bf16.mxu0 0
      %2577 = vmatpush2.bf16.msra.mxu0 %v2483
      %2578 = vmatprep.subr.bf16.mxu0 0
      %2579 = vmatpush2.bf16.msra.mxu0 %v2482
      %2580 = vmatprep.subr.bf16.mxu0 0
      %2581 = vmatpush2.bf16.msra.mxu0 %v2481
      %2582 = vmatprep.mubr.bf16.mxu0 %v2538
      %2583 = vmatmul.mubr.bf16.gmra.mxu0 %v2537
      %v2584 = vpop.f32.mrf.mxu0
      %v2585 = vadd.f32 %v2514, %v2584
      %v2586 = vpop.f32.mrf.mxu0
      %v2587 = vpop.f32.mrf.mxu0
      %v2588 = vadd.f32 %v2519, %v2587
      %v2589 = vpop.f32.mrf.mxu0
      %2590 = vdwg.mxu0
      %2591 = vmatprep.subr.bf16.mxu0 0
      %2592 = vmatpush1.bf16.msra.mxu0 %v2496
      %2593 = vmatprep.subr.bf16.mxu0 0
      %2594 = vmatpush1.bf16.msra.mxu0 %v2495
      %2595 = vmatprep.subr.bf16.mxu0 0
      %2596 = vmatpush1.bf16.msra.mxu0 %v2494
      %2597 = vmatprep.subr.bf16.mxu0 0
      %2598 = vmatpush1.bf16.msra.mxu0 %v2493
      %2599 = vmatprep.subr.bf16.mxu0 0
      %2600 = vmatpush1.bf16.msra.mxu0 %v2492
      %2601 = vmatprep.subr.bf16.mxu0 0
      %2602 = vmatpush1.bf16.msra.mxu0 %v2491
      %2603 = vmatprep.subr.bf16.mxu0 0
      %2604 = vmatpush1.bf16.msra.mxu0 %v2490
      %2605 = vmatprep.subr.bf16.mxu0 0
      %2606 = vmatpush1.bf16.msra.mxu0 %v2489
      %2607 = vmatprep.subr.bf16.mxu0 0
      %2608 = vmatpush2.bf16.msra.mxu0 %v2504
      %2609 = vmatprep.subr.bf16.mxu0 0
      %2610 = vmatpush2.bf16.msra.mxu0 %v2503
      %2611 = vmatprep.subr.bf16.mxu0 0
      %2612 = vmatpush2.bf16.msra.mxu0 %v2502
      %2613 = vmatprep.subr.bf16.mxu0 0
      %2614 = vmatpush2.bf16.msra.mxu0 %v2501
      %2615 = vmatprep.subr.bf16.mxu0 0
      %2616 = vmatpush2.bf16.msra.mxu0 %v2500
      %2617 = vmatprep.subr.bf16.mxu0 0
      %2618 = vmatpush2.bf16.msra.mxu0 %v2499
      %2619 = vmatprep.subr.bf16.mxu0 0
      %2620 = vmatpush2.bf16.msra.mxu0 %v2498
      %2621 = vmatprep.subr.bf16.mxu0 0
      %2622 = vmatpush2.bf16.msra.mxu0 %v2497
      %2623 = vmatprep.mubr.bf16.mxu0 %v2540
      %2624 = vmatmul.mubr.bf16.gmra.mxu0 %v2539
      %v2625 = vpop.f32.mrf.mxu0
      %v2626 = vadd.f32 %v2585, %v2625
      %v2627 = vpop.f32.mrf.mxu0
      %v2628 = vpop.f32.mrf.mxu0
      %v2629 = vadd.f32 %v2588, %v2628
      %v2630 = vpop.f32.mrf.mxu0
      %2631 = vdwg.mxu0
      %2632 = vmatprep.subr.bf16.mxu0 0
      %2633 = vmatpush1.bf16.msra.mxu0 0
      %2634 = vmatprep.subr.bf16.mxu0 0
      %2635 = vmatpush1.bf16.msra.mxu0 0
      %2636 = vmatprep.subr.bf16.mxu0 0
      %2637 = vmatpush1.bf16.msra.mxu0 0
      %2638 = vmatprep.subr.bf16.mxu0 0
      %2639 = vmatpush1.bf16.msra.mxu0 0
      %2640 = vmatprep.subr.bf16.mxu0 0
      %2641 = vmatpush1.bf16.msra.mxu0 %v2508
      %2642 = vmatprep.subr.bf16.mxu0 0
      %2643 = vmatpush1.bf16.msra.mxu0 %v2507
      %2644 = vmatprep.subr.bf16.mxu0 0
      %2645 = vmatpush1.bf16.msra.mxu0 %v2506
      %2646 = vmatprep.subr.bf16.mxu0 0
      %2647 = vmatpush1.bf16.msra.mxu0 %v2505
      %2648 = vmatprep.subr.bf16.mxu0 0
      %2649 = vmatpush2.bf16.msra.mxu0 0
      %2650 = vmatprep.subr.bf16.mxu0 0
      %2651 = vmatpush2.bf16.msra.mxu0 0
      %2652 = vmatprep.subr.bf16.mxu0 0
      %2653 = vmatpush2.bf16.msra.mxu0 0
      %2654 = vmatprep.subr.bf16.mxu0 0
      %2655 = vmatpush2.bf16.msra.mxu0 0
      %2656 = vmatprep.subr.bf16.mxu0 0
      %2657 = vmatpush2.bf16.msra.mxu0 0
      %2658 = vmatprep.subr.bf16.mxu0 0
      %2659 = vmatpush2.bf16.msra.mxu0 0
      %2660 = vmatprep.subr.bf16.mxu0 0
      %2661 = vmatpush2.bf16.msra.mxu0 0
      %2662 = vmatprep.subr.bf16.mxu0 0
      %2663 = vmatpush2.bf16.msra.mxu0 0
      %2664 = vmatprep.mubr.bf16.mxu0 0
      %2665 = vmatmul.mubr.bf16.gmra.mxu0 %v2548
      %v2666 = vpop.f32.mrf.mxu0
      %v2667 = vadd.f32 %v2626, %v2666
      %v2668 = vpop.f32.mrf.mxu0
      %v2669 = vpop.f32.mrf.mxu0
      %v2670 = vadd.f32 %v2629, %v2669
      %v2671 = vpop.f32.mrf.mxu0
      %2672 = vdwg.mxu0
      %v2673 = vld [vmem:[%s25] sm:$0x1]
      %v2675 = vlaneseq
      %v2676 = vshrl.u32 %v2675, 7
      %v2677 = vsub.s32 0, %v2676
      %v2678 = vrot.slane %v2673, %v2677
      %v2680 = vmul.f32 %v2667, %v2678
      %v2681 = vmul.f32 %v2670, %v2678
      %2684 = vrot.lane.b32.xlu0 %v2680, 10
      %v2685 = vpop.permute.xlu0 %2684
      %2686 = vrot.lane.b32.xlu0 %v2681, 10
      %v2687 = vpop.permute.xlu0 %2686
      %vm2690 = vcmask 80896
      %v2691 = vsel %vm2690, 0.0, %v2685
      %v2692 = vsel %vm2690, 0.0, %v2687
      %v2693 = vmax.f32 %v2691, 0.0
      %v2694 = vmax.f32 %v2692, 0.0
      %2697 = vrot.lane.b32.xlu0 %v2693, 10
      %v2698 = vpop.permute.xlu0 %2697
      %2699 = vrot.lane.b32.xlu0 %v2694, 10
      %v2700 = vpop.permute.xlu0 %2699
      %v2703 = vsel %vm2690, 0.0, %v2698
      %v2704 = vsel %vm2690, 0.0, %v2700
      %vm2705 = vcmask 744448
      %v2706 = vsel %vm2705, %v2703, 0.0
      %v2707 = vsel %vm2705, %v2704, 0.0
      %2710 = vrot.lane.b32.xlu0 %v2706, 127
      %v2711 = vpop.permute.xlu0 %2710
      %2712 = vrot.lane.b32.xlu0 %v2707, 127
      %v2713 = vpop.permute.xlu0 %2712
      %2716 = vrot.lane.b32.xlu0 %v2706, 126
      %v2717 = vpop.permute.xlu0 %2716
      %2718 = vrot.lane.b32.xlu0 %v2707, 126
      %v2719 = vpop.permute.xlu0 %2718
      %2722 = vrot.lane.b32.xlu0 %v2706, 119
      %v2723 = vpop.permute.xlu0 %2722
      %2724 = vrot.lane.b32.xlu0 %v2707, 119
      %v2725 = vpop.permute.xlu0 %2724
      %2728 = vrot.lane.b32.xlu0 %v2706, 118
      %v2729 = vpop.permute.xlu0 %2728
      %2730 = vrot.lane.b32.xlu0 %v2707, 118
      %v2731 = vpop.permute.xlu0 %2730
      %2734 = vrot.lane.b32.xlu0 %v2706, 117
      %v2735 = vpop.permute.xlu0 %2734
      %2736 = vrot.lane.b32.xlu0 %v2707, 117
      %v2737 = vpop.permute.xlu0 %2736
      %2740 = vrot.lane.b32.xlu0 %v2706, 110
      %v2741 = vpop.permute.xlu0 %2740
      %2742 = vrot.lane.b32.xlu0 %v2707, 110
      %v2743 = vpop.permute.xlu0 %2742
      %2746 = vrot.lane.b32.xlu0 %v2706, 109
      %v2747 = vpop.permute.xlu0 %2746
      %2748 = vrot.lane.b32.xlu0 %v2707, 109
      %v2749 = vpop.permute.xlu0 %2748
      %2752 = vrot.lane.b32.xlu0 %v2706, 108
      %v2753 = vpop.permute.xlu0 %2752
      %2754 = vrot.lane.b32.xlu0 %v2707, 108
      %v2755 = vpop.permute.xlu0 %2754
      %v2758 = vld [vmem:[%s27] sm:$0xff]
      %v2759 = vld [vmem:[%s27 + $0x8] sm:$0xff]
      %v2760 = vpack.c.bf16 %v2707, %v2706
      %v2761 = vpack.c.bf16 %v2713, %v2711
      %v2762 = vpack.c.bf16 %v2719, %v2717
      %v2763 = vpack.c.bf16 %v2725, %v2723
      %v2764 = vpack.c.bf16 %v2731, %v2729
      %v2765 = vpack.c.bf16 %v2737, %v2735
      %v2766 = vpack.c.bf16 %v2743, %v2741
      %v2767 = vpack.c.bf16 %v2749, %v2747
      %v2768 = vpack.c.bf16 %v2755, %v2753
      %v2769 = vld [vmem:[%s29] sm:$0xff]
      %v2770 = vld [vmem:[%s29 + $0x8] sm:$0xff]
      %2772 = vset.pattern.permute.xlu0 0
      %2773 = vperm.xlu0 %2772, %v2769
      %v2774 = vpop.permute.xlu0 %2773
      %2777 = vset.pattern.permute.xlu0 0
      %2778 = vperm.xlu0 %2777, %v2770
      %v2779 = vpop.permute.xlu0 %2778
      %v2783 = vunpack.c.l.b16 %v2758
      %v2784 = vunpack.c.h.b16 %v2758
      %v2785 = vunpack.c.l.b16 %v2759
      %v2786 = vunpack.c.h.b16 %v2759
      %v2787 = vpack.c.b16 %v2785, %v2783
      %v2788 = vpack.c.b16 %v2786, %v2784
      %vm2790 = vcmask 130048
      %v2792 = vsel %vm2790, %v2788, 0
      %2794 = vmatprep.subr.bf16.mxu0 0
      %2795 = vmatpush1.bf16.msra.mxu0 %v2767
      %2796 = vmatprep.subr.bf16.mxu0 0
      %2797 = vmatpush1.bf16.msra.mxu0 %v2766
      %2798 = vmatprep.subr.bf16.mxu0 0
      %2799 = vmatpush1.bf16.msra.mxu0 %v2765
      %2800 = vmatprep.subr.bf16.mxu0 0
      %2801 = vmatpush1.bf16.msra.mxu0 %v2764
      %2802 = vmatprep.subr.bf16.mxu0 0
      %2803 = vmatpush1.bf16.msra.mxu0 %v2763
      %2804 = vmatprep.subr.bf16.mxu0 0
      %2805 = vmatpush1.bf16.msra.mxu0 %v2762
      %2806 = vmatprep.subr.bf16.mxu0 0
      %2807 = vmatpush1.bf16.msra.mxu0 %v2761
      %2808 = vmatprep.subr.bf16.mxu0 0
      %2809 = vmatpush1.bf16.msra.mxu0 %v2760
      %2810 = vmatprep.subr.bf16.mxu0 0
      %2811 = vmatpush2.bf16.msra.mxu0 0
      %2812 = vmatprep.subr.bf16.mxu0 0
      %2813 = vmatpush2.bf16.msra.mxu0 0
      %2814 = vmatprep.subr.bf16.mxu0 0
      %2815 = vmatpush2.bf16.msra.mxu0 0
      %2816 = vmatprep.subr.bf16.mxu0 0
      %2817 = vmatpush2.bf16.msra.mxu0 0
      %2818 = vmatprep.subr.bf16.mxu0 0
      %2819 = vmatpush2.bf16.msra.mxu0 0
      %2820 = vmatprep.subr.bf16.mxu0 0
      %2821 = vmatpush2.bf16.msra.mxu0 0
      %2822 = vmatprep.subr.bf16.mxu0 0
      %2823 = vmatpush2.bf16.msra.mxu0 0
      %2824 = vmatprep.subr.bf16.mxu0 0
      %2825 = vmatpush2.bf16.msra.mxu0 %v2768
      %2826 = vmatprep.mubr.bf16.mxu0 %v2792
      %2827 = vmatmul.mubr.bf16.gmra.mxu0 %v2787
      %v2828 = vpop.f32.mrf.mxu0
      %v2829 = vadd.f32 %v2774, %v2828
      %v2830 = vpop.f32.mrf.mxu0
      %v2831 = vpop.f32.mrf.mxu0
      %v2832 = vadd.f32 %v2779, %v2831
      %v2833 = vpop.f32.mrf.mxu0
      %2834 = vdwg.mxu0
      %v2835 = vld [vmem:[%s35] sm:$0x1]
      %v2837 = vlaneseq
      %v2838 = vshrl.u32 %v2837, 7
      %v2839 = vsub.s32 0, %v2838
      %v2840 = vrot.slane %v2835, %v2839
      %v2842 = vmul.f32 %v2829, %v2840
      %v2843 = vmul.f32 %v2832, %v2840
      %v2844 = vmax.f32 %v2842, 0.0
      %v2845 = vmax.f32 %v2843, 0.0
      %2848 = vrot.lane.b32.xlu0 %v2844, 10
      %v2849 = vpop.permute.xlu0 %2848
      %2850 = vrot.lane.b32.xlu0 %v2845, 10
      %v2851 = vpop.permute.xlu0 %2850
      %v2854 = vsel %vm2690, 0.0, %v2849
      %v2855 = vsel %vm2690, 0.0, %v2851
      %v2856 = vsel %vm2705, %v2854, 0.0
      %v2857 = vsel %vm2705, %v2855, 0.0
      %2860 = vrot.lane.b32.xlu0 %v2856, 127
      %v2861 = vpop.permute.xlu0 %2860
      %2862 = vrot.lane.b32.xlu0 %v2857, 127
      %v2863 = vpop.permute.xlu0 %2862
      %2866 = vrot.lane.b32.xlu0 %v2856, 126
      %v2867 = vpop.permute.xlu0 %2866
      %2868 = vrot.lane.b32.xlu0 %v2857, 126
      %v2869 = vpop.permute.xlu0 %2868
      %2872 = vrot.lane.b32.xlu0 %v2856, 119
      %v2873 = vpop.permute.xlu0 %2872
      %2874 = vrot.lane.b32.xlu0 %v2857, 119
      %v2875 = vpop.permute.xlu0 %2874
      %2878 = vrot.lane.b32.xlu0 %v2856, 118
      %v2879 = vpop.permute.xlu0 %2878
      %2880 = vrot.lane.b32.xlu0 %v2857, 118
      %v2881 = vpop.permute.xlu0 %2880
      %2884 = vrot.lane.b32.xlu0 %v2856, 117
      %v2885 = vpop.permute.xlu0 %2884
      %2886 = vrot.lane.b32.xlu0 %v2857, 117
      %v2887 = vpop.permute.xlu0 %2886
      %2890 = vrot.lane.b32.xlu0 %v2856, 110
      %v2891 = vpop.permute.xlu0 %2890
      %2892 = vrot.lane.b32.xlu0 %v2857, 110
      %v2893 = vpop.permute.xlu0 %2892
      %2896 = vrot.lane.b32.xlu0 %v2856, 109
      %v2897 = vpop.permute.xlu0 %2896
      %2898 = vrot.lane.b32.xlu0 %v2857, 109
      %v2899 = vpop.permute.xlu0 %2898
      %2902 = vrot.lane.b32.xlu0 %v2856, 108
      %v2903 = vpop.permute.xlu0 %2902
      %2904 = vrot.lane.b32.xlu0 %v2857, 108
      %v2905 = vpop.permute.xlu0 %2904
      %v2908 = vld [vmem:[%s31] sm:$0xff]
      %v2909 = vld [vmem:[%s31 + $0x8] sm:$0xff]
      %v2910 = vpack.c.bf16 %v2857, %v2856
      %v2911 = vpack.c.bf16 %v2863, %v2861
      %v2912 = vpack.c.bf16 %v2869, %v2867
      %v2913 = vpack.c.bf16 %v2875, %v2873
      %v2914 = vpack.c.bf16 %v2881, %v2879
      %v2915 = vpack.c.bf16 %v2887, %v2885
      %v2916 = vpack.c.bf16 %v2893, %v2891
      %v2917 = vpack.c.bf16 %v2899, %v2897
      %v2918 = vpack.c.bf16 %v2905, %v2903
      %v2919 = vld [vmem:[%s33] sm:$0xff]
      %v2920 = vld [vmem:[%s33 + $0x8] sm:$0xff]
      %2922 = vset.pattern.permute.xlu0 0
      %2923 = vperm.xlu0 %2922, %v2919
      %v2924 = vpop.permute.xlu0 %2923
      %2927 = vset.pattern.permute.xlu0 0
      %2928 = vperm.xlu0 %2927, %v2920
      %v2929 = vpop.permute.xlu0 %2928
      %v2933 = vunpack.c.l.b16 %v2908
      %v2934 = vunpack.c.h.b16 %v2908
      %v2935 = vunpack.c.l.b16 %v2909
      %v2936 = vunpack.c.h.b16 %v2909
      %v2937 = vpack.c.b16 %v2935, %v2933
      %v2938 = vpack.c.b16 %v2936, %v2934
      %v2941 = vsel %vm2790, %v2938, 0
      %2943 = vmatprep.subr.bf16.mxu0 0
      %2944 = vmatpush1.bf16.msra.mxu0 %v2917
      %2945 = vmatprep.subr.bf16.mxu0 0
      %2946 = vmatpush1.bf16.msra.mxu0 %v2916
      %2947 = vmatprep.subr.bf16.mxu0 0
      %2948 = vmatpush1.bf16.msra.mxu0 %v2915
      %2949 = vmatprep.subr.bf16.mxu0 0
      %2950 = vmatpush1.bf16.msra.mxu0 %v2914
      %2951 = vmatprep.subr.bf16.mxu0 0
      %2952 = vmatpush1.bf16.msra.mxu0 %v2913
      %2953 = vmatprep.subr.bf16.mxu0 0
      %2954 = vmatpush1.bf16.msra.mxu0 %v2912
      %2955 = vmatprep.subr.bf16.mxu0 0
      %2956 = vmatpush1.bf16.msra.mxu0 %v2911
      %2957 = vmatprep.subr.bf16.mxu0 0
      %2958 = vmatpush1.bf16.msra.mxu0 %v2910
      %2959 = vmatprep.subr.bf16.mxu0 0
      %2960 = vmatpush2.bf16.msra.mxu0 0
      %2961 = vmatprep.subr.bf16.mxu0 0
      %2962 = vmatpush2.bf16.msra.mxu0 0
      %2963 = vmatprep.subr.bf16.mxu0 0
      %2964 = vmatpush2.bf16.msra.mxu0 0
      %2965 = vmatprep.subr.bf16.mxu0 0
      %2966 = vmatpush2.bf16.msra.mxu0 0
      %2967 = vmatprep.subr.bf16.mxu0 0
      %2968 = vmatpush2.bf16.msra.mxu0 0
      %2969 = vmatprep.subr.bf16.mxu0 0
      %2970 = vmatpush2.bf16.msra.mxu0 0
      %2971 = vmatprep.subr.bf16.mxu0 0
      %2972 = vmatpush2.bf16.msra.mxu0 0
      %2973 = vmatprep.subr.bf16.mxu0 0
      %2974 = vmatpush2.bf16.msra.mxu0 %v2918
      %2975 = vmatprep.mubr.bf16.mxu0 %v2941
      %2976 = vmatmul.mubr.bf16.gmra.mxu0 %v2937
      %v2977 = vpop.f32.mrf.mxu0
      %v2978 = vadd.f32 %v2924, %v2977
      %v2979 = vpop.f32.mrf.mxu0
      %v2980 = vpop.f32.mrf.mxu0
      %v2981 = vadd.f32 %v2929, %v2980
      %v2982 = vpop.f32.mrf.mxu0
      %2983 = vdwg.mxu0
      %v2984 = vmul.f32 %v2978, %v2840
      %v2985 = vmul.f32 %v2981, %v2840
      %v2986 = vadd.f32 %v2691, %v2984
      %v2987 = vadd.f32 %v2692, %v2985
      %v2988 = vmax.f32 %v2986, 0.0
      %v2989 = vmax.f32 %v2987, 0.0
      %2992 = vrot.lane.b32.xlu0 %v2988, 10
      %v2993 = vpop.permute.xlu0 %2992
      %2994 = vrot.lane.b32.xlu0 %v2989, 10
      %v2995 = vpop.permute.xlu0 %2994
      %v2998 = vsel %vm2690, 0.0, %v2993
      %v2999 = vsel %vm2690, 0.0, %v2995
      %v3000 = vsel %vm2705, %v2998, 0.0
      %v3001 = vsel %vm2705, %v2999, 0.0
      %3004 = vrot.lane.b32.xlu0 %v3000, 127
      %v3005 = vpop.permute.xlu0 %3004
      %3006 = vrot.lane.b32.xlu0 %v3001, 127
      %v3007 = vpop.permute.xlu0 %3006
      %3010 = vrot.lane.b32.xlu0 %v3000, 126
      %v3011 = vpop.permute.xlu0 %3010
      %3012 = vrot.lane.b32.xlu0 %v3001, 126
      %v3013 = vpop.permute.xlu0 %3012
      %3016 = vrot.lane.b32.xlu0 %v3000, 119
      %v3017 = vpop.permute.xlu0 %3016
      %3018 = vrot.lane.b32.xlu0 %v3001, 119
      %v3019 = vpop.permute.xlu0 %3018
      %3022 = vrot.lane.b32.xlu0 %v3000, 118
      %v3023 = vpop.permute.xlu0 %3022
      %3024 = vrot.lane.b32.xlu0 %v3001, 118
      %v3025 = vpop.permute.xlu0 %3024
      %3028 = vrot.lane.b32.xlu0 %v3000, 117
      %v3029 = vpop.permute.xlu0 %3028
      %3030 = vrot.lane.b32.xlu0 %v3001, 117
      %v3031 = vpop.permute.xlu0 %3030
      %3034 = vrot.lane.b32.xlu0 %v3000, 110
      %v3035 = vpop.permute.xlu0 %3034
      %3036 = vrot.lane.b32.xlu0 %v3001, 110
      %v3037 = vpop.permute.xlu0 %3036
      %3040 = vrot.lane.b32.xlu0 %v3000, 109
      %v3041 = vpop.permute.xlu0 %3040
      %3042 = vrot.lane.b32.xlu0 %v3001, 109
      %v3043 = vpop.permute.xlu0 %3042
      %3046 = vrot.lane.b32.xlu0 %v3000, 108
      %v3047 = vpop.permute.xlu0 %3046
      %3048 = vrot.lane.b32.xlu0 %v3001, 108
      %v3049 = vpop.permute.xlu0 %3048
      %v3052 = vld [vmem:[%s37] sm:$0xff]
      %v3053 = vld [vmem:[%s37 + $0x8] sm:$0xff]
      %v3054 = vpack.c.bf16 %v3001, %v3000
      %v3055 = vpack.c.bf16 %v3007, %v3005
      %v3056 = vpack.c.bf16 %v3013, %v3011
      %v3057 = vpack.c.bf16 %v3019, %v3017
      %v3058 = vpack.c.bf16 %v3025, %v3023
      %v3059 = vpack.c.bf16 %v3031, %v3029
      %v3060 = vpack.c.bf16 %v3037, %v3035
      %v3061 = vpack.c.bf16 %v3043, %v3041
      %v3062 = vpack.c.bf16 %v3049, %v3047
      %v3063 = vld [vmem:[%s39] sm:$0xff]
      %v3064 = vld [vmem:[%s39 + $0x8] sm:$0xff]
      %3066 = vset.pattern.permute.xlu0 0
      %3067 = vperm.xlu0 %3066, %v3063
      %v3068 = vpop.permute.xlu0 %3067
      %3071 = vset.pattern.permute.xlu0 0
      %3072 = vperm.xlu0 %3071, %v3064
      %v3073 = vpop.permute.xlu0 %3072
      %v3077 = vunpack.c.l.b16 %v3052
      %v3078 = vunpack.c.h.b16 %v3052
      %v3079 = vunpack.c.l.b16 %v3053
      %v3080 = vunpack.c.h.b16 %v3053
      %v3081 = vpack.c.b16 %v3079, %v3077
      %v3082 = vpack.c.b16 %v3080, %v3078
      %v3085 = vsel %vm2790, %v3082, 0
      %3087 = vmatprep.subr.bf16.mxu0 0
      %3088 = vmatpush1.bf16.msra.mxu0 %v3061
      %3089 = vmatprep.subr.bf16.mxu0 0
      %3090 = vmatpush1.bf16.msra.mxu0 %v3060
      %3091 = vmatprep.subr.bf16.mxu0 0
      %3092 = vmatpush1.bf16.msra.mxu0 %v3059
      %3093 = vmatprep.subr.bf16.mxu0 0
      %3094 = vmatpush1.bf16.msra.mxu0 %v3058
      %3095 = vmatprep.subr.bf16.mxu0 0
      %3096 = vmatpush1.bf16.msra.mxu0 %v3057
      %3097 = vmatprep.subr.bf16.mxu0 0
      %3098 = vmatpush1.bf16.msra.mxu0 %v3056
      %3099 = vmatprep.subr.bf16.mxu0 0
      %3100 = vmatpush1.bf16.msra.mxu0 %v3055
      %3101 = vmatprep.subr.bf16.mxu0 0
      %3102 = vmatpush1.bf16.msra.mxu0 %v3054
      %3103 = vmatprep.subr.bf16.mxu0 0
      %3104 = vmatpush2.bf16.msra.mxu0 0
      %3105 = vmatprep.subr.bf16.mxu0 0
      %3106 = vmatpush2.bf16.msra.mxu0 0
      %3107 = vmatprep.subr.bf16.mxu0 0
      %3108 = vmatpush2.bf16.msra.mxu0 0
      %3109 = vmatprep.subr.bf16.mxu0 0
      %3110 = vmatpush2.bf16.msra.mxu0 0
      %3111 = vmatprep.subr.bf16.mxu0 0
      %3112 = vmatpush2.bf16.msra.mxu0 0
      %3113 = vmatprep.subr.bf16.mxu0 0
      %3114 = vmatpush2.bf16.msra.mxu0 0
      %3115 = vmatprep.subr.bf16.mxu0 0
      %3116 = vmatpush2.bf16.msra.mxu0 0
      %3117 = vmatprep.subr.bf16.mxu0 0
      %3118 = vmatpush2.bf16.msra.mxu0 %v3062
      %3119 = vmatprep.mubr.bf16.mxu0 %v3085
      %3120 = vmatmul.mubr.bf16.gmra.mxu0 %v3081
      %v3121 = vpop.f32.mrf.mxu0
      %v3122 = vadd.f32 %v3068, %v3121
      %v3123 = vpop.f32.mrf.mxu0
      %v3124 = vpop.f32.mrf.mxu0
      %v3125 = vadd.f32 %v3073, %v3124
      %v3126 = vpop.f32.mrf.mxu0
      %3127 = vdwg.mxu0
      %v3128 = vld [vmem:[%s41] sm:$0x1]
      %v3130 = vlaneseq
      %v3131 = vshrl.u32 %v3130, 7
      %v3132 = vsub.s32 0, %v3131
      %v3133 = vrot.slane %v3128, %v3132
      %v3135 = vmul.f32 %v3122, %v3133
      %v3136 = vmul.f32 %v3125, %v3133
      %v3137 = vmax.f32 %v3135, 0.0
      %v3138 = vmax.f32 %v3136, 0.0
      %v3139 = vpack.c.bf16 %v2987, %v2986
      %v3140 = vpack.c.bf16 %v3138, %v3137
      %v3141 = vld [vmem:[%s47] sm:$0xff]
      %v3142 = vld [vmem:[%s47 + $0x8] sm:$0xf]
      %v3143 = vld [vmem:[%s47 + $0xc] sm:$0xff]
      %v3144 = vld [vmem:[%s47 + $0x14] sm:$0xf]
      %v3145 = vld [vmem:[%s47 + $0x18] sm:$0xff]
      %v3146 = vld [vmem:[%s47 + $0x20] sm:$0xf]
      %v3147 = vld [vmem:[%s47 + $0x24] sm:$0xff]
      %v3148 = vld [vmem:[%s47 + $0x2c] sm:$0xf]
      %v3149 = vld [vmem:[%s47 + $0x30] sm:$0xff]
      %v3150 = vld [vmem:[%s47 + $0x38] sm:$0xf]
      %v3151 = vld [vmem:[%s47 + $0x3c] sm:$0xff]
      %v3152 = vld [vmem:[%s47 + $0x44] sm:$0xf]
      %v3153 = vld [vmem:[%s47 + $0x48] sm:$0xff]
      %v3154 = vld [vmem:[%s47 + $0x50] sm:$0xf]
      %v3155 = vld [vmem:[%s47 + $0x54] sm:$0xff]
      %v3156 = vld [vmem:[%s47 + $0x5c] sm:$0xf]
      %v3157 = vld [vmem:[%s47 + $0x60] sm:$0xff]
      %v3158 = vld [vmem:[%s47 + $0x68] sm:$0xf]
      %v3159 = vld [vmem:[%s47 + $0x6c] sm:$0xff]
      %v3160 = vld [vmem:[%s47 + $0x74] sm:$0xf]
      %v3161 = vld [vmem:[%s47 + $0x78] sm:$0x11]
      %v3162 = vld [vmem:[%s47 + $0x80] sm:$0x1]
      %v3185 = vunpack.c.l.b16 %v3141
      %v3186 = vunpack.c.h.b16 %v3141
      %v3187 = vunpack.c.l.b16 %v3142
      %v3188 = vunpack.c.l.b16 %v3143
      %v3189 = vunpack.c.h.b16 %v3143
      %v3190 = vunpack.c.l.b16 %v3144
      %v3191 = vunpack.c.l.b16 %v3145
      %v3192 = vunpack.c.h.b16 %v3145
      %v3193 = vunpack.c.l.b16 %v3146
      %v3194 = vunpack.c.l.b16 %v3147
      %v3195 = vunpack.c.h.b16 %v3147
      %v3196 = vunpack.c.l.b16 %v3148
      %v3197 = vunpack.c.l.b16 %v3149
      %v3198 = vunpack.c.h.b16 %v3149
      %v3199 = vunpack.c.l.b16 %v3150
      %v3200 = vunpack.c.l.b16 %v3151
      %v3201 = vunpack.c.h.b16 %v3151
      %v3202 = vunpack.c.l.b16 %v3152
      %v3203 = vunpack.c.l.b16 %v3153
      %v3204 = vunpack.c.h.b16 %v3153
      %v3205 = vunpack.c.l.b16 %v3154
      %v3206 = vunpack.c.l.b16 %v3155
      %v3207 = vunpack.c.h.b16 %v3155
      %v3208 = vunpack.c.l.b16 %v3156
      %v3209 = vunpack.c.l.b16 %v3157
      %v3210 = vunpack.c.h.b16 %v3157
      %v3211 = vunpack.c.l.b16 %v3158
      %v3212 = vunpack.c.l.b16 %v3159
      %v3213 = vunpack.c.h.b16 %v3159
      %v3214 = vunpack.c.l.b16 %v3160
      %v3215 = vunpack.c.l.b16 %v3161
      %v3216 = vunpack.c.h.b16 %v3161
      %v3217 = vunpack.c.l.b16 %v3162
      %v3218 = vpack.c.b16 %v3188, %v3185
      %v3219 = vpack.c.b16 %v3189, %v3186
      %v3220 = vpack.c.b16 %v3190, %v3187
      %v3221 = vpack.c.b16 %v3194, %v3191
      %v3222 = vpack.c.b16 %v3195, %v3192
      %v3223 = vpack.c.b16 %v3196, %v3193
      %v3224 = vpack.c.b16 %v3200, %v3197
      %v3225 = vpack.c.b16 %v3201, %v3198
      %v3226 = vpack.c.b16 %v3202, %v3199
      %v3227 = vpack.c.b16 %v3206, %v3203
      %v3228 = vpack.c.b16 %v3207, %v3204
      %v3229 = vpack.c.b16 %v3208, %v3205
      %v3230 = vpack.c.b16 %v3212, %v3209
      %v3231 = vpack.c.b16 %v3213, %v3210
      %v3232 = vpack.c.b16 %v3214, %v3211
      %v3233 = vpack.c.b16 %v3215, %v3215
      %v3234 = vpack.c.b16 %v3216, %v3216
      %v3235 = vpack.c.b16 %v3217, %v3217
      %vm3251 = vcmask 662528
      %v3253 = vsel %vm3251, %v3139, 0
      %v3256 = vsel %vm3251, %v3140, 0
      %vm3258 = vcmask 1040384
      %v3259 = vsel 0, 4294967295, 65535
      %v3260 = vsel %vm3258, %v3259, 0
      %v3262 = vand.u32 %v3233, %v3260
      %v3265 = vand.u32 %v3234, %v3260
      %v3268 = vand.u32 %v3235, %v3260
      %3270 = vmatprep.subr.bf16.mxu0 0
      %3271 = vmatpush1.bf16.msra.mxu0 0
      %3272 = vmatprep.subr.bf16.mxu0 0
      %3273 = vmatpush1.bf16.msra.mxu0 0
      %3274 = vmatprep.subr.bf16.mxu0 %v3265
      %3275 = vmatpush1.bf16.msra.mxu0 %v3262
      %3276 = vmatprep.subr.bf16.mxu0 %v3231
      %3277 = vmatpush1.bf16.msra.mxu0 %v3230
      %3278 = vmatprep.subr.bf16.mxu0 %v3228
      %3279 = vmatpush1.bf16.msra.mxu0 %v3227
      %3280 = vmatprep.subr.bf16.mxu0 %v3225
      %3281 = vmatpush1.bf16.msra.mxu0 %v3224
      %3282 = vmatprep.subr.bf16.mxu0 %v3222
      %3283 = vmatpush1.bf16.msra.mxu0 %v3221
      %3284 = vmatprep.subr.bf16.mxu0 %v3219
      %3285 = vmatpush1.bf16.msra.mxu0 %v3218
      %3286 = vmatprep.subr.bf16.mxu0 0
      %3287 = vmatpush2.bf16.msra.mxu0 0
      %3288 = vmatprep.subr.bf16.mxu0 0
      %3289 = vmatpush2.bf16.msra.mxu0 0
      %3290 = vmatprep.subr.bf16.mxu0 0
      %3291 = vmatpush2.bf16.msra.mxu0 0
      %3292 = vmatprep.subr.bf16.mxu0 0
      %3293 = vmatpush2.bf16.msra.mxu0 0
      %3294 = vmatprep.subr.bf16.mxu0 0
      %3295 = vmatpush2.bf16.msra.mxu0 0
      %3296 = vmatprep.subr.bf16.mxu0 0
      %3297 = vmatpush2.bf16.msra.mxu0 0
      %3298 = vmatprep.subr.bf16.mxu0 0
      %3299 = vmatpush2.bf16.msra.mxu0 0
      %3300 = vmatprep.subr.bf16.mxu0 0
      %3301 = vmatpush2.bf16.msra.mxu0 0
      %3302 = vmatprep.mubr.bf16.mxu0 0
      %3303 = vmatmul.mubr.bf16.gmra.mxu0 %v3253
      %v3304 = vpop.f32.mrf.mxu0
      %v3305 = vadd.f32 0.0, %v3304
      %v3306 = vpop.f32.mrf.mxu0
      %v3307 = vadd.f32 0.0, %v3306
      %v3308 = vpop.f32.mrf.mxu0
      %v3309 = vadd.f32 0.0, %v3308
      %v3310 = vpop.f32.mrf.mxu0
      %v3311 = vadd.f32 0.0, %v3310
      %3312 = vmatprep.mubr.bf16.mxu0 0
      %3313 = vmatmul.mubr.bf16.gmra.mxu0 %v3256
      %v3314 = vpop.f32.mrf.mxu0
      %v3315 = vadd.f32 0.0, %v3314
      %v3316 = vpop.f32.mrf.mxu0
      %v3317 = vadd.f32 0.0, %v3316
      %v3318 = vpop.f32.mrf.mxu0
      %v3319 = vadd.f32 0.0, %v3318
      %v3320 = vpop.f32.mrf.mxu0
      %v3321 = vadd.f32 0.0, %v3320
      %3322 = vdwg.mxu0
      %3323 = vmatprep.subr.bf16.mxu0 0
      %3324 = vmatpush1.bf16.msra.mxu0 0
      %3325 = vmatprep.subr.bf16.mxu0 0
      %3326 = vmatpush1.bf16.msra.mxu0 0
      %3327 = vmatprep.subr.bf16.mxu0 0
      %3328 = vmatpush1.bf16.msra.mxu0 %v3268
      %3329 = vmatprep.subr.bf16.mxu0 0
      %3330 = vmatpush1.bf16.msra.mxu0 %v3232
      %3331 = vmatprep.subr.bf16.mxu0 0
      %3332 = vmatpush1.bf16.msra.mxu0 %v3229
      %3333 = vmatprep.subr.bf16.mxu0 0
      %3334 = vmatpush1.bf16.msra.mxu0 %v3226
      %3335 = vmatprep.subr.bf16.mxu0 0
      %3336 = vmatpush1.bf16.msra.mxu0 %v3223
      %3337 = vmatprep.subr.bf16.mxu0 0
      %3338 = vmatpush1.bf16.msra.mxu0 %v3220
      %3339 = vmatprep.subr.bf16.mxu0 0
      %3340 = vmatpush2.bf16.msra.mxu0 0
      %3341 = vmatprep.subr.bf16.mxu0 0
      %3342 = vmatpush2.bf16.msra.mxu0 0
      %3343 = vmatprep.subr.bf16.mxu0 0
      %3344 = vmatpush2.bf16.msra.mxu0 0
      %3345 = vmatprep.subr.bf16.mxu0 0
      %3346 = vmatpush2.bf16.msra.mxu0 0
      %3347 = vmatprep.subr.bf16.mxu0 0
      %3348 = vmatpush2.bf16.msra.mxu0 0
      %3349 = vmatprep.subr.bf16.mxu0 0
      %3350 = vmatpush2.bf16.msra.mxu0 0
      %3351 = vmatprep.subr.bf16.mxu0 0
      %3352 = vmatpush2.bf16.msra.mxu0 0
      %3353 = vmatprep.subr.bf16.mxu0 0
      %3354 = vmatpush2.bf16.msra.mxu0 0
      %3355 = vmatprep.mubr.bf16.mxu0 0
      %3356 = vmatmul.mubr.bf16.gmra.mxu0 %v3253
      %v3357 = vpop.f32.mrf.mxu0
      %v3358 = vadd.f32 0.0, %v3357
      %v3359 = vpop.f32.mrf.mxu0
      %v3360 = vpop.f32.mrf.mxu0
      %v3361 = vadd.f32 0.0, %v3360
      %v3362 = vpop.f32.mrf.mxu0
      %3363 = vmatprep.mubr.bf16.mxu0 0
      %3364 = vmatmul.mubr.bf16.gmra.mxu0 %v3256
      %v3365 = vpop.f32.mrf.mxu0
      %v3366 = vadd.f32 0.0, %v3365
      %v3367 = vpop.f32.mrf.mxu0
      %v3368 = vpop.f32.mrf.mxu0
      %v3369 = vadd.f32 0.0, %v3368
      %v3370 = vpop.f32.mrf.mxu0
      %3371 = vdwg.mxu0
      %3380 = vrot.lane.b32.xlu0 %v3305, 127
      %v3381 = vpop.permute.xlu0 %3380
      %3382 = vrot.lane.b32.xlu0 %v3307, 127
      %v3383 = vpop.permute.xlu0 %3382
      %3384 = vrot.lane.b32.xlu0 %v3309, 127
      %v3385 = vpop.permute.xlu0 %3384
      %3386 = vrot.lane.b32.xlu0 %v3311, 127
      %v3387 = vpop.permute.xlu0 %3386
      %3388 = vrot.lane.b32.xlu0 %v3315, 127
      %v3389 = vpop.permute.xlu0 %3388
      %3390 = vrot.lane.b32.xlu0 %v3317, 127
      %v3391 = vpop.permute.xlu0 %3390
      %3392 = vrot.lane.b32.xlu0 %v3319, 127
      %v3393 = vpop.permute.xlu0 %3392
      %3394 = vrot.lane.b32.xlu0 %v3321, 127
      %v3395 = vpop.permute.xlu0 %3394
      %vm3396 = vcmask 1039360
      %v3397 = vsel %vm3396, %v3381, %v3383
      %v3398 = vsel %vm3396, %v3385, %v3387
      %v3399 = vsel %vm3396, %v3389, %v3391
      %v3400 = vsel %vm3396, %v3393, %v3395
      %3409 = vrot.lane.b32.xlu0 %v3305, 126
      %v3410 = vpop.permute.xlu0 %3409
      %3411 = vrot.lane.b32.xlu0 %v3307, 126
      %v3412 = vpop.permute.xlu0 %3411
      %3413 = vrot.lane.b32.xlu0 %v3309, 126
      %v3414 = vpop.permute.xlu0 %3413
      %3415 = vrot.lane.b32.xlu0 %v3311, 126
      %v3416 = vpop.permute.xlu0 %3415
      %3417 = vrot.lane.b32.xlu0 %v3315, 126
      %v3418 = vpop.permute.xlu0 %3417
      %3419 = vrot.lane.b32.xlu0 %v3317, 126
      %v3420 = vpop.permute.xlu0 %3419
      %3421 = vrot.lane.b32.xlu0 %v3319, 126
      %v3422 = vpop.permute.xlu0 %3421
      %3423 = vrot.lane.b32.xlu0 %v3321, 126
      %v3424 = vpop.permute.xlu0 %3423
      %vm3425 = vcmask 1031168
      %v3426 = vsel %vm3425, %v3410, %v3412
      %v3427 = vsel %vm3425, %v3414, %v3416
      %v3428 = vsel %vm3425, %v3418, %v3420
      %v3429 = vsel %vm3425, %v3422, %v3424
      %3438 = vrot.lane.b32.xlu0 %v3305, 112
      %v3439 = vpop.permute.xlu0 %3438
      %3440 = vrot.lane.b32.xlu0 %v3307, 112
      %v3441 = vpop.permute.xlu0 %3440
      %3442 = vrot.lane.b32.xlu0 %v3309, 112
      %v3443 = vpop.permute.xlu0 %3442
      %3444 = vrot.lane.b32.xlu0 %v3311, 112
      %v3445 = vpop.permute.xlu0 %3444
      %3446 = vrot.lane.b32.xlu0 %v3315, 112
      %v3447 = vpop.permute.xlu0 %3446
      %3448 = vrot.lane.b32.xlu0 %v3317, 112
      %v3449 = vpop.permute.xlu0 %3448
      %3450 = vrot.lane.b32.xlu0 %v3319, 112
      %v3451 = vpop.permute.xlu0 %3450
      %3452 = vrot.lane.b32.xlu0 %v3321, 112
      %v3453 = vpop.permute.xlu0 %3452
      %vm3454 = vcmask 916480
      %v3455 = vsel %vm3454, %v3439, %v3441
      %v3456 = vsel %vm3454, %v3443, %v3445
      %v3457 = vsel %vm3454, %v3447, %v3449
      %v3458 = vsel %vm3454, %v3451, %v3453
      %3467 = vrot.lane.b32.xlu0 %v3305, 111
      %v3468 = vpop.permute.xlu0 %3467
      %3469 = vrot.lane.b32.xlu0 %v3307, 111
      %v3470 = vpop.permute.xlu0 %3469
      %3471 = vrot.lane.b32.xlu0 %v3309, 111
      %v3472 = vpop.permute.xlu0 %3471
      %3473 = vrot.lane.b32.xlu0 %v3311, 111
      %v3474 = vpop.permute.xlu0 %3473
      %3475 = vrot.lane.b32.xlu0 %v3315, 111
      %v3476 = vpop.permute.xlu0 %3475
      %3477 = vrot.lane.b32.xlu0 %v3317, 111
      %v3478 = vpop.permute.xlu0 %3477
      %3479 = vrot.lane.b32.xlu0 %v3319, 111
      %v3480 = vpop.permute.xlu0 %3479
      %3481 = vrot.lane.b32.xlu0 %v3321, 111
      %v3482 = vpop.permute.xlu0 %3481
      %vm3483 = vcmask 908288
      %v3484 = vsel %vm3483, %v3468, %v3470
      %v3485 = vsel %vm3483, %v3472, %v3474
      %v3486 = vsel %vm3483, %v3476, %v3478
      %v3487 = vsel %vm3483, %v3480, %v3482
      %3500 = vrot.lane.b32.xlu0 %v3305, 110
      %v3501 = vpop.permute.xlu0 %3500
      %3502 = vrot.lane.b32.xlu0 %v3307, 110
      %v3503 = vpop.permute.xlu0 %3502
      %3504 = vrot.lane.b32.xlu0 %v3358, 110
      %v3505 = vpop.permute.xlu0 %3504
      %3506 = vrot.lane.b32.xlu0 %v3309, 110
      %v3507 = vpop.permute.xlu0 %3506
      %3508 = vrot.lane.b32.xlu0 %v3311, 110
      %v3509 = vpop.permute.xlu0 %3508
      %3510 = vrot.lane.b32.xlu0 %v3361, 110
      %v3511 = vpop.permute.xlu0 %3510
      %3512 = vrot.lane.b32.xlu0 %v3315, 110
      %v3513 = vpop.permute.xlu0 %3512
      %3514 = vrot.lane.b32.xlu0 %v3317, 110
      %v3515 = vpop.permute.xlu0 %3514
      %3516 = vrot.lane.b32.xlu0 %v3366, 110
      %v3517 = vpop.permute.xlu0 %3516
      %3518 = vrot.lane.b32.xlu0 %v3319, 110
      %v3519 = vpop.permute.xlu0 %3518
      %3520 = vrot.lane.b32.xlu0 %v3321, 110
      %v3521 = vpop.permute.xlu0 %3520
      %3522 = vrot.lane.b32.xlu0 %v3369, 110
      %v3523 = vpop.permute.xlu0 %3522
      %vm3524 = vcmask 900096
      %v3525 = vsel %vm3524, %v3501, %v3503
      %v3526 = vsel %vm3524, %v3503, %v3505
      %v3527 = vsel %vm3524, %v3507, %v3509
      %v3528 = vsel %vm3524, %v3509, %v3511
      %v3529 = vsel %vm3524, %v3513, %v3515
      %v3530 = vsel %vm3524, %v3515, %v3517
      %v3531 = vsel %vm3524, %v3519, %v3521
      %v3532 = vsel %vm3524, %v3521, %v3523
      %3541 = vrot.lane.b32.xlu0 %v3305, 96
      %v3542 = vpop.permute.xlu0 %3541
      %3543 = vrot.lane.b32.xlu0 %v3307, 96
      %v3544 = vpop.permute.xlu0 %3543
      %3545 = vrot.lane.b32.xlu0 %v3358, 96
      %v3546 = vpop.permute.xlu0 %3545
      %3547 = vrot.lane.b32.xlu0 %v3309, 96
      %v3548 = vpop.permute.xlu0 %3547
      %3549 = vrot.lane.b32.xlu0 %v3311, 96
      %v3550 = vpop.permute.xlu0 %3549
      %3551 = vrot.lane.b32.xlu0 %v3361, 96
      %v3552 = vpop.permute.xlu0 %3551
      %3553 = vrot.lane.b32.xlu0 %v3315, 96
      %v3554 = vpop.permute.xlu0 %3553
      %3555 = vrot.lane.b32.xlu0 %v3317, 96
      %v3556 = vpop.permute.xlu0 %3555
      %3557 = vrot.lane.b32.xlu0 %v3366, 96
      %v3558 = vpop.permute.xlu0 %3557
      %3559 = vrot.lane.b32.xlu0 %v3319, 96
      %v3560 = vpop.permute.xlu0 %3559
      %3561 = vrot.lane.b32.xlu0 %v3321, 96
      %v3562 = vpop.permute.xlu0 %3561
      %3563 = vrot.lane.b32.xlu0 %v3369, 96
      %v3564 = vpop.permute.xlu0 %3563
      %vm3565 = vcmask 785408
      %v3566 = vsel %vm3565, %v3542, %v3544
      %v3567 = vsel %vm3565, %v3544, %v3546
      %v3568 = vsel %vm3565, %v3548, %v3550
      %v3569 = vsel %vm3565, %v3550, %v3552
      %v3570 = vsel %vm3565, %v3554, %v3556
      %v3571 = vsel %vm3565, %v3556, %v3558
      %v3572 = vsel %vm3565, %v3560, %v3562
      %v3573 = vsel %vm3565, %v3562, %v3564
      %3582 = vrot.lane.b32.xlu0 %v3305, 95
      %v3583 = vpop.permute.xlu0 %3582
      %3584 = vrot.lane.b32.xlu0 %v3307, 95
      %v3585 = vpop.permute.xlu0 %3584
      %3586 = vrot.lane.b32.xlu0 %v3358, 95
      %v3587 = vpop.permute.xlu0 %3586
      %3588 = vrot.lane.b32.xlu0 %v3309, 95
      %v3589 = vpop.permute.xlu0 %3588
      %3590 = vrot.lane.b32.xlu0 %v3311, 95
      %v3591 = vpop.permute.xlu0 %3590
      %3592 = vrot.lane.b32.xlu0 %v3361, 95
      %v3593 = vpop.permute.xlu0 %3592
      %3594 = vrot.lane.b32.xlu0 %v3315, 95
      %v3595 = vpop.permute.xlu0 %3594
      %3596 = vrot.lane.b32.xlu0 %v3317, 95
      %v3597 = vpop.permute.xlu0 %3596
      %3598 = vrot.lane.b32.xlu0 %v3366, 95
      %v3599 = vpop.permute.xlu0 %3598
      %3600 = vrot.lane.b32.xlu0 %v3319, 95
      %v3601 = vpop.permute.xlu0 %3600
      %3602 = vrot.lane.b32.xlu0 %v3321, 95
      %v3603 = vpop.permute.xlu0 %3602
      %3604 = vrot.lane.b32.xlu0 %v3369, 95
      %v3605 = vpop.permute.xlu0 %3604
      %vm3606 = vcmask 777216
      %v3607 = vsel %vm3606, %v3583, %v3585
      %v3608 = vsel %vm3606, %v3585, %v3587
      %v3609 = vsel %vm3606, %v3589, %v3591
      %v3610 = vsel %vm3606, %v3591, %v3593
      %v3611 = vsel %vm3606, %v3595, %v3597
      %v3612 = vsel %vm3606, %v3597, %v3599
      %v3613 = vsel %vm3606, %v3601, %v3603
      %v3614 = vsel %vm3606, %v3603, %v3605
      %3623 = vrot.lane.b32.xlu0 %v3305, 94
      %v3624 = vpop.permute.xlu0 %3623
      %3625 = vrot.lane.b32.xlu0 %v3307, 94
      %v3626 = vpop.permute.xlu0 %3625
      %3627 = vrot.lane.b32.xlu0 %v3358, 94
      %v3628 = vpop.permute.xlu0 %3627
      %3629 = vrot.lane.b32.xlu0 %v3309, 94
      %v3630 = vpop.permute.xlu0 %3629
      %3631 = vrot.lane.b32.xlu0 %v3311, 94
      %v3632 = vpop.permute.xlu0 %3631
      %3633 = vrot.lane.b32.xlu0 %v3361, 94
      %v3634 = vpop.permute.xlu0 %3633
      %3635 = vrot.lane.b32.xlu0 %v3315, 94
      %v3636 = vpop.permute.xlu0 %3635
      %3637 = vrot.lane.b32.xlu0 %v3317, 94
      %v3638 = vpop.permute.xlu0 %3637
      %3639 = vrot.lane.b32.xlu0 %v3366, 94
      %v3640 = vpop.permute.xlu0 %3639
      %3641 = vrot.lane.b32.xlu0 %v3319, 94
      %v3642 = vpop.permute.xlu0 %3641
      %3643 = vrot.lane.b32.xlu0 %v3321, 94
      %v3644 = vpop.permute.xlu0 %3643
      %3645 = vrot.lane.b32.xlu0 %v3369, 94
      %v3646 = vpop.permute.xlu0 %3645
      %vm3647 = vcmask 769024
      %v3648 = vsel %vm3647, %v3624, %v3626
      %v3649 = vsel %vm3647, %v3626, %v3628
      %v3650 = vsel %vm3647, %v3630, %v3632
      %v3651 = vsel %vm3647, %v3632, %v3634
      %v3652 = vsel %vm3647, %v3636, %v3638
      %v3653 = vsel %vm3647, %v3638, %v3640
      %v3654 = vsel %vm3647, %v3642, %v3644
      %v3655 = vsel %vm3647, %v3644, %v3646
      %v3664 = vld [vmem:[%s43] sm:$0xff]
      %v3665 = vld [vmem:[%s43 + $0x8] sm:$0xf]
      %v3666 = vpack.c.bf16 %v3309, %v3305
      %v3667 = vpack.c.bf16 %v3311, %v3307
      %v3668 = vpack.c.bf16 %v3319, %v3315
      %v3669 = vpack.c.bf16 %v3321, %v3317
      %v3670 = vpack.c.bf16 %v3398, %v3397
      %v3671 = vpack.c.bf16 %v3387, %v3383
      %v3672 = vpack.c.bf16 %v3400, %v3399
      %v3673 = vpack.c.bf16 %v3395, %v3391
      %v3674 = vpack.c.bf16 %v3427, %v3426
      %v3675 = vpack.c.bf16 %v3416, %v3412
      %v3676 = vpack.c.bf16 %v3429, %v3428
      %v3677 = vpack.c.bf16 %v3424, %v3420
      %v3678 = vpack.c.bf16 %v3456, %v3455
      %v3679 = vpack.c.bf16 %v3445, %v3441
      %v3680 = vpack.c.bf16 %v3458, %v3457
      %v3681 = vpack.c.bf16 %v3453, %v3449
      %v3682 = vpack.c.bf16 %v3485, %v3484
      %v3683 = vpack.c.bf16 %v3474, %v3470
      %v3684 = vpack.c.bf16 %v3487, %v3486
      %v3685 = vpack.c.bf16 %v3482, %v3478
      %v3686 = vpack.c.bf16 %v3527, %v3525
      %v3687 = vpack.c.bf16 %v3528, %v3526
      %v3688 = vpack.c.bf16 %v3531, %v3529
      %v3689 = vpack.c.bf16 %v3532, %v3530
      %v3690 = vpack.c.bf16 %v3568, %v3566
      %v3691 = vpack.c.bf16 %v3569, %v3567
      %v3692 = vpack.c.bf16 %v3572, %v3570
      %v3693 = vpack.c.bf16 %v3573, %v3571
      %v3694 = vpack.c.bf16 %v3609, %v3607
      %v3695 = vpack.c.bf16 %v3610, %v3608
      %v3696 = vpack.c.bf16 %v3613, %v3611
      %v3697 = vpack.c.bf16 %v3614, %v3612
      %v3698 = vpack.c.bf16 %v3650, %v3648
      %v3699 = vpack.c.bf16 %v3651, %v3649
      %v3700 = vpack.c.bf16 %v3654, %v3652
      %v3701 = vpack.c.bf16 %v3655, %v3653
      %v3702 = vld [vmem:[%s45] sm:$0xff]
      %3704 = vset.pattern.permute.xlu0 0
      %3705 = vperm.xlu0 %3704, %v3702
      %v3706 = vpop.permute.xlu0 %3705
      %v3710 = vunpack.c.l.b16 %v3664
      %v3711 = vunpack.c.h.b16 %v3664
      %v3712 = vunpack.c.l.b16 %v3665
      %v3713 = vpack.c.b16 %v3710, %v3710
      %v3714 = vpack.c.b16 %v3711, %v3711
      %v3715 = vpack.c.b16 %v3712, %v3712
      %v3719 = vsel %vm1398, %v3715, 0
      %3721 = vmatprep.subr.bf16.mxu0 %v3681
      %3722 = vmatpush1.bf16.msra.mxu0 %v3680
      %3723 = vmatprep.subr.bf16.mxu0 %v3679
      %3724 = vmatpush1.bf16.msra.mxu0 %v3678
      %3725 = vmatprep.subr.bf16.mxu0 %v3677
      %3726 = vmatpush1.bf16.msra.mxu0 %v3676
      %3727 = vmatprep.subr.bf16.mxu0 %v3675
      %3728 = vmatpush1.bf16.msra.mxu0 %v3674
      %3729 = vmatprep.subr.bf16.mxu0 %v3673
      %3730 = vmatpush1.bf16.msra.mxu0 %v3672
      %3731 = vmatprep.subr.bf16.mxu0 %v3671
      %3732 = vmatpush1.bf16.msra.mxu0 %v3670
      %3733 = vmatprep.subr.bf16.mxu0 %v3669
      %3734 = vmatpush1.bf16.msra.mxu0 %v3668
      %3735 = vmatprep.subr.bf16.mxu0 %v3667
      %3736 = vmatpush1.bf16.msra.mxu0 %v3666
      %3737 = vmatprep.subr.bf16.mxu0 %v3697
      %3738 = vmatpush2.bf16.msra.mxu0 %v3696
      %3739 = vmatprep.subr.bf16.mxu0 %v3695
      %3740 = vmatpush2.bf16.msra.mxu0 %v3694
      %3741 = vmatprep.subr.bf16.mxu0 %v3693
      %3742 = vmatpush2.bf16.msra.mxu0 %v3692
      %3743 = vmatprep.subr.bf16.mxu0 %v3691
      %3744 = vmatpush2.bf16.msra.mxu0 %v3690
      %3745 = vmatprep.subr.bf16.mxu0 %v3689
      %3746 = vmatpush2.bf16.msra.mxu0 %v3688
      %3747 = vmatprep.subr.bf16.mxu0 %v3687
      %3748 = vmatpush2.bf16.msra.mxu0 %v3686
      %3749 = vmatprep.subr.bf16.mxu0 %v3685
      %3750 = vmatpush2.bf16.msra.mxu0 %v3684
      %3751 = vmatprep.subr.bf16.mxu0 %v3683
      %3752 = vmatpush2.bf16.msra.mxu0 %v3682
      %3753 = vmatprep.mubr.bf16.mxu0 %v3714
      %3754 = vmatmul.mubr.bf16.gmra.mxu0 %v3713
      %v3755 = vpop.f32.mrf.mxu0
      %v3756 = vadd.f32 %v3706, %v3755
      %v3757 = vpop.f32.mrf.mxu0
      %v3758 = vadd.f32 %v3706, %v3757
      %v3759 = vpop.f32.mrf.mxu0
      %v3760 = vpop.f32.mrf.mxu0
      %3761 = vdwg.mxu0
      %3762 = vmatprep.subr.bf16.mxu0 0
      %3763 = vmatpush1.bf16.msra.mxu0 0
      %3764 = vmatprep.subr.bf16.mxu0 0
      %3765 = vmatpush1.bf16.msra.mxu0 0
      %3766 = vmatprep.subr.bf16.mxu0 0
      %3767 = vmatpush1.bf16.msra.mxu0 0
      %3768 = vmatprep.subr.bf16.mxu0 0
      %3769 = vmatpush1.bf16.msra.mxu0 0
      %3770 = vmatprep.subr.bf16.mxu0 0
      %3771 = vmatpush1.bf16.msra.mxu0 0
      %3772 = vmatprep.subr.bf16.mxu0 0
      %3773 = vmatpush1.bf16.msra.mxu0 0
      %3774 = vmatprep.subr.bf16.mxu0 %v3701
      %3775 = vmatpush1.bf16.msra.mxu0 %v3700
      %3776 = vmatprep.subr.bf16.mxu0 %v3699
      %3777 = vmatpush1.bf16.msra.mxu0 %v3698
      %3778 = vmatprep.subr.bf16.mxu0 0
      %3779 = vmatpush2.bf16.msra.mxu0 0
      %3780 = vmatprep.subr.bf16.mxu0 0
      %3781 = vmatpush2.bf16.msra.mxu0 0
      %3782 = vmatprep.subr.bf16.mxu0 0
      %3783 = vmatpush2.bf16.msra.mxu0 0
      %3784 = vmatprep.subr.bf16.mxu0 0
      %3785 = vmatpush2.bf16.msra.mxu0 0
      %3786 = vmatprep.subr.bf16.mxu0 0
      %3787 = vmatpush2.bf16.msra.mxu0 0
      %3788 = vmatprep.subr.bf16.mxu0 0
      %3789 = vmatpush2.bf16.msra.mxu0 0
      %3790 = vmatprep.subr.bf16.mxu0 0
      %3791 = vmatpush2.bf16.msra.mxu0 0
      %3792 = vmatprep.subr.bf16.mxu0 0
      %3793 = vmatpush2.bf16.msra.mxu0 0
      %3794 = vmatprep.mubr.bf16.mxu0 0
      %3795 = vmatmul.mubr.bf16.gmra.mxu0 %v3719
      %v3796 = vpop.f32.mrf.mxu0
      %v3797 = vadd.f32 %v3756, %v3796
      %v3798 = vpop.f32.mrf.mxu0
      %v3799 = vadd.f32 %v3758, %v3798
      %v3800 = vpop.f32.mrf.mxu0
      %v3801 = vpop.f32.mrf.mxu0
      %3802 = vdwg.mxu0
      %v3803 = vld [vmem:[%s49] sm:$0x3]
      %v3805 = vlaneseq
      %v3806 = vshrl.u32 %v3805, 7
      %v3807 = vsub.s32 0, %v3806
      %v3808 = vrot.slane %v3803, %v3807
      %v3809 = vlaneseq
      %v3810 = vshrl.u32 %v3809, 7
      %v3811 = vsub.s32 1, %v3810
      %v3812 = vrot.slane %v3803, %v3811
      %v3815 = vmul.f32 %v3797, %v3808
      %v3816 = vmul.f32 %v3799, %v3812
      %3819 = vrot.lane.b32.xlu0 %v3815, 17
      %v3820 = vpop.permute.xlu0 %3819
      %3821 = vrot.lane.b32.xlu0 %v3816, 17
      %v3822 = vpop.permute.xlu0 %3821
      %vm3823 = vcmask 138240
      %v3824 = vsel %vm3823, %v3820, %v3822
      %v3827 = vsel %vm3823, 0.0, %v3820
      %v3828 = vmax.f32 %v3827, 0.0
      %v3829 = vmax.f32 %v3824, 0.0
      %3832 = vrot.lane.b32.xlu0 %v3828, 17
      %v3833 = vpop.permute.xlu0 %3832
      %3834 = vrot.lane.b32.xlu0 %v3829, 17
      %v3835 = vpop.permute.xlu0 %3834
      %v3836 = vsel %vm3823, %v3833, %v3835
      %v3840 = vsel %vm3823, 0.0, %v3833
      %v3841 = vsel %vm3823, %v3835, 0.0
      %3844 = vrot.lane.b32.xlu0 %v3840, 127
      %v3845 = vpop.permute.xlu0 %3844
      %3846 = vrot.lane.b32.xlu0 %v3836, 127
      %v3847 = vpop.permute.xlu0 %3846
      %3848 = vrot.lane.b32.xlu0 %v3841, 127
      %v3849 = vpop.permute.xlu0 %3848
      %v3850 = vsel %vm3396, %v3845, %v3847
      %v3851 = vsel %vm3396, %v3847, %v3849
      %3854 = vrot.lane.b32.xlu0 %v3840, 126
      %v3855 = vpop.permute.xlu0 %3854
      %3856 = vrot.lane.b32.xlu0 %v3836, 126
      %v3857 = vpop.permute.xlu0 %3856
      %3858 = vrot.lane.b32.xlu0 %v3841, 126
      %v3859 = vpop.permute.xlu0 %3858
      %v3860 = vsel %vm3425, %v3855, %v3857
      %v3861 = vsel %vm3425, %v3857, %v3859
      %3864 = vrot.lane.b32.xlu0 %v3840, 112
      %v3865 = vpop.permute.xlu0 %3864
      %3866 = vrot.lane.b32.xlu0 %v3836, 112
      %v3867 = vpop.permute.xlu0 %3866
      %3868 = vrot.lane.b32.xlu0 %v3841, 112
      %v3869 = vpop.permute.xlu0 %3868
      %v3870 = vsel %vm3454, %v3865, %v3867
      %v3871 = vsel %vm3454, %v3867, %v3869
      %3874 = vrot.lane.b32.xlu0 %v3840, 111
      %v3875 = vpop.permute.xlu0 %3874
      %3876 = vrot.lane.b32.xlu0 %v3836, 111
      %v3877 = vpop.permute.xlu0 %3876
      %3878 = vrot.lane.b32.xlu0 %v3841, 111
      %v3879 = vpop.permute.xlu0 %3878
      %v3880 = vsel %vm3483, %v3875, %v3877
      %v3881 = vsel %vm3483, %v3877, %v3879
      %3884 = vrot.lane.b32.xlu0 %v3840, 110
      %v3885 = vpop.permute.xlu0 %3884
      %3886 = vrot.lane.b32.xlu0 %v3836, 110
      %v3887 = vpop.permute.xlu0 %3886
      %3888 = vrot.lane.b32.xlu0 %v3841, 110
      %v3889 = vpop.permute.xlu0 %3888
      %v3890 = vsel %vm3524, %v3885, %v3887
      %v3891 = vsel %vm3524, %v3887, %v3889
      %3894 = vrot.lane.b32.xlu0 %v3840, 96
      %v3895 = vpop.permute.xlu0 %3894
      %3896 = vrot.lane.b32.xlu0 %v3836, 96
      %v3897 = vpop.permute.xlu0 %3896
      %3898 = vrot.lane.b32.xlu0 %v3841, 96
      %v3899 = vpop.permute.xlu0 %3898
      %v3900 = vsel %vm3565, %v3895, %v3897
      %v3901 = vsel %vm3565, %v3897, %v3899
      %3904 = vrot.lane.b32.xlu0 %v3840, 95
      %v3905 = vpop.permute.xlu0 %3904
      %3906 = vrot.lane.b32.xlu0 %v3836, 95
      %v3907 = vpop.permute.xlu0 %3906
      %3908 = vrot.lane.b32.xlu0 %v3841, 95
      %v3909 = vpop.permute.xlu0 %3908
      %v3910 = vsel %vm3606, %v3905, %v3907
      %v3911 = vsel %vm3606, %v3907, %v3909
      %3914 = vrot.lane.b32.xlu0 %v3840, 94
      %v3915 = vpop.permute.xlu0 %3914
      %3916 = vrot.lane.b32.xlu0 %v3836, 94
      %v3917 = vpop.permute.xlu0 %3916
      %3918 = vrot.lane.b32.xlu0 %v3841, 94
      %v3919 = vpop.permute.xlu0 %3918
      %v3920 = vsel %vm3647, %v3915, %v3917
      %v3921 = vsel %vm3647, %v3917, %v3919
      %v3924 = vld [vmem:[%s51] sm:$0xf]
      %v3925 = vpack.c.bf16 %v3850, %v3840
      %v3926 = vpack.c.bf16 %v3851, %v3836
      %v3927 = vpack.c.bf16 %v3870, %v3860
      %v3928 = vpack.c.bf16 %v3871, %v3861
      %v3929 = vpack.c.bf16 %v3890, %v3880
      %v3930 = vpack.c.bf16 %v3891, %v3881
      %v3931 = vpack.c.bf16 %v3910, %v3900
      %v3932 = vpack.c.bf16 %v3911, %v3901
      %v3933 = vpack.c.bf16 %v3920, %v3920
      %v3934 = vpack.c.bf16 %v3921, %v3921
      %v3935 = vld [vmem:[%s53] sm:$0xff]
      %3937 = vset.pattern.permute.xlu0 0
      %3938 = vperm.xlu0 %3937, %v3935
      %v3939 = vpop.permute.xlu0 %3938
      %vm3941 = vcmask 588800
      %v3943 = vsel %vm3941, %v3924, 0
      %vm3945 = vcmask 1043456
      %v3947 = vsel %vm3945, %v3933, 0
      %v3950 = vsel %vm3945, %v3934, 0
      %3952 = vmatprep.subr.bf16.mxu0 0
      %3953 = vmatpush1.bf16.msra.mxu0 0
      %3954 = vmatprep.subr.bf16.mxu0 0
      %3955 = vmatpush1.bf16.msra.mxu0 0
      %3956 = vmatprep.subr.bf16.mxu0 0
      %3957 = vmatpush1.bf16.msra.mxu0 0
      %3958 = vmatprep.subr.bf16.mxu0 %v3950
      %3959 = vmatpush1.bf16.msra.mxu0 %v3947
      %3960 = vmatprep.subr.bf16.mxu0 %v3932
      %3961 = vmatpush1.bf16.msra.mxu0 %v3931
      %3962 = vmatprep.subr.bf16.mxu0 %v3930
      %3963 = vmatpush1.bf16.msra.mxu0 %v3929
      %3964 = vmatprep.subr.bf16.mxu0 %v3928
      %3965 = vmatpush1.bf16.msra.mxu0 %v3927
      %3966 = vmatprep.subr.bf16.mxu0 %v3926
      %3967 = vmatpush1.bf16.msra.mxu0 %v3925
      %3968 = vmatprep.subr.bf16.mxu0 0
      %3969 = vmatpush2.bf16.msra.mxu0 0
      %3970 = vmatprep.subr.bf16.mxu0 0
      %3971 = vmatpush2.bf16.msra.mxu0 0
      %3972 = vmatprep.subr.bf16.mxu0 0
      %3973 = vmatpush2.bf16.msra.mxu0 0
      %3974 = vmatprep.subr.bf16.mxu0 0
      %3975 = vmatpush2.bf16.msra.mxu0 0
      %3976 = vmatprep.subr.bf16.mxu0 0
      %3977 = vmatpush2.bf16.msra.mxu0 0
      %3978 = vmatprep.subr.bf16.mxu0 0
      %3979 = vmatpush2.bf16.msra.mxu0 0
      %3980 = vmatprep.subr.bf16.mxu0 0
      %3981 = vmatpush2.bf16.msra.mxu0 0
      %3982 = vmatprep.subr.bf16.mxu0 0
      %3983 = vmatpush2.bf16.msra.mxu0 0
      %3984 = vmatprep.mubr.bf16.mxu0 0
      %3985 = vmatmul.mubr.bf16.gmra.mxu0 %v3943
      %v3986 = vpop.f32.mrf.mxu0
      %v3987 = vadd.f32 %v3939, %v3986
      %v3988 = vpop.f32.mrf.mxu0
      %v3989 = vadd.f32 %v3939, %v3988
      %v3990 = vpop.f32.mrf.mxu0
      %v3991 = vpop.f32.mrf.mxu0
      %3992 = vdwg.mxu0
      %v3993 = vld [vmem:[%s59] sm:$0x3]
      %v3995 = vlaneseq
      %v3996 = vshrl.u32 %v3995, 7
      %v3997 = vsub.s32 0, %v3996
      %v3998 = vrot.slane %v3993, %v3997
      %v3999 = vlaneseq
      %v4000 = vshrl.u32 %v3999, 7
      %v4001 = vsub.s32 1, %v4000
      %v4002 = vrot.slane %v3993, %v4001
      %v4005 = vmul.f32 %v3987, %v3998
      %v4006 = vmul.f32 %v3989, %v4002
      %v4007 = vmax.f32 %v4005, 0.0
      %v4008 = vmax.f32 %v4006, 0.0
      %4011 = vrot.lane.b32.xlu0 %v4007, 17
      %v4012 = vpop.permute.xlu0 %4011
      %4013 = vrot.lane.b32.xlu0 %v4008, 17
      %v4014 = vpop.permute.xlu0 %4013
      %v4015 = vsel %vm3823, %v4012, %v4014
      %v4019 = vsel %vm3823, 0.0, %v4012
      %v4020 = vsel %vm3823, %v4014, 0.0
      %4023 = vrot.lane.b32.xlu0 %v4019, 127
      %v4024 = vpop.permute.xlu0 %4023
      %4025 = vrot.lane.b32.xlu0 %v4015, 127
      %v4026 = vpop.permute.xlu0 %4025
      %4027 = vrot.lane.b32.xlu0 %v4020, 127
      %v4028 = vpop.permute.xlu0 %4027
      %v4029 = vsel %vm3396, %v4024, %v4026
      %v4030 = vsel %vm3396, %v4026, %v4028
      %4033 = vrot.lane.b32.xlu0 %v4019, 126
      %v4034 = vpop.permute.xlu0 %4033
      %4035 = vrot.lane.b32.xlu0 %v4015, 126
      %v4036 = vpop.permute.xlu0 %4035
      %4037 = vrot.lane.b32.xlu0 %v4020, 126
      %v4038 = vpop.permute.xlu0 %4037
      %v4039 = vsel %vm3425, %v4034, %v4036
      %v4040 = vsel %vm3425, %v4036, %v4038
      %4043 = vrot.lane.b32.xlu0 %v4019, 112
      %v4044 = vpop.permute.xlu0 %4043
      %4045 = vrot.lane.b32.xlu0 %v4015, 112
      %v4046 = vpop.permute.xlu0 %4045
      %4047 = vrot.lane.b32.xlu0 %v4020, 112
      %v4048 = vpop.permute.xlu0 %4047
      %v4049 = vsel %vm3454, %v4044, %v4046
      %v4050 = vsel %vm3454, %v4046, %v4048
      %4053 = vrot.lane.b32.xlu0 %v4019, 111
      %v4054 = vpop.permute.xlu0 %4053
      %4055 = vrot.lane.b32.xlu0 %v4015, 111
      %v4056 = vpop.permute.xlu0 %4055
      %4057 = vrot.lane.b32.xlu0 %v4020, 111
      %v4058 = vpop.permute.xlu0 %4057
      %v4059 = vsel %vm3483, %v4054, %v4056
      %v4060 = vsel %vm3483, %v4056, %v4058
      %4063 = vrot.lane.b32.xlu0 %v4019, 110
      %v4064 = vpop.permute.xlu0 %4063
      %4065 = vrot.lane.b32.xlu0 %v4015, 110
      %v4066 = vpop.permute.xlu0 %4065
      %4067 = vrot.lane.b32.xlu0 %v4020, 110
      %v4068 = vpop.permute.xlu0 %4067
      %v4069 = vsel %vm3524, %v4064, %v4066
      %v4070 = vsel %vm3524, %v4066, %v4068
      %4073 = vrot.lane.b32.xlu0 %v4019, 96
      %v4074 = vpop.permute.xlu0 %4073
      %4075 = vrot.lane.b32.xlu0 %v4015, 96
      %v4076 = vpop.permute.xlu0 %4075
      %4077 = vrot.lane.b32.xlu0 %v4020, 96
      %v4078 = vpop.permute.xlu0 %4077
      %v4079 = vsel %vm3565, %v4074, %v4076
      %v4080 = vsel %vm3565, %v4076, %v4078
      %4083 = vrot.lane.b32.xlu0 %v4019, 95
      %v4084 = vpop.permute.xlu0 %4083
      %4085 = vrot.lane.b32.xlu0 %v4015, 95
      %v4086 = vpop.permute.xlu0 %4085
      %4087 = vrot.lane.b32.xlu0 %v4020, 95
      %v4088 = vpop.permute.xlu0 %4087
      %v4089 = vsel %vm3606, %v4084, %v4086
      %v4090 = vsel %vm3606, %v4086, %v4088
      %4093 = vrot.lane.b32.xlu0 %v4019, 94
      %v4094 = vpop.permute.xlu0 %4093
      %4095 = vrot.lane.b32.xlu0 %v4015, 94
      %v4096 = vpop.permute.xlu0 %4095
      %4097 = vrot.lane.b32.xlu0 %v4020, 94
      %v4098 = vpop.permute.xlu0 %4097
      %v4099 = vsel %vm3647, %v4094, %v4096
      %v4100 = vsel %vm3647, %v4096, %v4098
      %v4103 = vld [vmem:[%s55] sm:$0xf]
      %v4104 = vpack.c.bf16 %v4029, %v4019
      %v4105 = vpack.c.bf16 %v4030, %v4015
      %v4106 = vpack.c.bf16 %v4049, %v4039
      %v4107 = vpack.c.bf16 %v4050, %v4040
      %v4108 = vpack.c.bf16 %v4069, %v4059
      %v4109 = vpack.c.bf16 %v4070, %v4060
      %v4110 = vpack.c.bf16 %v4089, %v4079
      %v4111 = vpack.c.bf16 %v4090, %v4080
      %v4112 = vpack.c.bf16 %v4099, %v4099
      %v4113 = vpack.c.bf16 %v4100, %v4100
      %v4114 = vld [vmem:[%s57] sm:$0xff]
      %4116 = vset.pattern.permute.xlu0 0
      %4117 = vperm.xlu0 %4116, %v4114
      %v4118 = vpop.permute.xlu0 %4117
      %v4121 = vsel %vm3941, %v4103, 0
      %v4124 = vsel %vm3945, %v4112, 0
      %v4127 = vsel %vm3945, %v4113, 0
      %4129 = vmatprep.subr.bf16.mxu0 0
      %4130 = vmatpush1.bf16.msra.mxu0 0
      %4131 = vmatprep.subr.bf16.mxu0 0
      %4132 = vmatpush1.bf16.msra.mxu0 0
      %4133 = vmatprep.subr.bf16.mxu0 0
      %4134 = vmatpush1.bf16.msra.mxu0 0
      %4135 = vmatprep.subr.bf16.mxu0 %v4127
      %4136 = vmatpush1.bf16.msra.mxu0 %v4124
      %4137 = vmatprep.subr.bf16.mxu0 %v4111
      %4138 = vmatpush1.bf16.msra.mxu0 %v4110
      %4139 = vmatprep.subr.bf16.mxu0 %v4109
      %4140 = vmatpush1.bf16.msra.mxu0 %v4108
      %4141 = vmatprep.subr.bf16.mxu0 %v4107
      %4142 = vmatpush1.bf16.msra.mxu0 %v4106
      %4143 = vmatprep.subr.bf16.mxu0 %v4105
      %4144 = vmatpush1.bf16.msra.mxu0 %v4104
      %4145 = vmatprep.subr.bf16.mxu0 0
      %4146 = vmatpush2.bf16.msra.mxu0 0
      %4147 = vmatprep.subr.bf16.mxu0 0
      %4148 = vmatpush2.bf16.msra.mxu0 0
      %4149 = vmatprep.subr.bf16.mxu0 0
      %4150 = vmatpush2.bf16.msra.mxu0 0
      %4151 = vmatprep.subr.bf16.mxu0 0
      %4152 = vmatpush2.bf16.msra.mxu0 0
      %4153 = vmatprep.subr.bf16.mxu0 0
      %4154 = vmatpush2.bf16.msra.mxu0 0
      %4155 = vmatprep.subr.bf16.mxu0 0
      %4156 = vmatpush2.bf16.msra.mxu0 0
      %4157 = vmatprep.subr.bf16.mxu0 0
      %4158 = vmatpush2.bf16.msra.mxu0 0
      %4159 = vmatprep.subr.bf16.mxu0 0
      %4160 = vmatpush2.bf16.msra.mxu0 0
      %4161 = vmatprep.mubr.bf16.mxu0 0
      %4162 = vmatmul.mubr.bf16.gmra.mxu0 %v4121
      %v4163 = vpop.f32.mrf.mxu0
      %v4164 = vadd.f32 %v4118, %v4163
      %v4165 = vpop.f32.mrf.mxu0
      %v4166 = vadd.f32 %v4118, %v4165
      %v4167 = vpop.f32.mrf.mxu0
      %v4168 = vpop.f32.mrf.mxu0
      %4169 = vdwg.mxu0
      %v4170 = vmul.f32 %v4164, %v3998
      %v4171 = vmul.f32 %v4166, %v4002
      %v4172 = vadd.f32 %v3827, %v4170
      %v4173 = vadd.f32 %v3824, %v4171
      %v4174 = vmax.f32 %v4172, 0.0
      %v4175 = vmax.f32 %v4173, 0.0
      %4178 = vrot.lane.b32.xlu0 %v4174, 17
      %v4179 = vpop.permute.xlu0 %4178
      %4180 = vrot.lane.b32.xlu0 %v4175, 17
      %v4181 = vpop.permute.xlu0 %4180
      %v4182 = vsel %vm3823, %v4179, %v4181
      %v4186 = vsel %vm3823, 0.0, %v4179
      %v4187 = vsel %vm3823, %v4181, 0.0
      %4190 = vrot.lane.b32.xlu0 %v4186, 127
      %v4191 = vpop.permute.xlu0 %4190
      %4192 = vrot.lane.b32.xlu0 %v4182, 127
      %v4193 = vpop.permute.xlu0 %4192
      %4194 = vrot.lane.b32.xlu0 %v4187, 127
      %v4195 = vpop.permute.xlu0 %4194
      %v4196 = vsel %vm3396, %v4191, %v4193
      %v4197 = vsel %vm3396, %v4193, %v4195
      %4200 = vrot.lane.b32.xlu0 %v4186, 126
      %v4201 = vpop.permute.xlu0 %4200
      %4202 = vrot.lane.b32.xlu0 %v4182, 126
      %v4203 = vpop.permute.xlu0 %4202
      %4204 = vrot.lane.b32.xlu0 %v4187, 126
      %v4205 = vpop.permute.xlu0 %4204
      %v4206 = vsel %vm3425, %v4201, %v4203
      %v4207 = vsel %vm3425, %v4203, %v4205
      %4210 = vrot.lane.b32.xlu0 %v4186, 112
      %v4211 = vpop.permute.xlu0 %4210
      %4212 = vrot.lane.b32.xlu0 %v4182, 112
      %v4213 = vpop.permute.xlu0 %4212
      %4214 = vrot.lane.b32.xlu0 %v4187, 112
      %v4215 = vpop.permute.xlu0 %4214
      %v4216 = vsel %vm3454, %v4211, %v4213
      %v4217 = vsel %vm3454, %v4213, %v4215
      %4220 = vrot.lane.b32.xlu0 %v4186, 111
      %v4221 = vpop.permute.xlu0 %4220
      %4222 = vrot.lane.b32.xlu0 %v4182, 111
      %v4223 = vpop.permute.xlu0 %4222
      %4224 = vrot.lane.b32.xlu0 %v4187, 111
      %v4225 = vpop.permute.xlu0 %4224
      %v4226 = vsel %vm3483, %v4221, %v4223
      %v4227 = vsel %vm3483, %v4223, %v4225
      %4230 = vrot.lane.b32.xlu0 %v4186, 110
      %v4231 = vpop.permute.xlu0 %4230
      %4232 = vrot.lane.b32.xlu0 %v4182, 110
      %v4233 = vpop.permute.xlu0 %4232
      %4234 = vrot.lane.b32.xlu0 %v4187, 110
      %v4235 = vpop.permute.xlu0 %4234
      %v4236 = vsel %vm3524, %v4231, %v4233
      %v4237 = vsel %vm3524, %v4233, %v4235
      %4240 = vrot.lane.b32.xlu0 %v4186, 96
      %v4241 = vpop.permute.xlu0 %4240
      %4242 = vrot.lane.b32.xlu0 %v4182, 96
      %v4243 = vpop.permute.xlu0 %4242
      %4244 = vrot.lane.b32.xlu0 %v4187, 96
      %v4245 = vpop.permute.xlu0 %4244
      %v4246 = vsel %vm3565, %v4241, %v4243
      %v4247 = vsel %vm3565, %v4243, %v4245
      %4250 = vrot.lane.b32.xlu0 %v4186, 95
      %v4251 = vpop.permute.xlu0 %4250
      %4252 = vrot.lane.b32.xlu0 %v4182, 95
      %v4253 = vpop.permute.xlu0 %4252
      %4254 = vrot.lane.b32.xlu0 %v4187, 95
      %v4255 = vpop.permute.xlu0 %4254
      %v4256 = vsel %vm3606, %v4251, %v4253
      %v4257 = vsel %vm3606, %v4253, %v4255
      %4260 = vrot.lane.b32.xlu0 %v4186, 94
      %v4261 = vpop.permute.xlu0 %4260
      %4262 = vrot.lane.b32.xlu0 %v4182, 94
      %v4263 = vpop.permute.xlu0 %4262
      %4264 = vrot.lane.b32.xlu0 %v4187, 94
      %v4265 = vpop.permute.xlu0 %4264
      %v4266 = vsel %vm3647, %v4261, %v4263
      %v4267 = vsel %vm3647, %v4263, %v4265
      %v4270 = vld [vmem:[%s61] sm:$0xf]
      %v4271 = vpack.c.bf16 %v4196, %v4186
      %v4272 = vpack.c.bf16 %v4197, %v4182
      %v4273 = vpack.c.bf16 %v4216, %v4206
      %v4274 = vpack.c.bf16 %v4217, %v4207
      %v4275 = vpack.c.bf16 %v4236, %v4226
      %v4276 = vpack.c.bf16 %v4237, %v4227
      %v4277 = vpack.c.bf16 %v4256, %v4246
      %v4278 = vpack.c.bf16 %v4257, %v4247
      %v4279 = vpack.c.bf16 %v4266, %v4266
      %v4280 = vpack.c.bf16 %v4267, %v4267
      %v4281 = vld [vmem:[%s63] sm:$0xff]
      %4283 = vset.pattern.permute.xlu0 0
      %4284 = vperm.xlu0 %4283, %v4281
      %v4285 = vpop.permute.xlu0 %4284
      %v4288 = vsel %vm3941, %v4270, 0
      %v4291 = vsel %vm3945, %v4279, 0
      %v4294 = vsel %vm3945, %v4280, 0
      %4296 = vmatprep.subr.bf16.mxu0 0
      %4297 = vmatpush1.bf16.msra.mxu0 0
      %4298 = vmatprep.subr.bf16.mxu0 0
      %4299 = vmatpush1.bf16.msra.mxu0 0
      %4300 = vmatprep.subr.bf16.mxu0 0
      %4301 = vmatpush1.bf16.msra.mxu0 0
      %4302 = vmatprep.subr.bf16.mxu0 %v4294
      %4303 = vmatpush1.bf16.msra.mxu0 %v4291
      %4304 = vmatprep.subr.bf16.mxu0 %v4278
      %4305 = vmatpush1.bf16.msra.mxu0 %v4277
      %4306 = vmatprep.subr.bf16.mxu0 %v4276
      %4307 = vmatpush1.bf16.msra.mxu0 %v4275
      %4308 = vmatprep.subr.bf16.mxu0 %v4274
      %4309 = vmatpush1.bf16.msra.mxu0 %v4273
      %4310 = vmatprep.subr.bf16.mxu0 %v4272
      %4311 = vmatpush1.bf16.msra.mxu0 %v4271
      %4312 = vmatprep.subr.bf16.mxu0 0
      %4313 = vmatpush2.bf16.msra.mxu0 0
      %4314 = vmatprep.subr.bf16.mxu0 0
      %4315 = vmatpush2.bf16.msra.mxu0 0
      %4316 = vmatprep.subr.bf16.mxu0 0
      %4317 = vmatpush2.bf16.msra.mxu0 0
      %4318 = vmatprep.subr.bf16.mxu0 0
      %4319 = vmatpush2.bf16.msra.mxu0 0
      %4320 = vmatprep.subr.bf16.mxu0 0
      %4321 = vmatpush2.bf16.msra.mxu0 0
      %4322 = vmatprep.subr.bf16.mxu0 0
      %4323 = vmatpush2.bf16.msra.mxu0 0
      %4324 = vmatprep.subr.bf16.mxu0 0
      %4325 = vmatpush2.bf16.msra.mxu0 0
      %4326 = vmatprep.subr.bf16.mxu0 0
      %4327 = vmatpush2.bf16.msra.mxu0 0
      %4328 = vmatprep.mubr.bf16.mxu0 0
      %4329 = vmatmul.mubr.bf16.gmra.mxu0 %v4288
      %v4330 = vpop.f32.mrf.mxu0
      %v4331 = vadd.f32 %v4285, %v4330
      %v4332 = vpop.f32.mrf.mxu0
      %v4333 = vadd.f32 %v4285, %v4332
      %v4334 = vpop.f32.mrf.mxu0
      %v4335 = vpop.f32.mrf.mxu0
      %4336 = vdwg.mxu0
      %v4337 = vld [vmem:[%s65] sm:$0x3]
      %v4339 = vlaneseq
      %v4340 = vshrl.u32 %v4339, 7
      %v4341 = vsub.s32 0, %v4340
      %v4342 = vrot.slane %v4337, %v4341
      %v4343 = vlaneseq
      %v4344 = vshrl.u32 %v4343, 7
      %v4345 = vsub.s32 1, %v4344
      %v4346 = vrot.slane %v4337, %v4345
      %v4349 = vmul.f32 %v4331, %v4342
      %v4350 = vmul.f32 %v4333, %v4346
      %v4351 = vmax.f32 %v4349, 0.0
      %v4352 = vmax.f32 %v4350, 0.0
      %v4353 = vpack.c.bf16 %v4351, %v4172
      %v4354 = vpack.c.bf16 %v4352, %v4173
      %v4355 = vld [vmem:[%s71] sm:$0xff]
      %v4356 = vld [vmem:[%s71 + $0x8] sm:$0xff]
      %v4357 = vld [vmem:[%s71 + $0x10] sm:$0xff]
      %v4358 = vld [vmem:[%s71 + $0x18] sm:$0xff]
      %v4359 = vld [vmem:[%s71 + $0x20] sm:$0xff]
      %v4360 = vld [vmem:[%s71 + $0x28] sm:$0xff]
      %v4361 = vld [vmem:[%s71 + $0x30] sm:$0xff]
      %v4362 = vld [vmem:[%s71 + $0x38] sm:$0xff]
      %v4363 = vld [vmem:[%s71 + $0x40] sm:$0xff]
      %v4364 = vld [vmem:[%s71 + $0x48] sm:$0xff]
      %v4365 = vld [vmem:[%s71 + $0x50] sm:$0xff]
      %v4366 = vld [vmem:[%s71 + $0x58] sm:$0xff]
      %v4367 = vld [vmem:[%s71 + $0x60] sm:$0xff]
      %v4368 = vld [vmem:[%s71 + $0x68] sm:$0xff]
      %v4369 = vld [vmem:[%s71 + $0x70] sm:$0xff]
      %v4370 = vld [vmem:[%s71 + $0x78] sm:$0xff]
      %v4371 = vld [vmem:[%s71 + $0x80] sm:$0xff]
      %v4372 = vld [vmem:[%s71 + $0x88] sm:$0xff]
      %v4373 = vld [vmem:[%s71 + $0x90] sm:$0xff]
      %v4374 = vld [vmem:[%s71 + $0x98] sm:$0xff]
      %v4375 = vld [vmem:[%s71 + $0xa0] sm:$0xff]
      %v4376 = vld [vmem:[%s71 + $0xa8] sm:$0xff]
      %v4377 = vld [vmem:[%s71 + $0xb0] sm:$0xff]
      %v4378 = vld [vmem:[%s71 + $0xb8] sm:$0xff]
      %v4379 = vld [vmem:[%s71 + $0xc0] sm:$0xff]
      %v4380 = vld [vmem:[%s71 + $0xc8] sm:$0xff]
      %v4381 = vld [vmem:[%s71 + $0xd0] sm:$0xff]
      %v4382 = vld [vmem:[%s71 + $0xd8] sm:$0xff]
      %v4383 = vld [vmem:[%s71 + $0xe0] sm:$0xff]
      %v4384 = vld [vmem:[%s71 + $0xe8] sm:$0xff]
      %v4385 = vld [vmem:[%s71 + $0xf0] sm:$0xff]
      %v4386 = vld [vmem:[%s71 + $0xf8] sm:$0xff]
      %v4387 = vld [vmem:[%s71 + $0x100] sm:$0xff]
      %v4388 = vld [vmem:[%s71 + $0x108] sm:$0xff]
      %v4389 = vld [vmem:[%s71 + $0x110] sm:$0xff]
      %v4390 = vld [vmem:[%s71 + $0x118] sm:$0xff]
      %v4391 = vld [vmem:[%s71 + $0x120] sm:$0xff]
      %v4392 = vld [vmem:[%s71 + $0x128] sm:$0xff]
      %v4393 = vld [vmem:[%s71 + $0x130] sm:$0xff]
      %v4394 = vld [vmem:[%s71 + $0x138] sm:$0xff]
      %v4395 = vld [vmem:[%s71 + $0x140] sm:$0xff]
      %v4396 = vld [vmem:[%s71 + $0x148] sm:$0xff]
      %v4397 = vld [vmem:[%s71 + $0x150] sm:$0xff]
      %v4398 = vld [vmem:[%s71 + $0x158] sm:$0xff]
      %v4399 = vld [vmem:[%s71 + $0x160] sm:$0xff]
      %v4400 = vld [vmem:[%s71 + $0x168] sm:$0xff]
      %v4401 = vld [vmem:[%s71 + $0x170] sm:$0xff]
      %v4402 = vld [vmem:[%s71 + $0x178] sm:$0xff]
      %v4403 = vld [vmem:[%s71 + $0x180] sm:$0xff]
      %v4404 = vld [vmem:[%s71 + $0x188] sm:$0xff]
      %v4405 = vld [vmem:[%s71 + $0x190] sm:$0xff]
      %v4406 = vld [vmem:[%s71 + $0x198] sm:$0xff]
      %v4407 = vld [vmem:[%s71 + $0x1a0] sm:$0xff]
      %v4408 = vld [vmem:[%s71 + $0x1a8] sm:$0xff]
      %v4409 = vld [vmem:[%s71 + $0x1b0] sm:$0xff]
      %v4410 = vld [vmem:[%s71 + $0x1b8] sm:$0xff]
      %v4411 = vld [vmem:[%s71 + $0x1c0] sm:$0xff]
      %v4412 = vld [vmem:[%s71 + $0x1c8] sm:$0xff]
      %v4413 = vld [vmem:[%s71 + $0x1d0] sm:$0xff]
      %v4414 = vld [vmem:[%s71 + $0x1d8] sm:$0xff]
      %v4415 = vld [vmem:[%s71 + $0x1e0] sm:$0xff]
      %v4416 = vld [vmem:[%s71 + $0x1e8] sm:$0xff]
      %v4417 = vld [vmem:[%s71 + $0x1f0] sm:$0xff]
      %v4418 = vld [vmem:[%s71 + $0x1f8] sm:$0xff]
      %v4419 = vld [vmem:[%s71 + $0x200] sm:$0xff]
      %v4420 = vld [vmem:[%s71 + $0x208] sm:$0xff]
      %v4421 = vld [vmem:[%s71 + $0x210] sm:$0xff]
      %v4422 = vld [vmem:[%s71 + $0x218] sm:$0xff]
      %v4423 = vld [vmem:[%s71 + $0x220] sm:$0xff]
      %v4424 = vld [vmem:[%s71 + $0x228] sm:$0xff]
      %v4425 = vld [vmem:[%s71 + $0x230] sm:$0xff]
      %v4426 = vld [vmem:[%s71 + $0x238] sm:$0xff]
      %v4427 = vld [vmem:[%s71 + $0x240] sm:$0xff]
      %v4428 = vld [vmem:[%s71 + $0x248] sm:$0xff]
      %v4429 = vld [vmem:[%s71 + $0x250] sm:$0xff]
      %v4430 = vld [vmem:[%s71 + $0x258] sm:$0xff]
      %v4431 = vld [vmem:[%s71 + $0x260] sm:$0xff]
      %v4432 = vld [vmem:[%s71 + $0x268] sm:$0xff]
      %v4433 = vld [vmem:[%s71 + $0x270] sm:$0xff]
      %v4434 = vld [vmem:[%s71 + $0x278] sm:$0xff]
      %v4435 = vld [vmem:[%s71 + $0x280] sm:$0xff]
      %v4436 = vld [vmem:[%s71 + $0x288] sm:$0xff]
      %v4437 = vld [vmem:[%s71 + $0x290] sm:$0xff]
      %v4438 = vld [vmem:[%s71 + $0x298] sm:$0xff]
      %v4439 = vld [vmem:[%s71 + $0x2a0] sm:$0xff]
      %v4440 = vld [vmem:[%s71 + $0x2a8] sm:$0xff]
      %v4441 = vld [vmem:[%s71 + $0x2b0] sm:$0xff]
      %v4442 = vld [vmem:[%s71 + $0x2b8] sm:$0xff]
      %v4443 = vld [vmem:[%s71 + $0x2c0] sm:$0xff]
      %v4444 = vld [vmem:[%s71 + $0x2c8] sm:$0xff]
      %v4445 = vld [vmem:[%s71 + $0x2d0] sm:$0xff]
      %v4446 = vld [vmem:[%s71 + $0x2d8] sm:$0xff]
      %v4447 = vld [vmem:[%s71 + $0x2e0] sm:$0xff]
      %v4448 = vld [vmem:[%s71 + $0x2e8] sm:$0xff]
      %v4449 = vld [vmem:[%s71 + $0x2f0] sm:$0xff]
      %v4450 = vld [vmem:[%s71 + $0x2f8] sm:$0xff]
      %v4451 = vld [vmem:[%s71 + $0x300] sm:$0xff]
      %v4452 = vld [vmem:[%s71 + $0x308] sm:$0xff]
      %v4453 = vld [vmem:[%s71 + $0x310] sm:$0xff]
      %v4454 = vld [vmem:[%s71 + $0x318] sm:$0xff]
      %v4455 = vld [vmem:[%s71 + $0x320] sm:$0xff]
      %v4456 = vld [vmem:[%s71 + $0x328] sm:$0xff]
      %v4457 = vld [vmem:[%s71 + $0x330] sm:$0xff]
      %v4458 = vld [vmem:[%s71 + $0x338] sm:$0xff]
      %v4459 = vld [vmem:[%s71 + $0x340] sm:$0xff]
      %v4460 = vld [vmem:[%s71 + $0x348] sm:$0xff]
      %v4461 = vld [vmem:[%s71 + $0x350] sm:$0xff]
      %v4462 = vld [vmem:[%s71 + $0x358] sm:$0xff]
      %v4463 = vld [vmem:[%s71 + $0x360] sm:$0xff]
      %v4464 = vld [vmem:[%s71 + $0x368] sm:$0xff]
      %v4465 = vld [vmem:[%s71 + $0x370] sm:$0xff]
      %v4466 = vld [vmem:[%s71 + $0x378] sm:$0xff]
      %v4467 = vld [vmem:[%s71 + $0x380] sm:$0xff]
      %v4468 = vld [vmem:[%s71 + $0x388] sm:$0xff]
      %v4469 = vld [vmem:[%s71 + $0x390] sm:$0xff]
      %v4470 = vld [vmem:[%s71 + $0x398] sm:$0xff]
      %v4471 = vld [vmem:[%s71 + $0x3a0] sm:$0xff]
      %v4472 = vld [vmem:[%s71 + $0x3a8] sm:$0xff]
      %v4473 = vld [vmem:[%s71 + $0x3b0] sm:$0xff]
      %v4474 = vld [vmem:[%s71 + $0x3b8] sm:$0xff]
      %v4475 = vld [vmem:[%s71 + $0x3c0] sm:$0xff]
      %v4476 = vld [vmem:[%s71 + $0x3c8] sm:$0xff]
      %v4477 = vld [vmem:[%s71 + $0x3d0] sm:$0xff]
      %v4478 = vld [vmem:[%s71 + $0x3d8] sm:$0xff]
      %v4479 = vld [vmem:[%s71 + $0x3e0] sm:$0xff]
      %v4480 = vld [vmem:[%s71 + $0x3e8] sm:$0xff]
      %v4481 = vld [vmem:[%s71 + $0x3f0] sm:$0xff]
      %v4482 = vld [vmem:[%s71 + $0x3f8] sm:$0xff]
      %v4611 = vunpack.c.l.b16 %v4355
      %v4612 = vunpack.c.h.b16 %v4355
      %v4613 = vunpack.c.l.b16 %v4356
      %v4614 = vunpack.c.h.b16 %v4356
      %v4615 = vunpack.c.l.b16 %v4357
      %v4616 = vunpack.c.h.b16 %v4357
      %v4617 = vunpack.c.l.b16 %v4358
      %v4618 = vunpack.c.h.b16 %v4358
      %v4619 = vunpack.c.l.b16 %v4359
      %v4620 = vunpack.c.h.b16 %v4359
      %v4621 = vunpack.c.l.b16 %v4360
      %v4622 = vunpack.c.h.b16 %v4360
      %v4623 = vunpack.c.l.b16 %v4361
      %v4624 = vunpack.c.h.b16 %v4361
      %v4625 = vunpack.c.l.b16 %v4362
      %v4626 = vunpack.c.h.b16 %v4362
      %v4627 = vunpack.c.l.b16 %v4363
      %v4628 = vunpack.c.h.b16 %v4363
      %v4629 = vunpack.c.l.b16 %v4364
      %v4630 = vunpack.c.h.b16 %v4364
      %v4631 = vunpack.c.l.b16 %v4365
      %v4632 = vunpack.c.h.b16 %v4365
      %v4633 = vunpack.c.l.b16 %v4366
      %v4634 = vunpack.c.h.b16 %v4366
      %v4635 = vunpack.c.l.b16 %v4367
      %v4636 = vunpack.c.h.b16 %v4367
      %v4637 = vunpack.c.l.b16 %v4368
      %v4638 = vunpack.c.h.b16 %v4368
      %v4639 = vunpack.c.l.b16 %v4369
      %v4640 = vunpack.c.h.b16 %v4369
      %v4641 = vunpack.c.l.b16 %v4370
      %v4642 = vunpack.c.h.b16 %v4370
      %v4643 = vunpack.c.l.b16 %v4371
      %v4644 = vunpack.c.h.b16 %v4371
      %v4645 = vunpack.c.l.b16 %v4372
      %v4646 = vunpack.c.h.b16 %v4372
      %v4647 = vunpack.c.l.b16 %v4373
      %v4648 = vunpack.c.h.b16 %v4373
      %v4649 = vunpack.c.l.b16 %v4374
      %v4650 = vunpack.c.h.b16 %v4374
      %v4651 = vunpack.c.l.b16 %v4375
      %v4652 = vunpack.c.h.b16 %v4375
      %v4653 = vunpack.c.l.b16 %v4376
      %v4654 = vunpack.c.h.b16 %v4376
      %v4655 = vunpack.c.l.b16 %v4377
      %v4656 = vunpack.c.h.b16 %v4377
      %v4657 = vunpack.c.l.b16 %v4378
      %v4658 = vunpack.c.h.b16 %v4378
      %v4659 = vunpack.c.l.b16 %v4379
      %v4660 = vunpack.c.h.b16 %v4379
      %v4661 = vunpack.c.l.b16 %v4380
      %v4662 = vunpack.c.h.b16 %v4380
      %v4663 = vunpack.c.l.b16 %v4381
      %v4664 = vunpack.c.h.b16 %v4381
      %v4665 = vunpack.c.l.b16 %v4382
      %v4666 = vunpack.c.h.b16 %v4382
      %v4667 = vunpack.c.l.b16 %v4383
      %v4668 = vunpack.c.h.b16 %v4383
      %v4669 = vunpack.c.l.b16 %v4384
      %v4670 = vunpack.c.h.b16 %v4384
      %v4671 = vunpack.c.l.b16 %v4385
      %v4672 = vunpack.c.h.b16 %v4385
      %v4673 = vunpack.c.l.b16 %v4386
      %v4674 = vunpack.c.h.b16 %v4386
      %v4675 = vunpack.c.l.b16 %v4387
      %v4676 = vunpack.c.h.b16 %v4387
      %v4677 = vunpack.c.l.b16 %v4388
      %v4678 = vunpack.c.h.b16 %v4388
      %v4679 = vunpack.c.l.b16 %v4389
      %v4680 = vunpack.c.h.b16 %v4389
      %v4681 = vunpack.c.l.b16 %v4390
      %v4682 = vunpack.c.h.b16 %v4390
      %v4683 = vunpack.c.l.b16 %v4391
      %v4684 = vunpack.c.h.b16 %v4391
      %v4685 = vunpack.c.l.b16 %v4392
      %v4686 = vunpack.c.h.b16 %v4392
      %v4687 = vunpack.c.l.b16 %v4393
      %v4688 = vunpack.c.h.b16 %v4393
      %v4689 = vunpack.c.l.b16 %v4394
      %v4690 = vunpack.c.h.b16 %v4394
      %v4691 = vunpack.c.l.b16 %v4395
      %v4692 = vunpack.c.h.b16 %v4395
      %v4693 = vunpack.c.l.b16 %v4396
      %v4694 = vunpack.c.h.b16 %v4396
      %v4695 = vunpack.c.l.b16 %v4397
      %v4696 = vunpack.c.h.b16 %v4397
      %v4697 = vunpack.c.l.b16 %v4398
      %v4698 = vunpack.c.h.b16 %v4398
      %v4699 = vunpack.c.l.b16 %v4399
      %v4700 = vunpack.c.h.b16 %v4399
      %v4701 = vunpack.c.l.b16 %v4400
      %v4702 = vunpack.c.h.b16 %v4400
      %v4703 = vunpack.c.l.b16 %v4401
      %v4704 = vunpack.c.h.b16 %v4401
      %v4705 = vunpack.c.l.b16 %v4402
      %v4706 = vunpack.c.h.b16 %v4402
      %v4707 = vunpack.c.l.b16 %v4403
      %v4708 = vunpack.c.h.b16 %v4403
      %v4709 = vunpack.c.l.b16 %v4404
      %v4710 = vunpack.c.h.b16 %v4404
      %v4711 = vunpack.c.l.b16 %v4405
      %v4712 = vunpack.c.h.b16 %v4405
      %v4713 = vunpack.c.l.b16 %v4406
      %v4714 = vunpack.c.h.b16 %v4406
      %v4715 = vunpack.c.l.b16 %v4407
      %v4716 = vunpack.c.h.b16 %v4407
      %v4717 = vunpack.c.l.b16 %v4408
      %v4718 = vunpack.c.h.b16 %v4408
      %v4719 = vunpack.c.l.b16 %v4409
      %v4720 = vunpack.c.h.b16 %v4409
      %v4721 = vunpack.c.l.b16 %v4410
      %v4722 = vunpack.c.h.b16 %v4410
      %v4723 = vunpack.c.l.b16 %v4411
      %v4724 = vunpack.c.h.b16 %v4411
      %v4725 = vunpack.c.l.b16 %v4412
      %v4726 = vunpack.c.h.b16 %v4412
      %v4727 = vunpack.c.l.b16 %v4413
      %v4728 = vunpack.c.h.b16 %v4413
      %v4729 = vunpack.c.l.b16 %v4414
      %v4730 = vunpack.c.h.b16 %v4414
      %v4731 = vunpack.c.l.b16 %v4415
      %v4732 = vunpack.c.h.b16 %v4415
      %v4733 = vunpack.c.l.b16 %v4416
      %v4734 = vunpack.c.h.b16 %v4416
      %v4735 = vunpack.c.l.b16 %v4417
      %v4736 = vunpack.c.h.b16 %v4417
      %v4737 = vunpack.c.l.b16 %v4418
      %v4738 = vunpack.c.h.b16 %v4418
      %v4739 = vunpack.c.l.b16 %v4419
      %v4740 = vunpack.c.h.b16 %v4419
      %v4741 = vunpack.c.l.b16 %v4420
      %v4742 = vunpack.c.h.b16 %v4420
      %v4743 = vunpack.c.l.b16 %v4421
      %v4744 = vunpack.c.h.b16 %v4421
      %v4745 = vunpack.c.l.b16 %v4422
      %v4746 = vunpack.c.h.b16 %v4422
      %v4747 = vunpack.c.l.b16 %v4423
      %v4748 = vunpack.c.h.b16 %v4423
      %v4749 = vunpack.c.l.b16 %v4424
      %v4750 = vunpack.c.h.b16 %v4424
      %v4751 = vunpack.c.l.b16 %v4425
      %v4752 = vunpack.c.h.b16 %v4425
      %v4753 = vunpack.c.l.b16 %v4426
      %v4754 = vunpack.c.h.b16 %v4426
      %v4755 = vunpack.c.l.b16 %v4427
      %v4756 = vunpack.c.h.b16 %v4427
      %v4757 = vunpack.c.l.b16 %v4428
      %v4758 = vunpack.c.h.b16 %v4428
      %v4759 = vunpack.c.l.b16 %v4429
      %v4760 = vunpack.c.h.b16 %v4429
      %v4761 = vunpack.c.l.b16 %v4430
      %v4762 = vunpack.c.h.b16 %v4430
      %v4763 = vunpack.c.l.b16 %v4431
      %v4764 = vunpack.c.h.b16 %v4431
      %v4765 = vunpack.c.l.b16 %v4432
      %v4766 = vunpack.c.h.b16 %v4432
      %v4767 = vunpack.c.l.b16 %v4433
      %v4768 = vunpack.c.h.b16 %v4433
      %v4769 = vunpack.c.l.b16 %v4434
      %v4770 = vunpack.c.h.b16 %v4434
      %v4771 = vunpack.c.l.b16 %v4435
      %v4772 = vunpack.c.h.b16 %v4435
      %v4773 = vunpack.c.l.b16 %v4436
      %v4774 = vunpack.c.h.b16 %v4436
      %v4775 = vunpack.c.l.b16 %v4437
      %v4776 = vunpack.c.h.b16 %v4437
      %v4777 = vunpack.c.l.b16 %v4438
      %v4778 = vunpack.c.h.b16 %v4438
      %v4779 = vunpack.c.l.b16 %v4439
      %v4780 = vunpack.c.h.b16 %v4439
      %v4781 = vunpack.c.l.b16 %v4440
      %v4782 = vunpack.c.h.b16 %v4440
      %v4783 = vunpack.c.l.b16 %v4441
      %v4784 = vunpack.c.h.b16 %v4441
      %v4785 = vunpack.c.l.b16 %v4442
      %v4786 = vunpack.c.h.b16 %v4442
      %v4787 = vunpack.c.l.b16 %v4443
      %v4788 = vunpack.c.h.b16 %v4443
      %v4789 = vunpack.c.l.b16 %v4444
      %v4790 = vunpack.c.h.b16 %v4444
      %v4791 = vunpack.c.l.b16 %v4445
      %v4792 = vunpack.c.h.b16 %v4445
      %v4793 = vunpack.c.l.b16 %v4446
      %v4794 = vunpack.c.h.b16 %v4446
      %v4795 = vunpack.c.l.b16 %v4447
      %v4796 = vunpack.c.h.b16 %v4447
      %v4797 = vunpack.c.l.b16 %v4448
      %v4798 = vunpack.c.h.b16 %v4448
      %v4799 = vunpack.c.l.b16 %v4449
      %v4800 = vunpack.c.h.b16 %v4449
      %v4801 = vunpack.c.l.b16 %v4450
      %v4802 = vunpack.c.h.b16 %v4450
      %v4803 = vunpack.c.l.b16 %v4451
      %v4804 = vunpack.c.h.b16 %v4451
      %v4805 = vunpack.c.l.b16 %v4452
      %v4806 = vunpack.c.h.b16 %v4452
      %v4807 = vunpack.c.l.b16 %v4453
      %v4808 = vunpack.c.h.b16 %v4453
      %v4809 = vunpack.c.l.b16 %v4454
      %v4810 = vunpack.c.h.b16 %v4454
      %v4811 = vunpack.c.l.b16 %v4455
      %v4812 = vunpack.c.h.b16 %v4455
      %v4813 = vunpack.c.l.b16 %v4456
      %v4814 = vunpack.c.h.b16 %v4456
      %v4815 = vunpack.c.l.b16 %v4457
      %v4816 = vunpack.c.h.b16 %v4457
      %v4817 = vunpack.c.l.b16 %v4458
      %v4818 = vunpack.c.h.b16 %v4458
      %v4819 = vunpack.c.l.b16 %v4459
      %v4820 = vunpack.c.h.b16 %v4459
      %v4821 = vunpack.c.l.b16 %v4460
      %v4822 = vunpack.c.h.b16 %v4460
      %v4823 = vunpack.c.l.b16 %v4461
      %v4824 = vunpack.c.h.b16 %v4461
      %v4825 = vunpack.c.l.b16 %v4462
      %v4826 = vunpack.c.h.b16 %v4462
      %v4827 = vunpack.c.l.b16 %v4463
      %v4828 = vunpack.c.h.b16 %v4463
      %v4829 = vunpack.c.l.b16 %v4464
      %v4830 = vunpack.c.h.b16 %v4464
      %v4831 = vunpack.c.l.b16 %v4465
      %v4832 = vunpack.c.h.b16 %v4465
      %v4833 = vunpack.c.l.b16 %v4466
      %v4834 = vunpack.c.h.b16 %v4466
      %v4835 = vunpack.c.l.b16 %v4467
      %v4836 = vunpack.c.h.b16 %v4467
      %v4837 = vunpack.c.l.b16 %v4468
      %v4838 = vunpack.c.h.b16 %v4468
      %v4839 = vunpack.c.l.b16 %v4469
      %v4840 = vunpack.c.h.b16 %v4469
      %v4841 = vunpack.c.l.b16 %v4470
      %v4842 = vunpack.c.h.b16 %v4470
      %v4843 = vunpack.c.l.b16 %v4471
      %v4844 = vunpack.c.h.b16 %v4471
      %v4845 = vunpack.c.l.b16 %v4472
      %v4846 = vunpack.c.h.b16 %v4472
      %v4847 = vunpack.c.l.b16 %v4473
      %v4848 = vunpack.c.h.b16 %v4473
      %v4849 = vunpack.c.l.b16 %v4474
      %v4850 = vunpack.c.h.b16 %v4474
      %v4851 = vunpack.c.l.b16 %v4475
      %v4852 = vunpack.c.h.b16 %v4475
      %v4853 = vunpack.c.l.b16 %v4476
      %v4854 = vunpack.c.h.b16 %v4476
      %v4855 = vunpack.c.l.b16 %v4477
      %v4856 = vunpack.c.h.b16 %v4477
      %v4857 = vunpack.c.l.b16 %v4478
      %v4858 = vunpack.c.h.b16 %v4478
      %v4859 = vunpack.c.l.b16 %v4479
      %v4860 = vunpack.c.h.b16 %v4479
      %v4861 = vunpack.c.l.b16 %v4480
      %v4862 = vunpack.c.h.b16 %v4480
      %v4863 = vunpack.c.l.b16 %v4481
      %v4864 = vunpack.c.h.b16 %v4481
      %v4865 = vunpack.c.l.b16 %v4482
      %v4866 = vunpack.c.h.b16 %v4482
      %v4867 = vpack.c.b16 %v4619, %v4611
      %v4868 = vpack.c.b16 %v4620, %v4612
      %v4869 = vpack.c.b16 %v4621, %v4613
      %v4870 = vpack.c.b16 %v4622, %v4614
      %v4871 = vpack.c.b16 %v4623, %v4615
      %v4872 = vpack.c.b16 %v4624, %v4616
      %v4873 = vpack.c.b16 %v4625, %v4617
      %v4874 = vpack.c.b16 %v4626, %v4618
      %v4875 = vpack.c.b16 %v4635, %v4627
      %v4876 = vpack.c.b16 %v4636, %v4628
      %v4877 = vpack.c.b16 %v4637, %v4629
      %v4878 = vpack.c.b16 %v4638, %v4630
      %v4879 = vpack.c.b16 %v4639, %v4631
      %v4880 = vpack.c.b16 %v4640, %v4632
      %v4881 = vpack.c.b16 %v4641, %v4633
      %v4882 = vpack.c.b16 %v4642, %v4634
      %v4883 = vpack.c.b16 %v4651, %v4643
      %v4884 = vpack.c.b16 %v4652, %v4644
      %v4885 = vpack.c.b16 %v4653, %v4645
      %v4886 = vpack.c.b16 %v4654, %v4646
      %v4887 = vpack.c.b16 %v4655, %v4647
      %v4888 = vpack.c.b16 %v4656, %v4648
      %v4889 = vpack.c.b16 %v4657, %v4649
      %v4890 = vpack.c.b16 %v4658, %v4650
      %v4891 = vpack.c.b16 %v4667, %v4659
      %v4892 = vpack.c.b16 %v4668, %v4660
      %v4893 = vpack.c.b16 %v4669, %v4661
      %v4894 = vpack.c.b16 %v4670, %v4662
      %v4895 = vpack.c.b16 %v4671, %v4663
      %v4896 = vpack.c.b16 %v4672, %v4664
      %v4897 = vpack.c.b16 %v4673, %v4665
      %v4898 = vpack.c.b16 %v4674, %v4666
      %v4899 = vpack.c.b16 %v4683, %v4675
      %v4900 = vpack.c.b16 %v4684, %v4676
      %v4901 = vpack.c.b16 %v4685, %v4677
      %v4902 = vpack.c.b16 %v4686, %v4678
      %v4903 = vpack.c.b16 %v4687, %v4679
      %v4904 = vpack.c.b16 %v4688, %v4680
      %v4905 = vpack.c.b16 %v4689, %v4681
      %v4906 = vpack.c.b16 %v4690, %v4682
      %v4907 = vpack.c.b16 %v4699, %v4691
      %v4908 = vpack.c.b16 %v4700, %v4692
      %v4909 = vpack.c.b16 %v4701, %v4693
      %v4910 = vpack.c.b16 %v4702, %v4694
      %v4911 = vpack.c.b16 %v4703, %v4695
      %v4912 = vpack.c.b16 %v4704, %v4696
      %v4913 = vpack.c.b16 %v4705, %v4697
      %v4914 = vpack.c.b16 %v4706, %v4698
      %v4915 = vpack.c.b16 %v4715, %v4707
      %v4916 = vpack.c.b16 %v4716, %v4708
      %v4917 = vpack.c.b16 %v4717, %v4709
      %v4918 = vpack.c.b16 %v4718, %v4710
      %v4919 = vpack.c.b16 %v4719, %v4711
      %v4920 = vpack.c.b16 %v4720, %v4712
      %v4921 = vpack.c.b16 %v4721, %v4713
      %v4922 = vpack.c.b16 %v4722, %v4714
      %v4923 = vpack.c.b16 %v4731, %v4723
      %v4924 = vpack.c.b16 %v4732, %v4724
      %v4925 = vpack.c.b16 %v4733, %v4725
      %v4926 = vpack.c.b16 %v4734, %v4726
      %v4927 = vpack.c.b16 %v4735, %v4727
      %v4928 = vpack.c.b16 %v4736, %v4728
      %v4929 = vpack.c.b16 %v4737, %v4729
      %v4930 = vpack.c.b16 %v4738, %v4730
      %v4931 = vpack.c.b16 %v4747, %v4739
      %v4932 = vpack.c.b16 %v4748, %v4740
      %v4933 = vpack.c.b16 %v4749, %v4741
      %v4934 = vpack.c.b16 %v4750, %v4742
      %v4935 = vpack.c.b16 %v4751, %v4743
      %v4936 = vpack.c.b16 %v4752, %v4744
      %v4937 = vpack.c.b16 %v4753, %v4745
      %v4938 = vpack.c.b16 %v4754, %v4746
      %v4939 = vpack.c.b16 %v4763, %v4755
      %v4940 = vpack.c.b16 %v4764, %v4756
      %v4941 = vpack.c.b16 %v4765, %v4757
      %v4942 = vpack.c.b16 %v4766, %v4758
      %v4943 = vpack.c.b16 %v4767, %v4759
      %v4944 = vpack.c.b16 %v4768, %v4760
      %v4945 = vpack.c.b16 %v4769, %v4761
      %v4946 = vpack.c.b16 %v4770, %v4762
      %v4947 = vpack.c.b16 %v4779, %v4771
      %v4948 = vpack.c.b16 %v4780, %v4772
      %v4949 = vpack.c.b16 %v4781, %v4773
      %v4950 = vpack.c.b16 %v4782, %v4774
      %v4951 = vpack.c.b16 %v4783, %v4775
      %v4952 = vpack.c.b16 %v4784, %v4776
      %v4953 = vpack.c.b16 %v4785, %v4777
      %v4954 = vpack.c.b16 %v4786, %v4778
      %v4955 = vpack.c.b16 %v4795, %v4787
      %v4956 = vpack.c.b16 %v4796, %v4788
      %v4957 = vpack.c.b16 %v4797, %v4789
      %v4958 = vpack.c.b16 %v4798, %v4790
      %v4959 = vpack.c.b16 %v4799, %v4791
      %v4960 = vpack.c.b16 %v4800, %v4792
      %v4961 = vpack.c.b16 %v4801, %v4793
      %v4962 = vpack.c.b16 %v4802, %v4794
      %v4963 = vpack.c.b16 %v4811, %v4803
      %v4964 = vpack.c.b16 %v4812, %v4804
      %v4965 = vpack.c.b16 %v4813, %v4805
      %v4966 = vpack.c.b16 %v4814, %v4806
      %v4967 = vpack.c.b16 %v4815, %v4807
      %v4968 = vpack.c.b16 %v4816, %v4808
      %v4969 = vpack.c.b16 %v4817, %v4809
      %v4970 = vpack.c.b16 %v4818, %v4810
      %v4971 = vpack.c.b16 %v4827, %v4819
      %v4972 = vpack.c.b16 %v4828, %v4820
      %v4973 = vpack.c.b16 %v4829, %v4821
      %v4974 = vpack.c.b16 %v4830, %v4822
      %v4975 = vpack.c.b16 %v4831, %v4823
      %v4976 = vpack.c.b16 %v4832, %v4824
      %v4977 = vpack.c.b16 %v4833, %v4825
      %v4978 = vpack.c.b16 %v4834, %v4826
      %v4979 = vpack.c.b16 %v4843, %v4835
      %v4980 = vpack.c.b16 %v4844, %v4836
      %v4981 = vpack.c.b16 %v4845, %v4837
      %v4982 = vpack.c.b16 %v4846, %v4838
      %v4983 = vpack.c.b16 %v4847, %v4839
      %v4984 = vpack.c.b16 %v4848, %v4840
      %v4985 = vpack.c.b16 %v4849, %v4841
      %v4986 = vpack.c.b16 %v4850, %v4842
      %v4987 = vpack.c.b16 %v4859, %v4851
      %v4988 = vpack.c.b16 %v4860, %v4852
      %v4989 = vpack.c.b16 %v4861, %v4853
      %v4990 = vpack.c.b16 %v4862, %v4854
      %v4991 = vpack.c.b16 %v4863, %v4855
      %v4992 = vpack.c.b16 %v4864, %v4856
      %v4993 = vpack.c.b16 %v4865, %v4857
      %v4994 = vpack.c.b16 %v4866, %v4858
      %5123 = vmatprep.subr.bf16.mxu0 %v4924
      %5124 = vmatpush1.bf16.msra.mxu0 %v4923
      %5125 = vmatprep.subr.bf16.mxu0 %v4916
      %5126 = vmatpush1.bf16.msra.mxu0 %v4915
      %5127 = vmatprep.subr.bf16.mxu0 %v4908
      %5128 = vmatpush1.bf16.msra.mxu0 %v4907
      %5129 = vmatprep.subr.bf16.mxu0 %v4900
      %5130 = vmatpush1.bf16.msra.mxu0 %v4899
      %5131 = vmatprep.subr.bf16.mxu0 %v4892
      %5132 = vmatpush1.bf16.msra.mxu0 %v4891
      %5133 = vmatprep.subr.bf16.mxu0 %v4884
      %5134 = vmatpush1.bf16.msra.mxu0 %v4883
      %5135 = vmatprep.subr.bf16.mxu0 %v4876
      %5136 = vmatpush1.bf16.msra.mxu0 %v4875
      %5137 = vmatprep.subr.bf16.mxu0 %v4868
      %5138 = vmatpush1.bf16.msra.mxu0 %v4867
      %5139 = vmatprep.subr.bf16.mxu0 %v4988
      %5140 = vmatpush2.bf16.msra.mxu0 %v4987
      %5141 = vmatprep.subr.bf16.mxu0 %v4980
      %5142 = vmatpush2.bf16.msra.mxu0 %v4979
      %5143 = vmatprep.subr.bf16.mxu0 %v4972
      %5144 = vmatpush2.bf16.msra.mxu0 %v4971
      %5145 = vmatprep.subr.bf16.mxu0 %v4964
      %5146 = vmatpush2.bf16.msra.mxu0 %v4963
      %5147 = vmatprep.subr.bf16.mxu0 %v4956
      %5148 = vmatpush2.bf16.msra.mxu0 %v4955
      %5149 = vmatprep.subr.bf16.mxu0 %v4948
      %5150 = vmatpush2.bf16.msra.mxu0 %v4947
      %5151 = vmatprep.subr.bf16.mxu0 %v4940
      %5152 = vmatpush2.bf16.msra.mxu0 %v4939
      %5153 = vmatprep.subr.bf16.mxu0 %v4932
      %5154 = vmatpush2.bf16.msra.mxu0 %v4931
      %5155 = vmatprep.mubr.bf16.mxu0 %v4354
      %5156 = vmatmul.mubr.bf16.gmra.mxu0 %v4353
      %v5157 = vpop.f32.mrf.mxu0
      %v5158 = vadd.f32 0.0, %v5157
      %v5159 = vpop.f32.mrf.mxu0
      %v5160 = vadd.f32 0.0, %v5159
      %v5161 = vpop.f32.mrf.mxu0
      %v5162 = vadd.f32 0.0, %v5161
      %v5163 = vpop.f32.mrf.mxu0
      %v5164 = vadd.f32 0.0, %v5163
      %5165 = vdwg.mxu0
      %5166 = vmatprep.subr.bf16.mxu0 %v4926
      %5167 = vmatpush1.bf16.msra.mxu0 %v4925
      %5168 = vmatprep.subr.bf16.mxu0 %v4918
      %5169 = vmatpush1.bf16.msra.mxu0 %v4917
      %5170 = vmatprep.subr.bf16.mxu0 %v4910
      %5171 = vmatpush1.bf16.msra.mxu0 %v4909
      %5172 = vmatprep.subr.bf16.mxu0 %v4902
      %5173 = vmatpush1.bf16.msra.mxu0 %v4901
      %5174 = vmatprep.subr.bf16.mxu0 %v4894
      %5175 = vmatpush1.bf16.msra.mxu0 %v4893
      %5176 = vmatprep.subr.bf16.mxu0 %v4886
      %5177 = vmatpush1.bf16.msra.mxu0 %v4885
      %5178 = vmatprep.subr.bf16.mxu0 %v4878
      %5179 = vmatpush1.bf16.msra.mxu0 %v4877
      %5180 = vmatprep.subr.bf16.mxu0 %v4870
      %5181 = vmatpush1.bf16.msra.mxu0 %v4869
      %5182 = vmatprep.subr.bf16.mxu0 %v4990
      %5183 = vmatpush2.bf16.msra.mxu0 %v4989
      %5184 = vmatprep.subr.bf16.mxu0 %v4982
      %5185 = vmatpush2.bf16.msra.mxu0 %v4981
      %5186 = vmatprep.subr.bf16.mxu0 %v4974
      %5187 = vmatpush2.bf16.msra.mxu0 %v4973
      %5188 = vmatprep.subr.bf16.mxu0 %v4966
      %5189 = vmatpush2.bf16.msra.mxu0 %v4965
      %5190 = vmatprep.subr.bf16.mxu0 %v4958
      %5191 = vmatpush2.bf16.msra.mxu0 %v4957
      %5192 = vmatprep.subr.bf16.mxu0 %v4950
      %5193 = vmatpush2.bf16.msra.mxu0 %v4949
      %5194 = vmatprep.subr.bf16.mxu0 %v4942
      %5195 = vmatpush2.bf16.msra.mxu0 %v4941
      %5196 = vmatprep.subr.bf16.mxu0 %v4934
      %5197 = vmatpush2.bf16.msra.mxu0 %v4933
      %5198 = vmatprep.mubr.bf16.mxu0 %v4354
      %5199 = vmatmul.mubr.bf16.gmra.mxu0 %v4353
      %v5200 = vpop.f32.mrf.mxu0
      %v5201 = vadd.f32 0.0, %v5200
      %v5202 = vpop.f32.mrf.mxu0
      %v5203 = vadd.f32 0.0, %v5202
      %v5204 = vpop.f32.mrf.mxu0
      %v5205 = vadd.f32 0.0, %v5204
      %v5206 = vpop.f32.mrf.mxu0
      %v5207 = vadd.f32 0.0, %v5206
      %5208 = vdwg.mxu0
      %5209 = vmatprep.subr.bf16.mxu0 %v4928
      %5210 = vmatpush1.bf16.msra.mxu0 %v4927
      %5211 = vmatprep.subr.bf16.mxu0 %v4920
      %5212 = vmatpush1.bf16.msra.mxu0 %v4919
      %5213 = vmatprep.subr.bf16.mxu0 %v4912
      %5214 = vmatpush1.bf16.msra.mxu0 %v4911
      %5215 = vmatprep.subr.bf16.mxu0 %v4904
      %5216 = vmatpush1.bf16.msra.mxu0 %v4903
      %5217 = vmatprep.subr.bf16.mxu0 %v4896
      %5218 = vmatpush1.bf16.msra.mxu0 %v4895
      %5219 = vmatprep.subr.bf16.mxu0 %v4888
      %5220 = vmatpush1.bf16.msra.mxu0 %v4887
      %5221 = vmatprep.subr.bf16.mxu0 %v4880
      %5222 = vmatpush1.bf16.msra.mxu0 %v4879
      %5223 = vmatprep.subr.bf16.mxu0 %v4872
      %5224 = vmatpush1.bf16.msra.mxu0 %v4871
      %5225 = vmatprep.subr.bf16.mxu0 %v4992
      %5226 = vmatpush2.bf16.msra.mxu0 %v4991
      %5227 = vmatprep.subr.bf16.mxu0 %v4984
      %5228 = vmatpush2.bf16.msra.mxu0 %v4983
      %5229 = vmatprep.subr.bf16.mxu0 %v4976
      %5230 = vmatpush2.bf16.msra.mxu0 %v4975
      %5231 = vmatprep.subr.bf16.mxu0 %v4968
      %5232 = vmatpush2.bf16.msra.mxu0 %v4967
      %5233 = vmatprep.subr.bf16.mxu0 %v4960
      %5234 = vmatpush2.bf16.msra.mxu0 %v4959
      %5235 = vmatprep.subr.bf16.mxu0 %v4952
      %5236 = vmatpush2.bf16.msra.mxu0 %v4951
      %5237 = vmatprep.subr.bf16.mxu0 %v4944
      %5238 = vmatpush2.bf16.msra.mxu0 %v4943
      %5239 = vmatprep.subr.bf16.mxu0 %v4936
      %5240 = vmatpush2.bf16.msra.mxu0 %v4935
      %5241 = vmatprep.mubr.bf16.mxu0 %v4354
      %5242 = vmatmul.mubr.bf16.gmra.mxu0 %v4353
      %v5243 = vpop.f32.mrf.mxu0
      %v5244 = vadd.f32 0.0, %v5243
      %v5245 = vpop.f32.mrf.mxu0
      %v5246 = vadd.f32 0.0, %v5245
      %v5247 = vpop.f32.mrf.mxu0
      %v5248 = vadd.f32 0.0, %v5247
      %v5249 = vpop.f32.mrf.mxu0
      %v5250 = vadd.f32 0.0, %v5249
      %5251 = vdwg.mxu0
      %5252 = vmatprep.subr.bf16.mxu0 %v4930
      %5253 = vmatpush1.bf16.msra.mxu0 %v4929
      %5254 = vmatprep.subr.bf16.mxu0 %v4922
      %5255 = vmatpush1.bf16.msra.mxu0 %v4921
      %5256 = vmatprep.subr.bf16.mxu0 %v4914
      %5257 = vmatpush1.bf16.msra.mxu0 %v4913
      %5258 = vmatprep.subr.bf16.mxu0 %v4906
      %5259 = vmatpush1.bf16.msra.mxu0 %v4905
      %5260 = vmatprep.subr.bf16.mxu0 %v4898
      %5261 = vmatpush1.bf16.msra.mxu0 %v4897
      %5262 = vmatprep.subr.bf16.mxu0 %v4890
      %5263 = vmatpush1.bf16.msra.mxu0 %v4889
      %5264 = vmatprep.subr.bf16.mxu0 %v4882
      %5265 = vmatpush1.bf16.msra.mxu0 %v4881
      %5266 = vmatprep.subr.bf16.mxu0 %v4874
      %5267 = vmatpush1.bf16.msra.mxu0 %v4873
      %5268 = vmatprep.subr.bf16.mxu0 %v4994
      %5269 = vmatpush2.bf16.msra.mxu0 %v4993
      %5270 = vmatprep.subr.bf16.mxu0 %v4986
      %5271 = vmatpush2.bf16.msra.mxu0 %v4985
      %5272 = vmatprep.subr.bf16.mxu0 %v4978
      %5273 = vmatpush2.bf16.msra.mxu0 %v4977
      %5274 = vmatprep.subr.bf16.mxu0 %v4970
      %5275 = vmatpush2.bf16.msra.mxu0 %v4969
      %5276 = vmatprep.subr.bf16.mxu0 %v4962
      %5277 = vmatpush2.bf16.msra.mxu0 %v4961
      %5278 = vmatprep.subr.bf16.mxu0 %v4954
      %5279 = vmatpush2.bf16.msra.mxu0 %v4953
      %5280 = vmatprep.subr.bf16.mxu0 %v4946
      %5281 = vmatpush2.bf16.msra.mxu0 %v4945
      %5282 = vmatprep.subr.bf16.mxu0 %v4938
      %5283 = vmatpush2.bf16.msra.mxu0 %v4937
      %5284 = vmatprep.mubr.bf16.mxu0 %v4354
      %5285 = vmatmul.mubr.bf16.gmra.mxu0 %v4353
      %v5286 = vpop.f32.mrf.mxu0
      %v5287 = vadd.f32 0.0, %v5286
      %v5288 = vpop.f32.mrf.mxu0
      %v5289 = vadd.f32 0.0, %v5288
      %v5290 = vpop.f32.mrf.mxu0
      %v5291 = vadd.f32 0.0, %v5290
      %v5292 = vpop.f32.mrf.mxu0
      %v5293 = vadd.f32 0.0, %v5292
      %5294 = vdwg.mxu0
      %5309 = vrot.lane.b32.xlu0 %v5158, 127
      %v5310 = vpop.permute.xlu0 %5309
      %5311 = vrot.lane.b32.xlu0 %v5160, 127
      %v5312 = vpop.permute.xlu0 %5311
      %5313 = vrot.lane.b32.xlu0 %v5201, 127
      %v5314 = vpop.permute.xlu0 %5313
      %5315 = vrot.lane.b32.xlu0 %v5203, 127
      %v5316 = vpop.permute.xlu0 %5315
      %5317 = vrot.lane.b32.xlu0 %v5244, 127
      %v5318 = vpop.permute.xlu0 %5317
      %5319 = vrot.lane.b32.xlu0 %v5246, 127
      %v5320 = vpop.permute.xlu0 %5319
      %5321 = vrot.lane.b32.xlu0 %v5287, 127
      %v5322 = vpop.permute.xlu0 %5321
      %5323 = vrot.lane.b32.xlu0 %v5162, 127
      %v5324 = vpop.permute.xlu0 %5323
      %5325 = vrot.lane.b32.xlu0 %v5164, 127
      %v5326 = vpop.permute.xlu0 %5325
      %5327 = vrot.lane.b32.xlu0 %v5205, 127
      %v5328 = vpop.permute.xlu0 %5327
      %5329 = vrot.lane.b32.xlu0 %v5207, 127
      %v5330 = vpop.permute.xlu0 %5329
      %5331 = vrot.lane.b32.xlu0 %v5248, 127
      %v5332 = vpop.permute.xlu0 %5331
      %5333 = vrot.lane.b32.xlu0 %v5250, 127
      %v5334 = vpop.permute.xlu0 %5333
      %5335 = vrot.lane.b32.xlu0 %v5291, 127
      %v5336 = vpop.permute.xlu0 %5335
      %v5337 = vsel %vm3396, %v5310, %v5312
      %v5338 = vsel %vm3396, %v5312, %v5314
      %v5339 = vsel %vm3396, %v5314, %v5316
      %v5340 = vsel %vm3396, %v5316, %v5318
      %v5341 = vsel %vm3396, %v5318, %v5320
      %v5342 = vsel %vm3396, %v5320, %v5322
      %v5343 = vsel %vm3396, %v5324, %v5326
      %v5344 = vsel %vm3396, %v5326, %v5328
      %v5345 = vsel %vm3396, %v5328, %v5330
      %v5346 = vsel %vm3396, %v5330, %v5332
      %v5347 = vsel %vm3396, %v5332, %v5334
      %v5348 = vsel %vm3396, %v5334, %v5336
      %5363 = vrot.lane.b32.xlu0 %v5158, 126
      %v5364 = vpop.permute.xlu0 %5363
      %5365 = vrot.lane.b32.xlu0 %v5160, 126
      %v5366 = vpop.permute.xlu0 %5365
      %5367 = vrot.lane.b32.xlu0 %v5201, 126
      %v5368 = vpop.permute.xlu0 %5367
      %5369 = vrot.lane.b32.xlu0 %v5203, 126
      %v5370 = vpop.permute.xlu0 %5369
      %5371 = vrot.lane.b32.xlu0 %v5244, 126
      %v5372 = vpop.permute.xlu0 %5371
      %5373 = vrot.lane.b32.xlu0 %v5246, 126
      %v5374 = vpop.permute.xlu0 %5373
      %5375 = vrot.lane.b32.xlu0 %v5287, 126
      %v5376 = vpop.permute.xlu0 %5375
      %5377 = vrot.lane.b32.xlu0 %v5162, 126
      %v5378 = vpop.permute.xlu0 %5377
      %5379 = vrot.lane.b32.xlu0 %v5164, 126
      %v5380 = vpop.permute.xlu0 %5379
      %5381 = vrot.lane.b32.xlu0 %v5205, 126
      %v5382 = vpop.permute.xlu0 %5381
      %5383 = vrot.lane.b32.xlu0 %v5207, 126
      %v5384 = vpop.permute.xlu0 %5383
      %5385 = vrot.lane.b32.xlu0 %v5248, 126
      %v5386 = vpop.permute.xlu0 %5385
      %5387 = vrot.lane.b32.xlu0 %v5250, 126
      %v5388 = vpop.permute.xlu0 %5387
      %5389 = vrot.lane.b32.xlu0 %v5291, 126
      %v5390 = vpop.permute.xlu0 %5389
      %v5391 = vsel %vm3425, %v5364, %v5366
      %v5392 = vsel %vm3425, %v5366, %v5368
      %v5393 = vsel %vm3425, %v5368, %v5370
      %v5394 = vsel %vm3425, %v5370, %v5372
      %v5395 = vsel %vm3425, %v5372, %v5374
      %v5396 = vsel %vm3425, %v5374, %v5376
      %v5397 = vsel %vm3425, %v5378, %v5380
      %v5398 = vsel %vm3425, %v5380, %v5382
      %v5399 = vsel %vm3425, %v5382, %v5384
      %v5400 = vsel %vm3425, %v5384, %v5386
      %v5401 = vsel %vm3425, %v5386, %v5388
      %v5402 = vsel %vm3425, %v5388, %v5390
      %5419 = vrot.lane.b32.xlu0 %v5158, 98
      %v5420 = vpop.permute.xlu0 %5419
      %5421 = vrot.lane.b32.xlu0 %v5160, 98
      %v5422 = vpop.permute.xlu0 %5421
      %5423 = vrot.lane.b32.xlu0 %v5201, 98
      %v5424 = vpop.permute.xlu0 %5423
      %5425 = vrot.lane.b32.xlu0 %v5203, 98
      %v5426 = vpop.permute.xlu0 %5425
      %5427 = vrot.lane.b32.xlu0 %v5244, 98
      %v5428 = vpop.permute.xlu0 %5427
      %5429 = vrot.lane.b32.xlu0 %v5246, 98
      %v5430 = vpop.permute.xlu0 %5429
      %5431 = vrot.lane.b32.xlu0 %v5287, 98
      %v5432 = vpop.permute.xlu0 %5431
      %5433 = vrot.lane.b32.xlu0 %v5289, 98
      %v5434 = vpop.permute.xlu0 %5433
      %5435 = vrot.lane.b32.xlu0 %v5162, 98
      %v5436 = vpop.permute.xlu0 %5435
      %5437 = vrot.lane.b32.xlu0 %v5164, 98
      %v5438 = vpop.permute.xlu0 %5437
      %5439 = vrot.lane.b32.xlu0 %v5205, 98
      %v5440 = vpop.permute.xlu0 %5439
      %5441 = vrot.lane.b32.xlu0 %v5207, 98
      %v5442 = vpop.permute.xlu0 %5441
      %5443 = vrot.lane.b32.xlu0 %v5248, 98
      %v5444 = vpop.permute.xlu0 %5443
      %5445 = vrot.lane.b32.xlu0 %v5250, 98
      %v5446 = vpop.permute.xlu0 %5445
      %5447 = vrot.lane.b32.xlu0 %v5291, 98
      %v5448 = vpop.permute.xlu0 %5447
      %5449 = vrot.lane.b32.xlu0 %v5293, 98
      %v5450 = vpop.permute.xlu0 %5449
      %vm5451 = vcmask 801792
      %v5452 = vsel %vm5451, %v5420, %v5422
      %v5453 = vsel %vm5451, %v5422, %v5424
      %v5454 = vsel %vm5451, %v5424, %v5426
      %v5455 = vsel %vm5451, %v5426, %v5428
      %v5456 = vsel %vm5451, %v5428, %v5430
      %v5457 = vsel %vm5451, %v5430, %v5432
      %v5458 = vsel %vm5451, %v5432, %v5434
      %v5459 = vsel %vm5451, %v5436, %v5438
      %v5460 = vsel %vm5451, %v5438, %v5440
      %v5461 = vsel %vm5451, %v5440, %v5442
      %v5462 = vsel %vm5451, %v5442, %v5444
      %v5463 = vsel %vm5451, %v5444, %v5446
      %v5464 = vsel %vm5451, %v5446, %v5448
      %v5465 = vsel %vm5451, %v5448, %v5450
      %5480 = vrot.lane.b32.xlu0 %v5158, 97
      %v5481 = vpop.permute.xlu0 %5480
      %5482 = vrot.lane.b32.xlu0 %v5160, 97
      %v5483 = vpop.permute.xlu0 %5482
      %5484 = vrot.lane.b32.xlu0 %v5201, 97
      %v5485 = vpop.permute.xlu0 %5484
      %5486 = vrot.lane.b32.xlu0 %v5203, 97
      %v5487 = vpop.permute.xlu0 %5486
      %5488 = vrot.lane.b32.xlu0 %v5244, 97
      %v5489 = vpop.permute.xlu0 %5488
      %5490 = vrot.lane.b32.xlu0 %v5246, 97
      %v5491 = vpop.permute.xlu0 %5490
      %5492 = vrot.lane.b32.xlu0 %v5287, 97
      %v5493 = vpop.permute.xlu0 %5492
      %5494 = vrot.lane.b32.xlu0 %v5289, 97
      %v5495 = vpop.permute.xlu0 %5494
      %5496 = vrot.lane.b32.xlu0 %v5162, 97
      %v5497 = vpop.permute.xlu0 %5496
      %5498 = vrot.lane.b32.xlu0 %v5164, 97
      %v5499 = vpop.permute.xlu0 %5498
      %5500 = vrot.lane.b32.xlu0 %v5205, 97
      %v5501 = vpop.permute.xlu0 %5500
      %5502 = vrot.lane.b32.xlu0 %v5207, 97
      %v5503 = vpop.permute.xlu0 %5502
      %5504 = vrot.lane.b32.xlu0 %v5248, 97
      %v5505 = vpop.permute.xlu0 %5504
      %5506 = vrot.lane.b32.xlu0 %v5250, 97
      %v5507 = vpop.permute.xlu0 %5506
      %5508 = vrot.lane.b32.xlu0 %v5291, 97
      %v5509 = vpop.permute.xlu0 %5508
      %5510 = vrot.lane.b32.xlu0 %v5293, 97
      %v5511 = vpop.permute.xlu0 %5510
      %vm5512 = vcmask 793600
      %v5513 = vsel %vm5512, %v5481, %v5483
      %v5514 = vsel %vm5512, %v5483, %v5485
      %v5515 = vsel %vm5512, %v5485, %v5487
      %v5516 = vsel %vm5512, %v5487, %v5489
      %v5517 = vsel %vm5512, %v5489, %v5491
      %v5518 = vsel %vm5512, %v5491, %v5493
      %v5519 = vsel %vm5512, %v5493, %v5495
      %v5520 = vsel %vm5512, %v5497, %v5499
      %v5521 = vsel %vm5512, %v5499, %v5501
      %v5522 = vsel %vm5512, %v5501, %v5503
      %v5523 = vsel %vm5512, %v5503, %v5505
      %v5524 = vsel %vm5512, %v5505, %v5507
      %v5525 = vsel %vm5512, %v5507, %v5509
      %v5526 = vsel %vm5512, %v5509, %v5511
      %5541 = vrot.lane.b32.xlu0 %v5158, 96
      %v5542 = vpop.permute.xlu0 %5541
      %5543 = vrot.lane.b32.xlu0 %v5160, 96
      %v5544 = vpop.permute.xlu0 %5543
      %5545 = vrot.lane.b32.xlu0 %v5201, 96
      %v5546 = vpop.permute.xlu0 %5545
      %5547 = vrot.lane.b32.xlu0 %v5203, 96
      %v5548 = vpop.permute.xlu0 %5547
      %5549 = vrot.lane.b32.xlu0 %v5244, 96
      %v5550 = vpop.permute.xlu0 %5549
      %5551 = vrot.lane.b32.xlu0 %v5246, 96
      %v5552 = vpop.permute.xlu0 %5551
      %5553 = vrot.lane.b32.xlu0 %v5287, 96
      %v5554 = vpop.permute.xlu0 %5553
      %5555 = vrot.lane.b32.xlu0 %v5289, 96
      %v5556 = vpop.permute.xlu0 %5555
      %5557 = vrot.lane.b32.xlu0 %v5162, 96
      %v5558 = vpop.permute.xlu0 %5557
      %5559 = vrot.lane.b32.xlu0 %v5164, 96
      %v5560 = vpop.permute.xlu0 %5559
      %5561 = vrot.lane.b32.xlu0 %v5205, 96
      %v5562 = vpop.permute.xlu0 %5561
      %5563 = vrot.lane.b32.xlu0 %v5207, 96
      %v5564 = vpop.permute.xlu0 %5563
      %5565 = vrot.lane.b32.xlu0 %v5248, 96
      %v5566 = vpop.permute.xlu0 %5565
      %5567 = vrot.lane.b32.xlu0 %v5250, 96
      %v5568 = vpop.permute.xlu0 %5567
      %5569 = vrot.lane.b32.xlu0 %v5291, 96
      %v5570 = vpop.permute.xlu0 %5569
      %5571 = vrot.lane.b32.xlu0 %v5293, 96
      %v5572 = vpop.permute.xlu0 %5571
      %v5573 = vsel %vm3565, %v5542, %v5544
      %v5574 = vsel %vm3565, %v5544, %v5546
      %v5575 = vsel %vm3565, %v5546, %v5548
      %v5576 = vsel %vm3565, %v5548, %v5550
      %v5577 = vsel %vm3565, %v5550, %v5552
      %v5578 = vsel %vm3565, %v5552, %v5554
      %v5579 = vsel %vm3565, %v5554, %v5556
      %v5580 = vsel %vm3565, %v5558, %v5560
      %v5581 = vsel %vm3565, %v5560, %v5562
      %v5582 = vsel %vm3565, %v5562, %v5564
      %v5583 = vsel %vm3565, %v5564, %v5566
      %v5584 = vsel %vm3565, %v5566, %v5568
      %v5585 = vsel %vm3565, %v5568, %v5570
      %v5586 = vsel %vm3565, %v5570, %v5572
      %5601 = vrot.lane.b32.xlu0 %v5158, 68
      %v5602 = vpop.permute.xlu0 %5601
      %5603 = vrot.lane.b32.xlu0 %v5160, 68
      %v5604 = vpop.permute.xlu0 %5603
      %5605 = vrot.lane.b32.xlu0 %v5201, 68
      %v5606 = vpop.permute.xlu0 %5605
      %5607 = vrot.lane.b32.xlu0 %v5203, 68
      %v5608 = vpop.permute.xlu0 %5607
      %5609 = vrot.lane.b32.xlu0 %v5244, 68
      %v5610 = vpop.permute.xlu0 %5609
      %5611 = vrot.lane.b32.xlu0 %v5246, 68
      %v5612 = vpop.permute.xlu0 %5611
      %5613 = vrot.lane.b32.xlu0 %v5287, 68
      %v5614 = vpop.permute.xlu0 %5613
      %5615 = vrot.lane.b32.xlu0 %v5289, 68
      %v5616 = vpop.permute.xlu0 %5615
      %5617 = vrot.lane.b32.xlu0 %v5162, 68
      %v5618 = vpop.permute.xlu0 %5617
      %5619 = vrot.lane.b32.xlu0 %v5164, 68
      %v5620 = vpop.permute.xlu0 %5619
      %5621 = vrot.lane.b32.xlu0 %v5205, 68
      %v5622 = vpop.permute.xlu0 %5621
      %5623 = vrot.lane.b32.xlu0 %v5207, 68
      %v5624 = vpop.permute.xlu0 %5623
      %5625 = vrot.lane.b32.xlu0 %v5248, 68
      %v5626 = vpop.permute.xlu0 %5625
      %5627 = vrot.lane.b32.xlu0 %v5250, 68
      %v5628 = vpop.permute.xlu0 %5627
      %5629 = vrot.lane.b32.xlu0 %v5291, 68
      %v5630 = vpop.permute.xlu0 %5629
      %5631 = vrot.lane.b32.xlu0 %v5293, 68
      %v5632 = vpop.permute.xlu0 %5631
      %vm5633 = vcmask 556032
      %v5634 = vsel %vm5633, %v5602, %v5604
      %v5635 = vsel %vm5633, %v5604, %v5606
      %v5636 = vsel %vm5633, %v5606, %v5608
      %v5637 = vsel %vm5633, %v5608, %v5610
      %v5638 = vsel %vm5633, %v5610, %v5612
      %v5639 = vsel %vm5633, %v5612, %v5614
      %v5640 = vsel %vm5633, %v5614, %v5616
      %v5641 = vsel %vm5633, %v5618, %v5620
      %v5642 = vsel %vm5633, %v5620, %v5622
      %v5643 = vsel %vm5633, %v5622, %v5624
      %v5644 = vsel %vm5633, %v5624, %v5626
      %v5645 = vsel %vm5633, %v5626, %v5628
      %v5646 = vsel %vm5633, %v5628, %v5630
      %v5647 = vsel %vm5633, %v5630, %v5632
      %5662 = vrot.lane.b32.xlu0 %v5158, 67
      %v5663 = vpop.permute.xlu0 %5662
      %5664 = vrot.lane.b32.xlu0 %v5160, 67
      %v5665 = vpop.permute.xlu0 %5664
      %5666 = vrot.lane.b32.xlu0 %v5201, 67
      %v5667 = vpop.permute.xlu0 %5666
      %5668 = vrot.lane.b32.xlu0 %v5203, 67
      %v5669 = vpop.permute.xlu0 %5668
      %5670 = vrot.lane.b32.xlu0 %v5244, 67
      %v5671 = vpop.permute.xlu0 %5670
      %5672 = vrot.lane.b32.xlu0 %v5246, 67
      %v5673 = vpop.permute.xlu0 %5672
      %5674 = vrot.lane.b32.xlu0 %v5287, 67
      %v5675 = vpop.permute.xlu0 %5674
      %5676 = vrot.lane.b32.xlu0 %v5289, 67
      %v5677 = vpop.permute.xlu0 %5676
      %5678 = vrot.lane.b32.xlu0 %v5162, 67
      %v5679 = vpop.permute.xlu0 %5678
      %5680 = vrot.lane.b32.xlu0 %v5164, 67
      %v5681 = vpop.permute.xlu0 %5680
      %5682 = vrot.lane.b32.xlu0 %v5205, 67
      %v5683 = vpop.permute.xlu0 %5682
      %5684 = vrot.lane.b32.xlu0 %v5207, 67
      %v5685 = vpop.permute.xlu0 %5684
      %5686 = vrot.lane.b32.xlu0 %v5248, 67
      %v5687 = vpop.permute.xlu0 %5686
      %5688 = vrot.lane.b32.xlu0 %v5250, 67
      %v5689 = vpop.permute.xlu0 %5688
      %5690 = vrot.lane.b32.xlu0 %v5291, 67
      %v5691 = vpop.permute.xlu0 %5690
      %5692 = vrot.lane.b32.xlu0 %v5293, 67
      %v5693 = vpop.permute.xlu0 %5692
      %vm5694 = vcmask 547840
      %v5695 = vsel %vm5694, %v5663, %v5665
      %v5696 = vsel %vm5694, %v5665, %v5667
      %v5697 = vsel %vm5694, %v5667, %v5669
      %v5698 = vsel %vm5694, %v5669, %v5671
      %v5699 = vsel %vm5694, %v5671, %v5673
      %v5700 = vsel %vm5694, %v5673, %v5675
      %v5701 = vsel %vm5694, %v5675, %v5677
      %v5702 = vsel %vm5694, %v5679, %v5681
      %v5703 = vsel %vm5694, %v5681, %v5683
      %v5704 = vsel %vm5694, %v5683, %v5685
      %v5705 = vsel %vm5694, %v5685, %v5687
      %v5706 = vsel %vm5694, %v5687, %v5689
      %v5707 = vsel %vm5694, %v5689, %v5691
      %v5708 = vsel %vm5694, %v5691, %v5693
      %5723 = vrot.lane.b32.xlu0 %v5158, 66
      %v5724 = vpop.permute.xlu0 %5723
      %5725 = vrot.lane.b32.xlu0 %v5160, 66
      %v5726 = vpop.permute.xlu0 %5725
      %5727 = vrot.lane.b32.xlu0 %v5201, 66
      %v5728 = vpop.permute.xlu0 %5727
      %5729 = vrot.lane.b32.xlu0 %v5203, 66
      %v5730 = vpop.permute.xlu0 %5729
      %5731 = vrot.lane.b32.xlu0 %v5244, 66
      %v5732 = vpop.permute.xlu0 %5731
      %5733 = vrot.lane.b32.xlu0 %v5246, 66
      %v5734 = vpop.permute.xlu0 %5733
      %5735 = vrot.lane.b32.xlu0 %v5287, 66
      %v5736 = vpop.permute.xlu0 %5735
      %5737 = vrot.lane.b32.xlu0 %v5289, 66
      %v5738 = vpop.permute.xlu0 %5737
      %5739 = vrot.lane.b32.xlu0 %v5162, 66
      %v5740 = vpop.permute.xlu0 %5739
      %5741 = vrot.lane.b32.xlu0 %v5164, 66
      %v5742 = vpop.permute.xlu0 %5741
      %5743 = vrot.lane.b32.xlu0 %v5205, 66
      %v5744 = vpop.permute.xlu0 %5743
      %5745 = vrot.lane.b32.xlu0 %v5207, 66
      %v5746 = vpop.permute.xlu0 %5745
      %5747 = vrot.lane.b32.xlu0 %v5248, 66
      %v5748 = vpop.permute.xlu0 %5747
      %5749 = vrot.lane.b32.xlu0 %v5250, 66
      %v5750 = vpop.permute.xlu0 %5749
      %5751 = vrot.lane.b32.xlu0 %v5291, 66
      %v5752 = vpop.permute.xlu0 %5751
      %5753 = vrot.lane.b32.xlu0 %v5293, 66
      %v5754 = vpop.permute.xlu0 %5753
      %vm5755 = vcmask 539648
      %v5756 = vsel %vm5755, %v5724, %v5726
      %v5757 = vsel %vm5755, %v5726, %v5728
      %v5758 = vsel %vm5755, %v5728, %v5730
      %v5759 = vsel %vm5755, %v5730, %v5732
      %v5760 = vsel %vm5755, %v5732, %v5734
      %v5761 = vsel %vm5755, %v5734, %v5736
      %v5762 = vsel %vm5755, %v5736, %v5738
      %v5763 = vsel %vm5755, %v5740, %v5742
      %v5764 = vsel %vm5755, %v5742, %v5744
      %v5765 = vsel %vm5755, %v5744, %v5746
      %v5766 = vsel %vm5755, %v5746, %v5748
      %v5767 = vsel %vm5755, %v5748, %v5750
      %v5768 = vsel %vm5755, %v5750, %v5752
      %v5769 = vsel %vm5755, %v5752, %v5754
      %v5784 = vld [vmem:[%s67] sm:$0xf]
      %v5785 = vpack.c.bf16 %v5162, %v5158
      %v5786 = vpack.c.bf16 %v5164, %v5160
      %v5787 = vpack.c.bf16 %v5205, %v5201
      %v5788 = vpack.c.bf16 %v5207, %v5203
      %v5789 = vpack.c.bf16 %v5248, %v5244
      %v5790 = vpack.c.bf16 %v5250, %v5246
      %v5791 = vpack.c.bf16 %v5291, %v5287
      %v5792 = vpack.c.bf16 %v5343, %v5337
      %v5793 = vpack.c.bf16 %v5344, %v5338
      %v5794 = vpack.c.bf16 %v5345, %v5339
      %v5795 = vpack.c.bf16 %v5346, %v5340
      %v5796 = vpack.c.bf16 %v5347, %v5341
      %v5797 = vpack.c.bf16 %v5348, %v5342
      %v5798 = vpack.c.bf16 %v5336, %v5322
      %v5799 = vpack.c.bf16 %v5397, %v5391
      %v5800 = vpack.c.bf16 %v5398, %v5392
      %v5801 = vpack.c.bf16 %v5399, %v5393
      %v5802 = vpack.c.bf16 %v5400, %v5394
      %v5803 = vpack.c.bf16 %v5401, %v5395
      %v5804 = vpack.c.bf16 %v5402, %v5396
      %v5805 = vpack.c.bf16 %v5390, %v5376
      %v5806 = vpack.c.bf16 %v5459, %v5452
      %v5807 = vpack.c.bf16 %v5460, %v5453
      %v5808 = vpack.c.bf16 %v5461, %v5454
      %v5809 = vpack.c.bf16 %v5462, %v5455
      %v5810 = vpack.c.bf16 %v5463, %v5456
      %v5811 = vpack.c.bf16 %v5464, %v5457
      %v5812 = vpack.c.bf16 %v5465, %v5458
      %v5813 = vpack.c.bf16 %v5520, %v5513
      %v5814 = vpack.c.bf16 %v5521, %v5514
      %v5815 = vpack.c.bf16 %v5522, %v5515
      %v5816 = vpack.c.bf16 %v5523, %v5516
      %v5817 = vpack.c.bf16 %v5524, %v5517
      %v5818 = vpack.c.bf16 %v5525, %v5518
      %v5819 = vpack.c.bf16 %v5526, %v5519
      %v5820 = vpack.c.bf16 %v5580, %v5573
      %v5821 = vpack.c.bf16 %v5581, %v5574
      %v5822 = vpack.c.bf16 %v5582, %v5575
      %v5823 = vpack.c.bf16 %v5583, %v5576
      %v5824 = vpack.c.bf16 %v5584, %v5577
      %v5825 = vpack.c.bf16 %v5585, %v5578
      %v5826 = vpack.c.bf16 %v5586, %v5579
      %v5827 = vpack.c.bf16 %v5641, %v5634
      %v5828 = vpack.c.bf16 %v5642, %v5635
      %v5829 = vpack.c.bf16 %v5643, %v5636
      %v5830 = vpack.c.bf16 %v5644, %v5637
      %v5831 = vpack.c.bf16 %v5645, %v5638
      %v5832 = vpack.c.bf16 %v5646, %v5639
      %v5833 = vpack.c.bf16 %v5647, %v5640
      %v5834 = vpack.c.bf16 %v5702, %v5695
      %v5835 = vpack.c.bf16 %v5703, %v5696
      %v5836 = vpack.c.bf16 %v5704, %v5697
      %v5837 = vpack.c.bf16 %v5705, %v5698
      %v5838 = vpack.c.bf16 %v5706, %v5699
      %v5839 = vpack.c.bf16 %v5707, %v5700
      %v5840 = vpack.c.bf16 %v5708, %v5701
      %v5841 = vpack.c.bf16 %v5763, %v5756
      %v5842 = vpack.c.bf16 %v5764, %v5757
      %v5843 = vpack.c.bf16 %v5765, %v5758
      %v5844 = vpack.c.bf16 %v5766, %v5759
      %v5845 = vpack.c.bf16 %v5767, %v5760
      %v5846 = vpack.c.bf16 %v5768, %v5761
      %v5847 = vpack.c.bf16 %v5769, %v5762
      %v5848 = vld [vmem:[%s69] sm:$0xf]
      %5850 = vset.pattern.permute.xlu0 0
      %5851 = vperm.xlu0 %5850, %v5848
      %v5852 = vpop.permute.xlu0 %5851
      %v5856 = vunpack.c.l.s4 1983009808
      %v5857 = vunpack.c.0.s8 %v5856
      %v5858 = vlaneseq
      %v5859 = vshrl.u32 %v5858, 7
      %v5860 = vsub.s32 %v5857, %v5859
      %v5861 = vrot.slane %v5784, %v5860
      %v5862 = vcombine.high %v5861, %v5861
      %v5865 = vsel %vm2790, %v5862, 0
      %5867 = vmatprep.subr.bf16.mxu0 %v5835
      %5868 = vmatpush1.bf16.msra.mxu0 %v5834
      %5869 = vmatprep.subr.bf16.mxu0 %v5828
      %5870 = vmatpush1.bf16.msra.mxu0 %v5827
      %5871 = vmatprep.subr.bf16.mxu0 %v5821
      %5872 = vmatpush1.bf16.msra.mxu0 %v5820
      %5873 = vmatprep.subr.bf16.mxu0 %v5814
      %5874 = vmatpush1.bf16.msra.mxu0 %v5813
      %5875 = vmatprep.subr.bf16.mxu0 %v5807
      %5876 = vmatpush1.bf16.msra.mxu0 %v5806
      %5877 = vmatprep.subr.bf16.mxu0 %v5800
      %5878 = vmatpush1.bf16.msra.mxu0 %v5799
      %5879 = vmatprep.subr.bf16.mxu0 %v5793
      %5880 = vmatpush1.bf16.msra.mxu0 %v5792
      %5881 = vmatprep.subr.bf16.mxu0 %v5786
      %5882 = vmatpush1.bf16.msra.mxu0 %v5785
      %5883 = vmatprep.subr.bf16.mxu0 0
      %5884 = vmatpush2.bf16.msra.mxu0 0
      %5885 = vmatprep.subr.bf16.mxu0 0
      %5886 = vmatpush2.bf16.msra.mxu0 0
      %5887 = vmatprep.subr.bf16.mxu0 0
      %5888 = vmatpush2.bf16.msra.mxu0 0
      %5889 = vmatprep.subr.bf16.mxu0 0
      %5890 = vmatpush2.bf16.msra.mxu0 0
      %5891 = vmatprep.subr.bf16.mxu0 0
      %5892 = vmatpush2.bf16.msra.mxu0 0
      %5893 = vmatprep.subr.bf16.mxu0 0
      %5894 = vmatpush2.bf16.msra.mxu0 0
      %5895 = vmatprep.subr.bf16.mxu0 0
      %5896 = vmatpush2.bf16.msra.mxu0 0
      %5897 = vmatprep.subr.bf16.mxu0 %v5842
      %5898 = vmatpush2.bf16.msra.mxu0 %v5841
      %5899 = vmatprep.mubr.bf16.mxu0 %v5865
      %5900 = vmatmul.mubr.bf16.gmra.mxu0 %v5861
      %v5901 = vpop.f32.mrf.mxu0
      %v5902 = vadd.f32 %v5852, %v5901
      %v5903 = vpop.f32.mrf.mxu0
      %v5904 = vadd.f32 %v5852, %v5903
      %v5905 = vpop.f32.mrf.mxu0
      %v5906 = vpop.f32.mrf.mxu0
      %5907 = vdwg.mxu0
      %5908 = vmatprep.subr.bf16.mxu0 %v5837
      %5909 = vmatpush1.bf16.msra.mxu0 %v5836
      %5910 = vmatprep.subr.bf16.mxu0 %v5830
      %5911 = vmatpush1.bf16.msra.mxu0 %v5829
      %5912 = vmatprep.subr.bf16.mxu0 %v5823
      %5913 = vmatpush1.bf16.msra.mxu0 %v5822
      %5914 = vmatprep.subr.bf16.mxu0 %v5816
      %5915 = vmatpush1.bf16.msra.mxu0 %v5815
      %5916 = vmatprep.subr.bf16.mxu0 %v5809
      %5917 = vmatpush1.bf16.msra.mxu0 %v5808
      %5918 = vmatprep.subr.bf16.mxu0 %v5802
      %5919 = vmatpush1.bf16.msra.mxu0 %v5801
      %5920 = vmatprep.subr.bf16.mxu0 %v5795
      %5921 = vmatpush1.bf16.msra.mxu0 %v5794
      %5922 = vmatprep.subr.bf16.mxu0 %v5788
      %5923 = vmatpush1.bf16.msra.mxu0 %v5787
      %5924 = vmatprep.subr.bf16.mxu0 0
      %5925 = vmatpush2.bf16.msra.mxu0 0
      %5926 = vmatprep.subr.bf16.mxu0 0
      %5927 = vmatpush2.bf16.msra.mxu0 0
      %5928 = vmatprep.subr.bf16.mxu0 0
      %5929 = vmatpush2.bf16.msra.mxu0 0
      %5930 = vmatprep.subr.bf16.mxu0 0
      %5931 = vmatpush2.bf16.msra.mxu0 0
      %5932 = vmatprep.subr.bf16.mxu0 0
      %5933 = vmatpush2.bf16.msra.mxu0 0
      %5934 = vmatprep.subr.bf16.mxu0 0
      %5935 = vmatpush2.bf16.msra.mxu0 0
      %5936 = vmatprep.subr.bf16.mxu0 0
      %5937 = vmatpush2.bf16.msra.mxu0 0
      %5938 = vmatprep.subr.bf16.mxu0 %v5844
      %5939 = vmatpush2.bf16.msra.mxu0 %v5843
      %5940 = vmatprep.mubr.bf16.mxu0 %v5865
      %5941 = vmatmul.mubr.bf16.gmra.mxu0 %v5861
      %v5942 = vpop.f32.mrf.mxu0
      %v5943 = vadd.f32 %v5852, %v5942
      %v5944 = vpop.f32.mrf.mxu0
      %v5945 = vadd.f32 %v5852, %v5944
      %v5946 = vpop.f32.mrf.mxu0
      %v5947 = vpop.f32.mrf.mxu0
      %5948 = vdwg.mxu0
      %5949 = vmatprep.subr.bf16.mxu0 %v5839
      %5950 = vmatpush1.bf16.msra.mxu0 %v5838
      %5951 = vmatprep.subr.bf16.mxu0 %v5832
      %5952 = vmatpush1.bf16.msra.mxu0 %v5831
      %5953 = vmatprep.subr.bf16.mxu0 %v5825
      %5954 = vmatpush1.bf16.msra.mxu0 %v5824
      %5955 = vmatprep.subr.bf16.mxu0 %v5818
      %5956 = vmatpush1.bf16.msra.mxu0 %v5817
      %5957 = vmatprep.subr.bf16.mxu0 %v5811
      %5958 = vmatpush1.bf16.msra.mxu0 %v5810
      %5959 = vmatprep.subr.bf16.mxu0 %v5804
      %5960 = vmatpush1.bf16.msra.mxu0 %v5803
      %5961 = vmatprep.subr.bf16.mxu0 %v5797
      %5962 = vmatpush1.bf16.msra.mxu0 %v5796
      %5963 = vmatprep.subr.bf16.mxu0 %v5790
      %5964 = vmatpush1.bf16.msra.mxu0 %v5789
      %5965 = vmatprep.subr.bf16.mxu0 0
      %5966 = vmatpush2.bf16.msra.mxu0 0
      %5967 = vmatprep.subr.bf16.mxu0 0
      %5968 = vmatpush2.bf16.msra.mxu0 0
      %5969 = vmatprep.subr.bf16.mxu0 0
      %5970 = vmatpush2.bf16.msra.mxu0 0
      %5971 = vmatprep.subr.bf16.mxu0 0
      %5972 = vmatpush2.bf16.msra.mxu0 0
      %5973 = vmatprep.subr.bf16.mxu0 0
      %5974 = vmatpush2.bf16.msra.mxu0 0
      %5975 = vmatprep.subr.bf16.mxu0 0
      %5976 = vmatpush2.bf16.msra.mxu0 0
      %5977 = vmatprep.subr.bf16.mxu0 0
      %5978 = vmatpush2.bf16.msra.mxu0 0
      %5979 = vmatprep.subr.bf16.mxu0 %v5846
      %5980 = vmatpush2.bf16.msra.mxu0 %v5845
      %5981 = vmatprep.mubr.bf16.mxu0 %v5865
      %5982 = vmatmul.mubr.bf16.gmra.mxu0 %v5861
      %v5983 = vpop.f32.mrf.mxu0
      %v5984 = vadd.f32 %v5852, %v5983
      %v5985 = vpop.f32.mrf.mxu0
      %v5986 = vadd.f32 %v5852, %v5985
      %v5987 = vpop.f32.mrf.mxu0
      %v5988 = vpop.f32.mrf.mxu0
      %5989 = vdwg.mxu0
      %5990 = vmatprep.subr.bf16.mxu0 0
      %5991 = vmatpush1.bf16.msra.mxu0 %v5840
      %5992 = vmatprep.subr.bf16.mxu0 0
      %5993 = vmatpush1.bf16.msra.mxu0 %v5833
      %5994 = vmatprep.subr.bf16.mxu0 0
      %5995 = vmatpush1.bf16.msra.mxu0 %v5826
      %5996 = vmatprep.subr.bf16.mxu0 0
      %5997 = vmatpush1.bf16.msra.mxu0 %v5819
      %5998 = vmatprep.subr.bf16.mxu0 0
      %5999 = vmatpush1.bf16.msra.mxu0 %v5812
      %6000 = vmatprep.subr.bf16.mxu0 0
      %6001 = vmatpush1.bf16.msra.mxu0 %v5805
      %6002 = vmatprep.subr.bf16.mxu0 0
      %6003 = vmatpush1.bf16.msra.mxu0 %v5798
      %6004 = vmatprep.subr.bf16.mxu0 0
      %6005 = vmatpush1.bf16.msra.mxu0 %v5791
      %6006 = vmatprep.subr.bf16.mxu0 0
      %6007 = vmatpush2.bf16.msra.mxu0 0
      %6008 = vmatprep.subr.bf16.mxu0 0
      %6009 = vmatpush2.bf16.msra.mxu0 0
      %6010 = vmatprep.subr.bf16.mxu0 0
      %6011 = vmatpush2.bf16.msra.mxu0 0
      %6012 = vmatprep.subr.bf16.mxu0 0
      %6013 = vmatpush2.bf16.msra.mxu0 0
      %6014 = vmatprep.subr.bf16.mxu0 0
      %6015 = vmatpush2.bf16.msra.mxu0 0
      %6016 = vmatprep.subr.bf16.mxu0 0
      %6017 = vmatpush2.bf16.msra.mxu0 0
      %6018 = vmatprep.subr.bf16.mxu0 0
      %6019 = vmatpush2.bf16.msra.mxu0 0
      %6020 = vmatprep.subr.bf16.mxu0 0
      %6021 = vmatpush2.bf16.msra.mxu0 %v5847
      %6022 = vmatprep.mubr.bf16.mxu0 %v5865
      %6023 = vmatmul.mubr.bf16.gmra.mxu0 %v5861
      %v6024 = vpop.f32.mrf.mxu0
      %v6025 = vadd.f32 %v5852, %v6024
      %v6026 = vpop.f32.mrf.mxu0
      %v6027 = vpop.f32.mrf.mxu0
      %v6028 = vpop.f32.mrf.mxu0
      %6029 = vdwg.mxu0
      %v6030 = vld [vmem:[%s73] sm:$0x7f]
      %v6032 = vlaneseq
      %v6033 = vshrl.u32 %v6032, 7
      %v6034 = vsub.s32 0, %v6033
      %v6035 = vrot.slane %v6030, %v6034
      %v6036 = vlaneseq
      %v6037 = vshrl.u32 %v6036, 7
      %v6038 = vsub.s32 1, %v6037
      %v6039 = vrot.slane %v6030, %v6038
      %v6040 = vlaneseq
      %v6041 = vshrl.u32 %v6040, 7
      %v6042 = vsub.s32 2, %v6041
      %v6043 = vrot.slane %v6030, %v6042
      %v6044 = vlaneseq
      %v6045 = vshrl.u32 %v6044, 7
      %v6046 = vsub.s32 3, %v6045
      %v6047 = vrot.slane %v6030, %v6046
      %v6048 = vlaneseq
      %v6049 = vshrl.u32 %v6048, 7
      %v6050 = vsub.s32 4, %v6049
      %v6051 = vrot.slane %v6030, %v6050
      %v6052 = vlaneseq
      %v6053 = vshrl.u32 %v6052, 7
      %v6054 = vsub.s32 5, %v6053
      %v6055 = vrot.slane %v6030, %v6054
      %v6056 = vlaneseq
      %v6057 = vshrl.u32 %v6056, 7
      %v6058 = vsub.s32 6, %v6057
      %v6059 = vrot.slane %v6030, %v6058
      %v6067 = vmul.f32 %v5902, %v6035
      %v6068 = vmul.f32 %v5904, %v6039
      %v6069 = vmul.f32 %v5943, %v6043
      %v6070 = vmul.f32 %v5945, %v6047
      %v6071 = vmul.f32 %v5984, %v6051
      %v6072 = vmul.f32 %v5986, %v6055
      %v6073 = vmul.f32 %v6025, %v6059
      %6081 = vrot.lane.b32.xlu0 %v6067, 31
      %v6082 = vpop.permute.xlu0 %6081
      %6083 = vrot.lane.b32.xlu0 %v6068, 31
      %v6084 = vpop.permute.xlu0 %6083
      %6085 = vrot.lane.b32.xlu0 %v6069, 31
      %v6086 = vpop.permute.xlu0 %6085
      %6087 = vrot.lane.b32.xlu0 %v6070, 31
      %v6088 = vpop.permute.xlu0 %6087
      %6089 = vrot.lane.b32.xlu0 %v6071, 31
      %v6090 = vpop.permute.xlu0 %6089
      %6091 = vrot.lane.b32.xlu0 %v6072, 31
      %v6092 = vpop.permute.xlu0 %6091
      %6093 = vrot.lane.b32.xlu0 %v6073, 31
      %v6094 = vpop.permute.xlu0 %6093
      %vm6095 = vcmask 252928
      %v6096 = vsel %vm6095, %v6082, %v6084
      %v6097 = vsel %vm6095, %v6084, %v6086
      %v6098 = vsel %vm6095, %v6086, %v6088
      %v6099 = vsel %vm6095, %v6088, %v6090
      %v6100 = vsel %vm6095, %v6090, %v6092
      %v6101 = vsel %vm6095, %v6092, %v6094
      %v6110 = vsel %vm6095, 0.0, %v6082
      %v6111 = vmax.f32 %v6110, 0.0
      %v6112 = vmax.f32 %v6096, 0.0
      %v6113 = vmax.f32 %v6097, 0.0
      %v6114 = vmax.f32 %v6098, 0.0
      %v6115 = vmax.f32 %v6099, 0.0
      %v6116 = vmax.f32 %v6100, 0.0
      %v6117 = vmax.f32 %v6101, 0.0
      %v6118 = vmax.f32 %v6094, 0.0
      %v6119 = vld [vmem:[%s75] sm:$0xf]
      %6121 = vset.pattern.permute.xlu0 0
      %6122 = vperm.xlu0 %6121, %v6119
      %v6123 = vpop.permute.xlu0 %6122
      %v6125 = vmul.f32 %v6111, %v6123
      %v6126 = vmul.f32 %v6112, %v6123
      %v6127 = vmul.f32 %v6113, %v6123
      %v6128 = vmul.f32 %v6114, %v6123
      %v6129 = vmul.f32 %v6115, %v6123
      %v6130 = vmul.f32 %v6116, %v6123
      %v6131 = vmul.f32 %v6117, %v6123
      %v6132 = vmul.f32 %v6118, %v6123
      %v6133 = vsel %vm3945, %v6125, 0.0
      %v6134 = vrot.slane %v6133, 4
      %v6135 = vadd.f32 %v6133, %v6134
      %v6136 = vrot.slane %v6135, 2
      %v6137 = vadd.f32 %v6135, %v6136
      %v6138 = vrot.slane %v6137, 1
      %v6139 = vadd.f32 %v6137, %v6138
      %v6140 = vsel %vm3945, %v6126, 0.0
      %v6141 = vrot.slane %v6140, 4
      %v6142 = vadd.f32 %v6140, %v6141
      %v6143 = vrot.slane %v6142, 2
      %v6144 = vadd.f32 %v6142, %v6143
      %v6145 = vrot.slane %v6144, 1
      %v6146 = vadd.f32 %v6144, %v6145
      %v6147 = vsel %vm3945, %v6127, 0.0
      %v6148 = vrot.slane %v6147, 4
      %v6149 = vadd.f32 %v6147, %v6148
      %v6150 = vrot.slane %v6149, 2
      %v6151 = vadd.f32 %v6149, %v6150
      %v6152 = vrot.slane %v6151, 1
      %v6153 = vadd.f32 %v6151, %v6152
      %v6154 = vsel %vm3945, %v6128, 0.0
      %v6155 = vrot.slane %v6154, 4
      %v6156 = vadd.f32 %v6154, %v6155
      %v6157 = vrot.slane %v6156, 2
      %v6158 = vadd.f32 %v6156, %v6157
      %v6159 = vrot.slane %v6158, 1
      %v6160 = vadd.f32 %v6158, %v6159
      %v6161 = vsel %vm3945, %v6129, 0.0
      %v6162 = vrot.slane %v6161, 4
      %v6163 = vadd.f32 %v6161, %v6162
      %v6164 = vrot.slane %v6163, 2
      %v6165 = vadd.f32 %v6163, %v6164
      %v6166 = vrot.slane %v6165, 1
      %v6167 = vadd.f32 %v6165, %v6166
      %v6168 = vsel %vm3945, %v6130, 0.0
      %v6169 = vrot.slane %v6168, 4
      %v6170 = vadd.f32 %v6168, %v6169
      %v6171 = vrot.slane %v6170, 2
      %v6172 = vadd.f32 %v6170, %v6171
      %v6173 = vrot.slane %v6172, 1
      %v6174 = vadd.f32 %v6172, %v6173
      %v6175 = vsel %vm3945, %v6131, 0.0
      %v6176 = vrot.slane %v6175, 4
      %v6177 = vadd.f32 %v6175, %v6176
      %v6178 = vrot.slane %v6177, 2
      %v6179 = vadd.f32 %v6177, %v6178
      %v6180 = vrot.slane %v6179, 1
      %v6181 = vadd.f32 %v6179, %v6180
      %vm6182 = vcmask 27648
      %v6183 = vsel %vm6182, %v6132, 0.0
      %v6184 = vrot.slane %v6183, 4
      %v6185 = vadd.f32 %v6183, %v6184
      %v6186 = vrot.slane %v6185, 2
      %v6187 = vadd.f32 %v6185, %v6186
      %v6188 = vrot.slane %v6187, 1
      %v6189 = vadd.f32 %v6187, %v6188
      %v6190 = vld [vmem:[#allocation2] sm:$0x1]
      %6192 = vset.pattern.permute.xlu0 0
      %6193 = vperm.xlu0 %6192, %v6190
      %v6194 = vpop.permute.xlu0 %6193
      %v6196 = vlaneseq
      %v6197 = vshrl.u32 %v6196, 7
      %v6198 = vsub.s32 0, %v6197
      %v6199 = vrot.slane %v6194, %v6198
      %v6200 = vadd.f32 %v6139, %v6199
      %v6201 = vadd.f32 %v6146, %v6199
      %v6202 = vadd.f32 %v6153, %v6199
      %v6203 = vadd.f32 %v6160, %v6199
      %v6204 = vadd.f32 %v6167, %v6199
      %v6205 = vadd.f32 %v6174, %v6199
      %v6206 = vadd.f32 %v6181, %v6199
      %v6207 = vadd.f32 %v6189, %v6199
      %v6216 = vcombine.low %v6200, %v6201
      %v6217 = vcombine.low %v6202, %v6203
      %v6218 = vcombine.low %v6204, %v6205
      %v6219 = vcombine.low %v6206, %v6207
      %v6221 = vunpack.c.l.s4 1966171168
      %v6222 = vunpack.c.0.s8 %v6221
      %v6223 = vlaneseq
      %v6224 = vshrl.u32 %v6223, 7
      %v6225 = vsub.s32 %v6222, %v6224
      %v6226 = vrot.slane %v6216, %v6225
      %v6228 = vunpack.c.l.s4 1966171168
      %v6229 = vunpack.c.0.s8 %v6228
      %v6230 = vlaneseq
      %v6231 = vshrl.u32 %v6230, 7
      %v6232 = vsub.s32 %v6229, %v6231
      %v6233 = vrot.slane %v6217, %v6232
      %v6235 = vunpack.c.l.s4 1966171168
      %v6236 = vunpack.c.0.s8 %v6235
      %v6237 = vlaneseq
      %v6238 = vshrl.u32 %v6237, 7
      %v6239 = vsub.s32 %v6236, %v6238
      %v6240 = vrot.slane %v6218, %v6239
      %v6242 = vunpack.c.l.s4 1966171168
      %v6243 = vunpack.c.0.s8 %v6242
      %v6244 = vlaneseq
      %v6245 = vshrl.u32 %v6244, 7
      %v6246 = vsub.s32 %v6243, %v6245
      %v6247 = vrot.slane %v6219, %v6246
      %v6248 = vcombine.low %v6226, %v6233
      %v6249 = vcombine.low %v6240, %v6247
      %v6251 = vunpack.c.l.s4 1966171168
      %v6252 = vunpack.c.0.s8 %v6251
      %v6253 = vlaneseq
      %v6254 = vshrl.u32 %v6253, 7
      %v6255 = vsub.s32 %v6252, %v6254
      %v6256 = vrot.slane %v6248, %v6255
      %v6258 = vunpack.c.l.s4 1966171168
      %v6259 = vunpack.c.0.s8 %v6258
      %v6260 = vlaneseq
      %v6261 = vshrl.u32 %v6260, 7
      %v6262 = vsub.s32 %v6259, %v6261
      %v6263 = vrot.slane %v6249, %v6262
      %v6264 = vcombine.low %v6256, %v6263
      %v6266 = vlaneseq
      %vm6267 = vcmp.ge.s32.totalorder %v6266, 0
      %vm6268 = vcmp.lt.s32.totalorder %v6266, 900
      %vm6269 = vmand %vm6267, %vm6268
      %6270 = vst.msk [vmem:[%s1182] sm:$0xff] %vm6269, %v6264
      %p6271 = scmp.lt.s32.totalorder %s92, 1
      %s6272 = scalar_select %p6271, %s92, 1
      %s6273 = smul.addr %s6272, 8
      %s6274 = scalar_lea.vmem %s79, %s6273
      // Predicated region
      $region177: #{_lambda_.1} parent=175 // pred_check
        %p6275 = pneg %p934
      $region178: #{_lambda_.1} parent=175 // pred_check_branch
        %6277 = sbr.rel (%p6275) target = $region180
      $region179: #{_lambda_.1} parent=175 // pred_region
        _
      $region180: #{_lambda_.1} parent=175 // pred_fallthru
        _
    $region176: #{_lambda_.1} parent=5 // pred_fallthru
      _
    %p6278 = scmp.le.s32.totalorder 2, %s87
    // Predicated region
    $region181: #{_lambda_.1} parent=5 // pred_check
      %p6279 = pneg %p6278
    $region182: #{_lambda_.1} parent=5 // pred_check_branch
      %6281 = sbr.rel (%p6279) target = $region184
    $region183: #{_lambda_.1} parent=5 // pred_region
      %s6282 = ssub.s32 %s87, 2
      // Predicated region
      $region185: #{_lambda_.1} parent=183 // pred_check
        %p6283 = pneg %p940
      $region186: #{_lambda_.1} parent=183 // pred_check_branch
        %6285 = sbr.rel (%p6283) target = $region188
      $region187: #{_lambda_.1} parent=183 // pred_region
        %p6286 = scmp.lt.s32.totalorder %s93, 1
        %s6287 = scalar_select %p6286, %s93, 1
        %s6288 = smul.addr %s6287, 8
        %s6289 = scalar_lea.vmem %s79, %s6288
      $region188: #{_lambda_.1} parent=183 // pred_fallthru
        _
    $region184: #{_lambda_.1} parent=5 // pred_fallthru
      _
  $region6: #{_lambda_.1} parent=0 // loop_footer
    %s91 = sadd.s32 1, %s87
  $region7: #{_lambda_.1} parent=0 // loop_footer_branch
    %86 = sbr.rel target = $region3
  $region8: #{_lambda_.1} parent=0 // loop_exit
    _

</llo_original>
